<compile_context>
chip_gen: v7x
topology: tpu7x:2x2x1
jax: 0.10.0
libtpu: 0.0.40
codegen_flags: <defaults>
</compile_context>

<pallas_src>
import jax
import jax.numpy as jnp
from jax import lax
from jax.experimental import pallas as pl
from jax.experimental.pallas import tpu as pltpu


def _double_conv_kernel(x_ref, w1_ref, w2_ref, o_ref, ypad_ref, acc_ref):
    """Fused DoubleConv for one batch element, NHWC layout.

    x_ref   : (1, H+4, Wq+2, Cin)   input with a 2-px zero halo (W rounded up)
    w1_ref  : (9*Cin,  Cmid)        conv1 3x3 weights, row = (kh*3+kw)*Cin + cin
    w2_ref  : (9*Cmid, Cmid)        PConv weights + identity delta-kernel for the
                                    untouched channels
    o_ref   : (1, H, W, Cmid)
    ypad_ref: VMEM (H+2, Wq, Cmid)  zero-padded relu(conv1(x)) (kept on-chip)
    acc_ref : VMEM ((H+2)*Wq, Cmid) f32 accumulator shared by both stages
    """
    H, W, Cmid = o_ref.shape[1], o_ref.shape[2], o_ref.shape[3]
    Cin = x_ref.shape[3]
    Hp, Wq = ypad_ref.shape[0], ypad_ref.shape[1]

    # ---- stage 1: conv1 + ReLU evaluated on the (Hp, Wq) extended grid ----
    # 3x3 "same" conv as 9 shifted-window MXU matmuls accumulated in VMEM f32.
    for kh in range(3):
        for kw in range(3):
            win = x_ref[0, kh:kh + Hp, kw:kw + Wq, :].reshape(Hp * Wq, Cin)
            wk = w1_ref[(kh * 3 + kw) * Cin:(kh * 3 + kw + 1) * Cin, :]
            contrib = jnp.dot(win, wk, preferred_element_type=jnp.float32)
            if kh == 0 and kw == 0:
                acc_ref[...] = contrib          # init with first tap (no zero pass)
            else:
                acc_ref[...] += contrib
    y = jnp.maximum(acc_ref[...], 0.0).reshape(Hp, Wq, Cmid)

    # Zero everything outside the valid H x W interior so ypad is exactly the
    # zero-padded relu(conv1(x)) the second conv needs (no unaligned stores).
    ri = lax.broadcasted_iota(jnp.int32, (Hp, Wq, Cmid), 0)
    ci = lax.broadcasted_iota(jnp.int32, (Hp, Wq, Cmid), 1)
    interior = (ri >= 1) & (ri <= H) & (ci >= 1) & (ci <= W)
    ypad_ref[...] = jnp.where(interior, y, 0.0)

    # ---- stage 2: PConv (+ identity pass-through) + ReLU on the (H, W) grid ----
    # Reuses the stage-1 accumulator (static, 8-aligned row slice).
    for kh in range(3):
        for kw in range(3):
            win = ypad_ref[kh:kh + H, kw:kw + W, :].reshape(H * W, Cmid)
            wk = w2_ref[(kh * 3 + kw) * Cmid:(kh * 3 + kw + 1) * Cmid, :]
            contrib = jnp.dot(win, wk, preferred_element_type=jnp.float32)
            if kh == 0 and kw == 0:
                acc_ref[0:H * W, :] = contrib
            else:
                acc_ref[0:H * W, :] += contrib
    out = jnp.maximum(acc_ref[0:H * W, :], 0.0)
    # relu of the pass-through channels is a no-op (they came from relu(conv1));
    # the identity rows of w2 make this a single dense full-block store.
    o_ref[...] = out.reshape(1, H, W, Cmid).astype(o_ref.dtype)


def make_double_conv_params(w1_oihw, w2_oihw, n_div=4):
    """Pre-transpose / flatten the torch (OIHW) weights once, at init time."""
    Cmid, Cin = w1_oihw.shape[0], w1_oihw.shape[1]
    c3 = Cmid // n_div
    assert w2_oihw.shape[:2] == (c3, c3)
    w1_flat = jnp.transpose(w1_oihw, (2, 3, 1, 0)).reshape(9 * Cin, Cmid)
    # PConv weight with the untouched channels passed through as a centre-tap
    # delta kernel, so a single matmul chain yields all Cmid output channels.
    w2_hwio = jnp.transpose(w2_oihw, (2, 3, 1, 0))                  # (3,3,c3,c3)
    w2c = jnp.zeros((3, 3, Cmid, Cmid), w1_oihw.dtype)
    w2c = w2c.at[:, :, :c3, :c3].set(w2_hwio)
    w2c = w2c.at[1, 1, c3:, c3:].set(jnp.eye(Cmid - c3, dtype=w1_oihw.dtype))
    w2_flat = w2c.reshape(9 * Cmid, Cmid)
    return w1_flat, w2_flat


def double_conv_nhwc(x_nhwc, w1_flat, w2_flat):
    """Fused DoubleConv forward, NHWC (the TPU-native path)."""
    N, H, W, Cin = x_nhwc.shape
    Cmid = w1_flat.shape[1]
    Hp = H + 2
    # Round the extended-grid width up to a sublane multiple so the in-kernel
    # (rows, Wq, C) <-> (rows*Wq, C) reshapes are layout-preserving.
    Wq = ((W + 2 + 7) // 8) * 8
    # 2-px halo for the extended-grid conv1 (also supplies conv2's halo in-kernel).
    # Adjacent to the caller's layout transpose -> XLA fuses into one pass.
    x_halo = jnp.pad(x_nhwc, ((0, 0), (2, 2), (2, Wq - W), (0, 0)))
    return pl.pallas_call(
        _double_conv_kernel,
        out_shape=jax.ShapeDtypeStruct((N, H, W, Cmid), x_nhwc.dtype),
        grid_spec=pltpu.PrefetchScalarGridSpec(
            num_scalar_prefetch=0,
            grid=(N,),
            in_specs=[
                pl.BlockSpec((1, H + 4, Wq + 2, Cin), lambda n: (n, 0, 0, 0)),
                pl.BlockSpec((9 * Cin, Cmid), lambda n: (0, 0)),
                pl.BlockSpec((9 * Cmid, Cmid), lambda n: (0, 0)),
            ],
            out_specs=pl.BlockSpec((1, H, W, Cmid), lambda n: (n, 0, 0, 0)),
            scratch_shapes=[
                pltpu.VMEM((Hp, Wq, Cmid), jnp.float32),
                pltpu.VMEM((Hp * Wq, Cmid), jnp.float32),
            ],
        ),
        compiler_params=pltpu.CompilerParams(
            dimension_semantics=("parallel",),
            vmem_limit_bytes=32 * 1024 * 1024,
        ),
    )(x_halo, w1_flat, w2_flat)


def double_conv_forward(x_nchw, w1_oihw, w2_oihw, n_div=4):
    """DoubleConv.forward with the PyTorch NCHW / OIHW interface."""
    # NOTE: in a fully-NHWC model these two transposes disappear; use
    # make_double_conv_params + double_conv_nhwc directly.
    w1_flat, w2_flat = make_double_conv_params(w1_oihw, w2_oihw, n_div)
    x = jnp.transpose(x_nchw, (0, 2, 3, 1))          # NCHW -> NHWC
    out = double_conv_nhwc(x, w1_flat, w2_flat)
    return jnp.transpose(out, (0, 3, 1, 2))          # NHWC -> NCHW


# ---------------- pure-JAX reference for verification ----------------
def _conv_ref(x_nchw, w_oihw):
    return lax.conv_general_dilated(
        x_nchw, w_oihw, window_strides=(1, 1), padding="SAME",
        dimension_numbers=("NCHW", "OIHW", "NCHW"))


def double_conv_ref(x, w1, w2, n_div=4):
    y = jax.nn.relu(_conv_ref(x, w1))
    c3 = w1.shape[0] // n_div
    y1, y2 = y[:, :c3], y[:, c3:]
    z1 = _conv_ref(y1, w2)
    return jax.nn.relu(jnp.concatenate([z1, y2], axis=1))


if __name__ == "__main__":
    # Small shapes consistent with the module: batch=2, in_channels=4,
    # out_channels (= mid_channels) = 8, spatial 16x16, PConv n_div=4.
    N, Cin, Cout, H, W = 2, 4, 8, 16, 16
    n_div = 4
    c3 = Cout // n_div  # PConv2d conv channels = 2

    key = jax.random.PRNGKey(0)
    kx, kw1, kw2 = jax.random.split(key, 3)
    x = jax.random.normal(kx, (N, Cin, H, W), dtype=jnp.float32)
    # Deterministic synthetic weights (PyTorch OIHW layout, bias=False).
    w1 = 0.1 * jax.random.normal(kw1, (Cout, Cin, 3, 3), dtype=jnp.float32)
    w2 = 0.1 * jax.random.normal(kw2, (c3, c3, 3, 3), dtype=jnp.float32)

    out = double_conv_forward(x, w1, w2, n_div=n_div)
    out = jax.block_until_ready(out)

    ref = double_conv_ref(x, w1, w2, n_div=n_div)
    assert out.shape == (N, Cout, H, W), out.shape
    err = float(jnp.max(jnp.abs(out - ref)))
    assert jnp.allclose(out, ref, atol=1e-4, rtol=1e-4), err

    print("KERNEL_OK")
</pallas_src>

<mosaic_0001>
module attributes {stable_mosaic.version = 11 : i64} {
  func.func @_double_conv_kernel(%arg0: i32, %arg1: memref<1x20x26x4xf32, #tpu.memory_space<vmem>>, %arg2: memref<36x8xf32, #tpu.memory_space<vmem>>, %arg3: memref<72x8xf32, #tpu.memory_space<vmem>>, %arg4: memref<1x16x16x8xf32, #tpu.memory_space<vmem>>, %arg5: memref<18x24x8xf32, #tpu.memory_space<vmem>>, %arg6: memref<432x8xf32, #tpu.memory_space<vmem>>) attributes {dimension_semantics = [#tpu.dimension_semantics<parallel>], iteration_bounds = array<i64: 2>, scalar_prefetch = 0 : i64, scratch_operands = 2 : i64, tpu.core_type = #tpu.core_type<tc>, window_params = [{transform_indices = @transform_0, window_bounds = array<i64: 1, 20, 26, 4>}, {pipeline_mode = #tpu.pipeline_mode<synchronous>, transform_indices = @transform_1, window_bounds = array<i64: 36, 8>}, {pipeline_mode = #tpu.pipeline_mode<synchronous>, transform_indices = @transform_2, window_bounds = array<i64: 72, 8>}, {transform_indices = @transform_3, window_bounds = array<i64: 1, 16, 16, 8>}]} {
    %c0 = arith.constant 0 : index
    %c0_0 = arith.constant 0 : index
    %c0_1 = arith.constant 0 : index
    %c0_2 = arith.constant 0 : index
    %0 = vector.load %arg1[%c0, %c0_0, %c0_1, %c0_2] : memref<1x20x26x4xf32, #tpu.memory_space<vmem>>, vector<1x18x24x4xf32>
    %1 = vector.shape_cast %0 : vector<1x18x24x4xf32> to vector<18x24x4xf32>
    %2 = vector.shape_cast %1 : vector<18x24x4xf32> to vector<432x4xf32>
    %c0_3 = arith.constant 0 : index
    %c0_4 = arith.constant 0 : index
    %3 = vector.load %arg2[%c0_3, %c0_4] : memref<36x8xf32, #tpu.memory_space<vmem>>, vector<4x8xf32>
    %cst = arith.constant dense<0.000000e+00> : vector<432x8xf32>
    %4 = tpu.matmul %2, %3, %cst {dimension_numbers = #tpu.dot_dimension_numbers<[1], [0], [0], [1], [0, 0, 1, 1], [], []>} : vector<432x4xf32>, vector<4x8xf32>, vector<432x8xf32> -> vector<432x8xf32>
    %c0_5 = arith.constant 0 : index
    %c0_6 = arith.constant 0 : index
    %5 = vector.load %arg6[%c0_5, %c0_6] : memref<432x8xf32, #tpu.memory_space<vmem>>, vector<432x8xf32>
    tpu.vector_store %arg6[%c0_5, %c0_6], %4 {strides = array<i32>} : memref<432x8xf32, #tpu.memory_space<vmem>>, vector<432x8xf32>,
    %c0_7 = arith.constant 0 : index
    %c0_8 = arith.constant 0 : index
    %c1 = arith.constant 1 : index
    %c0_9 = arith.constant 0 : index
    %6 = vector.load %arg1[%c0_7, %c0_8, %c1, %c0_9] : memref<1x20x26x4xf32, #tpu.memory_space<vmem>>, vector<1x18x24x4xf32>
    %7 = vector.shape_cast %6 : vector<1x18x24x4xf32> to vector<18x24x4xf32>
    %8 = vector.shape_cast %7 : vector<18x24x4xf32> to vector<432x4xf32>
    %c4 = arith.constant 4 : index
    %c0_10 = arith.constant 0 : index
    %9 = vector.load %arg2[%c4, %c0_10] : memref<36x8xf32, #tpu.memory_space<vmem>>, vector<4x8xf32>
    %cst_11 = arith.constant dense<0.000000e+00> : vector<432x8xf32>
    %10 = tpu.matmul %8, %9, %cst_11 {dimension_numbers = #tpu.dot_dimension_numbers<[1], [0], [0], [1], [0, 0, 1, 1], [], []>} : vector<432x4xf32>, vector<4x8xf32>, vector<432x8xf32> -> vector<432x8xf32>
    %c0_12 = arith.constant 0 : index
    %c0_13 = arith.constant 0 : index
    %11 = vector.load %arg6[%c0_12, %c0_13] : memref<432x8xf32, #tpu.memory_space<vmem>>, vector<432x8xf32>
    %12 = arith.addf %11, %10 : vector<432x8xf32>
    %c0_14 = arith.constant 0 : index
    %c0_15 = arith.constant 0 : index
    %13 = vector.load %arg6[%c0_14, %c0_15] : memref<432x8xf32, #tpu.memory_space<vmem>>, vector<432x8xf32>
    tpu.vector_store %arg6[%c0_14, %c0_15], %12 {strides = array<i32>} : memref<432x8xf32, #tpu.memory_space<vmem>>, vector<432x8xf32>,
    %c0_16 = arith.constant 0 : index
    %c0_17 = arith.constant 0 : index
    %c2 = arith.constant 2 : index
    %c0_18 = arith.constant 0 : index
    %14 = vector.load %arg1[%c0_16, %c0_17, %c2, %c0_18] : memref<1x20x26x4xf32, #tpu.memory_space<vmem>>, vector<1x18x24x4xf32>
    %15 = vector.shape_cast %14 : vector<1x18x24x4xf32> to vector<18x24x4xf32>
    %16 = vector.shape_cast %15 : vector<18x24x4xf32> to vector<432x4xf32>
    %c8 = arith.constant 8 : index
    %c0_19 = arith.constant 0 : index
    %17 = vector.load %arg2[%c8, %c0_19] : memref<36x8xf32, #tpu.memory_space<vmem>>, vector<4x8xf32>
    %cst_20 = arith.constant dense<0.000000e+00> : vector<432x8xf32>
    %18 = tpu.matmul %16, %17, %cst_20 {dimension_numbers = #tpu.dot_dimension_numbers<[1], [0], [0], [1], [0, 0, 1, 1], [], []>} : vector<432x4xf32>, vector<4x8xf32>, vector<432x8xf32> -> vector<432x8xf32>
    %c0_21 = arith.constant 0 : index
    %c0_22 = arith.constant 0 : index
    %19 = vector.load %arg6[%c0_21, %c0_22] : memref<432x8xf32, #tpu.memory_space<vmem>>, vector<432x8xf32>
    %20 = arith.addf %19, %18 : vector<432x8xf32>
    %c0_23 = arith.constant 0 : index
    %c0_24 = arith.constant 0 : index
    %21 = vector.load %arg6[%c0_23, %c0_24] : memref<432x8xf32, #tpu.memory_space<vmem>>, vector<432x8xf32>
    tpu.vector_store %arg6[%c0_23, %c0_24], %20 {strides = array<i32>} : memref<432x8xf32, #tpu.memory_space<vmem>>, vector<432x8xf32>,
    %c0_25 = arith.constant 0 : index
    %c1_26 = arith.constant 1 : index
    %c0_27 = arith.constant 0 : index
    %c0_28 = arith.constant 0 : index
    %22 = vector.load %arg1[%c0_25, %c1_26, %c0_27, %c0_28] : memref<1x20x26x4xf32, #tpu.memory_space<vmem>>, vector<1x18x24x4xf32>
    %23 = vector.shape_cast %22 : vector<1x18x24x4xf32> to vector<18x24x4xf32>
    %24 = vector.shape_cast %23 : vector<18x24x4xf32> to vector<432x4xf32>
    %c12 = arith.constant 12 : index
    %c0_29 = arith.constant 0 : index
    %25 = vector.load %arg2[%c12, %c0_29] : memref<36x8xf32, #tpu.memory_space<vmem>>, vector<4x8xf32>
    %cst_30 = arith.constant dense<0.000000e+00> : vector<432x8xf32>
    %26 = tpu.matmul %24, %25, %cst_30 {dimension_numbers = #tpu.dot_dimension_numbers<[1], [0], [0], [1], [0, 0, 1, 1], [], []>} : vector<432x4xf32>, vector<4x8xf32>, vector<432x8xf32> -> vector<432x8xf32>
    %c0_31 = arith.constant 0 : index
    %c0_32 = arith.constant 0 : index
    %27 = vector.load %arg6[%c0_31, %c0_32] : memref<432x8xf32, #tpu.memory_space<vmem>>, vector<432x8xf32>
    %28 = arith.addf %27, %26 : vector<432x8xf32>
    %c0_33 = arith.constant 0 : index
    %c0_34 = arith.constant 0 : index
    %29 = vector.load %arg6[%c0_33, %c0_34] : memref<432x8xf32, #tpu.memory_space<vmem>>, vector<432x8xf32>
    tpu.vector_store %arg6[%c0_33, %c0_34], %28 {strides = array<i32>} : memref<432x8xf32, #tpu.memory_space<vmem>>, vector<432x8xf32>,
    %c0_35 = arith.constant 0 : index
    %c1_36 = arith.constant 1 : index
    %c1_37 = arith.constant 1 : index
    %c0_38 = arith.constant 0 : index
    %30 = vector.load %arg1[%c0_35, %c1_36, %c1_37, %c0_38] : memref<1x20x26x4xf32, #tpu.memory_space<vmem>>, vector<1x18x24x4xf32>
    %31 = vector.shape_cast %30 : vector<1x18x24x4xf32> to vector<18x24x4xf32>
    %32 = vector.shape_cast %31 : vector<18x24x4xf32> to vector<432x4xf32>
    %c16 = arith.constant 16 : index
    %c0_39 = arith.constant 0 : index
    %33 = vector.load %arg2[%c16, %c0_39] : memref<36x8xf32, #tpu.memory_space<vmem>>, vector<4x8xf32>
    %cst_40 = arith.constant dense<0.000000e+00> : vector<432x8xf32>
    %34 = tpu.matmul %32, %33, %cst_40 {dimension_numbers = #tpu.dot_dimension_numbers<[1], [0], [0], [1], [0, 0, 1, 1], [], []>} : vector<432x4xf32>, vector<4x8xf32>, vector<432x8xf32> -> vector<432x8xf32>
    %c0_41 = arith.constant 0 : index
    %c0_42 = arith.constant 0 : index
    %35 = vector.load %arg6[%c0_41, %c0_42] : memref<432x8xf32, #tpu.memory_space<vmem>>, vector<432x8xf32>
    %36 = arith.addf %35, %34 : vector<432x8xf32>
    %c0_43 = arith.constant 0 : index
    %c0_44 = arith.constant 0 : index
    %37 = vector.load %arg6[%c0_43, %c0_44] : memref<432x8xf32, #tpu.memory_space<vmem>>, vector<432x8xf32>
    tpu.vector_store %arg6[%c0_43, %c0_44], %36 {strides = array<i32>} : memref<432x8xf32, #tpu.memory_space<vmem>>, vector<432x8xf32>,
    %c0_45 = arith.constant 0 : index
    %c1_46 = arith.constant 1 : index
    %c2_47 = arith.constant 2 : index
    %c0_48 = arith.constant 0 : index
    %38 = vector.load %arg1[%c0_45, %c1_46, %c2_47, %c0_48] : memref<1x20x26x4xf32, #tpu.memory_space<vmem>>, vector<1x18x24x4xf32>
    %39 = vector.shape_cast %38 : vector<1x18x24x4xf32> to vector<18x24x4xf32>
    %40 = vector.shape_cast %39 : vector<18x24x4xf32> to vector<432x4xf32>
    %c20 = arith.constant 20 : index
    %c0_49 = arith.constant 0 : index
    %41 = vector.load %arg2[%c20, %c0_49] : memref<36x8xf32, #tpu.memory_space<vmem>>, vector<4x8xf32>
    %cst_50 = arith.constant dense<0.000000e+00> : vector<432x8xf32>
    %42 = tpu.matmul %40, %41, %cst_50 {dimension_numbers = #tpu.dot_dimension_numbers<[1], [0], [0], [1], [0, 0, 1, 1], [], []>} : vector<432x4xf32>, vector<4x8xf32>, vector<432x8xf32> -> vector<432x8xf32>
    %c0_51 = arith.constant 0 : index
    %c0_52 = arith.constant 0 : index
    %43 = vector.load %arg6[%c0_51, %c0_52] : memref<432x8xf32, #tpu.memory_space<vmem>>, vector<432x8xf32>
    %44 = arith.addf %43, %42 : vector<432x8xf32>
    %c0_53 = arith.constant 0 : index
    %c0_54 = arith.constant 0 : index
    %45 = vector.load %arg6[%c0_53, %c0_54] : memref<432x8xf32, #tpu.memory_space<vmem>>, vector<432x8xf32>
    tpu.vector_store %arg6[%c0_53, %c0_54], %44 {strides = array<i32>} : memref<432x8xf32, #tpu.memory_space<vmem>>, vector<432x8xf32>,
    %c0_55 = arith.constant 0 : index
    %c2_56 = arith.constant 2 : index
    %c0_57 = arith.constant 0 : index
    %c0_58 = arith.constant 0 : index
    %46 = vector.load %arg1[%c0_55, %c2_56, %c0_57, %c0_58] : memref<1x20x26x4xf32, #tpu.memory_space<vmem>>, vector<1x18x24x4xf32>
    %47 = vector.shape_cast %46 : vector<1x18x24x4xf32> to vector<18x24x4xf32>
    %48 = vector.shape_cast %47 : vector<18x24x4xf32> to vector<432x4xf32>
    %c24 = arith.constant 24 : index
    %c0_59 = arith.constant 0 : index
    %49 = vector.load %arg2[%c24, %c0_59] : memref<36x8xf32, #tpu.memory_space<vmem>>, vector<4x8xf32>
    %cst_60 = arith.constant dense<0.000000e+00> : vector<432x8xf32>
    %50 = tpu.matmul %48, %49, %cst_60 {dimension_numbers = #tpu.dot_dimension_numbers<[1], [0], [0], [1], [0, 0, 1, 1], [], []>} : vector<432x4xf32>, vector<4x8xf32>, vector<432x8xf32> -> vector<432x8xf32>
    %c0_61 = arith.constant 0 : index
    %c0_62 = arith.constant 0 : index
    %51 = vector.load %arg6[%c0_61, %c0_62] : memref<432x8xf32, #tpu.memory_space<vmem>>, vector<432x8xf32>
    %52 = arith.addf %51, %50 : vector<432x8xf32>
    %c0_63 = arith.constant 0 : index
    %c0_64 = arith.constant 0 : index
    %53 = vector.load %arg6[%c0_63, %c0_64] : memref<432x8xf32, #tpu.memory_space<vmem>>, vector<432x8xf32>
    tpu.vector_store %arg6[%c0_63, %c0_64], %52 {strides = array<i32>} : memref<432x8xf32, #tpu.memory_space<vmem>>, vector<432x8xf32>,
    %c0_65 = arith.constant 0 : index
    %c2_66 = arith.constant 2 : index
    %c1_67 = arith.constant 1 : index
    %c0_68 = arith.constant 0 : index
    %54 = vector.load %arg1[%c0_65, %c2_66, %c1_67, %c0_68] : memref<1x20x26x4xf32, #tpu.memory_space<vmem>>, vector<1x18x24x4xf32>
    %55 = vector.shape_cast %54 : vector<1x18x24x4xf32> to vector<18x24x4xf32>
    %56 = vector.shape_cast %55 : vector<18x24x4xf32> to vector<432x4xf32>
    %c28 = arith.constant 28 : index
    %c0_69 = arith.constant 0 : index
    %57 = vector.load %arg2[%c28, %c0_69] : memref<36x8xf32, #tpu.memory_space<vmem>>, vector<4x8xf32>
    %cst_70 = arith.constant dense<0.000000e+00> : vector<432x8xf32>
    %58 = tpu.matmul %56, %57, %cst_70 {dimension_numbers = #tpu.dot_dimension_numbers<[1], [0], [0], [1], [0, 0, 1, 1], [], []>} : vector<432x4xf32>, vector<4x8xf32>, vector<432x8xf32> -> vector<432x8xf32>
    %c0_71 = arith.constant 0 : index
    %c0_72 = arith.constant 0 : index
    %59 = vector.load %arg6[%c0_71, %c0_72] : memref<432x8xf32, #tpu.memory_space<vmem>>, vector<432x8xf32>
    %60 = arith.addf %59, %58 : vector<432x8xf32>
    %c0_73 = arith.constant 0 : index
    %c0_74 = arith.constant 0 : index
    %61 = vector.load %arg6[%c0_73, %c0_74] : memref<432x8xf32, #tpu.memory_space<vmem>>, vector<432x8xf32>
    tpu.vector_store %arg6[%c0_73, %c0_74], %60 {strides = array<i32>} : memref<432x8xf32, #tpu.memory_space<vmem>>, vector<432x8xf32>,
    %c0_75 = arith.constant 0 : index
    %c2_76 = arith.constant 2 : index
    %c2_77 = arith.constant 2 : index
    %c0_78 = arith.constant 0 : index
    %62 = vector.load %arg1[%c0_75, %c2_76, %c2_77, %c0_78] : memref<1x20x26x4xf32, #tpu.memory_space<vmem>>, vector<1x18x24x4xf32>
    %63 = vector.shape_cast %62 : vector<1x18x24x4xf32> to vector<18x24x4xf32>
    %64 = vector.shape_cast %63 : vector<18x24x4xf32> to vector<432x4xf32>
    %c32 = arith.constant 32 : index
    %c0_79 = arith.constant 0 : index
    %65 = vector.load %arg2[%c32, %c0_79] : memref<36x8xf32, #tpu.memory_space<vmem>>, vector<4x8xf32>
    %cst_80 = arith.constant dense<0.000000e+00> : vector<432x8xf32>
    %66 = tpu.matmul %64, %65, %cst_80 {dimension_numbers = #tpu.dot_dimension_numbers<[1], [0], [0], [1], [0, 0, 1, 1], [], []>} : vector<432x4xf32>, vector<4x8xf32>, vector<432x8xf32> -> vector<432x8xf32>
    %c0_81 = arith.constant 0 : index
    %c0_82 = arith.constant 0 : index
    %67 = vector.load %arg6[%c0_81, %c0_82] : memref<432x8xf32, #tpu.memory_space<vmem>>, vector<432x8xf32>
    %68 = arith.addf %67, %66 : vector<432x8xf32>
    %c0_83 = arith.constant 0 : index
    %c0_84 = arith.constant 0 : index
    %69 = vector.load %arg6[%c0_83, %c0_84] : memref<432x8xf32, #tpu.memory_space<vmem>>, vector<432x8xf32>
    tpu.vector_store %arg6[%c0_83, %c0_84], %68 {strides = array<i32>} : memref<432x8xf32, #tpu.memory_space<vmem>>, vector<432x8xf32>,
    %c0_85 = arith.constant 0 : index
    %c0_86 = arith.constant 0 : index
    %70 = vector.load %arg6[%c0_85, %c0_86] : memref<432x8xf32, #tpu.memory_space<vmem>>, vector<432x8xf32>
    %cst_87 = arith.constant 0.000000e+00 : f32
    %71 = vector.broadcast %cst_87 : f32 to vector<432x8xf32>
    %72 = arith.maximumf %70, %71 : vector<432x8xf32>
    %73 = vector.shape_cast %72 : vector<432x8xf32> to vector<18x24x8xf32>
    %74 = tpu.iota {dimensions = array<i32: 0>} : vector<18x24x8xi32>
    %75 = tpu.iota {dimensions = array<i32: 1>} : vector<18x24x8xi32>
    %c1_i32 = arith.constant 1 : i32
    %76 = vector.broadcast %c1_i32 : i32 to vector<18x24x8xi32>
    %77 = arith.cmpi sge, %74, %76 : vector<18x24x8xi32>
    %c16_i32 = arith.constant 16 : i32
    %78 = vector.broadcast %c16_i32 : i32 to vector<18x24x8xi32>
    %79 = arith.cmpi sle, %74, %78 : vector<18x24x8xi32>
    %80 = arith.andi %77, %79 : vector<18x24x8xi1>
    %c1_i32_88 = arith.constant 1 : i32
    %81 = vector.broadcast %c1_i32_88 : i32 to vector<18x24x8xi32>
    %82 = arith.cmpi sge, %75, %81 : vector<18x24x8xi32>
    %83 = arith.andi %80, %82 : vector<18x24x8xi1>
    %c16_i32_89 = arith.constant 16 : i32
    %84 = vector.broadcast %c16_i32_89 : i32 to vector<18x24x8xi32>
    %85 = arith.cmpi sle, %75, %84 : vector<18x24x8xi32>
    %86 = arith.andi %83, %85 : vector<18x24x8xi1>
    %cst_90 = arith.constant 0.000000e+00 : f32
    %87 = vector.broadcast %cst_90 : f32 to vector<18x24x8xf32>
    %88 = arith.select %86, %73, %87 : vector<18x24x8xi1>, vector<18x24x8xf32>
    %c0_91 = arith.constant 0 : index
    %c0_92 = arith.constant 0 : index
    %c0_93 = arith.constant 0 : index
    %89 = vector.load %arg5[%c0_91, %c0_92, %c0_93] : memref<18x24x8xf32, #tpu.memory_space<vmem>>, vector<18x24x8xf32>
    tpu.vector_store %arg5[%c0_91, %c0_92, %c0_93], %88 {strides = array<i32>} : memref<18x24x8xf32, #tpu.memory_space<vmem>>, vector<18x24x8xf32>,
    %c0_94 = arith.constant 0 : index
    %c0_95 = arith.constant 0 : index
    %c0_96 = arith.constant 0 : index
    %90 = vector.load %arg5[%c0_94, %c0_95, %c0_96] : memref<18x24x8xf32, #tpu.memory_space<vmem>>, vector<16x16x8xf32>
    %91 = vector.shape_cast %90 : vector<16x16x8xf32> to vector<256x8xf32>
    %c0_97 = arith.constant 0 : index
    %c0_98 = arith.constant 0 : index
    %92 = vector.load %arg3[%c0_97, %c0_98] : memref<72x8xf32, #tpu.memory_space<vmem>>, vector<8x8xf32>
    %cst_99 = arith.constant dense<0.000000e+00> : vector<256x8xf32>
    %93 = tpu.matmul %91, %92, %cst_99 {dimension_numbers = #tpu.dot_dimension_numbers<[1], [0], [0], [1], [0, 0, 1, 1], [], []>} : vector<256x8xf32>, vector<8x8xf32>, vector<256x8xf32> -> vector<256x8xf32>
    %c0_100 = arith.constant 0 : index
    %c0_101 = arith.constant 0 : index
    %94 = vector.load %arg6[%c0_100, %c0_101] : memref<432x8xf32, #tpu.memory_space<vmem>>, vector<256x8xf32>
    tpu.vector_store %arg6[%c0_100, %c0_101], %93 {strides = array<i32>} : memref<432x8xf32, #tpu.memory_space<vmem>>, vector<256x8xf32>,
    %c0_102 = arith.constant 0 : index
    %c1_103 = arith.constant 1 : index
    %c0_104 = arith.constant 0 : index
    %95 = vector.load %arg5[%c0_102, %c1_103, %c0_104] : memref<18x24x8xf32, #tpu.memory_space<vmem>>, vector<16x16x8xf32>
    %96 = vector.shape_cast %95 : vector<16x16x8xf32> to vector<256x8xf32>
    %c8_105 = arith.constant 8 : index
    %c0_106 = arith.constant 0 : index
    %97 = vector.load %arg3[%c8_105, %c0_106] : memref<72x8xf32, #tpu.memory_space<vmem>>, vector<8x8xf32>
    %cst_107 = arith.constant dense<0.000000e+00> : vector<256x8xf32>
    %98 = tpu.matmul %96, %97, %cst_107 {dimension_numbers = #tpu.dot_dimension_numbers<[1], [0], [0], [1], [0, 0, 1, 1], [], []>} : vector<256x8xf32>, vector<8x8xf32>, vector<256x8xf32> -> vector<256x8xf32>
    %c0_108 = arith.constant 0 : index
    %c0_109 = arith.constant 0 : index
    %99 = vector.load %arg6[%c0_108, %c0_109] : memref<432x8xf32, #tpu.memory_space<vmem>>, vector<256x8xf32>
    %100 = arith.addf %99, %98 : vector<256x8xf32>
    %c0_110 = arith.constant 0 : index
    %c0_111 = arith.constant 0 : index
    %101 = vector.load %arg6[%c0_110, %c0_111] : memref<432x8xf32, #tpu.memory_space<vmem>>, vector<256x8xf32>
    tpu.vector_store %arg6[%c0_110, %c0_111], %100 {strides = array<i32>} : memref<432x8xf32, #tpu.memory_space<vmem>>, vector<256x8xf32>,
    %c0_112 = arith.constant 0 : index
    %c2_113 = arith.constant 2 : index
    %c0_114 = arith.constant 0 : index
    %102 = vector.load %arg5[%c0_112, %c2_113, %c0_114] : memref<18x24x8xf32, #tpu.memory_space<vmem>>, vector<16x16x8xf32>
    %103 = vector.shape_cast %102 : vector<16x16x8xf32> to vector<256x8xf32>
    %c16_115 = arith.constant 16 : index
    %c0_116 = arith.constant 0 : index
    %104 = vector.load %arg3[%c16_115, %c0_116] : memref<72x8xf32, #tpu.memory_space<vmem>>, vector<8x8xf32>
    %cst_117 = arith.constant dense<0.000000e+00> : vector<256x8xf32>
    %105 = tpu.matmul %103, %104, %cst_117 {dimension_numbers = #tpu.dot_dimension_numbers<[1], [0], [0], [1], [0, 0, 1, 1], [], []>} : vector<256x8xf32>, vector<8x8xf32>, vector<256x8xf32> -> vector<256x8xf32>
    %c0_118 = arith.constant 0 : index
    %c0_119 = arith.constant 0 : index
    %106 = vector.load %arg6[%c0_118, %c0_119] : memref<432x8xf32, #tpu.memory_space<vmem>>, vector<256x8xf32>
    %107 = arith.addf %106, %105 : vector<256x8xf32>
    %c0_120 = arith.constant 0 : index
    %c0_121 = arith.constant 0 : index
    %108 = vector.load %arg6[%c0_120, %c0_121] : memref<432x8xf32, #tpu.memory_space<vmem>>, vector<256x8xf32>
    tpu.vector_store %arg6[%c0_120, %c0_121], %107 {strides = array<i32>} : memref<432x8xf32, #tpu.memory_space<vmem>>, vector<256x8xf32>,
    %c1_122 = arith.constant 1 : index
    %c0_123 = arith.constant 0 : index
    %c0_124 = arith.constant 0 : index
    %109 = vector.load %arg5[%c1_122, %c0_123, %c0_124] : memref<18x24x8xf32, #tpu.memory_space<vmem>>, vector<16x16x8xf32>
    %110 = vector.shape_cast %109 : vector<16x16x8xf32> to vector<256x8xf32>
    %c24_125 = arith.constant 24 : index
    %c0_126 = arith.constant 0 : index
    %111 = vector.load %arg3[%c24_125, %c0_126] : memref<72x8xf32, #tpu.memory_space<vmem>>, vector<8x8xf32>
    %cst_127 = arith.constant dense<0.000000e+00> : vector<256x8xf32>
    %112 = tpu.matmul %110, %111, %cst_127 {dimension_numbers = #tpu.dot_dimension_numbers<[1], [0], [0], [1], [0, 0, 1, 1], [], []>} : vector<256x8xf32>, vector<8x8xf32>, vector<256x8xf32> -> vector<256x8xf32>
    %c0_128 = arith.constant 0 : index
    %c0_129 = arith.constant 0 : index
    %113 = vector.load %arg6[%c0_128, %c0_129] : memref<432x8xf32, #tpu.memory_space<vmem>>, vector<256x8xf32>
    %114 = arith.addf %113, %112 : vector<256x8xf32>
    %c0_130 = arith.constant 0 : index
    %c0_131 = arith.constant 0 : index
    %115 = vector.load %arg6[%c0_130, %c0_131] : memref<432x8xf32, #tpu.memory_space<vmem>>, vector<256x8xf32>
    tpu.vector_store %arg6[%c0_130, %c0_131], %114 {strides = array<i32>} : memref<432x8xf32, #tpu.memory_space<vmem>>, vector<256x8xf32>,
    %c1_132 = arith.constant 1 : index
    %c1_133 = arith.constant 1 : index
    %c0_134 = arith.constant 0 : index
    %116 = vector.load %arg5[%c1_132, %c1_133, %c0_134] : memref<18x24x8xf32, #tpu.memory_space<vmem>>, vector<16x16x8xf32>
    %117 = vector.shape_cast %116 : vector<16x16x8xf32> to vector<256x8xf32>
    %c32_135 = arith.constant 32 : index
    %c0_136 = arith.constant 0 : index
    %118 = vector.load %arg3[%c32_135, %c0_136] : memref<72x8xf32, #tpu.memory_space<vmem>>, vector<8x8xf32>
    %cst_137 = arith.constant dense<0.000000e+00> : vector<256x8xf32>
    %119 = tpu.matmul %117, %118, %cst_137 {dimension_numbers = #tpu.dot_dimension_numbers<[1], [0], [0], [1], [0, 0, 1, 1], [], []>} : vector<256x8xf32>, vector<8x8xf32>, vector<256x8xf32> -> vector<256x8xf32>
    %c0_138 = arith.constant 0 : index
    %c0_139 = arith.constant 0 : index
    %120 = vector.load %arg6[%c0_138, %c0_139] : memref<432x8xf32, #tpu.memory_space<vmem>>, vector<256x8xf32>
    %121 = arith.addf %120, %119 : vector<256x8xf32>
    %c0_140 = arith.constant 0 : index
    %c0_141 = arith.constant 0 : index
    %122 = vector.load %arg6[%c0_140, %c0_141] : memref<432x8xf32, #tpu.memory_space<vmem>>, vector<256x8xf32>
    tpu.vector_store %arg6[%c0_140, %c0_141], %121 {strides = array<i32>} : memref<432x8xf32, #tpu.memory_space<vmem>>, vector<256x8xf32>,
    %c1_142 = arith.constant 1 : index
    %c2_143 = arith.constant 2 : index
    %c0_144 = arith.constant 0 : index
    %123 = vector.load %arg5[%c1_142, %c2_143, %c0_144] : memref<18x24x8xf32, #tpu.memory_space<vmem>>, vector<16x16x8xf32>
    %124 = vector.shape_cast %123 : vector<16x16x8xf32> to vector<256x8xf32>
    %c40 = arith.constant 40 : index
    %c0_145 = arith.constant 0 : index
    %125 = vector.load %arg3[%c40, %c0_145] : memref<72x8xf32, #tpu.memory_space<vmem>>, vector<8x8xf32>
    %cst_146 = arith.constant dense<0.000000e+00> : vector<256x8xf32>
    %126 = tpu.matmul %124, %125, %cst_146 {dimension_numbers = #tpu.dot_dimension_numbers<[1], [0], [0], [1], [0, 0, 1, 1], [], []>} : vector<256x8xf32>, vector<8x8xf32>, vector<256x8xf32> -> vector<256x8xf32>
    %c0_147 = arith.constant 0 : index
    %c0_148 = arith.constant 0 : index
    %127 = vector.load %arg6[%c0_147, %c0_148] : memref<432x8xf32, #tpu.memory_space<vmem>>, vector<256x8xf32>
    %128 = arith.addf %127, %126 : vector<256x8xf32>
    %c0_149 = arith.constant 0 : index
    %c0_150 = arith.constant 0 : index
    %129 = vector.load %arg6[%c0_149, %c0_150] : memref<432x8xf32, #tpu.memory_space<vmem>>, vector<256x8xf32>
    tpu.vector_store %arg6[%c0_149, %c0_150], %128 {strides = array<i32>} : memref<432x8xf32, #tpu.memory_space<vmem>>, vector<256x8xf32>,
    %c2_151 = arith.constant 2 : index
    %c0_152 = arith.constant 0 : index
    %c0_153 = arith.constant 0 : index
    %130 = vector.load %arg5[%c2_151, %c0_152, %c0_153] : memref<18x24x8xf32, #tpu.memory_space<vmem>>, vector<16x16x8xf32>
    %131 = vector.shape_cast %130 : vector<16x16x8xf32> to vector<256x8xf32>
    %c48 = arith.constant 48 : index
    %c0_154 = arith.constant 0 : index
    %132 = vector.load %arg3[%c48, %c0_154] : memref<72x8xf32, #tpu.memory_space<vmem>>, vector<8x8xf32>
    %cst_155 = arith.constant dense<0.000000e+00> : vector<256x8xf32>
    %133 = tpu.matmul %131, %132, %cst_155 {dimension_numbers = #tpu.dot_dimension_numbers<[1], [0], [0], [1], [0, 0, 1, 1], [], []>} : vector<256x8xf32>, vector<8x8xf32>, vector<256x8xf32> -> vector<256x8xf32>
    %c0_156 = arith.constant 0 : index
    %c0_157 = arith.constant 0 : index
    %134 = vector.load %arg6[%c0_156, %c0_157] : memref<432x8xf32, #tpu.memory_space<vmem>>, vector<256x8xf32>
    %135 = arith.addf %134, %133 : vector<256x8xf32>
    %c0_158 = arith.constant 0 : index
    %c0_159 = arith.constant 0 : index
    %136 = vector.load %arg6[%c0_158, %c0_159] : memref<432x8xf32, #tpu.memory_space<vmem>>, vector<256x8xf32>
    tpu.vector_store %arg6[%c0_158, %c0_159], %135 {strides = array<i32>} : memref<432x8xf32, #tpu.memory_space<vmem>>, vector<256x8xf32>,
    %c2_160 = arith.constant 2 : index
    %c1_161 = arith.constant 1 : index
    %c0_162 = arith.constant 0 : index
    %137 = vector.load %arg5[%c2_160, %c1_161, %c0_162] : memref<18x24x8xf32, #tpu.memory_space<vmem>>, vector<16x16x8xf32>
    %138 = vector.shape_cast %137 : vector<16x16x8xf32> to vector<256x8xf32>
    %c56 = arith.constant 56 : index
    %c0_163 = arith.constant 0 : index
    %139 = vector.load %arg3[%c56, %c0_163] : memref<72x8xf32, #tpu.memory_space<vmem>>, vector<8x8xf32>
    %cst_164 = arith.constant dense<0.000000e+00> : vector<256x8xf32>
    %140 = tpu.matmul %138, %139, %cst_164 {dimension_numbers = #tpu.dot_dimension_numbers<[1], [0], [0], [1], [0, 0, 1, 1], [], []>} : vector<256x8xf32>, vector<8x8xf32>, vector<256x8xf32> -> vector<256x8xf32>
    %c0_165 = arith.constant 0 : index
    %c0_166 = arith.constant 0 : index
    %141 = vector.load %arg6[%c0_165, %c0_166] : memref<432x8xf32, #tpu.memory_space<vmem>>, vector<256x8xf32>
    %142 = arith.addf %141, %140 : vector<256x8xf32>
    %c0_167 = arith.constant 0 : index
    %c0_168 = arith.constant 0 : index
    %143 = vector.load %arg6[%c0_167, %c0_168] : memref<432x8xf32, #tpu.memory_space<vmem>>, vector<256x8xf32>
    tpu.vector_store %arg6[%c0_167, %c0_168], %142 {strides = array<i32>} : memref<432x8xf32, #tpu.memory_space<vmem>>, vector<256x8xf32>,
    %c2_169 = arith.constant 2 : index
    %c2_170 = arith.constant 2 : index
    %c0_171 = arith.constant 0 : index
    %144 = vector.load %arg5[%c2_169, %c2_170, %c0_171] : memref<18x24x8xf32, #tpu.memory_space<vmem>>, vector<16x16x8xf32>
    %145 = vector.shape_cast %144 : vector<16x16x8xf32> to vector<256x8xf32>
    %c64 = arith.constant 64 : index
    %c0_172 = arith.constant 0 : index
    %146 = vector.load %arg3[%c64, %c0_172] : memref<72x8xf32, #tpu.memory_space<vmem>>, vector<8x8xf32>
    %cst_173 = arith.constant dense<0.000000e+00> : vector<256x8xf32>
    %147 = tpu.matmul %145, %146, %cst_173 {dimension_numbers = #tpu.dot_dimension_numbers<[1], [0], [0], [1], [0, 0, 1, 1], [], []>} : vector<256x8xf32>, vector<8x8xf32>, vector<256x8xf32> -> vector<256x8xf32>
    %c0_174 = arith.constant 0 : index
    %c0_175 = arith.constant 0 : index
    %148 = vector.load %arg6[%c0_174, %c0_175] : memref<432x8xf32, #tpu.memory_space<vmem>>, vector<256x8xf32>
    %149 = arith.addf %148, %147 : vector<256x8xf32>
    %c0_176 = arith.constant 0 : index
    %c0_177 = arith.constant 0 : index
    %150 = vector.load %arg6[%c0_176, %c0_177] : memref<432x8xf32, #tpu.memory_space<vmem>>, vector<256x8xf32>
    tpu.vector_store %arg6[%c0_176, %c0_177], %149 {strides = array<i32>} : memref<432x8xf32, #tpu.memory_space<vmem>>, vector<256x8xf32>,
    %c0_178 = arith.constant 0 : index
    %c0_179 = arith.constant 0 : index
    %151 = vector.load %arg6[%c0_178, %c0_179] : memref<432x8xf32, #tpu.memory_space<vmem>>, vector<256x8xf32>
    %cst_180 = arith.constant 0.000000e+00 : f32
    %152 = vector.broadcast %cst_180 : f32 to vector<256x8xf32>
    %153 = arith.maximumf %151, %152 : vector<256x8xf32>
    %154 = vector.shape_cast %153 : vector<256x8xf32> to vector<1x16x16x8xf32>
    %c0_181 = arith.constant 0 : index
    %c0_182 = arith.constant 0 : index
    %c0_183 = arith.constant 0 : index
    %c0_184 = arith.constant 0 : index
    %155 = vector.load %arg4[%c0_181, %c0_182, %c0_183, %c0_184] : memref<1x16x16x8xf32, #tpu.memory_space<vmem>>, vector<1x16x16x8xf32>
    tpu.vector_store %arg4[%c0_181, %c0_182, %c0_183, %c0_184], %154 {strides = array<i32>} : memref<1x16x16x8xf32, #tpu.memory_space<vmem>>, vector<1x16x16x8xf32>,
    return
  }
  func.func @transform_0(%arg0: i32) -> (i32, i32, i32, i32) {
    %c0_i32 = arith.constant 0 : i32
    %c0_i32_0 = arith.constant 0 : i32
    %c0_i32_1 = arith.constant 0 : i32
    %c0_i32_2 = arith.constant 0 : i32
    return %arg0, %c0_i32, %c0_i32_0, %c0_i32_1 : i32, i32, i32, i32
  }
  func.func @transform_1(%arg0: i32) -> (i32, i32) {
    %c0_i32 = arith.constant 0 : i32
    %c0_i32_0 = arith.constant 0 : i32
    %c0_i32_1 = arith.constant 0 : i32
    return %c0_i32, %c0_i32_0 : i32, i32
  }
  func.func @transform_2(%arg0: i32) -> (i32, i32) {
    %c0_i32 = arith.constant 0 : i32
    %c0_i32_0 = arith.constant 0 : i32
    %c0_i32_1 = arith.constant 0 : i32
    return %c0_i32, %c0_i32_0 : i32, i32
  }
  func.func @transform_3(%arg0: i32) -> (i32, i32, i32, i32) {
    %c0_i32 = arith.constant 0 : i32
    %c0_i32_0 = arith.constant 0 : i32
    %c0_i32_1 = arith.constant 0 : i32
    %c0_i32_2 = arith.constant 0 : i32
    return %arg0, %c0_i32, %c0_i32_0, %c0_i32_1 : i32, i32, i32, i32
  }
}

</mosaic_0001>

<llo_original>
// kernel: tpu_custom_call.1
$region0: #{tpu_custom_call.1}
  #allocation0 [shape = 'u32[]', space=smem, size = 0x4, offset = 0x4, fixed_abs, tag = 'smem constant byte address 0x4 - core index']
  #allocation1 [shape = 'u32[144,128]{1,0:T(1,128)}', space=vmem, size = 0x12000, scoped, tag = 'internal scratch']
  #allocation2 [shape = 'f32[18,24,8]{2,1,0:T(8,128)}', space=vmem, size = 0x36000, scoped, tag = 'scratch operand']
  #allocation3 [shape = 'f32[432,8]{1,0:T(8,128)}', space=vmem, size = 0x36000, scoped, tag = 'scratch operand']
  %s0 = inlined_call_operand.vmem [shape: f32[2,20,26,4], index: 0, kind: input, shape index: {}]
  %s1 = inlined_call_operand.vmem [shape: f32[36,8], index: 1, kind: input, shape index: {}]
  %s2 = inlined_call_operand.vmem [shape: f32[72,8], index: 2, kind: input, shape index: {}]
  %s3 = inlined_call_operand.vmem [shape: f32[2,16,16,8], index: 3, kind: output, shape index: {}]
  %s4 = sld [smem:[#allocation0]]
  $region45: #{tpu_custom_call.1} parent=0
    _
  %s6 = ssub.s32 1, %s4
  %s7 = scalar_select 0, %s6, %s4
  loop: start=0, step=1, limit=4
  $region2: #{tpu_custom_call.1} parent=0 // loop_pre_header
    _
  $region3: #{tpu_custom_call.1} parent=0 // loop_header
    %s9 = sphi 0, %s13
    %p10 = scmp.ge.s32.totalorder %s9, 4
    %s19 = sphi 0, %s21
    %s22 = sphi 0, %s19
    %s23 = sphi 0, %s22
    %s39 = sphi 0, %s23
    %s43 = sphi 0, %s43
    %s45 = sphi 0, %s43
    %s46 = sphi 0, %s45
    %s60 = sphi 0, %s46
    %s64 = sphi 0, %s64
    %s66 = sphi 0, %s64
    %s67 = sphi 0, %s66
    %s81 = sphi 0, %s67
    %s87 = sphi 0, %s89
    %s90 = sphi 0, %s87
    %s91 = sphi 0, %s90
    %s107 = sphi 0, %s91
  $region4: #{tpu_custom_call.1} parent=0 // loop_header_branch
    %12 = sbr.rel (%p10) target = $region8
  $region5: #{tpu_custom_call.1} parent=0 // loop_body
    %s14 = ssub.s32 %s9, 1
    %s15 = ssub.s32 %s9, 2
    %s16 = sadd.s32 %s9, 1
    %s17 = ssub.s32 %s9, %s16
    %p18 = scmp.eq.s32.totalorder %s17, 0
    %s20 = sadd.s32 %s19, 1
    %s21 = scalar_select %p18, %s19, %s20
    %p24 = pneg %p18
    %p25 = scmp.eq.s32.totalorder %s9, 1
    %p26 = por %p24, %p25
    %p27 = scmp.ne.s32.totalorder %s19, %s22
    %p28 = scmp.eq.s32.totalorder %s9, 0
    %p29 = por %p27, %p28
    %p30 = scmp.ne.s32.totalorder %s19, %s22
    %p31 = scmp.eq.s32.totalorder %s14, 1
    %p32 = por %p30, %p31
    %p33 = scmp.ne.s32.totalorder %s22, %s23
    %p34 = scmp.eq.s32.totalorder %s14, 0
    %p35 = por %p33, %p34
    %p36 = scmp.ne.s32.totalorder %s22, %s23
    %p37 = scmp.eq.s32.totalorder %s15, 1
    %p38 = por %p36, %p37
    %p40 = scmp.ne.s32.totalorder %s23, %s39
    %p41 = scmp.eq.s32.totalorder %s15, 0
    %p42 = por %p40, %p41
    %s44 = sadd.s32 %s43, 1
    %p47 = scmp.eq.s32.totalorder %s9, 1
    %p48 = scmp.ne.s32.totalorder %s43, %s45
    %p49 = scmp.eq.s32.totalorder %s9, 0
    %p50 = por %p48, %p49
    %p51 = scmp.ne.s32.totalorder %s43, %s45
    %p52 = scmp.eq.s32.totalorder %s14, 1
    %p53 = por %p51, %p52
    %p54 = scmp.ne.s32.totalorder %s45, %s46
    %p55 = scmp.eq.s32.totalorder %s14, 0
    %p56 = por %p54, %p55
    %p57 = scmp.ne.s32.totalorder %s45, %s46
    %p58 = scmp.eq.s32.totalorder %s15, 1
    %p59 = por %p57, %p58
    %p61 = scmp.ne.s32.totalorder %s46, %s60
    %p62 = scmp.eq.s32.totalorder %s15, 0
    %p63 = por %p61, %p62
    %s65 = sadd.s32 %s64, 1
    %p68 = scmp.eq.s32.totalorder %s9, 1
    %p69 = scmp.ne.s32.totalorder %s64, %s66
    %p70 = scmp.eq.s32.totalorder %s9, 0
    %p71 = por %p69, %p70
    %p72 = scmp.ne.s32.totalorder %s64, %s66
    %p73 = scmp.eq.s32.totalorder %s14, 1
    %p74 = por %p72, %p73
    %p75 = scmp.ne.s32.totalorder %s66, %s67
    %p76 = scmp.eq.s32.totalorder %s14, 0
    %p77 = por %p75, %p76
    %p78 = scmp.ne.s32.totalorder %s66, %s67
    %p79 = scmp.eq.s32.totalorder %s15, 1
    %p80 = por %p78, %p79
    %p82 = scmp.ne.s32.totalorder %s67, %s81
    %p83 = scmp.eq.s32.totalorder %s15, 0
    %p84 = por %p82, %p83
    %s85 = ssub.s32 %s9, %s16
    %p86 = scmp.eq.s32.totalorder %s85, 0
    %s88 = sadd.s32 %s87, 1
    %s89 = scalar_select %p86, %s87, %s88
    %p92 = pneg %p86
    %p93 = scmp.eq.s32.totalorder %s9, 1
    %p94 = por %p92, %p93
    %p95 = scmp.ne.s32.totalorder %s87, %s90
    %p96 = scmp.eq.s32.totalorder %s9, 0
    %p97 = por %p95, %p96
    %p98 = scmp.ne.s32.totalorder %s87, %s90
    %p99 = scmp.eq.s32.totalorder %s14, 1
    %p100 = por %p98, %p99
    %p101 = scmp.ne.s32.totalorder %s90, %s91
    %p102 = scmp.eq.s32.totalorder %s14, 0
    %p103 = por %p101, %p102
    %p104 = scmp.ne.s32.totalorder %s90, %s91
    %p105 = scmp.eq.s32.totalorder %s15, 1
    %p106 = por %p104, %p105
    %p108 = scmp.ne.s32.totalorder %s91, %s107
    %p109 = scmp.eq.s32.totalorder %s15, 0
    %p110 = por %p108, %p109
    %p111 = scmp.le.s32.totalorder 1, %s9
    %p112 = scmp.lt.s32.totalorder %s9, 3
    %p113 = pnand %p111, %p112
    %p114 = pneg %p113
    // Predicated region
    $region9: #{tpu_custom_call.1} parent=5 // pred_check
      _
    $region10: #{tpu_custom_call.1} parent=5 // pred_check_branch
      %116 = sbr.rel (%p113) target = $region12
    $region11: #{tpu_custom_call.1} parent=5 // pred_region
      %s117 = ssub.s32 %s9, 1
      // Predicated region
      $region13: #{tpu_custom_call.1} parent=11 // pred_check
        %p118 = pneg %p56
      $region14: #{tpu_custom_call.1} parent=11 // pred_check_branch
        %120 = sbr.rel (%p118) target = $region16
      $region15: #{tpu_custom_call.1} parent=11 // pred_region
        _
      $region16: #{tpu_custom_call.1} parent=11 // pred_fallthru
        _
      // Predicated region
      $region17: #{tpu_custom_call.1} parent=11 // pred_check
        %p121 = pneg %p77
      $region18: #{tpu_custom_call.1} parent=11 // pred_check_branch
        %123 = sbr.rel (%p121) target = $region20
      $region19: #{tpu_custom_call.1} parent=11 // pred_region
        _
      $region20: #{tpu_custom_call.1} parent=11 // pred_fallthru
        _
    $region12: #{tpu_custom_call.1} parent=5 // pred_fallthru
      _
    %p124 = scmp.lt.s32.totalorder %s9, 2
    // Predicated region
    $region21: #{tpu_custom_call.1} parent=5 // pred_check
      %p125 = pneg %p124
    $region22: #{tpu_custom_call.1} parent=5 // pred_check_branch
      %127 = sbr.rel (%p125) target = $region24
    $region23: #{tpu_custom_call.1} parent=5 // pred_region
      // Predicated region
      $region25: #{tpu_custom_call.1} parent=23 // pred_check
        %p128 = pneg %p29
      $region26: #{tpu_custom_call.1} parent=23 // pred_check_branch
        %130 = sbr.rel (%p128) target = $region28
      $region27: #{tpu_custom_call.1} parent=23 // pred_region
        %p131 = scmp.lt.s32.totalorder %s9, 1
        %s132 = scalar_select %p131, %s9, 1
        %s133 = smul.addr %s132, 80
        %s134 = smul.addr %s133, 8
        %s135 = scalar_lea.vmem %s0, %s134
      $region28: #{tpu_custom_call.1} parent=23 // pred_fallthru
        _
    $region24: #{tpu_custom_call.1} parent=5 // pred_fallthru
      _
    %p136 = scmp.le.s32.totalorder 1, %s9
    %p137 = scmp.lt.s32.totalorder %s9, 3
    %p138 = pnand %p136, %p137
    %p139 = pneg %p138
    // Predicated region
    $region29: #{tpu_custom_call.1} parent=5 // pred_check
      _
    $region30: #{tpu_custom_call.1} parent=5 // pred_check_branch
      %141 = sbr.rel (%p138) target = $region32
    $region31: #{tpu_custom_call.1} parent=5 // pred_region
      %s142 = ssub.s32 %s9, 1
      %p143 = scmp.lt.s32.totalorder %s14, 1
      %s144 = scalar_select %p143, %s14, 1
      %s145 = smul.addr %s144, 80
      %s146 = smul.addr %s145, 8
      %s147 = scalar_lea.vmem %s0, %s146
      %p148 = pneg %p35
      %p149 = pneg %p32
      %p150 = pneg %p56
      %p151 = pneg %p53
      %p152 = pneg %p77
      %p153 = pneg %p74
      %p154 = pneg %p103
      %p155 = pneg %p100
      %p156 = scmp.lt.s32.totalorder %s14, 1
      %s157 = scalar_select %p156, %s14, 1
      %s158 = smul.addr %s157, 32
      %s159 = smul.addr %s158, 8
      %s160 = scalar_lea.vmem %s3, %s159
      %p161 = scmp.lt.s32.totalorder %s14, 1
      %s162 = scalar_select %p161, %s14, 1
      %s163 = smul.addr %s162, 80
      %s164 = smul.addr %s163, 8
      %s165 = scalar_lea.vmem %s0, %s164
      %p166 = scmp.lt.s32.totalorder %s14, 1
      %s167 = scalar_select %p166, %s14, 1
      %s168 = smul.addr %s167, 32
      %s169 = smul.addr %s168, 8
      %s170 = scalar_lea.vmem %s3, %s169
      %v171 = vld [vmem:[%s165] sm:$0xff]
      %v172 = vld [vmem:[%s165 + $0x8] sm:$0xff]
      %v173 = vld [vmem:[%s165 + $0x10] sm:$0xff]
      %v174 = vld [vmem:[%s165 + $0x20] sm:$0xff]
      %v175 = vld [vmem:[%s165 + $0x28] sm:$0xff]
      %v176 = vld [vmem:[%s165 + $0x30] sm:$0xff]
      %v177 = vld [vmem:[%s165 + $0x40] sm:$0xff]
      %v178 = vld [vmem:[%s165 + $0x48] sm:$0xff]
      %v179 = vld [vmem:[%s165 + $0x50] sm:$0xff]
      %v180 = vld [vmem:[%s165 + $0x60] sm:$0xff]
      %v181 = vld [vmem:[%s165 + $0x68] sm:$0xff]
      %v182 = vld [vmem:[%s165 + $0x70] sm:$0xff]
      %v183 = vld [vmem:[%s165 + $0x80] sm:$0xff]
      %v184 = vld [vmem:[%s165 + $0x88] sm:$0xff]
      %v185 = vld [vmem:[%s165 + $0x90] sm:$0xff]
      %v186 = vld [vmem:[%s165 + $0xa0] sm:$0xff]
      %v187 = vld [vmem:[%s165 + $0xa8] sm:$0xff]
      %v188 = vld [vmem:[%s165 + $0xb0] sm:$0xff]
      %v189 = vld [vmem:[%s165 + $0xc0] sm:$0xff]
      %v190 = vld [vmem:[%s165 + $0xc8] sm:$0xff]
      %v191 = vld [vmem:[%s165 + $0xd0] sm:$0xff]
      %v192 = vld [vmem:[%s165 + $0xe0] sm:$0xff]
      %v193 = vld [vmem:[%s165 + $0xe8] sm:$0xff]
      %v194 = vld [vmem:[%s165 + $0xf0] sm:$0xff]
      %v195 = vld [vmem:[%s165 + $0x100] sm:$0xff]
      %v196 = vld [vmem:[%s165 + $0x108] sm:$0xff]
      %v197 = vld [vmem:[%s165 + $0x110] sm:$0xff]
      %v198 = vld [vmem:[%s165 + $0x120] sm:$0xff]
      %v199 = vld [vmem:[%s165 + $0x128] sm:$0xff]
      %v200 = vld [vmem:[%s165 + $0x130] sm:$0xff]
      %v201 = vld [vmem:[%s165 + $0x140] sm:$0xff]
      %v202 = vld [vmem:[%s165 + $0x148] sm:$0xff]
      %v203 = vld [vmem:[%s165 + $0x150] sm:$0xff]
      %v204 = vld [vmem:[%s165 + $0x160] sm:$0xff]
      %v205 = vld [vmem:[%s165 + $0x168] sm:$0xff]
      %v206 = vld [vmem:[%s165 + $0x170] sm:$0xff]
      %v207 = vld [vmem:[%s165 + $0x180] sm:$0xff]
      %v208 = vld [vmem:[%s165 + $0x188] sm:$0xff]
      %v209 = vld [vmem:[%s165 + $0x190] sm:$0xff]
      %v210 = vld [vmem:[%s165 + $0x1a0] sm:$0xff]
      %v211 = vld [vmem:[%s165 + $0x1a8] sm:$0xff]
      %v212 = vld [vmem:[%s165 + $0x1b0] sm:$0xff]
      %v213 = vld [vmem:[%s165 + $0x1c0] sm:$0xff]
      %v214 = vld [vmem:[%s165 + $0x1c8] sm:$0xff]
      %v215 = vld [vmem:[%s165 + $0x1d0] sm:$0xff]
      %v216 = vld [vmem:[%s165 + $0x1e0] sm:$0xff]
      %v217 = vld [vmem:[%s165 + $0x1e8] sm:$0xff]
      %v218 = vld [vmem:[%s165 + $0x1f0] sm:$0xff]
      %v219 = vld [vmem:[%s165 + $0x200] sm:$0xff]
      %v220 = vld [vmem:[%s165 + $0x208] sm:$0xff]
      %v221 = vld [vmem:[%s165 + $0x210] sm:$0xff]
      %v222 = vld [vmem:[%s165 + $0x220] sm:$0xff]
      %v223 = vld [vmem:[%s165 + $0x228] sm:$0xff]
      %v224 = vld [vmem:[%s165 + $0x230] sm:$0xff]
      %v225 = vld [vmem:[%s1] sm:$0xf]
      %vm226 = vcmask 31744
      %v228 = vsel %vm226, %v171, 0
      %v231 = vsel %vm226, %v172, 0
      %v234 = vsel %vm226, %v173, 0
      %v237 = vsel %vm226, %v174, 0
      %v240 = vsel %vm226, %v175, 0
      %v243 = vsel %vm226, %v176, 0
      %v246 = vsel %vm226, %v177, 0
      %v249 = vsel %vm226, %v178, 0
      %v252 = vsel %vm226, %v179, 0
      %v255 = vsel %vm226, %v180, 0
      %v258 = vsel %vm226, %v181, 0
      %v261 = vsel %vm226, %v182, 0
      %v264 = vsel %vm226, %v183, 0
      %v267 = vsel %vm226, %v184, 0
      %v270 = vsel %vm226, %v185, 0
      %v273 = vsel %vm226, %v186, 0
      %v276 = vsel %vm226, %v187, 0
      %v279 = vsel %vm226, %v188, 0
      %v282 = vsel %vm226, %v189, 0
      %v285 = vsel %vm226, %v190, 0
      %v288 = vsel %vm226, %v191, 0
      %v291 = vsel %vm226, %v192, 0
      %v294 = vsel %vm226, %v193, 0
      %v297 = vsel %vm226, %v194, 0
      %v300 = vsel %vm226, %v195, 0
      %v303 = vsel %vm226, %v196, 0
      %v306 = vsel %vm226, %v197, 0
      %v309 = vsel %vm226, %v198, 0
      %v312 = vsel %vm226, %v199, 0
      %v315 = vsel %vm226, %v200, 0
      %v318 = vsel %vm226, %v201, 0
      %v321 = vsel %vm226, %v202, 0
      %v324 = vsel %vm226, %v203, 0
      %v327 = vsel %vm226, %v204, 0
      %v330 = vsel %vm226, %v205, 0
      %v333 = vsel %vm226, %v206, 0
      %v336 = vsel %vm226, %v207, 0
      %v339 = vsel %vm226, %v208, 0
      %v342 = vsel %vm226, %v209, 0
      %v345 = vsel %vm226, %v210, 0
      %v348 = vsel %vm226, %v211, 0
      %v351 = vsel %vm226, %v212, 0
      %v354 = vsel %vm226, %v213, 0
      %v357 = vsel %vm226, %v214, 0
      %v360 = vsel %vm226, %v215, 0
      %v363 = vsel %vm226, %v216, 0
      %v366 = vsel %vm226, %v217, 0
      %v369 = vsel %vm226, %v218, 0
      %v372 = vsel %vm226, %v219, 0
      %v375 = vsel %vm226, %v220, 0
      %v378 = vsel %vm226, %v221, 0
      %v381 = vsel %vm226, %v222, 0
      %v384 = vsel %vm226, %v223, 0
      %v387 = vsel %vm226, %v224, 0
      %vm389 = vcmask 1043456
      %v391 = vsel %vm389, %v225, 0
      %393 = vmatprep.subr.mxu0 0.0
      %394 = vmatpush1.msra.mxu0 %v391
      %395 = vmatprep.subr.mxu0 0.0
      %396 = vmatpush1.msra.mxu0 0.0
      %397 = vmatprep.subr.mxu0 0.0
      %398 = vmatpush1.msra.mxu0 0.0
      %399 = vmatprep.subr.mxu0 0.0
      %400 = vmatpush1.msra.mxu0 0.0
      %401 = vmatprep.subr.mxu0 0.0
      %402 = vmatpush1.msra.mxu0 0.0
      %403 = vmatprep.subr.mxu0 0.0
      %404 = vmatpush1.msra.mxu0 0.0
      %405 = vmatprep.subr.mxu0 0.0
      %406 = vmatpush1.msra.mxu0 0.0
      %407 = vmatprep.subr.mxu0 0.0
      %408 = vmatpush1.msra.mxu0 0.0
      %409 = vmatprep.subr.mxu0 0.0
      %410 = vmatpush1.msra.mxu0 0.0
      %411 = vmatprep.subr.mxu0 0.0
      %412 = vmatpush1.msra.mxu0 0.0
      %413 = vmatprep.subr.mxu0 0.0
      %414 = vmatpush1.msra.mxu0 0.0
      %415 = vmatprep.subr.mxu0 0.0
      %416 = vmatpush1.msra.mxu0 0.0
      %417 = vmatprep.subr.mxu0 0.0
      %418 = vmatpush1.msra.mxu0 0.0
      %419 = vmatprep.subr.mxu0 0.0
      %420 = vmatpush1.msra.mxu0 0.0
      %421 = vmatprep.subr.mxu0 0.0
      %422 = vmatpush1.msra.mxu0 0.0
      %423 = vmatprep.subr.mxu0 0.0
      %424 = vmatpush1.msra.mxu0 0.0
      %425 = vmatprep.subr.mxu0 0.0
      %426 = vmatpush1.msra.mxu0 0.0
      %427 = vmatprep.subr.mxu0 0.0
      %428 = vmatpush1.msra.mxu0 0.0
      %429 = vmatprep.subr.mxu0 0.0
      %430 = vmatpush1.msra.mxu0 0.0
      %431 = vmatprep.subr.mxu0 0.0
      %432 = vmatpush1.msra.mxu0 0.0
      %433 = vmatprep.subr.mxu0 0.0
      %434 = vmatpush1.msra.mxu0 0.0
      %435 = vmatprep.subr.mxu0 0.0
      %436 = vmatpush1.msra.mxu0 0.0
      %437 = vmatprep.subr.mxu0 0.0
      %438 = vmatpush1.msra.mxu0 0.0
      %439 = vmatprep.subr.mxu0 0.0
      %440 = vmatpush1.msra.mxu0 0.0
      %441 = vmatprep.subr.mxu0 0.0
      %442 = vmatpush1.msra.mxu0 0.0
      %443 = vmatprep.subr.mxu0 0.0
      %444 = vmatpush1.msra.mxu0 0.0
      %445 = vmatprep.subr.mxu0 0.0
      %446 = vmatpush1.msra.mxu0 0.0
      %447 = vmatprep.subr.mxu0 0.0
      %448 = vmatpush1.msra.mxu0 0.0
      %449 = vmatprep.subr.mxu0 0.0
      %450 = vmatpush1.msra.mxu0 0.0
      %451 = vmatprep.subr.mxu0 0.0
      %452 = vmatpush1.msra.mxu0 0.0
      %453 = vmatprep.subr.mxu0 0.0
      %454 = vmatpush1.msra.mxu0 0.0
      %455 = vmatprep.subr.mxu0 0.0
      %456 = vmatpush1.msra.mxu0 0.0
      %457 = vmatprep.mubr.f32.mxu0 0.0
      %458 = vmatmul.mubr.f32.gmra.mrb[0].mxu0 %v228
      %v459 = vpop.f32.mrb[0].mxu0
      %v460 = vadd.f32 0.0, %v459
      %v461 = vpop.f32.mrb[0].mxu0
      %462 = vmatprep.mubr.f32.mxu0 0.0
      %463 = vmatmul.mubr.f32.gmra.mrb[0].mxu0 %v231
      %v464 = vpop.f32.mrb[0].mxu0
      %v465 = vadd.f32 0.0, %v464
      %v466 = vpop.f32.mrb[0].mxu0
      %467 = vmatprep.mubr.f32.mxu0 0.0
      %468 = vmatmul.mubr.f32.gmra.mrb[0].mxu0 %v234
      %v469 = vpop.f32.mrb[0].mxu0
      %v470 = vadd.f32 0.0, %v469
      %v471 = vpop.f32.mrb[0].mxu0
      %472 = vmatprep.mubr.f32.mxu0 0.0
      %473 = vmatmul.mubr.f32.gmra.mrb[0].mxu0 %v237
      %v474 = vpop.f32.mrb[0].mxu0
      %v475 = vadd.f32 0.0, %v474
      %v476 = vpop.f32.mrb[0].mxu0
      %477 = vmatprep.mubr.f32.mxu0 0.0
      %478 = vmatmul.mubr.f32.gmra.mrb[0].mxu0 %v240
      %v479 = vpop.f32.mrb[0].mxu0
      %v480 = vadd.f32 0.0, %v479
      %v481 = vpop.f32.mrb[0].mxu0
      %482 = vmatprep.mubr.f32.mxu0 0.0
      %483 = vmatmul.mubr.f32.gmra.mrb[0].mxu0 %v243
      %v484 = vpop.f32.mrb[0].mxu0
      %v485 = vadd.f32 0.0, %v484
      %v486 = vpop.f32.mrb[0].mxu0
      %487 = vmatprep.mubr.f32.mxu0 0.0
      %488 = vmatmul.mubr.f32.gmra.mrb[0].mxu0 %v246
      %v489 = vpop.f32.mrb[0].mxu0
      %v490 = vadd.f32 0.0, %v489
      %v491 = vpop.f32.mrb[0].mxu0
      %492 = vmatprep.mubr.f32.mxu0 0.0
      %493 = vmatmul.mubr.f32.gmra.mrb[0].mxu0 %v249
      %v494 = vpop.f32.mrb[0].mxu0
      %v495 = vadd.f32 0.0, %v494
      %v496 = vpop.f32.mrb[0].mxu0
      %497 = vmatprep.mubr.f32.mxu0 0.0
      %498 = vmatmul.mubr.f32.gmra.mrb[0].mxu0 %v252
      %v499 = vpop.f32.mrb[0].mxu0
      %v500 = vadd.f32 0.0, %v499
      %v501 = vpop.f32.mrb[0].mxu0
      %502 = vmatprep.mubr.f32.mxu0 0.0
      %503 = vmatmul.mubr.f32.gmra.mrb[0].mxu0 %v255
      %v504 = vpop.f32.mrb[0].mxu0
      %v505 = vadd.f32 0.0, %v504
      %v506 = vpop.f32.mrb[0].mxu0
      %507 = vmatprep.mubr.f32.mxu0 0.0
      %508 = vmatmul.mubr.f32.gmra.mrb[0].mxu0 %v258
      %v509 = vpop.f32.mrb[0].mxu0
      %v510 = vadd.f32 0.0, %v509
      %v511 = vpop.f32.mrb[0].mxu0
      %512 = vmatprep.mubr.f32.mxu0 0.0
      %513 = vmatmul.mubr.f32.gmra.mrb[0].mxu0 %v261
      %v514 = vpop.f32.mrb[0].mxu0
      %v515 = vadd.f32 0.0, %v514
      %v516 = vpop.f32.mrb[0].mxu0
      %517 = vmatprep.mubr.f32.mxu0 0.0
      %518 = vmatmul.mubr.f32.gmra.mrb[0].mxu0 %v264
      %v519 = vpop.f32.mrb[0].mxu0
      %v520 = vadd.f32 0.0, %v519
      %v521 = vpop.f32.mrb[0].mxu0
      %522 = vmatprep.mubr.f32.mxu0 0.0
      %523 = vmatmul.mubr.f32.gmra.mrb[0].mxu0 %v267
      %v524 = vpop.f32.mrb[0].mxu0
      %v525 = vadd.f32 0.0, %v524
      %v526 = vpop.f32.mrb[0].mxu0
      %527 = vmatprep.mubr.f32.mxu0 0.0
      %528 = vmatmul.mubr.f32.gmra.mrb[0].mxu0 %v270
      %v529 = vpop.f32.mrb[0].mxu0
      %v530 = vadd.f32 0.0, %v529
      %v531 = vpop.f32.mrb[0].mxu0
      %532 = vmatprep.mubr.f32.mxu0 0.0
      %533 = vmatmul.mubr.f32.gmra.mrb[0].mxu0 %v273
      %v534 = vpop.f32.mrb[0].mxu0
      %v535 = vadd.f32 0.0, %v534
      %v536 = vpop.f32.mrb[0].mxu0
      %537 = vmatprep.mubr.f32.mxu0 0.0
      %538 = vmatmul.mubr.f32.gmra.mrb[0].mxu0 %v276
      %v539 = vpop.f32.mrb[0].mxu0
      %v540 = vadd.f32 0.0, %v539
      %v541 = vpop.f32.mrb[0].mxu0
      %542 = vmatprep.mubr.f32.mxu0 0.0
      %543 = vmatmul.mubr.f32.gmra.mrb[0].mxu0 %v279
      %v544 = vpop.f32.mrb[0].mxu0
      %v545 = vadd.f32 0.0, %v544
      %v546 = vpop.f32.mrb[0].mxu0
      %547 = vmatprep.mubr.f32.mxu0 0.0
      %548 = vmatmul.mubr.f32.gmra.mrb[0].mxu0 %v282
      %v549 = vpop.f32.mrb[0].mxu0
      %v550 = vadd.f32 0.0, %v549
      %v551 = vpop.f32.mrb[0].mxu0
      %552 = vmatprep.mubr.f32.mxu0 0.0
      %553 = vmatmul.mubr.f32.gmra.mrb[0].mxu0 %v285
      %v554 = vpop.f32.mrb[0].mxu0
      %v555 = vadd.f32 0.0, %v554
      %v556 = vpop.f32.mrb[0].mxu0
      %557 = vmatprep.mubr.f32.mxu0 0.0
      %558 = vmatmul.mubr.f32.gmra.mrb[0].mxu0 %v288
      %v559 = vpop.f32.mrb[0].mxu0
      %v560 = vadd.f32 0.0, %v559
      %v561 = vpop.f32.mrb[0].mxu0
      %562 = vmatprep.mubr.f32.mxu0 0.0
      %563 = vmatmul.mubr.f32.gmra.mrb[0].mxu0 %v291
      %v564 = vpop.f32.mrb[0].mxu0
      %v565 = vadd.f32 0.0, %v564
      %v566 = vpop.f32.mrb[0].mxu0
      %567 = vmatprep.mubr.f32.mxu0 0.0
      %568 = vmatmul.mubr.f32.gmra.mrb[0].mxu0 %v294
      %v569 = vpop.f32.mrb[0].mxu0
      %v570 = vadd.f32 0.0, %v569
      %v571 = vpop.f32.mrb[0].mxu0
      %572 = vmatprep.mubr.f32.mxu0 0.0
      %573 = vmatmul.mubr.f32.gmra.mrb[0].mxu0 %v297
      %v574 = vpop.f32.mrb[0].mxu0
      %v575 = vadd.f32 0.0, %v574
      %v576 = vpop.f32.mrb[0].mxu0
      %577 = vmatprep.mubr.f32.mxu0 0.0
      %578 = vmatmul.mubr.f32.gmra.mrb[0].mxu0 %v300
      %v579 = vpop.f32.mrb[0].mxu0
      %v580 = vadd.f32 0.0, %v579
      %v581 = vpop.f32.mrb[0].mxu0
      %582 = vmatprep.mubr.f32.mxu0 0.0
      %583 = vmatmul.mubr.f32.gmra.mrb[0].mxu0 %v303
      %v584 = vpop.f32.mrb[0].mxu0
      %v585 = vadd.f32 0.0, %v584
      %v586 = vpop.f32.mrb[0].mxu0
      %587 = vmatprep.mubr.f32.mxu0 0.0
      %588 = vmatmul.mubr.f32.gmra.mrb[0].mxu0 %v306
      %v589 = vpop.f32.mrb[0].mxu0
      %v590 = vadd.f32 0.0, %v589
      %v591 = vpop.f32.mrb[0].mxu0
      %592 = vmatprep.mubr.f32.mxu0 0.0
      %593 = vmatmul.mubr.f32.gmra.mrb[0].mxu0 %v309
      %v594 = vpop.f32.mrb[0].mxu0
      %v595 = vadd.f32 0.0, %v594
      %v596 = vpop.f32.mrb[0].mxu0
      %597 = vmatprep.mubr.f32.mxu0 0.0
      %598 = vmatmul.mubr.f32.gmra.mrb[0].mxu0 %v312
      %v599 = vpop.f32.mrb[0].mxu0
      %v600 = vadd.f32 0.0, %v599
      %v601 = vpop.f32.mrb[0].mxu0
      %602 = vmatprep.mubr.f32.mxu0 0.0
      %603 = vmatmul.mubr.f32.gmra.mrb[0].mxu0 %v315
      %v604 = vpop.f32.mrb[0].mxu0
      %v605 = vadd.f32 0.0, %v604
      %v606 = vpop.f32.mrb[0].mxu0
      %607 = vmatprep.mubr.f32.mxu0 0.0
      %608 = vmatmul.mubr.f32.gmra.mrb[0].mxu0 %v318
      %v609 = vpop.f32.mrb[0].mxu0
      %v610 = vadd.f32 0.0, %v609
      %v611 = vpop.f32.mrb[0].mxu0
      %612 = vmatprep.mubr.f32.mxu0 0.0
      %613 = vmatmul.mubr.f32.gmra.mrb[0].mxu0 %v321
      %v614 = vpop.f32.mrb[0].mxu0
      %v615 = vadd.f32 0.0, %v614
      %v616 = vpop.f32.mrb[0].mxu0
      %617 = vmatprep.mubr.f32.mxu0 0.0
      %618 = vmatmul.mubr.f32.gmra.mrb[0].mxu0 %v324
      %v619 = vpop.f32.mrb[0].mxu0
      %v620 = vadd.f32 0.0, %v619
      %v621 = vpop.f32.mrb[0].mxu0
      %622 = vmatprep.mubr.f32.mxu0 0.0
      %623 = vmatmul.mubr.f32.gmra.mrb[0].mxu0 %v327
      %v624 = vpop.f32.mrb[0].mxu0
      %v625 = vadd.f32 0.0, %v624
      %v626 = vpop.f32.mrb[0].mxu0
      %627 = vmatprep.mubr.f32.mxu0 0.0
      %628 = vmatmul.mubr.f32.gmra.mrb[0].mxu0 %v330
      %v629 = vpop.f32.mrb[0].mxu0
      %v630 = vadd.f32 0.0, %v629
      %v631 = vpop.f32.mrb[0].mxu0
      %632 = vmatprep.mubr.f32.mxu0 0.0
      %633 = vmatmul.mubr.f32.gmra.mrb[0].mxu0 %v333
      %v634 = vpop.f32.mrb[0].mxu0
      %v635 = vadd.f32 0.0, %v634
      %v636 = vpop.f32.mrb[0].mxu0
      %637 = vmatprep.mubr.f32.mxu0 0.0
      %638 = vmatmul.mubr.f32.gmra.mrb[0].mxu0 %v336
      %v639 = vpop.f32.mrb[0].mxu0
      %v640 = vadd.f32 0.0, %v639
      %v641 = vpop.f32.mrb[0].mxu0
      %642 = vmatprep.mubr.f32.mxu0 0.0
      %643 = vmatmul.mubr.f32.gmra.mrb[0].mxu0 %v339
      %v644 = vpop.f32.mrb[0].mxu0
      %v645 = vadd.f32 0.0, %v644
      %v646 = vpop.f32.mrb[0].mxu0
      %647 = vmatprep.mubr.f32.mxu0 0.0
      %648 = vmatmul.mubr.f32.gmra.mrb[0].mxu0 %v342
      %v649 = vpop.f32.mrb[0].mxu0
      %v650 = vadd.f32 0.0, %v649
      %v651 = vpop.f32.mrb[0].mxu0
      %652 = vmatprep.mubr.f32.mxu0 0.0
      %653 = vmatmul.mubr.f32.gmra.mrb[0].mxu0 %v345
      %v654 = vpop.f32.mrb[0].mxu0
      %v655 = vadd.f32 0.0, %v654
      %v656 = vpop.f32.mrb[0].mxu0
      %657 = vmatprep.mubr.f32.mxu0 0.0
      %658 = vmatmul.mubr.f32.gmra.mrb[0].mxu0 %v348
      %v659 = vpop.f32.mrb[0].mxu0
      %v660 = vadd.f32 0.0, %v659
      %v661 = vpop.f32.mrb[0].mxu0
      %662 = vmatprep.mubr.f32.mxu0 0.0
      %663 = vmatmul.mubr.f32.gmra.mrb[0].mxu0 %v351
      %v664 = vpop.f32.mrb[0].mxu0
      %v665 = vadd.f32 0.0, %v664
      %v666 = vpop.f32.mrb[0].mxu0
      %667 = vmatprep.mubr.f32.mxu0 0.0
      %668 = vmatmul.mubr.f32.gmra.mrb[0].mxu0 %v354
      %v669 = vpop.f32.mrb[0].mxu0
      %v670 = vadd.f32 0.0, %v669
      %v671 = vpop.f32.mrb[0].mxu0
      %672 = vmatprep.mubr.f32.mxu0 0.0
      %673 = vmatmul.mubr.f32.gmra.mrb[0].mxu0 %v357
      %v674 = vpop.f32.mrb[0].mxu0
      %v675 = vadd.f32 0.0, %v674
      %v676 = vpop.f32.mrb[0].mxu0
      %677 = vmatprep.mubr.f32.mxu0 0.0
      %678 = vmatmul.mubr.f32.gmra.mrb[0].mxu0 %v360
      %v679 = vpop.f32.mrb[0].mxu0
      %v680 = vadd.f32 0.0, %v679
      %v681 = vpop.f32.mrb[0].mxu0
      %682 = vmatprep.mubr.f32.mxu0 0.0
      %683 = vmatmul.mubr.f32.gmra.mrb[0].mxu0 %v363
      %v684 = vpop.f32.mrb[0].mxu0
      %v685 = vadd.f32 0.0, %v684
      %v686 = vpop.f32.mrb[0].mxu0
      %687 = vmatprep.mubr.f32.mxu0 0.0
      %688 = vmatmul.mubr.f32.gmra.mrb[0].mxu0 %v366
      %v689 = vpop.f32.mrb[0].mxu0
      %v690 = vadd.f32 0.0, %v689
      %v691 = vpop.f32.mrb[0].mxu0
      %692 = vmatprep.mubr.f32.mxu0 0.0
      %693 = vmatmul.mubr.f32.gmra.mrb[0].mxu0 %v369
      %v694 = vpop.f32.mrb[0].mxu0
      %v695 = vadd.f32 0.0, %v694
      %v696 = vpop.f32.mrb[0].mxu0
      %697 = vmatprep.mubr.f32.mxu0 0.0
      %698 = vmatmul.mubr.f32.gmra.mrb[0].mxu0 %v372
      %v699 = vpop.f32.mrb[0].mxu0
      %v700 = vadd.f32 0.0, %v699
      %v701 = vpop.f32.mrb[0].mxu0
      %702 = vmatprep.mubr.f32.mxu0 0.0
      %703 = vmatmul.mubr.f32.gmra.mrb[0].mxu0 %v375
      %v704 = vpop.f32.mrb[0].mxu0
      %v705 = vadd.f32 0.0, %v704
      %v706 = vpop.f32.mrb[0].mxu0
      %707 = vmatprep.mubr.f32.mxu0 0.0
      %708 = vmatmul.mubr.f32.gmra.mrb[0].mxu0 %v378
      %v709 = vpop.f32.mrb[0].mxu0
      %v710 = vadd.f32 0.0, %v709
      %v711 = vpop.f32.mrb[0].mxu0
      %712 = vmatprep.mubr.f32.mxu0 0.0
      %713 = vmatmul.mubr.f32.gmra.mrb[0].mxu0 %v381
      %v714 = vpop.f32.mrb[0].mxu0
      %v715 = vadd.f32 0.0, %v714
      %v716 = vpop.f32.mrb[0].mxu0
      %717 = vmatprep.mubr.f32.mxu0 0.0
      %718 = vmatmul.mubr.f32.gmra.mrb[0].mxu0 %v384
      %v719 = vpop.f32.mrb[0].mxu0
      %v720 = vadd.f32 0.0, %v719
      %v721 = vpop.f32.mrb[0].mxu0
      %722 = vmatprep.mubr.f32.mxu0 0.0
      %723 = vmatmul.mubr.f32.gmra.mrb[0].mxu0 %v387
      %v724 = vpop.f32.mrb[0].mxu0
      %v725 = vadd.f32 0.0, %v724
      %v726 = vpop.f32.mrb[0].mxu0
      %727 = vdwg.mxu0
      %vm728 = vcmask 64512
      %729 = vst.msk [vmem:[#allocation3] sm:$0xff] %vm728, %v460
      %730 = vst.msk [vmem:[#allocation3 + $0x8] sm:$0xff] %vm728, %v465
      %731 = vst.msk [vmem:[#allocation3 + $0x10] sm:$0xff] %vm728, %v470
      %732 = vst.msk [vmem:[#allocation3 + $0x18] sm:$0xff] %vm728, %v475
      %733 = vst.msk [vmem:[#allocation3 + $0x20] sm:$0xff] %vm728, %v480
      %734 = vst.msk [vmem:[#allocation3 + $0x28] sm:$0xff] %vm728, %v485
      %735 = vst.msk [vmem:[#allocation3 + $0x30] sm:$0xff] %vm728, %v490
      %736 = vst.msk [vmem:[#allocation3 + $0x38] sm:$0xff] %vm728, %v495
      %737 = vst.msk [vmem:[#allocation3 + $0x40] sm:$0xff] %vm728, %v500
      %738 = vst.msk [vmem:[#allocation3 + $0x48] sm:$0xff] %vm728, %v505
      %739 = vst.msk [vmem:[#allocation3 + $0x50] sm:$0xff] %vm728, %v510
      %740 = vst.msk [vmem:[#allocation3 + $0x58] sm:$0xff] %vm728, %v515
      %741 = vst.msk [vmem:[#allocation3 + $0x60] sm:$0xff] %vm728, %v520
      %742 = vst.msk [vmem:[#allocation3 + $0x68] sm:$0xff] %vm728, %v525
      %743 = vst.msk [vmem:[#allocation3 + $0x70] sm:$0xff] %vm728, %v530
      %744 = vst.msk [vmem:[#allocation3 + $0x78] sm:$0xff] %vm728, %v535
      %745 = vst.msk [vmem:[#allocation3 + $0x80] sm:$0xff] %vm728, %v540
      %746 = vst.msk [vmem:[#allocation3 + $0x88] sm:$0xff] %vm728, %v545
      %747 = vst.msk [vmem:[#allocation3 + $0x90] sm:$0xff] %vm728, %v550
      %748 = vst.msk [vmem:[#allocation3 + $0x98] sm:$0xff] %vm728, %v555
      %749 = vst.msk [vmem:[#allocation3 + $0xa0] sm:$0xff] %vm728, %v560
      %750 = vst.msk [vmem:[#allocation3 + $0xa8] sm:$0xff] %vm728, %v565
      %751 = vst.msk [vmem:[#allocation3 + $0xb0] sm:$0xff] %vm728, %v570
      %752 = vst.msk [vmem:[#allocation3 + $0xb8] sm:$0xff] %vm728, %v575
      %753 = vst.msk [vmem:[#allocation3 + $0xc0] sm:$0xff] %vm728, %v580
      %754 = vst.msk [vmem:[#allocation3 + $0xc8] sm:$0xff] %vm728, %v585
      %755 = vst.msk [vmem:[#allocation3 + $0xd0] sm:$0xff] %vm728, %v590
      %756 = vst.msk [vmem:[#allocation3 + $0xd8] sm:$0xff] %vm728, %v595
      %757 = vst.msk [vmem:[#allocation3 + $0xe0] sm:$0xff] %vm728, %v600
      %758 = vst.msk [vmem:[#allocation3 + $0xe8] sm:$0xff] %vm728, %v605
      %759 = vst.msk [vmem:[#allocation3 + $0xf0] sm:$0xff] %vm728, %v610
      %760 = vst.msk [vmem:[#allocation3 + $0xf8] sm:$0xff] %vm728, %v615
      %761 = vst.msk [vmem:[#allocation3 + $0x100] sm:$0xff] %vm728, %v620
      %762 = vst.msk [vmem:[#allocation3 + $0x108] sm:$0xff] %vm728, %v625
      %763 = vst.msk [vmem:[#allocation3 + $0x110] sm:$0xff] %vm728, %v630
      %764 = vst.msk [vmem:[#allocation3 + $0x118] sm:$0xff] %vm728, %v635
      %765 = vst.msk [vmem:[#allocation3 + $0x120] sm:$0xff] %vm728, %v640
      %766 = vst.msk [vmem:[#allocation3 + $0x128] sm:$0xff] %vm728, %v645
      %767 = vst.msk [vmem:[#allocation3 + $0x130] sm:$0xff] %vm728, %v650
      %768 = vst.msk [vmem:[#allocation3 + $0x138] sm:$0xff] %vm728, %v655
      %769 = vst.msk [vmem:[#allocation3 + $0x140] sm:$0xff] %vm728, %v660
      %770 = vst.msk [vmem:[#allocation3 + $0x148] sm:$0xff] %vm728, %v665
      %771 = vst.msk [vmem:[#allocation3 + $0x150] sm:$0xff] %vm728, %v670
      %772 = vst.msk [vmem:[#allocation3 + $0x158] sm:$0xff] %vm728, %v675
      %773 = vst.msk [vmem:[#allocation3 + $0x160] sm:$0xff] %vm728, %v680
      %774 = vst.msk [vmem:[#allocation3 + $0x168] sm:$0xff] %vm728, %v685
      %775 = vst.msk [vmem:[#allocation3 + $0x170] sm:$0xff] %vm728, %v690
      %776 = vst.msk [vmem:[#allocation3 + $0x178] sm:$0xff] %vm728, %v695
      %777 = vst.msk [vmem:[#allocation3 + $0x180] sm:$0xff] %vm728, %v700
      %778 = vst.msk [vmem:[#allocation3 + $0x188] sm:$0xff] %vm728, %v705
      %779 = vst.msk [vmem:[#allocation3 + $0x190] sm:$0xff] %vm728, %v710
      %780 = vst.msk [vmem:[#allocation3 + $0x198] sm:$0xff] %vm728, %v715
      %781 = vst.msk [vmem:[#allocation3 + $0x1a0] sm:$0xff] %vm728, %v720
      %782 = vst.msk [vmem:[#allocation3 + $0x1a8] sm:$0xff] %vm728, %v725
      %v783 = vld [vmem:[%s165 + $0x1] sm:$0xff]
      %v784 = vld [vmem:[%s165 + $0x9] sm:$0xff]
      %v785 = vld [vmem:[%s165 + $0x11] sm:$0xff]
      %v786 = vld [vmem:[%s165 + $0x21] sm:$0xff]
      %v787 = vld [vmem:[%s165 + $0x29] sm:$0xff]
      %v788 = vld [vmem:[%s165 + $0x31] sm:$0xff]
      %v789 = vld [vmem:[%s165 + $0x41] sm:$0xff]
      %v790 = vld [vmem:[%s165 + $0x49] sm:$0xff]
      %v791 = vld [vmem:[%s165 + $0x51] sm:$0xff]
      %v792 = vld [vmem:[%s165 + $0x61] sm:$0xff]
      %v793 = vld [vmem:[%s165 + $0x69] sm:$0xff]
      %v794 = vld [vmem:[%s165 + $0x71] sm:$0xff]
      %v795 = vld [vmem:[%s165 + $0x81] sm:$0xff]
      %v796 = vld [vmem:[%s165 + $0x89] sm:$0xff]
      %v797 = vld [vmem:[%s165 + $0x91] sm:$0xff]
      %v798 = vld [vmem:[%s165 + $0xa1] sm:$0xff]
      %v799 = vld [vmem:[%s165 + $0xa9] sm:$0xff]
      %v800 = vld [vmem:[%s165 + $0xb1] sm:$0xff]
      %v801 = vld [vmem:[%s165 + $0xc1] sm:$0xff]
      %v802 = vld [vmem:[%s165 + $0xc9] sm:$0xff]
      %v803 = vld [vmem:[%s165 + $0xd1] sm:$0xff]
      %v804 = vld [vmem:[%s165 + $0xe1] sm:$0xff]
      %v805 = vld [vmem:[%s165 + $0xe9] sm:$0xff]
      %v806 = vld [vmem:[%s165 + $0xf1] sm:$0xff]
      %v807 = vld [vmem:[%s165 + $0x101] sm:$0xff]
      %v808 = vld [vmem:[%s165 + $0x109] sm:$0xff]
      %v809 = vld [vmem:[%s165 + $0x111] sm:$0xff]
      %v810 = vld [vmem:[%s165 + $0x121] sm:$0xff]
      %v811 = vld [vmem:[%s165 + $0x129] sm:$0xff]
      %v812 = vld [vmem:[%s165 + $0x131] sm:$0xff]
      %v813 = vld [vmem:[%s165 + $0x141] sm:$0xff]
      %v814 = vld [vmem:[%s165 + $0x149] sm:$0xff]
      %v815 = vld [vmem:[%s165 + $0x151] sm:$0xff]
      %v816 = vld [vmem:[%s165 + $0x161] sm:$0xff]
      %v817 = vld [vmem:[%s165 + $0x169] sm:$0xff]
      %v818 = vld [vmem:[%s165 + $0x171] sm:$0xff]
      %v819 = vld [vmem:[%s165 + $0x181] sm:$0xff]
      %v820 = vld [vmem:[%s165 + $0x189] sm:$0xff]
      %v821 = vld [vmem:[%s165 + $0x191] sm:$0xff]
      %v822 = vld [vmem:[%s165 + $0x1a1] sm:$0xff]
      %v823 = vld [vmem:[%s165 + $0x1a9] sm:$0xff]
      %v824 = vld [vmem:[%s165 + $0x1b1] sm:$0xff]
      %v825 = vld [vmem:[%s165 + $0x1c1] sm:$0xff]
      %v826 = vld [vmem:[%s165 + $0x1c9] sm:$0xff]
      %v827 = vld [vmem:[%s165 + $0x1d1] sm:$0xff]
      %v828 = vld [vmem:[%s165 + $0x1e1] sm:$0xff]
      %v829 = vld [vmem:[%s165 + $0x1e9] sm:$0xff]
      %v830 = vld [vmem:[%s165 + $0x1f1] sm:$0xff]
      %v831 = vld [vmem:[%s165 + $0x201] sm:$0xff]
      %v832 = vld [vmem:[%s165 + $0x209] sm:$0xff]
      %v833 = vld [vmem:[%s165 + $0x211] sm:$0xff]
      %v834 = vld [vmem:[%s165 + $0x221] sm:$0xff]
      %v835 = vld [vmem:[%s165 + $0x229] sm:$0xff]
      %v836 = vld [vmem:[%s165 + $0x231] sm:$0xff]
      %v837 = vld [vmem:[%s1 + $0x4] sm:$0xf]
      %v839 = vsel %vm226, %v783, 0
      %v842 = vsel %vm226, %v784, 0
      %v845 = vsel %vm226, %v785, 0
      %v848 = vsel %vm226, %v786, 0
      %v851 = vsel %vm226, %v787, 0
      %v854 = vsel %vm226, %v788, 0
      %v857 = vsel %vm226, %v789, 0
      %v860 = vsel %vm226, %v790, 0
      %v863 = vsel %vm226, %v791, 0
      %v866 = vsel %vm226, %v792, 0
      %v869 = vsel %vm226, %v793, 0
      %v872 = vsel %vm226, %v794, 0
      %v875 = vsel %vm226, %v795, 0
      %v878 = vsel %vm226, %v796, 0
      %v881 = vsel %vm226, %v797, 0
      %v884 = vsel %vm226, %v798, 0
      %v887 = vsel %vm226, %v799, 0
      %v890 = vsel %vm226, %v800, 0
      %v893 = vsel %vm226, %v801, 0
      %v896 = vsel %vm226, %v802, 0
      %v899 = vsel %vm226, %v803, 0
      %v902 = vsel %vm226, %v804, 0
      %v905 = vsel %vm226, %v805, 0
      %v908 = vsel %vm226, %v806, 0
      %v911 = vsel %vm226, %v807, 0
      %v914 = vsel %vm226, %v808, 0
      %v917 = vsel %vm226, %v809, 0
      %v920 = vsel %vm226, %v810, 0
      %v923 = vsel %vm226, %v811, 0
      %v926 = vsel %vm226, %v812, 0
      %v929 = vsel %vm226, %v813, 0
      %v932 = vsel %vm226, %v814, 0
      %v935 = vsel %vm226, %v815, 0
      %v938 = vsel %vm226, %v816, 0
      %v941 = vsel %vm226, %v817, 0
      %v944 = vsel %vm226, %v818, 0
      %v947 = vsel %vm226, %v819, 0
      %v950 = vsel %vm226, %v820, 0
      %v953 = vsel %vm226, %v821, 0
      %v956 = vsel %vm226, %v822, 0
      %v959 = vsel %vm226, %v823, 0
      %v962 = vsel %vm226, %v824, 0
      %v965 = vsel %vm226, %v825, 0
      %v968 = vsel %vm226, %v826, 0
      %v971 = vsel %vm226, %v827, 0
      %v974 = vsel %vm226, %v828, 0
      %v977 = vsel %vm226, %v829, 0
      %v980 = vsel %vm226, %v830, 0
      %v983 = vsel %vm226, %v831, 0
      %v986 = vsel %vm226, %v832, 0
      %v989 = vsel %vm226, %v833, 0
      %v992 = vsel %vm226, %v834, 0
      %v995 = vsel %vm226, %v835, 0
      %v998 = vsel %vm226, %v836, 0
      %v1001 = vsel %vm389, %v837, 0
      %1003 = vmatprep.subr.mxu0 0.0
      %1004 = vmatpush1.msra.mxu0 %v1001
      %1005 = vmatprep.subr.mxu0 0.0
      %1006 = vmatpush1.msra.mxu0 0.0
      %1007 = vmatprep.subr.mxu0 0.0
      %1008 = vmatpush1.msra.mxu0 0.0
      %1009 = vmatprep.subr.mxu0 0.0
      %1010 = vmatpush1.msra.mxu0 0.0
      %1011 = vmatprep.subr.mxu0 0.0
      %1012 = vmatpush1.msra.mxu0 0.0
      %1013 = vmatprep.subr.mxu0 0.0
      %1014 = vmatpush1.msra.mxu0 0.0
      %1015 = vmatprep.subr.mxu0 0.0
      %1016 = vmatpush1.msra.mxu0 0.0
      %1017 = vmatprep.subr.mxu0 0.0
      %1018 = vmatpush1.msra.mxu0 0.0
      %1019 = vmatprep.subr.mxu0 0.0
      %1020 = vmatpush1.msra.mxu0 0.0
      %1021 = vmatprep.subr.mxu0 0.0
      %1022 = vmatpush1.msra.mxu0 0.0
      %1023 = vmatprep.subr.mxu0 0.0
      %1024 = vmatpush1.msra.mxu0 0.0
      %1025 = vmatprep.subr.mxu0 0.0
      %1026 = vmatpush1.msra.mxu0 0.0
      %1027 = vmatprep.subr.mxu0 0.0
      %1028 = vmatpush1.msra.mxu0 0.0
      %1029 = vmatprep.subr.mxu0 0.0
      %1030 = vmatpush1.msra.mxu0 0.0
      %1031 = vmatprep.subr.mxu0 0.0
      %1032 = vmatpush1.msra.mxu0 0.0
      %1033 = vmatprep.subr.mxu0 0.0
      %1034 = vmatpush1.msra.mxu0 0.0
      %1035 = vmatprep.subr.mxu0 0.0
      %1036 = vmatpush1.msra.mxu0 0.0
      %1037 = vmatprep.subr.mxu0 0.0
      %1038 = vmatpush1.msra.mxu0 0.0
      %1039 = vmatprep.subr.mxu0 0.0
      %1040 = vmatpush1.msra.mxu0 0.0
      %1041 = vmatprep.subr.mxu0 0.0
      %1042 = vmatpush1.msra.mxu0 0.0
      %1043 = vmatprep.subr.mxu0 0.0
      %1044 = vmatpush1.msra.mxu0 0.0
      %1045 = vmatprep.subr.mxu0 0.0
      %1046 = vmatpush1.msra.mxu0 0.0
      %1047 = vmatprep.subr.mxu0 0.0
      %1048 = vmatpush1.msra.mxu0 0.0
      %1049 = vmatprep.subr.mxu0 0.0
      %1050 = vmatpush1.msra.mxu0 0.0
      %1051 = vmatprep.subr.mxu0 0.0
      %1052 = vmatpush1.msra.mxu0 0.0
      %1053 = vmatprep.subr.mxu0 0.0
      %1054 = vmatpush1.msra.mxu0 0.0
      %1055 = vmatprep.subr.mxu0 0.0
      %1056 = vmatpush1.msra.mxu0 0.0
      %1057 = vmatprep.subr.mxu0 0.0
      %1058 = vmatpush1.msra.mxu0 0.0
      %1059 = vmatprep.subr.mxu0 0.0
      %1060 = vmatpush1.msra.mxu0 0.0
      %1061 = vmatprep.subr.mxu0 0.0
      %1062 = vmatpush1.msra.mxu0 0.0
      %1063 = vmatprep.subr.mxu0 0.0
      %1064 = vmatpush1.msra.mxu0 0.0
      %1065 = vmatprep.subr.mxu0 0.0
      %1066 = vmatpush1.msra.mxu0 0.0
      %1067 = vmatprep.mubr.f32.mxu0 0.0
      %1068 = vmatmul.mubr.f32.gmra.mrb[0].mxu0 %v839
      %v1069 = vpop.f32.mrb[0].mxu0
      %v1070 = vadd.f32 0.0, %v1069
      %v1071 = vpop.f32.mrb[0].mxu0
      %1072 = vmatprep.mubr.f32.mxu0 0.0
      %1073 = vmatmul.mubr.f32.gmra.mrb[0].mxu0 %v842
      %v1074 = vpop.f32.mrb[0].mxu0
      %v1075 = vadd.f32 0.0, %v1074
      %v1076 = vpop.f32.mrb[0].mxu0
      %1077 = vmatprep.mubr.f32.mxu0 0.0
      %1078 = vmatmul.mubr.f32.gmra.mrb[0].mxu0 %v845
      %v1079 = vpop.f32.mrb[0].mxu0
      %v1080 = vadd.f32 0.0, %v1079
      %v1081 = vpop.f32.mrb[0].mxu0
      %1082 = vmatprep.mubr.f32.mxu0 0.0
      %1083 = vmatmul.mubr.f32.gmra.mrb[0].mxu0 %v848
      %v1084 = vpop.f32.mrb[0].mxu0
      %v1085 = vadd.f32 0.0, %v1084
      %v1086 = vpop.f32.mrb[0].mxu0
      %1087 = vmatprep.mubr.f32.mxu0 0.0
      %1088 = vmatmul.mubr.f32.gmra.mrb[0].mxu0 %v851
      %v1089 = vpop.f32.mrb[0].mxu0
      %v1090 = vadd.f32 0.0, %v1089
      %v1091 = vpop.f32.mrb[0].mxu0
      %1092 = vmatprep.mubr.f32.mxu0 0.0
      %1093 = vmatmul.mubr.f32.gmra.mrb[0].mxu0 %v854
      %v1094 = vpop.f32.mrb[0].mxu0
      %v1095 = vadd.f32 0.0, %v1094
      %v1096 = vpop.f32.mrb[0].mxu0
      %1097 = vmatprep.mubr.f32.mxu0 0.0
      %1098 = vmatmul.mubr.f32.gmra.mrb[0].mxu0 %v857
      %v1099 = vpop.f32.mrb[0].mxu0
      %v1100 = vadd.f32 0.0, %v1099
      %v1101 = vpop.f32.mrb[0].mxu0
      %1102 = vmatprep.mubr.f32.mxu0 0.0
      %1103 = vmatmul.mubr.f32.gmra.mrb[0].mxu0 %v860
      %v1104 = vpop.f32.mrb[0].mxu0
      %v1105 = vadd.f32 0.0, %v1104
      %v1106 = vpop.f32.mrb[0].mxu0
      %1107 = vmatprep.mubr.f32.mxu0 0.0
      %1108 = vmatmul.mubr.f32.gmra.mrb[0].mxu0 %v863
      %v1109 = vpop.f32.mrb[0].mxu0
      %v1110 = vadd.f32 0.0, %v1109
      %v1111 = vpop.f32.mrb[0].mxu0
      %1112 = vmatprep.mubr.f32.mxu0 0.0
      %1113 = vmatmul.mubr.f32.gmra.mrb[0].mxu0 %v866
      %v1114 = vpop.f32.mrb[0].mxu0
      %v1115 = vadd.f32 0.0, %v1114
      %v1116 = vpop.f32.mrb[0].mxu0
      %1117 = vmatprep.mubr.f32.mxu0 0.0
      %1118 = vmatmul.mubr.f32.gmra.mrb[0].mxu0 %v869
      %v1119 = vpop.f32.mrb[0].mxu0
      %v1120 = vadd.f32 0.0, %v1119
      %v1121 = vpop.f32.mrb[0].mxu0
      %1122 = vmatprep.mubr.f32.mxu0 0.0
      %1123 = vmatmul.mubr.f32.gmra.mrb[0].mxu0 %v872
      %v1124 = vpop.f32.mrb[0].mxu0
      %v1125 = vadd.f32 0.0, %v1124
      %v1126 = vpop.f32.mrb[0].mxu0
      %1127 = vmatprep.mubr.f32.mxu0 0.0
      %1128 = vmatmul.mubr.f32.gmra.mrb[0].mxu0 %v875
      %v1129 = vpop.f32.mrb[0].mxu0
      %v1130 = vadd.f32 0.0, %v1129
      %v1131 = vpop.f32.mrb[0].mxu0
      %1132 = vmatprep.mubr.f32.mxu0 0.0
      %1133 = vmatmul.mubr.f32.gmra.mrb[0].mxu0 %v878
      %v1134 = vpop.f32.mrb[0].mxu0
      %v1135 = vadd.f32 0.0, %v1134
      %v1136 = vpop.f32.mrb[0].mxu0
      %1137 = vmatprep.mubr.f32.mxu0 0.0
      %1138 = vmatmul.mubr.f32.gmra.mrb[0].mxu0 %v881
      %v1139 = vpop.f32.mrb[0].mxu0
      %v1140 = vadd.f32 0.0, %v1139
      %v1141 = vpop.f32.mrb[0].mxu0
      %1142 = vmatprep.mubr.f32.mxu0 0.0
      %1143 = vmatmul.mubr.f32.gmra.mrb[0].mxu0 %v884
      %v1144 = vpop.f32.mrb[0].mxu0
      %v1145 = vadd.f32 0.0, %v1144
      %v1146 = vpop.f32.mrb[0].mxu0
      %1147 = vmatprep.mubr.f32.mxu0 0.0
      %1148 = vmatmul.mubr.f32.gmra.mrb[0].mxu0 %v887
      %v1149 = vpop.f32.mrb[0].mxu0
      %v1150 = vadd.f32 0.0, %v1149
      %v1151 = vpop.f32.mrb[0].mxu0
      %1152 = vmatprep.mubr.f32.mxu0 0.0
      %1153 = vmatmul.mubr.f32.gmra.mrb[0].mxu0 %v890
      %v1154 = vpop.f32.mrb[0].mxu0
      %v1155 = vadd.f32 0.0, %v1154
      %v1156 = vpop.f32.mrb[0].mxu0
      %1157 = vmatprep.mubr.f32.mxu0 0.0
      %1158 = vmatmul.mubr.f32.gmra.mrb[0].mxu0 %v893
      %v1159 = vpop.f32.mrb[0].mxu0
      %v1160 = vadd.f32 0.0, %v1159
      %v1161 = vpop.f32.mrb[0].mxu0
      %1162 = vmatprep.mubr.f32.mxu0 0.0
      %1163 = vmatmul.mubr.f32.gmra.mrb[0].mxu0 %v896
      %v1164 = vpop.f32.mrb[0].mxu0
      %v1165 = vadd.f32 0.0, %v1164
      %v1166 = vpop.f32.mrb[0].mxu0
      %1167 = vmatprep.mubr.f32.mxu0 0.0
      %1168 = vmatmul.mubr.f32.gmra.mrb[0].mxu0 %v899
      %v1169 = vpop.f32.mrb[0].mxu0
      %v1170 = vadd.f32 0.0, %v1169
      %v1171 = vpop.f32.mrb[0].mxu0
      %1172 = vmatprep.mubr.f32.mxu0 0.0
      %1173 = vmatmul.mubr.f32.gmra.mrb[0].mxu0 %v902
      %v1174 = vpop.f32.mrb[0].mxu0
      %v1175 = vadd.f32 0.0, %v1174
      %v1176 = vpop.f32.mrb[0].mxu0
      %1177 = vmatprep.mubr.f32.mxu0 0.0
      %1178 = vmatmul.mubr.f32.gmra.mrb[0].mxu0 %v905
      %v1179 = vpop.f32.mrb[0].mxu0
      %v1180 = vadd.f32 0.0, %v1179
      %v1181 = vpop.f32.mrb[0].mxu0
      %1182 = vmatprep.mubr.f32.mxu0 0.0
      %1183 = vmatmul.mubr.f32.gmra.mrb[0].mxu0 %v908
      %v1184 = vpop.f32.mrb[0].mxu0
      %v1185 = vadd.f32 0.0, %v1184
      %v1186 = vpop.f32.mrb[0].mxu0
      %1187 = vmatprep.mubr.f32.mxu0 0.0
      %1188 = vmatmul.mubr.f32.gmra.mrb[0].mxu0 %v911
      %v1189 = vpop.f32.mrb[0].mxu0
      %v1190 = vadd.f32 0.0, %v1189
      %v1191 = vpop.f32.mrb[0].mxu0
      %1192 = vmatprep.mubr.f32.mxu0 0.0
      %1193 = vmatmul.mubr.f32.gmra.mrb[0].mxu0 %v914
      %v1194 = vpop.f32.mrb[0].mxu0
      %v1195 = vadd.f32 0.0, %v1194
      %v1196 = vpop.f32.mrb[0].mxu0
      %1197 = vmatprep.mubr.f32.mxu0 0.0
      %1198 = vmatmul.mubr.f32.gmra.mrb[0].mxu0 %v917
      %v1199 = vpop.f32.mrb[0].mxu0
      %v1200 = vadd.f32 0.0, %v1199
      %v1201 = vpop.f32.mrb[0].mxu0
      %1202 = vmatprep.mubr.f32.mxu0 0.0
      %1203 = vmatmul.mubr.f32.gmra.mrb[0].mxu0 %v920
      %v1204 = vpop.f32.mrb[0].mxu0
      %v1205 = vadd.f32 0.0, %v1204
      %v1206 = vpop.f32.mrb[0].mxu0
      %1207 = vmatprep.mubr.f32.mxu0 0.0
      %1208 = vmatmul.mubr.f32.gmra.mrb[0].mxu0 %v923
      %v1209 = vpop.f32.mrb[0].mxu0
      %v1210 = vadd.f32 0.0, %v1209
      %v1211 = vpop.f32.mrb[0].mxu0
      %1212 = vmatprep.mubr.f32.mxu0 0.0
      %1213 = vmatmul.mubr.f32.gmra.mrb[0].mxu0 %v926
      %v1214 = vpop.f32.mrb[0].mxu0
      %v1215 = vadd.f32 0.0, %v1214
      %v1216 = vpop.f32.mrb[0].mxu0
      %1217 = vmatprep.mubr.f32.mxu0 0.0
      %1218 = vmatmul.mubr.f32.gmra.mrb[0].mxu0 %v929
      %v1219 = vpop.f32.mrb[0].mxu0
      %v1220 = vadd.f32 0.0, %v1219
      %v1221 = vpop.f32.mrb[0].mxu0
      %1222 = vmatprep.mubr.f32.mxu0 0.0
      %1223 = vmatmul.mubr.f32.gmra.mrb[0].mxu0 %v932
      %v1224 = vpop.f32.mrb[0].mxu0
      %v1225 = vadd.f32 0.0, %v1224
      %v1226 = vpop.f32.mrb[0].mxu0
      %1227 = vmatprep.mubr.f32.mxu0 0.0
      %1228 = vmatmul.mubr.f32.gmra.mrb[0].mxu0 %v935
      %v1229 = vpop.f32.mrb[0].mxu0
      %v1230 = vadd.f32 0.0, %v1229
      %v1231 = vpop.f32.mrb[0].mxu0
      %1232 = vmatprep.mubr.f32.mxu0 0.0
      %1233 = vmatmul.mubr.f32.gmra.mrb[0].mxu0 %v938
      %v1234 = vpop.f32.mrb[0].mxu0
      %v1235 = vadd.f32 0.0, %v1234
      %v1236 = vpop.f32.mrb[0].mxu0
      %1237 = vmatprep.mubr.f32.mxu0 0.0
      %1238 = vmatmul.mubr.f32.gmra.mrb[0].mxu0 %v941
      %v1239 = vpop.f32.mrb[0].mxu0
      %v1240 = vadd.f32 0.0, %v1239
      %v1241 = vpop.f32.mrb[0].mxu0
      %1242 = vmatprep.mubr.f32.mxu0 0.0
      %1243 = vmatmul.mubr.f32.gmra.mrb[0].mxu0 %v944
      %v1244 = vpop.f32.mrb[0].mxu0
      %v1245 = vadd.f32 0.0, %v1244
      %v1246 = vpop.f32.mrb[0].mxu0
      %1247 = vmatprep.mubr.f32.mxu0 0.0
      %1248 = vmatmul.mubr.f32.gmra.mrb[0].mxu0 %v947
      %v1249 = vpop.f32.mrb[0].mxu0
      %v1250 = vadd.f32 0.0, %v1249
      %v1251 = vpop.f32.mrb[0].mxu0
      %1252 = vmatprep.mubr.f32.mxu0 0.0
      %1253 = vmatmul.mubr.f32.gmra.mrb[0].mxu0 %v950
      %v1254 = vpop.f32.mrb[0].mxu0
      %v1255 = vadd.f32 0.0, %v1254
      %v1256 = vpop.f32.mrb[0].mxu0
      %1257 = vmatprep.mubr.f32.mxu0 0.0
      %1258 = vmatmul.mubr.f32.gmra.mrb[0].mxu0 %v953
      %v1259 = vpop.f32.mrb[0].mxu0
      %v1260 = vadd.f32 0.0, %v1259
      %v1261 = vpop.f32.mrb[0].mxu0
      %1262 = vmatprep.mubr.f32.mxu0 0.0
      %1263 = vmatmul.mubr.f32.gmra.mrb[0].mxu0 %v956
      %v1264 = vpop.f32.mrb[0].mxu0
      %v1265 = vadd.f32 0.0, %v1264
      %v1266 = vpop.f32.mrb[0].mxu0
      %1267 = vmatprep.mubr.f32.mxu0 0.0
      %1268 = vmatmul.mubr.f32.gmra.mrb[0].mxu0 %v959
      %v1269 = vpop.f32.mrb[0].mxu0
      %v1270 = vadd.f32 0.0, %v1269
      %v1271 = vpop.f32.mrb[0].mxu0
      %1272 = vmatprep.mubr.f32.mxu0 0.0
      %1273 = vmatmul.mubr.f32.gmra.mrb[0].mxu0 %v962
      %v1274 = vpop.f32.mrb[0].mxu0
      %v1275 = vadd.f32 0.0, %v1274
      %v1276 = vpop.f32.mrb[0].mxu0
      %1277 = vmatprep.mubr.f32.mxu0 0.0
      %1278 = vmatmul.mubr.f32.gmra.mrb[0].mxu0 %v965
      %v1279 = vpop.f32.mrb[0].mxu0
      %v1280 = vadd.f32 0.0, %v1279
      %v1281 = vpop.f32.mrb[0].mxu0
      %1282 = vmatprep.mubr.f32.mxu0 0.0
      %1283 = vmatmul.mubr.f32.gmra.mrb[0].mxu0 %v968
      %v1284 = vpop.f32.mrb[0].mxu0
      %v1285 = vadd.f32 0.0, %v1284
      %v1286 = vpop.f32.mrb[0].mxu0
      %1287 = vmatprep.mubr.f32.mxu0 0.0
      %1288 = vmatmul.mubr.f32.gmra.mrb[0].mxu0 %v971
      %v1289 = vpop.f32.mrb[0].mxu0
      %v1290 = vadd.f32 0.0, %v1289
      %v1291 = vpop.f32.mrb[0].mxu0
      %1292 = vmatprep.mubr.f32.mxu0 0.0
      %1293 = vmatmul.mubr.f32.gmra.mrb[0].mxu0 %v974
      %v1294 = vpop.f32.mrb[0].mxu0
      %v1295 = vadd.f32 0.0, %v1294
      %v1296 = vpop.f32.mrb[0].mxu0
      %1297 = vmatprep.mubr.f32.mxu0 0.0
      %1298 = vmatmul.mubr.f32.gmra.mrb[0].mxu0 %v977
      %v1299 = vpop.f32.mrb[0].mxu0
      %v1300 = vadd.f32 0.0, %v1299
      %v1301 = vpop.f32.mrb[0].mxu0
      %1302 = vmatprep.mubr.f32.mxu0 0.0
      %1303 = vmatmul.mubr.f32.gmra.mrb[0].mxu0 %v980
      %v1304 = vpop.f32.mrb[0].mxu0
      %v1305 = vadd.f32 0.0, %v1304
      %v1306 = vpop.f32.mrb[0].mxu0
      %1307 = vmatprep.mubr.f32.mxu0 0.0
      %1308 = vmatmul.mubr.f32.gmra.mrb[0].mxu0 %v983
      %v1309 = vpop.f32.mrb[0].mxu0
      %v1310 = vadd.f32 0.0, %v1309
      %v1311 = vpop.f32.mrb[0].mxu0
      %1312 = vmatprep.mubr.f32.mxu0 0.0
      %1313 = vmatmul.mubr.f32.gmra.mrb[0].mxu0 %v986
      %v1314 = vpop.f32.mrb[0].mxu0
      %v1315 = vadd.f32 0.0, %v1314
      %v1316 = vpop.f32.mrb[0].mxu0
      %1317 = vmatprep.mubr.f32.mxu0 0.0
      %1318 = vmatmul.mubr.f32.gmra.mrb[0].mxu0 %v989
      %v1319 = vpop.f32.mrb[0].mxu0
      %v1320 = vadd.f32 0.0, %v1319
      %v1321 = vpop.f32.mrb[0].mxu0
      %1322 = vmatprep.mubr.f32.mxu0 0.0
      %1323 = vmatmul.mubr.f32.gmra.mrb[0].mxu0 %v992
      %v1324 = vpop.f32.mrb[0].mxu0
      %v1325 = vadd.f32 0.0, %v1324
      %v1326 = vpop.f32.mrb[0].mxu0
      %1327 = vmatprep.mubr.f32.mxu0 0.0
      %1328 = vmatmul.mubr.f32.gmra.mrb[0].mxu0 %v995
      %v1329 = vpop.f32.mrb[0].mxu0
      %v1330 = vadd.f32 0.0, %v1329
      %v1331 = vpop.f32.mrb[0].mxu0
      %1332 = vmatprep.mubr.f32.mxu0 0.0
      %1333 = vmatmul.mubr.f32.gmra.mrb[0].mxu0 %v998
      %v1334 = vpop.f32.mrb[0].mxu0
      %v1335 = vadd.f32 0.0, %v1334
      %v1336 = vpop.f32.mrb[0].mxu0
      %1337 = vdwg.mxu0
      %v1338 = vld [vmem:[#allocation3] sm:$0xff]
      %v1339 = vld [vmem:[#allocation3 + $0x8] sm:$0xff]
      %v1340 = vld [vmem:[#allocation3 + $0x10] sm:$0xff]
      %v1341 = vld [vmem:[#allocation3 + $0x18] sm:$0xff]
      %v1342 = vld [vmem:[#allocation3 + $0x20] sm:$0xff]
      %v1343 = vld [vmem:[#allocation3 + $0x28] sm:$0xff]
      %v1344 = vld [vmem:[#allocation3 + $0x30] sm:$0xff]
      %v1345 = vld [vmem:[#allocation3 + $0x38] sm:$0xff]
      %v1346 = vld [vmem:[#allocation3 + $0x40] sm:$0xff]
      %v1347 = vld [vmem:[#allocation3 + $0x48] sm:$0xff]
      %v1348 = vld [vmem:[#allocation3 + $0x50] sm:$0xff]
      %v1349 = vld [vmem:[#allocation3 + $0x58] sm:$0xff]
      %v1350 = vld [vmem:[#allocation3 + $0x60] sm:$0xff]
      %v1351 = vld [vmem:[#allocation3 + $0x68] sm:$0xff]
      %v1352 = vld [vmem:[#allocation3 + $0x70] sm:$0xff]
      %v1353 = vld [vmem:[#allocation3 + $0x78] sm:$0xff]
      %v1354 = vld [vmem:[#allocation3 + $0x80] sm:$0xff]
      %v1355 = vld [vmem:[#allocation3 + $0x88] sm:$0xff]
      %v1356 = vld [vmem:[#allocation3 + $0x90] sm:$0xff]
      %v1357 = vld [vmem:[#allocation3 + $0x98] sm:$0xff]
      %v1358 = vld [vmem:[#allocation3 + $0xa0] sm:$0xff]
      %v1359 = vld [vmem:[#allocation3 + $0xa8] sm:$0xff]
      %v1360 = vld [vmem:[#allocation3 + $0xb0] sm:$0xff]
      %v1361 = vld [vmem:[#allocation3 + $0xb8] sm:$0xff]
      %v1362 = vld [vmem:[#allocation3 + $0xc0] sm:$0xff]
      %v1363 = vld [vmem:[#allocation3 + $0xc8] sm:$0xff]
      %v1364 = vld [vmem:[#allocation3 + $0xd0] sm:$0xff]
      %v1365 = vld [vmem:[#allocation3 + $0xd8] sm:$0xff]
      %v1366 = vld [vmem:[#allocation3 + $0xe0] sm:$0xff]
      %v1367 = vld [vmem:[#allocation3 + $0xe8] sm:$0xff]
      %v1368 = vld [vmem:[#allocation3 + $0xf0] sm:$0xff]
      %v1369 = vld [vmem:[#allocation3 + $0xf8] sm:$0xff]
      %v1370 = vld [vmem:[#allocation3 + $0x100] sm:$0xff]
      %v1371 = vld [vmem:[#allocation3 + $0x108] sm:$0xff]
      %v1372 = vld [vmem:[#allocation3 + $0x110] sm:$0xff]
      %v1373 = vld [vmem:[#allocation3 + $0x118] sm:$0xff]
      %v1374 = vld [vmem:[#allocation3 + $0x120] sm:$0xff]
      %v1375 = vld [vmem:[#allocation3 + $0x128] sm:$0xff]
      %v1376 = vld [vmem:[#allocation3 + $0x130] sm:$0xff]
      %v1377 = vld [vmem:[#allocation3 + $0x138] sm:$0xff]
      %v1378 = vld [vmem:[#allocation3 + $0x140] sm:$0xff]
      %v1379 = vld [vmem:[#allocation3 + $0x148] sm:$0xff]
      %v1380 = vld [vmem:[#allocation3 + $0x150] sm:$0xff]
      %v1381 = vld [vmem:[#allocation3 + $0x158] sm:$0xff]
      %v1382 = vld [vmem:[#allocation3 + $0x160] sm:$0xff]
      %v1383 = vld [vmem:[#allocation3 + $0x168] sm:$0xff]
      %v1384 = vld [vmem:[#allocation3 + $0x170] sm:$0xff]
      %v1385 = vld [vmem:[#allocation3 + $0x178] sm:$0xff]
      %v1386 = vld [vmem:[#allocation3 + $0x180] sm:$0xff]
      %v1387 = vld [vmem:[#allocation3 + $0x188] sm:$0xff]
      %v1388 = vld [vmem:[#allocation3 + $0x190] sm:$0xff]
      %v1389 = vld [vmem:[#allocation3 + $0x198] sm:$0xff]
      %v1390 = vld [vmem:[#allocation3 + $0x1a0] sm:$0xff]
      %v1391 = vld [vmem:[#allocation3 + $0x1a8] sm:$0xff]
      %v1392 = vadd.f32 %v1338, %v1070
      %v1393 = vadd.f32 %v1339, %v1075
      %v1394 = vadd.f32 %v1340, %v1080
      %v1395 = vadd.f32 %v1341, %v1085
      %v1396 = vadd.f32 %v1342, %v1090
      %v1397 = vadd.f32 %v1343, %v1095
      %v1398 = vadd.f32 %v1344, %v1100
      %v1399 = vadd.f32 %v1345, %v1105
      %v1400 = vadd.f32 %v1346, %v1110
      %v1401 = vadd.f32 %v1347, %v1115
      %v1402 = vadd.f32 %v1348, %v1120
      %v1403 = vadd.f32 %v1349, %v1125
      %v1404 = vadd.f32 %v1350, %v1130
      %v1405 = vadd.f32 %v1351, %v1135
      %v1406 = vadd.f32 %v1352, %v1140
      %v1407 = vadd.f32 %v1353, %v1145
      %v1408 = vadd.f32 %v1354, %v1150
      %v1409 = vadd.f32 %v1355, %v1155
      %v1410 = vadd.f32 %v1356, %v1160
      %v1411 = vadd.f32 %v1357, %v1165
      %v1412 = vadd.f32 %v1358, %v1170
      %v1413 = vadd.f32 %v1359, %v1175
      %v1414 = vadd.f32 %v1360, %v1180
      %v1415 = vadd.f32 %v1361, %v1185
      %v1416 = vadd.f32 %v1362, %v1190
      %v1417 = vadd.f32 %v1363, %v1195
      %v1418 = vadd.f32 %v1364, %v1200
      %v1419 = vadd.f32 %v1365, %v1205
      %v1420 = vadd.f32 %v1366, %v1210
      %v1421 = vadd.f32 %v1367, %v1215
      %v1422 = vadd.f32 %v1368, %v1220
      %v1423 = vadd.f32 %v1369, %v1225
      %v1424 = vadd.f32 %v1370, %v1230
      %v1425 = vadd.f32 %v1371, %v1235
      %v1426 = vadd.f32 %v1372, %v1240
      %v1427 = vadd.f32 %v1373, %v1245
      %v1428 = vadd.f32 %v1374, %v1250
      %v1429 = vadd.f32 %v1375, %v1255
      %v1430 = vadd.f32 %v1376, %v1260
      %v1431 = vadd.f32 %v1377, %v1265
      %v1432 = vadd.f32 %v1378, %v1270
      %v1433 = vadd.f32 %v1379, %v1275
      %v1434 = vadd.f32 %v1380, %v1280
      %v1435 = vadd.f32 %v1381, %v1285
      %v1436 = vadd.f32 %v1382, %v1290
      %v1437 = vadd.f32 %v1383, %v1295
      %v1438 = vadd.f32 %v1384, %v1300
      %v1439 = vadd.f32 %v1385, %v1305
      %v1440 = vadd.f32 %v1386, %v1310
      %v1441 = vadd.f32 %v1387, %v1315
      %v1442 = vadd.f32 %v1388, %v1320
      %v1443 = vadd.f32 %v1389, %v1325
      %v1444 = vadd.f32 %v1390, %v1330
      %v1445 = vadd.f32 %v1391, %v1335
      %1446 = vst.msk [vmem:[#allocation3] sm:$0xff] %vm728, %v1392
      %1447 = vst.msk [vmem:[#allocation3 + $0x8] sm:$0xff] %vm728, %v1393
      %1448 = vst.msk [vmem:[#allocation3 + $0x10] sm:$0xff] %vm728, %v1394
      %1449 = vst.msk [vmem:[#allocation3 + $0x18] sm:$0xff] %vm728, %v1395
      %1450 = vst.msk [vmem:[#allocation3 + $0x20] sm:$0xff] %vm728, %v1396
      %1451 = vst.msk [vmem:[#allocation3 + $0x28] sm:$0xff] %vm728, %v1397
      %1452 = vst.msk [vmem:[#allocation3 + $0x30] sm:$0xff] %vm728, %v1398
      %1453 = vst.msk [vmem:[#allocation3 + $0x38] sm:$0xff] %vm728, %v1399
      %1454 = vst.msk [vmem:[#allocation3 + $0x40] sm:$0xff] %vm728, %v1400
      %1455 = vst.msk [vmem:[#allocation3 + $0x48] sm:$0xff] %vm728, %v1401
      %1456 = vst.msk [vmem:[#allocation3 + $0x50] sm:$0xff] %vm728, %v1402
      %1457 = vst.msk [vmem:[#allocation3 + $0x58] sm:$0xff] %vm728, %v1403
      %1458 = vst.msk [vmem:[#allocation3 + $0x60] sm:$0xff] %vm728, %v1404
      %1459 = vst.msk [vmem:[#allocation3 + $0x68] sm:$0xff] %vm728, %v1405
      %1460 = vst.msk [vmem:[#allocation3 + $0x70] sm:$0xff] %vm728, %v1406
      %1461 = vst.msk [vmem:[#allocation3 + $0x78] sm:$0xff] %vm728, %v1407
      %1462 = vst.msk [vmem:[#allocation3 + $0x80] sm:$0xff] %vm728, %v1408
      %1463 = vst.msk [vmem:[#allocation3 + $0x88] sm:$0xff] %vm728, %v1409
      %1464 = vst.msk [vmem:[#allocation3 + $0x90] sm:$0xff] %vm728, %v1410
      %1465 = vst.msk [vmem:[#allocation3 + $0x98] sm:$0xff] %vm728, %v1411
      %1466 = vst.msk [vmem:[#allocation3 + $0xa0] sm:$0xff] %vm728, %v1412
      %1467 = vst.msk [vmem:[#allocation3 + $0xa8] sm:$0xff] %vm728, %v1413
      %1468 = vst.msk [vmem:[#allocation3 + $0xb0] sm:$0xff] %vm728, %v1414
      %1469 = vst.msk [vmem:[#allocation3 + $0xb8] sm:$0xff] %vm728, %v1415
      %1470 = vst.msk [vmem:[#allocation3 + $0xc0] sm:$0xff] %vm728, %v1416
      %1471 = vst.msk [vmem:[#allocation3 + $0xc8] sm:$0xff] %vm728, %v1417
      %1472 = vst.msk [vmem:[#allocation3 + $0xd0] sm:$0xff] %vm728, %v1418
      %1473 = vst.msk [vmem:[#allocation3 + $0xd8] sm:$0xff] %vm728, %v1419
      %1474 = vst.msk [vmem:[#allocation3 + $0xe0] sm:$0xff] %vm728, %v1420
      %1475 = vst.msk [vmem:[#allocation3 + $0xe8] sm:$0xff] %vm728, %v1421
      %1476 = vst.msk [vmem:[#allocation3 + $0xf0] sm:$0xff] %vm728, %v1422
      %1477 = vst.msk [vmem:[#allocation3 + $0xf8] sm:$0xff] %vm728, %v1423
      %1478 = vst.msk [vmem:[#allocation3 + $0x100] sm:$0xff] %vm728, %v1424
      %1479 = vst.msk [vmem:[#allocation3 + $0x108] sm:$0xff] %vm728, %v1425
      %1480 = vst.msk [vmem:[#allocation3 + $0x110] sm:$0xff] %vm728, %v1426
      %1481 = vst.msk [vmem:[#allocation3 + $0x118] sm:$0xff] %vm728, %v1427
      %1482 = vst.msk [vmem:[#allocation3 + $0x120] sm:$0xff] %vm728, %v1428
      %1483 = vst.msk [vmem:[#allocation3 + $0x128] sm:$0xff] %vm728, %v1429
      %1484 = vst.msk [vmem:[#allocation3 + $0x130] sm:$0xff] %vm728, %v1430
      %1485 = vst.msk [vmem:[#allocation3 + $0x138] sm:$0xff] %vm728, %v1431
      %1486 = vst.msk [vmem:[#allocation3 + $0x140] sm:$0xff] %vm728, %v1432
      %1487 = vst.msk [vmem:[#allocation3 + $0x148] sm:$0xff] %vm728, %v1433
      %1488 = vst.msk [vmem:[#allocation3 + $0x150] sm:$0xff] %vm728, %v1434
      %1489 = vst.msk [vmem:[#allocation3 + $0x158] sm:$0xff] %vm728, %v1435
      %1490 = vst.msk [vmem:[#allocation3 + $0x160] sm:$0xff] %vm728, %v1436
      %1491 = vst.msk [vmem:[#allocation3 + $0x168] sm:$0xff] %vm728, %v1437
      %1492 = vst.msk [vmem:[#allocation3 + $0x170] sm:$0xff] %vm728, %v1438
      %1493 = vst.msk [vmem:[#allocation3 + $0x178] sm:$0xff] %vm728, %v1439
      %1494 = vst.msk [vmem:[#allocation3 + $0x180] sm:$0xff] %vm728, %v1440
      %1495 = vst.msk [vmem:[#allocation3 + $0x188] sm:$0xff] %vm728, %v1441
      %1496 = vst.msk [vmem:[#allocation3 + $0x190] sm:$0xff] %vm728, %v1442
      %1497 = vst.msk [vmem:[#allocation3 + $0x198] sm:$0xff] %vm728, %v1443
      %1498 = vst.msk [vmem:[#allocation3 + $0x1a0] sm:$0xff] %vm728, %v1444
      %1499 = vst.msk [vmem:[#allocation3 + $0x1a8] sm:$0xff] %vm728, %v1445
      %v1500 = vld [vmem:[%s165 + $0x2] sm:$0xff]
      %v1501 = vld [vmem:[%s165 + $0xa] sm:$0xff]
      %v1502 = vld [vmem:[%s165 + $0x12] sm:$0xff]
      %v1503 = vld [vmem:[%s165 + $0x22] sm:$0xff]
      %v1504 = vld [vmem:[%s165 + $0x2a] sm:$0xff]
      %v1505 = vld [vmem:[%s165 + $0x32] sm:$0xff]
      %v1506 = vld [vmem:[%s165 + $0x42] sm:$0xff]
      %v1507 = vld [vmem:[%s165 + $0x4a] sm:$0xff]
      %v1508 = vld [vmem:[%s165 + $0x52] sm:$0xff]
      %v1509 = vld [vmem:[%s165 + $0x62] sm:$0xff]
      %v1510 = vld [vmem:[%s165 + $0x6a] sm:$0xff]
      %v1511 = vld [vmem:[%s165 + $0x72] sm:$0xff]
      %v1512 = vld [vmem:[%s165 + $0x82] sm:$0xff]
      %v1513 = vld [vmem:[%s165 + $0x8a] sm:$0xff]
      %v1514 = vld [vmem:[%s165 + $0x92] sm:$0xff]
      %v1515 = vld [vmem:[%s165 + $0xa2] sm:$0xff]
      %v1516 = vld [vmem:[%s165 + $0xaa] sm:$0xff]
      %v1517 = vld [vmem:[%s165 + $0xb2] sm:$0xff]
      %v1518 = vld [vmem:[%s165 + $0xc2] sm:$0xff]
      %v1519 = vld [vmem:[%s165 + $0xca] sm:$0xff]
      %v1520 = vld [vmem:[%s165 + $0xd2] sm:$0xff]
      %v1521 = vld [vmem:[%s165 + $0xe2] sm:$0xff]
      %v1522 = vld [vmem:[%s165 + $0xea] sm:$0xff]
      %v1523 = vld [vmem:[%s165 + $0xf2] sm:$0xff]
      %v1524 = vld [vmem:[%s165 + $0x102] sm:$0xff]
      %v1525 = vld [vmem:[%s165 + $0x10a] sm:$0xff]
      %v1526 = vld [vmem:[%s165 + $0x112] sm:$0xff]
      %v1527 = vld [vmem:[%s165 + $0x122] sm:$0xff]
      %v1528 = vld [vmem:[%s165 + $0x12a] sm:$0xff]
      %v1529 = vld [vmem:[%s165 + $0x132] sm:$0xff]
      %v1530 = vld [vmem:[%s165 + $0x142] sm:$0xff]
      %v1531 = vld [vmem:[%s165 + $0x14a] sm:$0xff]
      %v1532 = vld [vmem:[%s165 + $0x152] sm:$0xff]
      %v1533 = vld [vmem:[%s165 + $0x162] sm:$0xff]
      %v1534 = vld [vmem:[%s165 + $0x16a] sm:$0xff]
      %v1535 = vld [vmem:[%s165 + $0x172] sm:$0xff]
      %v1536 = vld [vmem:[%s165 + $0x182] sm:$0xff]
      %v1537 = vld [vmem:[%s165 + $0x18a] sm:$0xff]
      %v1538 = vld [vmem:[%s165 + $0x192] sm:$0xff]
      %v1539 = vld [vmem:[%s165 + $0x1a2] sm:$0xff]
      %v1540 = vld [vmem:[%s165 + $0x1aa] sm:$0xff]
      %v1541 = vld [vmem:[%s165 + $0x1b2] sm:$0xff]
      %v1542 = vld [vmem:[%s165 + $0x1c2] sm:$0xff]
      %v1543 = vld [vmem:[%s165 + $0x1ca] sm:$0xff]
      %v1544 = vld [vmem:[%s165 + $0x1d2] sm:$0xff]
      %v1545 = vld [vmem:[%s165 + $0x1e2] sm:$0xff]
      %v1546 = vld [vmem:[%s165 + $0x1ea] sm:$0xff]
      %v1547 = vld [vmem:[%s165 + $0x1f2] sm:$0xff]
      %v1548 = vld [vmem:[%s165 + $0x202] sm:$0xff]
      %v1549 = vld [vmem:[%s165 + $0x20a] sm:$0xff]
      %v1550 = vld [vmem:[%s165 + $0x212] sm:$0xff]
      %v1551 = vld [vmem:[%s165 + $0x222] sm:$0xff]
      %v1552 = vld [vmem:[%s165 + $0x22a] sm:$0xff]
      %v1553 = vld [vmem:[%s165 + $0x232] sm:$0xff]
      %v1554 = vld [vmem:[%s1 + $0x8] sm:$0xf]
      %v1556 = vsel %vm226, %v1500, 0
      %v1559 = vsel %vm226, %v1501, 0
      %v1562 = vsel %vm226, %v1502, 0
      %v1565 = vsel %vm226, %v1503, 0
      %v1568 = vsel %vm226, %v1504, 0
      %v1571 = vsel %vm226, %v1505, 0
      %v1574 = vsel %vm226, %v1506, 0
      %v1577 = vsel %vm226, %v1507, 0
      %v1580 = vsel %vm226, %v1508, 0
      %v1583 = vsel %vm226, %v1509, 0
      %v1586 = vsel %vm226, %v1510, 0
      %v1589 = vsel %vm226, %v1511, 0
      %v1592 = vsel %vm226, %v1512, 0
      %v1595 = vsel %vm226, %v1513, 0
      %v1598 = vsel %vm226, %v1514, 0
      %v1601 = vsel %vm226, %v1515, 0
      %v1604 = vsel %vm226, %v1516, 0
      %v1607 = vsel %vm226, %v1517, 0
      %v1610 = vsel %vm226, %v1518, 0
      %v1613 = vsel %vm226, %v1519, 0
      %v1616 = vsel %vm226, %v1520, 0
      %v1619 = vsel %vm226, %v1521, 0
      %v1622 = vsel %vm226, %v1522, 0
      %v1625 = vsel %vm226, %v1523, 0
      %v1628 = vsel %vm226, %v1524, 0
      %v1631 = vsel %vm226, %v1525, 0
      %v1634 = vsel %vm226, %v1526, 0
      %v1637 = vsel %vm226, %v1527, 0
      %v1640 = vsel %vm226, %v1528, 0
      %v1643 = vsel %vm226, %v1529, 0
      %v1646 = vsel %vm226, %v1530, 0
      %v1649 = vsel %vm226, %v1531, 0
      %v1652 = vsel %vm226, %v1532, 0
      %v1655 = vsel %vm226, %v1533, 0
      %v1658 = vsel %vm226, %v1534, 0
      %v1661 = vsel %vm226, %v1535, 0
      %v1664 = vsel %vm226, %v1536, 0
      %v1667 = vsel %vm226, %v1537, 0
      %v1670 = vsel %vm226, %v1538, 0
      %v1673 = vsel %vm226, %v1539, 0
      %v1676 = vsel %vm226, %v1540, 0
      %v1679 = vsel %vm226, %v1541, 0
      %v1682 = vsel %vm226, %v1542, 0
      %v1685 = vsel %vm226, %v1543, 0
      %v1688 = vsel %vm226, %v1544, 0
      %v1691 = vsel %vm226, %v1545, 0
      %v1694 = vsel %vm226, %v1546, 0
      %v1697 = vsel %vm226, %v1547, 0
      %v1700 = vsel %vm226, %v1548, 0
      %v1703 = vsel %vm226, %v1549, 0
      %v1706 = vsel %vm226, %v1550, 0
      %v1709 = vsel %vm226, %v1551, 0
      %v1712 = vsel %vm226, %v1552, 0
      %v1715 = vsel %vm226, %v1553, 0
      %v1718 = vsel %vm389, %v1554, 0
      %1720 = vmatprep.subr.mxu0 0.0
      %1721 = vmatpush1.msra.mxu0 %v1718
      %1722 = vmatprep.subr.mxu0 0.0
      %1723 = vmatpush1.msra.mxu0 0.0
      %1724 = vmatprep.subr.mxu0 0.0
      %1725 = vmatpush1.msra.mxu0 0.0
      %1726 = vmatprep.subr.mxu0 0.0
      %1727 = vmatpush1.msra.mxu0 0.0
      %1728 = vmatprep.subr.mxu0 0.0
      %1729 = vmatpush1.msra.mxu0 0.0
      %1730 = vmatprep.subr.mxu0 0.0
      %1731 = vmatpush1.msra.mxu0 0.0
      %1732 = vmatprep.subr.mxu0 0.0
      %1733 = vmatpush1.msra.mxu0 0.0
      %1734 = vmatprep.subr.mxu0 0.0
      %1735 = vmatpush1.msra.mxu0 0.0
      %1736 = vmatprep.subr.mxu0 0.0
      %1737 = vmatpush1.msra.mxu0 0.0
      %1738 = vmatprep.subr.mxu0 0.0
      %1739 = vmatpush1.msra.mxu0 0.0
      %1740 = vmatprep.subr.mxu0 0.0
      %1741 = vmatpush1.msra.mxu0 0.0
      %1742 = vmatprep.subr.mxu0 0.0
      %1743 = vmatpush1.msra.mxu0 0.0
      %1744 = vmatprep.subr.mxu0 0.0
      %1745 = vmatpush1.msra.mxu0 0.0
      %1746 = vmatprep.subr.mxu0 0.0
      %1747 = vmatpush1.msra.mxu0 0.0
      %1748 = vmatprep.subr.mxu0 0.0
      %1749 = vmatpush1.msra.mxu0 0.0
      %1750 = vmatprep.subr.mxu0 0.0
      %1751 = vmatpush1.msra.mxu0 0.0
      %1752 = vmatprep.subr.mxu0 0.0
      %1753 = vmatpush1.msra.mxu0 0.0
      %1754 = vmatprep.subr.mxu0 0.0
      %1755 = vmatpush1.msra.mxu0 0.0
      %1756 = vmatprep.subr.mxu0 0.0
      %1757 = vmatpush1.msra.mxu0 0.0
      %1758 = vmatprep.subr.mxu0 0.0
      %1759 = vmatpush1.msra.mxu0 0.0
      %1760 = vmatprep.subr.mxu0 0.0
      %1761 = vmatpush1.msra.mxu0 0.0
      %1762 = vmatprep.subr.mxu0 0.0
      %1763 = vmatpush1.msra.mxu0 0.0
      %1764 = vmatprep.subr.mxu0 0.0
      %1765 = vmatpush1.msra.mxu0 0.0
      %1766 = vmatprep.subr.mxu0 0.0
      %1767 = vmatpush1.msra.mxu0 0.0
      %1768 = vmatprep.subr.mxu0 0.0
      %1769 = vmatpush1.msra.mxu0 0.0
      %1770 = vmatprep.subr.mxu0 0.0
      %1771 = vmatpush1.msra.mxu0 0.0
      %1772 = vmatprep.subr.mxu0 0.0
      %1773 = vmatpush1.msra.mxu0 0.0
      %1774 = vmatprep.subr.mxu0 0.0
      %1775 = vmatpush1.msra.mxu0 0.0
      %1776 = vmatprep.subr.mxu0 0.0
      %1777 = vmatpush1.msra.mxu0 0.0
      %1778 = vmatprep.subr.mxu0 0.0
      %1779 = vmatpush1.msra.mxu0 0.0
      %1780 = vmatprep.subr.mxu0 0.0
      %1781 = vmatpush1.msra.mxu0 0.0
      %1782 = vmatprep.subr.mxu0 0.0
      %1783 = vmatpush1.msra.mxu0 0.0
      %1784 = vmatprep.mubr.f32.mxu0 0.0
      %1785 = vmatmul.mubr.f32.gmra.mrb[0].mxu0 %v1556
      %v1786 = vpop.f32.mrb[0].mxu0
      %v1787 = vadd.f32 0.0, %v1786
      %v1788 = vpop.f32.mrb[0].mxu0
      %1789 = vmatprep.mubr.f32.mxu0 0.0
      %1790 = vmatmul.mubr.f32.gmra.mrb[0].mxu0 %v1559
      %v1791 = vpop.f32.mrb[0].mxu0
      %v1792 = vadd.f32 0.0, %v1791
      %v1793 = vpop.f32.mrb[0].mxu0
      %1794 = vmatprep.mubr.f32.mxu0 0.0
      %1795 = vmatmul.mubr.f32.gmra.mrb[0].mxu0 %v1562
      %v1796 = vpop.f32.mrb[0].mxu0
      %v1797 = vadd.f32 0.0, %v1796
      %v1798 = vpop.f32.mrb[0].mxu0
      %1799 = vmatprep.mubr.f32.mxu0 0.0
      %1800 = vmatmul.mubr.f32.gmra.mrb[0].mxu0 %v1565
      %v1801 = vpop.f32.mrb[0].mxu0
      %v1802 = vadd.f32 0.0, %v1801
      %v1803 = vpop.f32.mrb[0].mxu0
      %1804 = vmatprep.mubr.f32.mxu0 0.0
      %1805 = vmatmul.mubr.f32.gmra.mrb[0].mxu0 %v1568
      %v1806 = vpop.f32.mrb[0].mxu0
      %v1807 = vadd.f32 0.0, %v1806
      %v1808 = vpop.f32.mrb[0].mxu0
      %1809 = vmatprep.mubr.f32.mxu0 0.0
      %1810 = vmatmul.mubr.f32.gmra.mrb[0].mxu0 %v1571
      %v1811 = vpop.f32.mrb[0].mxu0
      %v1812 = vadd.f32 0.0, %v1811
      %v1813 = vpop.f32.mrb[0].mxu0
      %1814 = vmatprep.mubr.f32.mxu0 0.0
      %1815 = vmatmul.mubr.f32.gmra.mrb[0].mxu0 %v1574
      %v1816 = vpop.f32.mrb[0].mxu0
      %v1817 = vadd.f32 0.0, %v1816
      %v1818 = vpop.f32.mrb[0].mxu0
      %1819 = vmatprep.mubr.f32.mxu0 0.0
      %1820 = vmatmul.mubr.f32.gmra.mrb[0].mxu0 %v1577
      %v1821 = vpop.f32.mrb[0].mxu0
      %v1822 = vadd.f32 0.0, %v1821
      %v1823 = vpop.f32.mrb[0].mxu0
      %1824 = vmatprep.mubr.f32.mxu0 0.0
      %1825 = vmatmul.mubr.f32.gmra.mrb[0].mxu0 %v1580
      %v1826 = vpop.f32.mrb[0].mxu0
      %v1827 = vadd.f32 0.0, %v1826
      %v1828 = vpop.f32.mrb[0].mxu0
      %1829 = vmatprep.mubr.f32.mxu0 0.0
      %1830 = vmatmul.mubr.f32.gmra.mrb[0].mxu0 %v1583
      %v1831 = vpop.f32.mrb[0].mxu0
      %v1832 = vadd.f32 0.0, %v1831
      %v1833 = vpop.f32.mrb[0].mxu0
      %1834 = vmatprep.mubr.f32.mxu0 0.0
      %1835 = vmatmul.mubr.f32.gmra.mrb[0].mxu0 %v1586
      %v1836 = vpop.f32.mrb[0].mxu0
      %v1837 = vadd.f32 0.0, %v1836
      %v1838 = vpop.f32.mrb[0].mxu0
      %1839 = vmatprep.mubr.f32.mxu0 0.0
      %1840 = vmatmul.mubr.f32.gmra.mrb[0].mxu0 %v1589
      %v1841 = vpop.f32.mrb[0].mxu0
      %v1842 = vadd.f32 0.0, %v1841
      %v1843 = vpop.f32.mrb[0].mxu0
      %1844 = vmatprep.mubr.f32.mxu0 0.0
      %1845 = vmatmul.mubr.f32.gmra.mrb[0].mxu0 %v1592
      %v1846 = vpop.f32.mrb[0].mxu0
      %v1847 = vadd.f32 0.0, %v1846
      %v1848 = vpop.f32.mrb[0].mxu0
      %1849 = vmatprep.mubr.f32.mxu0 0.0
      %1850 = vmatmul.mubr.f32.gmra.mrb[0].mxu0 %v1595
      %v1851 = vpop.f32.mrb[0].mxu0
      %v1852 = vadd.f32 0.0, %v1851
      %v1853 = vpop.f32.mrb[0].mxu0
      %1854 = vmatprep.mubr.f32.mxu0 0.0
      %1855 = vmatmul.mubr.f32.gmra.mrb[0].mxu0 %v1598
      %v1856 = vpop.f32.mrb[0].mxu0
      %v1857 = vadd.f32 0.0, %v1856
      %v1858 = vpop.f32.mrb[0].mxu0
      %1859 = vmatprep.mubr.f32.mxu0 0.0
      %1860 = vmatmul.mubr.f32.gmra.mrb[0].mxu0 %v1601
      %v1861 = vpop.f32.mrb[0].mxu0
      %v1862 = vadd.f32 0.0, %v1861
      %v1863 = vpop.f32.mrb[0].mxu0
      %1864 = vmatprep.mubr.f32.mxu0 0.0
      %1865 = vmatmul.mubr.f32.gmra.mrb[0].mxu0 %v1604
      %v1866 = vpop.f32.mrb[0].mxu0
      %v1867 = vadd.f32 0.0, %v1866
      %v1868 = vpop.f32.mrb[0].mxu0
      %1869 = vmatprep.mubr.f32.mxu0 0.0
      %1870 = vmatmul.mubr.f32.gmra.mrb[0].mxu0 %v1607
      %v1871 = vpop.f32.mrb[0].mxu0
      %v1872 = vadd.f32 0.0, %v1871
      %v1873 = vpop.f32.mrb[0].mxu0
      %1874 = vmatprep.mubr.f32.mxu0 0.0
      %1875 = vmatmul.mubr.f32.gmra.mrb[0].mxu0 %v1610
      %v1876 = vpop.f32.mrb[0].mxu0
      %v1877 = vadd.f32 0.0, %v1876
      %v1878 = vpop.f32.mrb[0].mxu0
      %1879 = vmatprep.mubr.f32.mxu0 0.0
      %1880 = vmatmul.mubr.f32.gmra.mrb[0].mxu0 %v1613
      %v1881 = vpop.f32.mrb[0].mxu0
      %v1882 = vadd.f32 0.0, %v1881
      %v1883 = vpop.f32.mrb[0].mxu0
      %1884 = vmatprep.mubr.f32.mxu0 0.0
      %1885 = vmatmul.mubr.f32.gmra.mrb[0].mxu0 %v1616
      %v1886 = vpop.f32.mrb[0].mxu0
      %v1887 = vadd.f32 0.0, %v1886
      %v1888 = vpop.f32.mrb[0].mxu0
      %1889 = vmatprep.mubr.f32.mxu0 0.0
      %1890 = vmatmul.mubr.f32.gmra.mrb[0].mxu0 %v1619
      %v1891 = vpop.f32.mrb[0].mxu0
      %v1892 = vadd.f32 0.0, %v1891
      %v1893 = vpop.f32.mrb[0].mxu0
      %1894 = vmatprep.mubr.f32.mxu0 0.0
      %1895 = vmatmul.mubr.f32.gmra.mrb[0].mxu0 %v1622
      %v1896 = vpop.f32.mrb[0].mxu0
      %v1897 = vadd.f32 0.0, %v1896
      %v1898 = vpop.f32.mrb[0].mxu0
      %1899 = vmatprep.mubr.f32.mxu0 0.0
      %1900 = vmatmul.mubr.f32.gmra.mrb[0].mxu0 %v1625
      %v1901 = vpop.f32.mrb[0].mxu0
      %v1902 = vadd.f32 0.0, %v1901
      %v1903 = vpop.f32.mrb[0].mxu0
      %1904 = vmatprep.mubr.f32.mxu0 0.0
      %1905 = vmatmul.mubr.f32.gmra.mrb[0].mxu0 %v1628
      %v1906 = vpop.f32.mrb[0].mxu0
      %v1907 = vadd.f32 0.0, %v1906
      %v1908 = vpop.f32.mrb[0].mxu0
      %1909 = vmatprep.mubr.f32.mxu0 0.0
      %1910 = vmatmul.mubr.f32.gmra.mrb[0].mxu0 %v1631
      %v1911 = vpop.f32.mrb[0].mxu0
      %v1912 = vadd.f32 0.0, %v1911
      %v1913 = vpop.f32.mrb[0].mxu0
      %1914 = vmatprep.mubr.f32.mxu0 0.0
      %1915 = vmatmul.mubr.f32.gmra.mrb[0].mxu0 %v1634
      %v1916 = vpop.f32.mrb[0].mxu0
      %v1917 = vadd.f32 0.0, %v1916
      %v1918 = vpop.f32.mrb[0].mxu0
      %1919 = vmatprep.mubr.f32.mxu0 0.0
      %1920 = vmatmul.mubr.f32.gmra.mrb[0].mxu0 %v1637
      %v1921 = vpop.f32.mrb[0].mxu0
      %v1922 = vadd.f32 0.0, %v1921
      %v1923 = vpop.f32.mrb[0].mxu0
      %1924 = vmatprep.mubr.f32.mxu0 0.0
      %1925 = vmatmul.mubr.f32.gmra.mrb[0].mxu0 %v1640
      %v1926 = vpop.f32.mrb[0].mxu0
      %v1927 = vadd.f32 0.0, %v1926
      %v1928 = vpop.f32.mrb[0].mxu0
      %1929 = vmatprep.mubr.f32.mxu0 0.0
      %1930 = vmatmul.mubr.f32.gmra.mrb[0].mxu0 %v1643
      %v1931 = vpop.f32.mrb[0].mxu0
      %v1932 = vadd.f32 0.0, %v1931
      %v1933 = vpop.f32.mrb[0].mxu0
      %1934 = vmatprep.mubr.f32.mxu0 0.0
      %1935 = vmatmul.mubr.f32.gmra.mrb[0].mxu0 %v1646
      %v1936 = vpop.f32.mrb[0].mxu0
      %v1937 = vadd.f32 0.0, %v1936
      %v1938 = vpop.f32.mrb[0].mxu0
      %1939 = vmatprep.mubr.f32.mxu0 0.0
      %1940 = vmatmul.mubr.f32.gmra.mrb[0].mxu0 %v1649
      %v1941 = vpop.f32.mrb[0].mxu0
      %v1942 = vadd.f32 0.0, %v1941
      %v1943 = vpop.f32.mrb[0].mxu0
      %1944 = vmatprep.mubr.f32.mxu0 0.0
      %1945 = vmatmul.mubr.f32.gmra.mrb[0].mxu0 %v1652
      %v1946 = vpop.f32.mrb[0].mxu0
      %v1947 = vadd.f32 0.0, %v1946
      %v1948 = vpop.f32.mrb[0].mxu0
      %1949 = vmatprep.mubr.f32.mxu0 0.0
      %1950 = vmatmul.mubr.f32.gmra.mrb[0].mxu0 %v1655
      %v1951 = vpop.f32.mrb[0].mxu0
      %v1952 = vadd.f32 0.0, %v1951
      %v1953 = vpop.f32.mrb[0].mxu0
      %1954 = vmatprep.mubr.f32.mxu0 0.0
      %1955 = vmatmul.mubr.f32.gmra.mrb[0].mxu0 %v1658
      %v1956 = vpop.f32.mrb[0].mxu0
      %v1957 = vadd.f32 0.0, %v1956
      %v1958 = vpop.f32.mrb[0].mxu0
      %1959 = vmatprep.mubr.f32.mxu0 0.0
      %1960 = vmatmul.mubr.f32.gmra.mrb[0].mxu0 %v1661
      %v1961 = vpop.f32.mrb[0].mxu0
      %v1962 = vadd.f32 0.0, %v1961
      %v1963 = vpop.f32.mrb[0].mxu0
      %1964 = vmatprep.mubr.f32.mxu0 0.0
      %1965 = vmatmul.mubr.f32.gmra.mrb[0].mxu0 %v1664
      %v1966 = vpop.f32.mrb[0].mxu0
      %v1967 = vadd.f32 0.0, %v1966
      %v1968 = vpop.f32.mrb[0].mxu0
      %1969 = vmatprep.mubr.f32.mxu0 0.0
      %1970 = vmatmul.mubr.f32.gmra.mrb[0].mxu0 %v1667
      %v1971 = vpop.f32.mrb[0].mxu0
      %v1972 = vadd.f32 0.0, %v1971
      %v1973 = vpop.f32.mrb[0].mxu0
      %1974 = vmatprep.mubr.f32.mxu0 0.0
      %1975 = vmatmul.mubr.f32.gmra.mrb[0].mxu0 %v1670
      %v1976 = vpop.f32.mrb[0].mxu0
      %v1977 = vadd.f32 0.0, %v1976
      %v1978 = vpop.f32.mrb[0].mxu0
      %1979 = vmatprep.mubr.f32.mxu0 0.0
      %1980 = vmatmul.mubr.f32.gmra.mrb[0].mxu0 %v1673
      %v1981 = vpop.f32.mrb[0].mxu0
      %v1982 = vadd.f32 0.0, %v1981
      %v1983 = vpop.f32.mrb[0].mxu0
      %1984 = vmatprep.mubr.f32.mxu0 0.0
      %1985 = vmatmul.mubr.f32.gmra.mrb[0].mxu0 %v1676
      %v1986 = vpop.f32.mrb[0].mxu0
      %v1987 = vadd.f32 0.0, %v1986
      %v1988 = vpop.f32.mrb[0].mxu0
      %1989 = vmatprep.mubr.f32.mxu0 0.0
      %1990 = vmatmul.mubr.f32.gmra.mrb[0].mxu0 %v1679
      %v1991 = vpop.f32.mrb[0].mxu0
      %v1992 = vadd.f32 0.0, %v1991
      %v1993 = vpop.f32.mrb[0].mxu0
      %1994 = vmatprep.mubr.f32.mxu0 0.0
      %1995 = vmatmul.mubr.f32.gmra.mrb[0].mxu0 %v1682
      %v1996 = vpop.f32.mrb[0].mxu0
      %v1997 = vadd.f32 0.0, %v1996
      %v1998 = vpop.f32.mrb[0].mxu0
      %1999 = vmatprep.mubr.f32.mxu0 0.0
      %2000 = vmatmul.mubr.f32.gmra.mrb[0].mxu0 %v1685
      %v2001 = vpop.f32.mrb[0].mxu0
      %v2002 = vadd.f32 0.0, %v2001
      %v2003 = vpop.f32.mrb[0].mxu0
      %2004 = vmatprep.mubr.f32.mxu0 0.0
      %2005 = vmatmul.mubr.f32.gmra.mrb[0].mxu0 %v1688
      %v2006 = vpop.f32.mrb[0].mxu0
      %v2007 = vadd.f32 0.0, %v2006
      %v2008 = vpop.f32.mrb[0].mxu0
      %2009 = vmatprep.mubr.f32.mxu0 0.0
      %2010 = vmatmul.mubr.f32.gmra.mrb[0].mxu0 %v1691
      %v2011 = vpop.f32.mrb[0].mxu0
      %v2012 = vadd.f32 0.0, %v2011
      %v2013 = vpop.f32.mrb[0].mxu0
      %2014 = vmatprep.mubr.f32.mxu0 0.0
      %2015 = vmatmul.mubr.f32.gmra.mrb[0].mxu0 %v1694
      %v2016 = vpop.f32.mrb[0].mxu0
      %v2017 = vadd.f32 0.0, %v2016
      %v2018 = vpop.f32.mrb[0].mxu0
      %2019 = vmatprep.mubr.f32.mxu0 0.0
      %2020 = vmatmul.mubr.f32.gmra.mrb[0].mxu0 %v1697
      %v2021 = vpop.f32.mrb[0].mxu0
      %v2022 = vadd.f32 0.0, %v2021
      %v2023 = vpop.f32.mrb[0].mxu0
      %2024 = vmatprep.mubr.f32.mxu0 0.0
      %2025 = vmatmul.mubr.f32.gmra.mrb[0].mxu0 %v1700
      %v2026 = vpop.f32.mrb[0].mxu0
      %v2027 = vadd.f32 0.0, %v2026
      %v2028 = vpop.f32.mrb[0].mxu0
      %2029 = vmatprep.mubr.f32.mxu0 0.0
      %2030 = vmatmul.mubr.f32.gmra.mrb[0].mxu0 %v1703
      %v2031 = vpop.f32.mrb[0].mxu0
      %v2032 = vadd.f32 0.0, %v2031
      %v2033 = vpop.f32.mrb[0].mxu0
      %2034 = vmatprep.mubr.f32.mxu0 0.0
      %2035 = vmatmul.mubr.f32.gmra.mrb[0].mxu0 %v1706
      %v2036 = vpop.f32.mrb[0].mxu0
      %v2037 = vadd.f32 0.0, %v2036
      %v2038 = vpop.f32.mrb[0].mxu0
      %2039 = vmatprep.mubr.f32.mxu0 0.0
      %2040 = vmatmul.mubr.f32.gmra.mrb[0].mxu0 %v1709
      %v2041 = vpop.f32.mrb[0].mxu0
      %v2042 = vadd.f32 0.0, %v2041
      %v2043 = vpop.f32.mrb[0].mxu0
      %2044 = vmatprep.mubr.f32.mxu0 0.0
      %2045 = vmatmul.mubr.f32.gmra.mrb[0].mxu0 %v1712
      %v2046 = vpop.f32.mrb[0].mxu0
      %v2047 = vadd.f32 0.0, %v2046
      %v2048 = vpop.f32.mrb[0].mxu0
      %2049 = vmatprep.mubr.f32.mxu0 0.0
      %2050 = vmatmul.mubr.f32.gmra.mrb[0].mxu0 %v1715
      %v2051 = vpop.f32.mrb[0].mxu0
      %v2052 = vadd.f32 0.0, %v2051
      %v2053 = vpop.f32.mrb[0].mxu0
      %2054 = vdwg.mxu0
      %v2055 = vld [vmem:[#allocation3] sm:$0xff]
      %v2056 = vld [vmem:[#allocation3 + $0x8] sm:$0xff]
      %v2057 = vld [vmem:[#allocation3 + $0x10] sm:$0xff]
      %v2058 = vld [vmem:[#allocation3 + $0x18] sm:$0xff]
      %v2059 = vld [vmem:[#allocation3 + $0x20] sm:$0xff]
      %v2060 = vld [vmem:[#allocation3 + $0x28] sm:$0xff]
      %v2061 = vld [vmem:[#allocation3 + $0x30] sm:$0xff]
      %v2062 = vld [vmem:[#allocation3 + $0x38] sm:$0xff]
      %v2063 = vld [vmem:[#allocation3 + $0x40] sm:$0xff]
      %v2064 = vld [vmem:[#allocation3 + $0x48] sm:$0xff]
      %v2065 = vld [vmem:[#allocation3 + $0x50] sm:$0xff]
      %v2066 = vld [vmem:[#allocation3 + $0x58] sm:$0xff]
      %v2067 = vld [vmem:[#allocation3 + $0x60] sm:$0xff]
      %v2068 = vld [vmem:[#allocation3 + $0x68] sm:$0xff]
      %v2069 = vld [vmem:[#allocation3 + $0x70] sm:$0xff]
      %v2070 = vld [vmem:[#allocation3 + $0x78] sm:$0xff]
      %v2071 = vld [vmem:[#allocation3 + $0x80] sm:$0xff]
      %v2072 = vld [vmem:[#allocation3 + $0x88] sm:$0xff]
      %v2073 = vld [vmem:[#allocation3 + $0x90] sm:$0xff]
      %v2074 = vld [vmem:[#allocation3 + $0x98] sm:$0xff]
      %v2075 = vld [vmem:[#allocation3 + $0xa0] sm:$0xff]
      %v2076 = vld [vmem:[#allocation3 + $0xa8] sm:$0xff]
      %v2077 = vld [vmem:[#allocation3 + $0xb0] sm:$0xff]
      %v2078 = vld [vmem:[#allocation3 + $0xb8] sm:$0xff]
      %v2079 = vld [vmem:[#allocation3 + $0xc0] sm:$0xff]
      %v2080 = vld [vmem:[#allocation3 + $0xc8] sm:$0xff]
      %v2081 = vld [vmem:[#allocation3 + $0xd0] sm:$0xff]
      %v2082 = vld [vmem:[#allocation3 + $0xd8] sm:$0xff]
      %v2083 = vld [vmem:[#allocation3 + $0xe0] sm:$0xff]
      %v2084 = vld [vmem:[#allocation3 + $0xe8] sm:$0xff]
      %v2085 = vld [vmem:[#allocation3 + $0xf0] sm:$0xff]
      %v2086 = vld [vmem:[#allocation3 + $0xf8] sm:$0xff]
      %v2087 = vld [vmem:[#allocation3 + $0x100] sm:$0xff]
      %v2088 = vld [vmem:[#allocation3 + $0x108] sm:$0xff]
      %v2089 = vld [vmem:[#allocation3 + $0x110] sm:$0xff]
      %v2090 = vld [vmem:[#allocation3 + $0x118] sm:$0xff]
      %v2091 = vld [vmem:[#allocation3 + $0x120] sm:$0xff]
      %v2092 = vld [vmem:[#allocation3 + $0x128] sm:$0xff]
      %v2093 = vld [vmem:[#allocation3 + $0x130] sm:$0xff]
      %v2094 = vld [vmem:[#allocation3 + $0x138] sm:$0xff]
      %v2095 = vld [vmem:[#allocation3 + $0x140] sm:$0xff]
      %v2096 = vld [vmem:[#allocation3 + $0x148] sm:$0xff]
      %v2097 = vld [vmem:[#allocation3 + $0x150] sm:$0xff]
      %v2098 = vld [vmem:[#allocation3 + $0x158] sm:$0xff]
      %v2099 = vld [vmem:[#allocation3 + $0x160] sm:$0xff]
      %v2100 = vld [vmem:[#allocation3 + $0x168] sm:$0xff]
      %v2101 = vld [vmem:[#allocation3 + $0x170] sm:$0xff]
      %v2102 = vld [vmem:[#allocation3 + $0x178] sm:$0xff]
      %v2103 = vld [vmem:[#allocation3 + $0x180] sm:$0xff]
      %v2104 = vld [vmem:[#allocation3 + $0x188] sm:$0xff]
      %v2105 = vld [vmem:[#allocation3 + $0x190] sm:$0xff]
      %v2106 = vld [vmem:[#allocation3 + $0x198] sm:$0xff]
      %v2107 = vld [vmem:[#allocation3 + $0x1a0] sm:$0xff]
      %v2108 = vld [vmem:[#allocation3 + $0x1a8] sm:$0xff]
      %v2109 = vadd.f32 %v2055, %v1787
      %v2110 = vadd.f32 %v2056, %v1792
      %v2111 = vadd.f32 %v2057, %v1797
      %v2112 = vadd.f32 %v2058, %v1802
      %v2113 = vadd.f32 %v2059, %v1807
      %v2114 = vadd.f32 %v2060, %v1812
      %v2115 = vadd.f32 %v2061, %v1817
      %v2116 = vadd.f32 %v2062, %v1822
      %v2117 = vadd.f32 %v2063, %v1827
      %v2118 = vadd.f32 %v2064, %v1832
      %v2119 = vadd.f32 %v2065, %v1837
      %v2120 = vadd.f32 %v2066, %v1842
      %v2121 = vadd.f32 %v2067, %v1847
      %v2122 = vadd.f32 %v2068, %v1852
      %v2123 = vadd.f32 %v2069, %v1857
      %v2124 = vadd.f32 %v2070, %v1862
      %v2125 = vadd.f32 %v2071, %v1867
      %v2126 = vadd.f32 %v2072, %v1872
      %v2127 = vadd.f32 %v2073, %v1877
      %v2128 = vadd.f32 %v2074, %v1882
      %v2129 = vadd.f32 %v2075, %v1887
      %v2130 = vadd.f32 %v2076, %v1892
      %v2131 = vadd.f32 %v2077, %v1897
      %v2132 = vadd.f32 %v2078, %v1902
      %v2133 = vadd.f32 %v2079, %v1907
      %v2134 = vadd.f32 %v2080, %v1912
      %v2135 = vadd.f32 %v2081, %v1917
      %v2136 = vadd.f32 %v2082, %v1922
      %v2137 = vadd.f32 %v2083, %v1927
      %v2138 = vadd.f32 %v2084, %v1932
      %v2139 = vadd.f32 %v2085, %v1937
      %v2140 = vadd.f32 %v2086, %v1942
      %v2141 = vadd.f32 %v2087, %v1947
      %v2142 = vadd.f32 %v2088, %v1952
      %v2143 = vadd.f32 %v2089, %v1957
      %v2144 = vadd.f32 %v2090, %v1962
      %v2145 = vadd.f32 %v2091, %v1967
      %v2146 = vadd.f32 %v2092, %v1972
      %v2147 = vadd.f32 %v2093, %v1977
      %v2148 = vadd.f32 %v2094, %v1982
      %v2149 = vadd.f32 %v2095, %v1987
      %v2150 = vadd.f32 %v2096, %v1992
      %v2151 = vadd.f32 %v2097, %v1997
      %v2152 = vadd.f32 %v2098, %v2002
      %v2153 = vadd.f32 %v2099, %v2007
      %v2154 = vadd.f32 %v2100, %v2012
      %v2155 = vadd.f32 %v2101, %v2017
      %v2156 = vadd.f32 %v2102, %v2022
      %v2157 = vadd.f32 %v2103, %v2027
      %v2158 = vadd.f32 %v2104, %v2032
      %v2159 = vadd.f32 %v2105, %v2037
      %v2160 = vadd.f32 %v2106, %v2042
      %v2161 = vadd.f32 %v2107, %v2047
      %v2162 = vadd.f32 %v2108, %v2052
      %2163 = vst.msk [vmem:[#allocation3] sm:$0xff] %vm728, %v2109
      %2164 = vst.msk [vmem:[#allocation3 + $0x8] sm:$0xff] %vm728, %v2110
      %2165 = vst.msk [vmem:[#allocation3 + $0x10] sm:$0xff] %vm728, %v2111
      %2166 = vst.msk [vmem:[#allocation3 + $0x18] sm:$0xff] %vm728, %v2112
      %2167 = vst.msk [vmem:[#allocation3 + $0x20] sm:$0xff] %vm728, %v2113
      %2168 = vst.msk [vmem:[#allocation3 + $0x28] sm:$0xff] %vm728, %v2114
      %2169 = vst.msk [vmem:[#allocation3 + $0x30] sm:$0xff] %vm728, %v2115
      %2170 = vst.msk [vmem:[#allocation3 + $0x38] sm:$0xff] %vm728, %v2116
      %2171 = vst.msk [vmem:[#allocation3 + $0x40] sm:$0xff] %vm728, %v2117
      %2172 = vst.msk [vmem:[#allocation3 + $0x48] sm:$0xff] %vm728, %v2118
      %2173 = vst.msk [vmem:[#allocation3 + $0x50] sm:$0xff] %vm728, %v2119
      %2174 = vst.msk [vmem:[#allocation3 + $0x58] sm:$0xff] %vm728, %v2120
      %2175 = vst.msk [vmem:[#allocation3 + $0x60] sm:$0xff] %vm728, %v2121
      %2176 = vst.msk [vmem:[#allocation3 + $0x68] sm:$0xff] %vm728, %v2122
      %2177 = vst.msk [vmem:[#allocation3 + $0x70] sm:$0xff] %vm728, %v2123
      %2178 = vst.msk [vmem:[#allocation3 + $0x78] sm:$0xff] %vm728, %v2124
      %2179 = vst.msk [vmem:[#allocation3 + $0x80] sm:$0xff] %vm728, %v2125
      %2180 = vst.msk [vmem:[#allocation3 + $0x88] sm:$0xff] %vm728, %v2126
      %2181 = vst.msk [vmem:[#allocation3 + $0x90] sm:$0xff] %vm728, %v2127
      %2182 = vst.msk [vmem:[#allocation3 + $0x98] sm:$0xff] %vm728, %v2128
      %2183 = vst.msk [vmem:[#allocation3 + $0xa0] sm:$0xff] %vm728, %v2129
      %2184 = vst.msk [vmem:[#allocation3 + $0xa8] sm:$0xff] %vm728, %v2130
      %2185 = vst.msk [vmem:[#allocation3 + $0xb0] sm:$0xff] %vm728, %v2131
      %2186 = vst.msk [vmem:[#allocation3 + $0xb8] sm:$0xff] %vm728, %v2132
      %2187 = vst.msk [vmem:[#allocation3 + $0xc0] sm:$0xff] %vm728, %v2133
      %2188 = vst.msk [vmem:[#allocation3 + $0xc8] sm:$0xff] %vm728, %v2134
      %2189 = vst.msk [vmem:[#allocation3 + $0xd0] sm:$0xff] %vm728, %v2135
      %2190 = vst.msk [vmem:[#allocation3 + $0xd8] sm:$0xff] %vm728, %v2136
      %2191 = vst.msk [vmem:[#allocation3 + $0xe0] sm:$0xff] %vm728, %v2137
      %2192 = vst.msk [vmem:[#allocation3 + $0xe8] sm:$0xff] %vm728, %v2138
      %2193 = vst.msk [vmem:[#allocation3 + $0xf0] sm:$0xff] %vm728, %v2139
      %2194 = vst.msk [vmem:[#allocation3 + $0xf8] sm:$0xff] %vm728, %v2140
      %2195 = vst.msk [vmem:[#allocation3 + $0x100] sm:$0xff] %vm728, %v2141
      %2196 = vst.msk [vmem:[#allocation3 + $0x108] sm:$0xff] %vm728, %v2142
      %2197 = vst.msk [vmem:[#allocation3 + $0x110] sm:$0xff] %vm728, %v2143
      %2198 = vst.msk [vmem:[#allocation3 + $0x118] sm:$0xff] %vm728, %v2144
      %2199 = vst.msk [vmem:[#allocation3 + $0x120] sm:$0xff] %vm728, %v2145
      %2200 = vst.msk [vmem:[#allocation3 + $0x128] sm:$0xff] %vm728, %v2146
      %2201 = vst.msk [vmem:[#allocation3 + $0x130] sm:$0xff] %vm728, %v2147
      %2202 = vst.msk [vmem:[#allocation3 + $0x138] sm:$0xff] %vm728, %v2148
      %2203 = vst.msk [vmem:[#allocation3 + $0x140] sm:$0xff] %vm728, %v2149
      %2204 = vst.msk [vmem:[#allocation3 + $0x148] sm:$0xff] %vm728, %v2150
      %2205 = vst.msk [vmem:[#allocation3 + $0x150] sm:$0xff] %vm728, %v2151
      %2206 = vst.msk [vmem:[#allocation3 + $0x158] sm:$0xff] %vm728, %v2152
      %2207 = vst.msk [vmem:[#allocation3 + $0x160] sm:$0xff] %vm728, %v2153
      %2208 = vst.msk [vmem:[#allocation3 + $0x168] sm:$0xff] %vm728, %v2154
      %2209 = vst.msk [vmem:[#allocation3 + $0x170] sm:$0xff] %vm728, %v2155
      %2210 = vst.msk [vmem:[#allocation3 + $0x178] sm:$0xff] %vm728, %v2156
      %2211 = vst.msk [vmem:[#allocation3 + $0x180] sm:$0xff] %vm728, %v2157
      %2212 = vst.msk [vmem:[#allocation3 + $0x188] sm:$0xff] %vm728, %v2158
      %2213 = vst.msk [vmem:[#allocation3 + $0x190] sm:$0xff] %vm728, %v2159
      %2214 = vst.msk [vmem:[#allocation3 + $0x198] sm:$0xff] %vm728, %v2160
      %2215 = vst.msk [vmem:[#allocation3 + $0x1a0] sm:$0xff] %vm728, %v2161
      %2216 = vst.msk [vmem:[#allocation3 + $0x1a8] sm:$0xff] %vm728, %v2162
      %s2217 = scalar_lea.vmem %s165, 32
      %v2218 = vld [vmem:[%s2217] sm:$0xff]
      %v2219 = vld [vmem:[%s2217 + $0x8] sm:$0xff]
      %v2220 = vld [vmem:[%s2217 + $0x10] sm:$0xff]
      %v2221 = vld [vmem:[%s2217 + $0x20] sm:$0xff]
      %v2222 = vld [vmem:[%s2217 + $0x28] sm:$0xff]
      %v2223 = vld [vmem:[%s2217 + $0x30] sm:$0xff]
      %v2224 = vld [vmem:[%s2217 + $0x40] sm:$0xff]
      %v2225 = vld [vmem:[%s2217 + $0x48] sm:$0xff]
      %v2226 = vld [vmem:[%s2217 + $0x50] sm:$0xff]
      %v2227 = vld [vmem:[%s2217 + $0x60] sm:$0xff]
      %v2228 = vld [vmem:[%s2217 + $0x68] sm:$0xff]
      %v2229 = vld [vmem:[%s2217 + $0x70] sm:$0xff]
      %v2230 = vld [vmem:[%s2217 + $0x80] sm:$0xff]
      %v2231 = vld [vmem:[%s2217 + $0x88] sm:$0xff]
      %v2232 = vld [vmem:[%s2217 + $0x90] sm:$0xff]
      %v2233 = vld [vmem:[%s2217 + $0xa0] sm:$0xff]
      %v2234 = vld [vmem:[%s2217 + $0xa8] sm:$0xff]
      %v2235 = vld [vmem:[%s2217 + $0xb0] sm:$0xff]
      %v2236 = vld [vmem:[%s2217 + $0xc0] sm:$0xff]
      %v2237 = vld [vmem:[%s2217 + $0xc8] sm:$0xff]
      %v2238 = vld [vmem:[%s2217 + $0xd0] sm:$0xff]
      %v2239 = vld [vmem:[%s2217 + $0xe0] sm:$0xff]
      %v2240 = vld [vmem:[%s2217 + $0xe8] sm:$0xff]
      %v2241 = vld [vmem:[%s2217 + $0xf0] sm:$0xff]
      %v2242 = vld [vmem:[%s2217 + $0x100] sm:$0xff]
      %v2243 = vld [vmem:[%s2217 + $0x108] sm:$0xff]
      %v2244 = vld [vmem:[%s2217 + $0x110] sm:$0xff]
      %v2245 = vld [vmem:[%s2217 + $0x120] sm:$0xff]
      %v2246 = vld [vmem:[%s2217 + $0x128] sm:$0xff]
      %v2247 = vld [vmem:[%s2217 + $0x130] sm:$0xff]
      %v2248 = vld [vmem:[%s2217 + $0x140] sm:$0xff]
      %v2249 = vld [vmem:[%s2217 + $0x148] sm:$0xff]
      %v2250 = vld [vmem:[%s2217 + $0x150] sm:$0xff]
      %v2251 = vld [vmem:[%s2217 + $0x160] sm:$0xff]
      %v2252 = vld [vmem:[%s2217 + $0x168] sm:$0xff]
      %v2253 = vld [vmem:[%s2217 + $0x170] sm:$0xff]
      %v2254 = vld [vmem:[%s2217 + $0x180] sm:$0xff]
      %v2255 = vld [vmem:[%s2217 + $0x188] sm:$0xff]
      %v2256 = vld [vmem:[%s2217 + $0x190] sm:$0xff]
      %v2257 = vld [vmem:[%s2217 + $0x1a0] sm:$0xff]
      %v2258 = vld [vmem:[%s2217 + $0x1a8] sm:$0xff]
      %v2259 = vld [vmem:[%s2217 + $0x1b0] sm:$0xff]
      %v2260 = vld [vmem:[%s2217 + $0x1c0] sm:$0xff]
      %v2261 = vld [vmem:[%s2217 + $0x1c8] sm:$0xff]
      %v2262 = vld [vmem:[%s2217 + $0x1d0] sm:$0xff]
      %v2263 = vld [vmem:[%s2217 + $0x1e0] sm:$0xff]
      %v2264 = vld [vmem:[%s2217 + $0x1e8] sm:$0xff]
      %v2265 = vld [vmem:[%s2217 + $0x1f0] sm:$0xff]
      %v2266 = vld [vmem:[%s2217 + $0x200] sm:$0xff]
      %v2267 = vld [vmem:[%s2217 + $0x208] sm:$0xff]
      %v2268 = vld [vmem:[%s2217 + $0x210] sm:$0xff]
      %v2269 = vld [vmem:[%s2217 + $0x220] sm:$0xff]
      %v2270 = vld [vmem:[%s2217 + $0x228] sm:$0xff]
      %v2271 = vld [vmem:[%s2217 + $0x230] sm:$0xff]
      %v2272 = vld [vmem:[%s1 + $0xc] sm:$0xf]
      %v2274 = vsel %vm226, %v2218, 0
      %v2277 = vsel %vm226, %v2219, 0
      %v2280 = vsel %vm226, %v2220, 0
      %v2283 = vsel %vm226, %v2221, 0
      %v2286 = vsel %vm226, %v2222, 0
      %v2289 = vsel %vm226, %v2223, 0
      %v2292 = vsel %vm226, %v2224, 0
      %v2295 = vsel %vm226, %v2225, 0
      %v2298 = vsel %vm226, %v2226, 0
      %v2301 = vsel %vm226, %v2227, 0
      %v2304 = vsel %vm226, %v2228, 0
      %v2307 = vsel %vm226, %v2229, 0
      %v2310 = vsel %vm226, %v2230, 0
      %v2313 = vsel %vm226, %v2231, 0
      %v2316 = vsel %vm226, %v2232, 0
      %v2319 = vsel %vm226, %v2233, 0
      %v2322 = vsel %vm226, %v2234, 0
      %v2325 = vsel %vm226, %v2235, 0
      %v2328 = vsel %vm226, %v2236, 0
      %v2331 = vsel %vm226, %v2237, 0
      %v2334 = vsel %vm226, %v2238, 0
      %v2337 = vsel %vm226, %v2239, 0
      %v2340 = vsel %vm226, %v2240, 0
      %v2343 = vsel %vm226, %v2241, 0
      %v2346 = vsel %vm226, %v2242, 0
      %v2349 = vsel %vm226, %v2243, 0
      %v2352 = vsel %vm226, %v2244, 0
      %v2355 = vsel %vm226, %v2245, 0
      %v2358 = vsel %vm226, %v2246, 0
      %v2361 = vsel %vm226, %v2247, 0
      %v2364 = vsel %vm226, %v2248, 0
      %v2367 = vsel %vm226, %v2249, 0
      %v2370 = vsel %vm226, %v2250, 0
      %v2373 = vsel %vm226, %v2251, 0
      %v2376 = vsel %vm226, %v2252, 0
      %v2379 = vsel %vm226, %v2253, 0
      %v2382 = vsel %vm226, %v2254, 0
      %v2385 = vsel %vm226, %v2255, 0
      %v2388 = vsel %vm226, %v2256, 0
      %v2391 = vsel %vm226, %v2257, 0
      %v2394 = vsel %vm226, %v2258, 0
      %v2397 = vsel %vm226, %v2259, 0
      %v2400 = vsel %vm226, %v2260, 0
      %v2403 = vsel %vm226, %v2261, 0
      %v2406 = vsel %vm226, %v2262, 0
      %v2409 = vsel %vm226, %v2263, 0
      %v2412 = vsel %vm226, %v2264, 0
      %v2415 = vsel %vm226, %v2265, 0
      %v2418 = vsel %vm226, %v2266, 0
      %v2421 = vsel %vm226, %v2267, 0
      %v2424 = vsel %vm226, %v2268, 0
      %v2427 = vsel %vm226, %v2269, 0
      %v2430 = vsel %vm226, %v2270, 0
      %v2433 = vsel %vm226, %v2271, 0
      %v2436 = vsel %vm389, %v2272, 0
      %2438 = vmatprep.subr.mxu0 0.0
      %2439 = vmatpush1.msra.mxu0 %v2436
      %2440 = vmatprep.subr.mxu0 0.0
      %2441 = vmatpush1.msra.mxu0 0.0
      %2442 = vmatprep.subr.mxu0 0.0
      %2443 = vmatpush1.msra.mxu0 0.0
      %2444 = vmatprep.subr.mxu0 0.0
      %2445 = vmatpush1.msra.mxu0 0.0
      %2446 = vmatprep.subr.mxu0 0.0
      %2447 = vmatpush1.msra.mxu0 0.0
      %2448 = vmatprep.subr.mxu0 0.0
      %2449 = vmatpush1.msra.mxu0 0.0
      %2450 = vmatprep.subr.mxu0 0.0
      %2451 = vmatpush1.msra.mxu0 0.0
      %2452 = vmatprep.subr.mxu0 0.0
      %2453 = vmatpush1.msra.mxu0 0.0
      %2454 = vmatprep.subr.mxu0 0.0
      %2455 = vmatpush1.msra.mxu0 0.0
      %2456 = vmatprep.subr.mxu0 0.0
      %2457 = vmatpush1.msra.mxu0 0.0
      %2458 = vmatprep.subr.mxu0 0.0
      %2459 = vmatpush1.msra.mxu0 0.0
      %2460 = vmatprep.subr.mxu0 0.0
      %2461 = vmatpush1.msra.mxu0 0.0
      %2462 = vmatprep.subr.mxu0 0.0
      %2463 = vmatpush1.msra.mxu0 0.0
      %2464 = vmatprep.subr.mxu0 0.0
      %2465 = vmatpush1.msra.mxu0 0.0
      %2466 = vmatprep.subr.mxu0 0.0
      %2467 = vmatpush1.msra.mxu0 0.0
      %2468 = vmatprep.subr.mxu0 0.0
      %2469 = vmatpush1.msra.mxu0 0.0
      %2470 = vmatprep.subr.mxu0 0.0
      %2471 = vmatpush1.msra.mxu0 0.0
      %2472 = vmatprep.subr.mxu0 0.0
      %2473 = vmatpush1.msra.mxu0 0.0
      %2474 = vmatprep.subr.mxu0 0.0
      %2475 = vmatpush1.msra.mxu0 0.0
      %2476 = vmatprep.subr.mxu0 0.0
      %2477 = vmatpush1.msra.mxu0 0.0
      %2478 = vmatprep.subr.mxu0 0.0
      %2479 = vmatpush1.msra.mxu0 0.0
      %2480 = vmatprep.subr.mxu0 0.0
      %2481 = vmatpush1.msra.mxu0 0.0
      %2482 = vmatprep.subr.mxu0 0.0
      %2483 = vmatpush1.msra.mxu0 0.0
      %2484 = vmatprep.subr.mxu0 0.0
      %2485 = vmatpush1.msra.mxu0 0.0
      %2486 = vmatprep.subr.mxu0 0.0
      %2487 = vmatpush1.msra.mxu0 0.0
      %2488 = vmatprep.subr.mxu0 0.0
      %2489 = vmatpush1.msra.mxu0 0.0
      %2490 = vmatprep.subr.mxu0 0.0
      %2491 = vmatpush1.msra.mxu0 0.0
      %2492 = vmatprep.subr.mxu0 0.0
      %2493 = vmatpush1.msra.mxu0 0.0
      %2494 = vmatprep.subr.mxu0 0.0
      %2495 = vmatpush1.msra.mxu0 0.0
      %2496 = vmatprep.subr.mxu0 0.0
      %2497 = vmatpush1.msra.mxu0 0.0
      %2498 = vmatprep.subr.mxu0 0.0
      %2499 = vmatpush1.msra.mxu0 0.0
      %2500 = vmatprep.subr.mxu0 0.0
      %2501 = vmatpush1.msra.mxu0 0.0
      %2502 = vmatprep.mubr.f32.mxu0 0.0
      %2503 = vmatmul.mubr.f32.gmra.mrb[0].mxu0 %v2274
      %v2504 = vpop.f32.mrb[0].mxu0
      %v2505 = vadd.f32 0.0, %v2504
      %v2506 = vpop.f32.mrb[0].mxu0
      %2507 = vmatprep.mubr.f32.mxu0 0.0
      %2508 = vmatmul.mubr.f32.gmra.mrb[0].mxu0 %v2277
      %v2509 = vpop.f32.mrb[0].mxu0
      %v2510 = vadd.f32 0.0, %v2509
      %v2511 = vpop.f32.mrb[0].mxu0
      %2512 = vmatprep.mubr.f32.mxu0 0.0
      %2513 = vmatmul.mubr.f32.gmra.mrb[0].mxu0 %v2280
      %v2514 = vpop.f32.mrb[0].mxu0
      %v2515 = vadd.f32 0.0, %v2514
      %v2516 = vpop.f32.mrb[0].mxu0
      %2517 = vmatprep.mubr.f32.mxu0 0.0
      %2518 = vmatmul.mubr.f32.gmra.mrb[0].mxu0 %v2283
      %v2519 = vpop.f32.mrb[0].mxu0
      %v2520 = vadd.f32 0.0, %v2519
      %v2521 = vpop.f32.mrb[0].mxu0
      %2522 = vmatprep.mubr.f32.mxu0 0.0
      %2523 = vmatmul.mubr.f32.gmra.mrb[0].mxu0 %v2286
      %v2524 = vpop.f32.mrb[0].mxu0
      %v2525 = vadd.f32 0.0, %v2524
      %v2526 = vpop.f32.mrb[0].mxu0
      %2527 = vmatprep.mubr.f32.mxu0 0.0
      %2528 = vmatmul.mubr.f32.gmra.mrb[0].mxu0 %v2289
      %v2529 = vpop.f32.mrb[0].mxu0
      %v2530 = vadd.f32 0.0, %v2529
      %v2531 = vpop.f32.mrb[0].mxu0
      %2532 = vmatprep.mubr.f32.mxu0 0.0
      %2533 = vmatmul.mubr.f32.gmra.mrb[0].mxu0 %v2292
      %v2534 = vpop.f32.mrb[0].mxu0
      %v2535 = vadd.f32 0.0, %v2534
      %v2536 = vpop.f32.mrb[0].mxu0
      %2537 = vmatprep.mubr.f32.mxu0 0.0
      %2538 = vmatmul.mubr.f32.gmra.mrb[0].mxu0 %v2295
      %v2539 = vpop.f32.mrb[0].mxu0
      %v2540 = vadd.f32 0.0, %v2539
      %v2541 = vpop.f32.mrb[0].mxu0
      %2542 = vmatprep.mubr.f32.mxu0 0.0
      %2543 = vmatmul.mubr.f32.gmra.mrb[0].mxu0 %v2298
      %v2544 = vpop.f32.mrb[0].mxu0
      %v2545 = vadd.f32 0.0, %v2544
      %v2546 = vpop.f32.mrb[0].mxu0
      %2547 = vmatprep.mubr.f32.mxu0 0.0
      %2548 = vmatmul.mubr.f32.gmra.mrb[0].mxu0 %v2301
      %v2549 = vpop.f32.mrb[0].mxu0
      %v2550 = vadd.f32 0.0, %v2549
      %v2551 = vpop.f32.mrb[0].mxu0
      %2552 = vmatprep.mubr.f32.mxu0 0.0
      %2553 = vmatmul.mubr.f32.gmra.mrb[0].mxu0 %v2304
      %v2554 = vpop.f32.mrb[0].mxu0
      %v2555 = vadd.f32 0.0, %v2554
      %v2556 = vpop.f32.mrb[0].mxu0
      %2557 = vmatprep.mubr.f32.mxu0 0.0
      %2558 = vmatmul.mubr.f32.gmra.mrb[0].mxu0 %v2307
      %v2559 = vpop.f32.mrb[0].mxu0
      %v2560 = vadd.f32 0.0, %v2559
      %v2561 = vpop.f32.mrb[0].mxu0
      %2562 = vmatprep.mubr.f32.mxu0 0.0
      %2563 = vmatmul.mubr.f32.gmra.mrb[0].mxu0 %v2310
      %v2564 = vpop.f32.mrb[0].mxu0
      %v2565 = vadd.f32 0.0, %v2564
      %v2566 = vpop.f32.mrb[0].mxu0
      %2567 = vmatprep.mubr.f32.mxu0 0.0
      %2568 = vmatmul.mubr.f32.gmra.mrb[0].mxu0 %v2313
      %v2569 = vpop.f32.mrb[0].mxu0
      %v2570 = vadd.f32 0.0, %v2569
      %v2571 = vpop.f32.mrb[0].mxu0
      %2572 = vmatprep.mubr.f32.mxu0 0.0
      %2573 = vmatmul.mubr.f32.gmra.mrb[0].mxu0 %v2316
      %v2574 = vpop.f32.mrb[0].mxu0
      %v2575 = vadd.f32 0.0, %v2574
      %v2576 = vpop.f32.mrb[0].mxu0
      %2577 = vmatprep.mubr.f32.mxu0 0.0
      %2578 = vmatmul.mubr.f32.gmra.mrb[0].mxu0 %v2319
      %v2579 = vpop.f32.mrb[0].mxu0
      %v2580 = vadd.f32 0.0, %v2579
      %v2581 = vpop.f32.mrb[0].mxu0
      %2582 = vmatprep.mubr.f32.mxu0 0.0
      %2583 = vmatmul.mubr.f32.gmra.mrb[0].mxu0 %v2322
      %v2584 = vpop.f32.mrb[0].mxu0
      %v2585 = vadd.f32 0.0, %v2584
      %v2586 = vpop.f32.mrb[0].mxu0
      %2587 = vmatprep.mubr.f32.mxu0 0.0
      %2588 = vmatmul.mubr.f32.gmra.mrb[0].mxu0 %v2325
      %v2589 = vpop.f32.mrb[0].mxu0
      %v2590 = vadd.f32 0.0, %v2589
      %v2591 = vpop.f32.mrb[0].mxu0
      %2592 = vmatprep.mubr.f32.mxu0 0.0
      %2593 = vmatmul.mubr.f32.gmra.mrb[0].mxu0 %v2328
      %v2594 = vpop.f32.mrb[0].mxu0
      %v2595 = vadd.f32 0.0, %v2594
      %v2596 = vpop.f32.mrb[0].mxu0
      %2597 = vmatprep.mubr.f32.mxu0 0.0
      %2598 = vmatmul.mubr.f32.gmra.mrb[0].mxu0 %v2331
      %v2599 = vpop.f32.mrb[0].mxu0
      %v2600 = vadd.f32 0.0, %v2599
      %v2601 = vpop.f32.mrb[0].mxu0
      %2602 = vmatprep.mubr.f32.mxu0 0.0
      %2603 = vmatmul.mubr.f32.gmra.mrb[0].mxu0 %v2334
      %v2604 = vpop.f32.mrb[0].mxu0
      %v2605 = vadd.f32 0.0, %v2604
      %v2606 = vpop.f32.mrb[0].mxu0
      %2607 = vmatprep.mubr.f32.mxu0 0.0
      %2608 = vmatmul.mubr.f32.gmra.mrb[0].mxu0 %v2337
      %v2609 = vpop.f32.mrb[0].mxu0
      %v2610 = vadd.f32 0.0, %v2609
      %v2611 = vpop.f32.mrb[0].mxu0
      %2612 = vmatprep.mubr.f32.mxu0 0.0
      %2613 = vmatmul.mubr.f32.gmra.mrb[0].mxu0 %v2340
      %v2614 = vpop.f32.mrb[0].mxu0
      %v2615 = vadd.f32 0.0, %v2614
      %v2616 = vpop.f32.mrb[0].mxu0
      %2617 = vmatprep.mubr.f32.mxu0 0.0
      %2618 = vmatmul.mubr.f32.gmra.mrb[0].mxu0 %v2343
      %v2619 = vpop.f32.mrb[0].mxu0
      %v2620 = vadd.f32 0.0, %v2619
      %v2621 = vpop.f32.mrb[0].mxu0
      %2622 = vmatprep.mubr.f32.mxu0 0.0
      %2623 = vmatmul.mubr.f32.gmra.mrb[0].mxu0 %v2346
      %v2624 = vpop.f32.mrb[0].mxu0
      %v2625 = vadd.f32 0.0, %v2624
      %v2626 = vpop.f32.mrb[0].mxu0
      %2627 = vmatprep.mubr.f32.mxu0 0.0
      %2628 = vmatmul.mubr.f32.gmra.mrb[0].mxu0 %v2349
      %v2629 = vpop.f32.mrb[0].mxu0
      %v2630 = vadd.f32 0.0, %v2629
      %v2631 = vpop.f32.mrb[0].mxu0
      %2632 = vmatprep.mubr.f32.mxu0 0.0
      %2633 = vmatmul.mubr.f32.gmra.mrb[0].mxu0 %v2352
      %v2634 = vpop.f32.mrb[0].mxu0
      %v2635 = vadd.f32 0.0, %v2634
      %v2636 = vpop.f32.mrb[0].mxu0
      %2637 = vmatprep.mubr.f32.mxu0 0.0
      %2638 = vmatmul.mubr.f32.gmra.mrb[0].mxu0 %v2355
      %v2639 = vpop.f32.mrb[0].mxu0
      %v2640 = vadd.f32 0.0, %v2639
      %v2641 = vpop.f32.mrb[0].mxu0
      %2642 = vmatprep.mubr.f32.mxu0 0.0
      %2643 = vmatmul.mubr.f32.gmra.mrb[0].mxu0 %v2358
      %v2644 = vpop.f32.mrb[0].mxu0
      %v2645 = vadd.f32 0.0, %v2644
      %v2646 = vpop.f32.mrb[0].mxu0
      %2647 = vmatprep.mubr.f32.mxu0 0.0
      %2648 = vmatmul.mubr.f32.gmra.mrb[0].mxu0 %v2361
      %v2649 = vpop.f32.mrb[0].mxu0
      %v2650 = vadd.f32 0.0, %v2649
      %v2651 = vpop.f32.mrb[0].mxu0
      %2652 = vmatprep.mubr.f32.mxu0 0.0
      %2653 = vmatmul.mubr.f32.gmra.mrb[0].mxu0 %v2364
      %v2654 = vpop.f32.mrb[0].mxu0
      %v2655 = vadd.f32 0.0, %v2654
      %v2656 = vpop.f32.mrb[0].mxu0
      %2657 = vmatprep.mubr.f32.mxu0 0.0
      %2658 = vmatmul.mubr.f32.gmra.mrb[0].mxu0 %v2367
      %v2659 = vpop.f32.mrb[0].mxu0
      %v2660 = vadd.f32 0.0, %v2659
      %v2661 = vpop.f32.mrb[0].mxu0
      %2662 = vmatprep.mubr.f32.mxu0 0.0
      %2663 = vmatmul.mubr.f32.gmra.mrb[0].mxu0 %v2370
      %v2664 = vpop.f32.mrb[0].mxu0
      %v2665 = vadd.f32 0.0, %v2664
      %v2666 = vpop.f32.mrb[0].mxu0
      %2667 = vmatprep.mubr.f32.mxu0 0.0
      %2668 = vmatmul.mubr.f32.gmra.mrb[0].mxu0 %v2373
      %v2669 = vpop.f32.mrb[0].mxu0
      %v2670 = vadd.f32 0.0, %v2669
      %v2671 = vpop.f32.mrb[0].mxu0
      %2672 = vmatprep.mubr.f32.mxu0 0.0
      %2673 = vmatmul.mubr.f32.gmra.mrb[0].mxu0 %v2376
      %v2674 = vpop.f32.mrb[0].mxu0
      %v2675 = vadd.f32 0.0, %v2674
      %v2676 = vpop.f32.mrb[0].mxu0
      %2677 = vmatprep.mubr.f32.mxu0 0.0
      %2678 = vmatmul.mubr.f32.gmra.mrb[0].mxu0 %v2379
      %v2679 = vpop.f32.mrb[0].mxu0
      %v2680 = vadd.f32 0.0, %v2679
      %v2681 = vpop.f32.mrb[0].mxu0
      %2682 = vmatprep.mubr.f32.mxu0 0.0
      %2683 = vmatmul.mubr.f32.gmra.mrb[0].mxu0 %v2382
      %v2684 = vpop.f32.mrb[0].mxu0
      %v2685 = vadd.f32 0.0, %v2684
      %v2686 = vpop.f32.mrb[0].mxu0
      %2687 = vmatprep.mubr.f32.mxu0 0.0
      %2688 = vmatmul.mubr.f32.gmra.mrb[0].mxu0 %v2385
      %v2689 = vpop.f32.mrb[0].mxu0
      %v2690 = vadd.f32 0.0, %v2689
      %v2691 = vpop.f32.mrb[0].mxu0
      %2692 = vmatprep.mubr.f32.mxu0 0.0
      %2693 = vmatmul.mubr.f32.gmra.mrb[0].mxu0 %v2388
      %v2694 = vpop.f32.mrb[0].mxu0
      %v2695 = vadd.f32 0.0, %v2694
      %v2696 = vpop.f32.mrb[0].mxu0
      %2697 = vmatprep.mubr.f32.mxu0 0.0
      %2698 = vmatmul.mubr.f32.gmra.mrb[0].mxu0 %v2391
      %v2699 = vpop.f32.mrb[0].mxu0
      %v2700 = vadd.f32 0.0, %v2699
      %v2701 = vpop.f32.mrb[0].mxu0
      %2702 = vmatprep.mubr.f32.mxu0 0.0
      %2703 = vmatmul.mubr.f32.gmra.mrb[0].mxu0 %v2394
      %v2704 = vpop.f32.mrb[0].mxu0
      %v2705 = vadd.f32 0.0, %v2704
      %v2706 = vpop.f32.mrb[0].mxu0
      %2707 = vmatprep.mubr.f32.mxu0 0.0
      %2708 = vmatmul.mubr.f32.gmra.mrb[0].mxu0 %v2397
      %v2709 = vpop.f32.mrb[0].mxu0
      %v2710 = vadd.f32 0.0, %v2709
      %v2711 = vpop.f32.mrb[0].mxu0
      %2712 = vmatprep.mubr.f32.mxu0 0.0
      %2713 = vmatmul.mubr.f32.gmra.mrb[0].mxu0 %v2400
      %v2714 = vpop.f32.mrb[0].mxu0
      %v2715 = vadd.f32 0.0, %v2714
      %v2716 = vpop.f32.mrb[0].mxu0
      %2717 = vmatprep.mubr.f32.mxu0 0.0
      %2718 = vmatmul.mubr.f32.gmra.mrb[0].mxu0 %v2403
      %v2719 = vpop.f32.mrb[0].mxu0
      %v2720 = vadd.f32 0.0, %v2719
      %v2721 = vpop.f32.mrb[0].mxu0
      %2722 = vmatprep.mubr.f32.mxu0 0.0
      %2723 = vmatmul.mubr.f32.gmra.mrb[0].mxu0 %v2406
      %v2724 = vpop.f32.mrb[0].mxu0
      %v2725 = vadd.f32 0.0, %v2724
      %v2726 = vpop.f32.mrb[0].mxu0
      %2727 = vmatprep.mubr.f32.mxu0 0.0
      %2728 = vmatmul.mubr.f32.gmra.mrb[0].mxu0 %v2409
      %v2729 = vpop.f32.mrb[0].mxu0
      %v2730 = vadd.f32 0.0, %v2729
      %v2731 = vpop.f32.mrb[0].mxu0
      %2732 = vmatprep.mubr.f32.mxu0 0.0
      %2733 = vmatmul.mubr.f32.gmra.mrb[0].mxu0 %v2412
      %v2734 = vpop.f32.mrb[0].mxu0
      %v2735 = vadd.f32 0.0, %v2734
      %v2736 = vpop.f32.mrb[0].mxu0
      %2737 = vmatprep.mubr.f32.mxu0 0.0
      %2738 = vmatmul.mubr.f32.gmra.mrb[0].mxu0 %v2415
      %v2739 = vpop.f32.mrb[0].mxu0
      %v2740 = vadd.f32 0.0, %v2739
      %v2741 = vpop.f32.mrb[0].mxu0
      %2742 = vmatprep.mubr.f32.mxu0 0.0
      %2743 = vmatmul.mubr.f32.gmra.mrb[0].mxu0 %v2418
      %v2744 = vpop.f32.mrb[0].mxu0
      %v2745 = vadd.f32 0.0, %v2744
      %v2746 = vpop.f32.mrb[0].mxu0
      %2747 = vmatprep.mubr.f32.mxu0 0.0
      %2748 = vmatmul.mubr.f32.gmra.mrb[0].mxu0 %v2421
      %v2749 = vpop.f32.mrb[0].mxu0
      %v2750 = vadd.f32 0.0, %v2749
      %v2751 = vpop.f32.mrb[0].mxu0
      %2752 = vmatprep.mubr.f32.mxu0 0.0
      %2753 = vmatmul.mubr.f32.gmra.mrb[0].mxu0 %v2424
      %v2754 = vpop.f32.mrb[0].mxu0
      %v2755 = vadd.f32 0.0, %v2754
      %v2756 = vpop.f32.mrb[0].mxu0
      %2757 = vmatprep.mubr.f32.mxu0 0.0
      %2758 = vmatmul.mubr.f32.gmra.mrb[0].mxu0 %v2427
      %v2759 = vpop.f32.mrb[0].mxu0
      %v2760 = vadd.f32 0.0, %v2759
      %v2761 = vpop.f32.mrb[0].mxu0
      %2762 = vmatprep.mubr.f32.mxu0 0.0
      %2763 = vmatmul.mubr.f32.gmra.mrb[0].mxu0 %v2430
      %v2764 = vpop.f32.mrb[0].mxu0
      %v2765 = vadd.f32 0.0, %v2764
      %v2766 = vpop.f32.mrb[0].mxu0
      %2767 = vmatprep.mubr.f32.mxu0 0.0
      %2768 = vmatmul.mubr.f32.gmra.mrb[0].mxu0 %v2433
      %v2769 = vpop.f32.mrb[0].mxu0
      %v2770 = vadd.f32 0.0, %v2769
      %v2771 = vpop.f32.mrb[0].mxu0
      %2772 = vdwg.mxu0
      %v2773 = vld [vmem:[#allocation3] sm:$0xff]
      %v2774 = vld [vmem:[#allocation3 + $0x8] sm:$0xff]
      %v2775 = vld [vmem:[#allocation3 + $0x10] sm:$0xff]
      %v2776 = vld [vmem:[#allocation3 + $0x18] sm:$0xff]
      %v2777 = vld [vmem:[#allocation3 + $0x20] sm:$0xff]
      %v2778 = vld [vmem:[#allocation3 + $0x28] sm:$0xff]
      %v2779 = vld [vmem:[#allocation3 + $0x30] sm:$0xff]
      %v2780 = vld [vmem:[#allocation3 + $0x38] sm:$0xff]
      %v2781 = vld [vmem:[#allocation3 + $0x40] sm:$0xff]
      %v2782 = vld [vmem:[#allocation3 + $0x48] sm:$0xff]
      %v2783 = vld [vmem:[#allocation3 + $0x50] sm:$0xff]
      %v2784 = vld [vmem:[#allocation3 + $0x58] sm:$0xff]
      %v2785 = vld [vmem:[#allocation3 + $0x60] sm:$0xff]
      %v2786 = vld [vmem:[#allocation3 + $0x68] sm:$0xff]
      %v2787 = vld [vmem:[#allocation3 + $0x70] sm:$0xff]
      %v2788 = vld [vmem:[#allocation3 + $0x78] sm:$0xff]
      %v2789 = vld [vmem:[#allocation3 + $0x80] sm:$0xff]
      %v2790 = vld [vmem:[#allocation3 + $0x88] sm:$0xff]
      %v2791 = vld [vmem:[#allocation3 + $0x90] sm:$0xff]
      %v2792 = vld [vmem:[#allocation3 + $0x98] sm:$0xff]
      %v2793 = vld [vmem:[#allocation3 + $0xa0] sm:$0xff]
      %v2794 = vld [vmem:[#allocation3 + $0xa8] sm:$0xff]
      %v2795 = vld [vmem:[#allocation3 + $0xb0] sm:$0xff]
      %v2796 = vld [vmem:[#allocation3 + $0xb8] sm:$0xff]
      %v2797 = vld [vmem:[#allocation3 + $0xc0] sm:$0xff]
      %v2798 = vld [vmem:[#allocation3 + $0xc8] sm:$0xff]
      %v2799 = vld [vmem:[#allocation3 + $0xd0] sm:$0xff]
      %v2800 = vld [vmem:[#allocation3 + $0xd8] sm:$0xff]
      %v2801 = vld [vmem:[#allocation3 + $0xe0] sm:$0xff]
      %v2802 = vld [vmem:[#allocation3 + $0xe8] sm:$0xff]
      %v2803 = vld [vmem:[#allocation3 + $0xf0] sm:$0xff]
      %v2804 = vld [vmem:[#allocation3 + $0xf8] sm:$0xff]
      %v2805 = vld [vmem:[#allocation3 + $0x100] sm:$0xff]
      %v2806 = vld [vmem:[#allocation3 + $0x108] sm:$0xff]
      %v2807 = vld [vmem:[#allocation3 + $0x110] sm:$0xff]
      %v2808 = vld [vmem:[#allocation3 + $0x118] sm:$0xff]
      %v2809 = vld [vmem:[#allocation3 + $0x120] sm:$0xff]
      %v2810 = vld [vmem:[#allocation3 + $0x128] sm:$0xff]
      %v2811 = vld [vmem:[#allocation3 + $0x130] sm:$0xff]
      %v2812 = vld [vmem:[#allocation3 + $0x138] sm:$0xff]
      %v2813 = vld [vmem:[#allocation3 + $0x140] sm:$0xff]
      %v2814 = vld [vmem:[#allocation3 + $0x148] sm:$0xff]
      %v2815 = vld [vmem:[#allocation3 + $0x150] sm:$0xff]
      %v2816 = vld [vmem:[#allocation3 + $0x158] sm:$0xff]
      %v2817 = vld [vmem:[#allocation3 + $0x160] sm:$0xff]
      %v2818 = vld [vmem:[#allocation3 + $0x168] sm:$0xff]
      %v2819 = vld [vmem:[#allocation3 + $0x170] sm:$0xff]
      %v2820 = vld [vmem:[#allocation3 + $0x178] sm:$0xff]
      %v2821 = vld [vmem:[#allocation3 + $0x180] sm:$0xff]
      %v2822 = vld [vmem:[#allocation3 + $0x188] sm:$0xff]
      %v2823 = vld [vmem:[#allocation3 + $0x190] sm:$0xff]
      %v2824 = vld [vmem:[#allocation3 + $0x198] sm:$0xff]
      %v2825 = vld [vmem:[#allocation3 + $0x1a0] sm:$0xff]
      %v2826 = vld [vmem:[#allocation3 + $0x1a8] sm:$0xff]
      %v2827 = vadd.f32 %v2773, %v2505
      %v2828 = vadd.f32 %v2774, %v2510
      %v2829 = vadd.f32 %v2775, %v2515
      %v2830 = vadd.f32 %v2776, %v2520
      %v2831 = vadd.f32 %v2777, %v2525
      %v2832 = vadd.f32 %v2778, %v2530
      %v2833 = vadd.f32 %v2779, %v2535
      %v2834 = vadd.f32 %v2780, %v2540
      %v2835 = vadd.f32 %v2781, %v2545
      %v2836 = vadd.f32 %v2782, %v2550
      %v2837 = vadd.f32 %v2783, %v2555
      %v2838 = vadd.f32 %v2784, %v2560
      %v2839 = vadd.f32 %v2785, %v2565
      %v2840 = vadd.f32 %v2786, %v2570
      %v2841 = vadd.f32 %v2787, %v2575
      %v2842 = vadd.f32 %v2788, %v2580
      %v2843 = vadd.f32 %v2789, %v2585
      %v2844 = vadd.f32 %v2790, %v2590
      %v2845 = vadd.f32 %v2791, %v2595
      %v2846 = vadd.f32 %v2792, %v2600
      %v2847 = vadd.f32 %v2793, %v2605
      %v2848 = vadd.f32 %v2794, %v2610
      %v2849 = vadd.f32 %v2795, %v2615
      %v2850 = vadd.f32 %v2796, %v2620
      %v2851 = vadd.f32 %v2797, %v2625
      %v2852 = vadd.f32 %v2798, %v2630
      %v2853 = vadd.f32 %v2799, %v2635
      %v2854 = vadd.f32 %v2800, %v2640
      %v2855 = vadd.f32 %v2801, %v2645
      %v2856 = vadd.f32 %v2802, %v2650
      %v2857 = vadd.f32 %v2803, %v2655
      %v2858 = vadd.f32 %v2804, %v2660
      %v2859 = vadd.f32 %v2805, %v2665
      %v2860 = vadd.f32 %v2806, %v2670
      %v2861 = vadd.f32 %v2807, %v2675
      %v2862 = vadd.f32 %v2808, %v2680
      %v2863 = vadd.f32 %v2809, %v2685
      %v2864 = vadd.f32 %v2810, %v2690
      %v2865 = vadd.f32 %v2811, %v2695
      %v2866 = vadd.f32 %v2812, %v2700
      %v2867 = vadd.f32 %v2813, %v2705
      %v2868 = vadd.f32 %v2814, %v2710
      %v2869 = vadd.f32 %v2815, %v2715
      %v2870 = vadd.f32 %v2816, %v2720
      %v2871 = vadd.f32 %v2817, %v2725
      %v2872 = vadd.f32 %v2818, %v2730
      %v2873 = vadd.f32 %v2819, %v2735
      %v2874 = vadd.f32 %v2820, %v2740
      %v2875 = vadd.f32 %v2821, %v2745
      %v2876 = vadd.f32 %v2822, %v2750
      %v2877 = vadd.f32 %v2823, %v2755
      %v2878 = vadd.f32 %v2824, %v2760
      %v2879 = vadd.f32 %v2825, %v2765
      %v2880 = vadd.f32 %v2826, %v2770
      %2881 = vst.msk [vmem:[#allocation3] sm:$0xff] %vm728, %v2827
      %2882 = vst.msk [vmem:[#allocation3 + $0x8] sm:$0xff] %vm728, %v2828
      %2883 = vst.msk [vmem:[#allocation3 + $0x10] sm:$0xff] %vm728, %v2829
      %2884 = vst.msk [vmem:[#allocation3 + $0x18] sm:$0xff] %vm728, %v2830
      %2885 = vst.msk [vmem:[#allocation3 + $0x20] sm:$0xff] %vm728, %v2831
      %2886 = vst.msk [vmem:[#allocation3 + $0x28] sm:$0xff] %vm728, %v2832
      %2887 = vst.msk [vmem:[#allocation3 + $0x30] sm:$0xff] %vm728, %v2833
      %2888 = vst.msk [vmem:[#allocation3 + $0x38] sm:$0xff] %vm728, %v2834
      %2889 = vst.msk [vmem:[#allocation3 + $0x40] sm:$0xff] %vm728, %v2835
      %2890 = vst.msk [vmem:[#allocation3 + $0x48] sm:$0xff] %vm728, %v2836
      %2891 = vst.msk [vmem:[#allocation3 + $0x50] sm:$0xff] %vm728, %v2837
      %2892 = vst.msk [vmem:[#allocation3 + $0x58] sm:$0xff] %vm728, %v2838
      %2893 = vst.msk [vmem:[#allocation3 + $0x60] sm:$0xff] %vm728, %v2839
      %2894 = vst.msk [vmem:[#allocation3 + $0x68] sm:$0xff] %vm728, %v2840
      %2895 = vst.msk [vmem:[#allocation3 + $0x70] sm:$0xff] %vm728, %v2841
      %2896 = vst.msk [vmem:[#allocation3 + $0x78] sm:$0xff] %vm728, %v2842
      %2897 = vst.msk [vmem:[#allocation3 + $0x80] sm:$0xff] %vm728, %v2843
      %2898 = vst.msk [vmem:[#allocation3 + $0x88] sm:$0xff] %vm728, %v2844
      %2899 = vst.msk [vmem:[#allocation3 + $0x90] sm:$0xff] %vm728, %v2845
      %2900 = vst.msk [vmem:[#allocation3 + $0x98] sm:$0xff] %vm728, %v2846
      %2901 = vst.msk [vmem:[#allocation3 + $0xa0] sm:$0xff] %vm728, %v2847
      %2902 = vst.msk [vmem:[#allocation3 + $0xa8] sm:$0xff] %vm728, %v2848
      %2903 = vst.msk [vmem:[#allocation3 + $0xb0] sm:$0xff] %vm728, %v2849
      %2904 = vst.msk [vmem:[#allocation3 + $0xb8] sm:$0xff] %vm728, %v2850
      %2905 = vst.msk [vmem:[#allocation3 + $0xc0] sm:$0xff] %vm728, %v2851
      %2906 = vst.msk [vmem:[#allocation3 + $0xc8] sm:$0xff] %vm728, %v2852
      %2907 = vst.msk [vmem:[#allocation3 + $0xd0] sm:$0xff] %vm728, %v2853
      %2908 = vst.msk [vmem:[#allocation3 + $0xd8] sm:$0xff] %vm728, %v2854
      %2909 = vst.msk [vmem:[#allocation3 + $0xe0] sm:$0xff] %vm728, %v2855
      %2910 = vst.msk [vmem:[#allocation3 + $0xe8] sm:$0xff] %vm728, %v2856
      %2911 = vst.msk [vmem:[#allocation3 + $0xf0] sm:$0xff] %vm728, %v2857
      %2912 = vst.msk [vmem:[#allocation3 + $0xf8] sm:$0xff] %vm728, %v2858
      %2913 = vst.msk [vmem:[#allocation3 + $0x100] sm:$0xff] %vm728, %v2859
      %2914 = vst.msk [vmem:[#allocation3 + $0x108] sm:$0xff] %vm728, %v2860
      %2915 = vst.msk [vmem:[#allocation3 + $0x110] sm:$0xff] %vm728, %v2861
      %2916 = vst.msk [vmem:[#allocation3 + $0x118] sm:$0xff] %vm728, %v2862
      %2917 = vst.msk [vmem:[#allocation3 + $0x120] sm:$0xff] %vm728, %v2863
      %2918 = vst.msk [vmem:[#allocation3 + $0x128] sm:$0xff] %vm728, %v2864
      %2919 = vst.msk [vmem:[#allocation3 + $0x130] sm:$0xff] %vm728, %v2865
      %2920 = vst.msk [vmem:[#allocation3 + $0x138] sm:$0xff] %vm728, %v2866
      %2921 = vst.msk [vmem:[#allocation3 + $0x140] sm:$0xff] %vm728, %v2867
      %2922 = vst.msk [vmem:[#allocation3 + $0x148] sm:$0xff] %vm728, %v2868
      %2923 = vst.msk [vmem:[#allocation3 + $0x150] sm:$0xff] %vm728, %v2869
      %2924 = vst.msk [vmem:[#allocation3 + $0x158] sm:$0xff] %vm728, %v2870
      %2925 = vst.msk [vmem:[#allocation3 + $0x160] sm:$0xff] %vm728, %v2871
      %2926 = vst.msk [vmem:[#allocation3 + $0x168] sm:$0xff] %vm728, %v2872
      %2927 = vst.msk [vmem:[#allocation3 + $0x170] sm:$0xff] %vm728, %v2873
      %2928 = vst.msk [vmem:[#allocation3 + $0x178] sm:$0xff] %vm728, %v2874
      %2929 = vst.msk [vmem:[#allocation3 + $0x180] sm:$0xff] %vm728, %v2875
      %2930 = vst.msk [vmem:[#allocation3 + $0x188] sm:$0xff] %vm728, %v2876
      %2931 = vst.msk [vmem:[#allocation3 + $0x190] sm:$0xff] %vm728, %v2877
      %2932 = vst.msk [vmem:[#allocation3 + $0x198] sm:$0xff] %vm728, %v2878
      %2933 = vst.msk [vmem:[#allocation3 + $0x1a0] sm:$0xff] %vm728, %v2879
      %2934 = vst.msk [vmem:[#allocation3 + $0x1a8] sm:$0xff] %vm728, %v2880
      %v2935 = vld [vmem:[%s2217 + $0x1] sm:$0xff]
      %v2936 = vld [vmem:[%s2217 + $0x9] sm:$0xff]
      %v2937 = vld [vmem:[%s2217 + $0x11] sm:$0xff]
      %v2938 = vld [vmem:[%s2217 + $0x21] sm:$0xff]
      %v2939 = vld [vmem:[%s2217 + $0x29] sm:$0xff]
      %v2940 = vld [vmem:[%s2217 + $0x31] sm:$0xff]
      %v2941 = vld [vmem:[%s2217 + $0x41] sm:$0xff]
      %v2942 = vld [vmem:[%s2217 + $0x49] sm:$0xff]
      %v2943 = vld [vmem:[%s2217 + $0x51] sm:$0xff]
      %v2944 = vld [vmem:[%s2217 + $0x61] sm:$0xff]
      %v2945 = vld [vmem:[%s2217 + $0x69] sm:$0xff]
      %v2946 = vld [vmem:[%s2217 + $0x71] sm:$0xff]
      %v2947 = vld [vmem:[%s2217 + $0x81] sm:$0xff]
      %v2948 = vld [vmem:[%s2217 + $0x89] sm:$0xff]
      %v2949 = vld [vmem:[%s2217 + $0x91] sm:$0xff]
      %v2950 = vld [vmem:[%s2217 + $0xa1] sm:$0xff]
      %v2951 = vld [vmem:[%s2217 + $0xa9] sm:$0xff]
      %v2952 = vld [vmem:[%s2217 + $0xb1] sm:$0xff]
      %v2953 = vld [vmem:[%s2217 + $0xc1] sm:$0xff]
      %v2954 = vld [vmem:[%s2217 + $0xc9] sm:$0xff]
      %v2955 = vld [vmem:[%s2217 + $0xd1] sm:$0xff]
      %v2956 = vld [vmem:[%s2217 + $0xe1] sm:$0xff]
      %v2957 = vld [vmem:[%s2217 + $0xe9] sm:$0xff]
      %v2958 = vld [vmem:[%s2217 + $0xf1] sm:$0xff]
      %v2959 = vld [vmem:[%s2217 + $0x101] sm:$0xff]
      %v2960 = vld [vmem:[%s2217 + $0x109] sm:$0xff]
      %v2961 = vld [vmem:[%s2217 + $0x111] sm:$0xff]
      %v2962 = vld [vmem:[%s2217 + $0x121] sm:$0xff]
      %v2963 = vld [vmem:[%s2217 + $0x129] sm:$0xff]
      %v2964 = vld [vmem:[%s2217 + $0x131] sm:$0xff]
      %v2965 = vld [vmem:[%s2217 + $0x141] sm:$0xff]
      %v2966 = vld [vmem:[%s2217 + $0x149] sm:$0xff]
      %v2967 = vld [vmem:[%s2217 + $0x151] sm:$0xff]
      %v2968 = vld [vmem:[%s2217 + $0x161] sm:$0xff]
      %v2969 = vld [vmem:[%s2217 + $0x169] sm:$0xff]
      %v2970 = vld [vmem:[%s2217 + $0x171] sm:$0xff]
      %v2971 = vld [vmem:[%s2217 + $0x181] sm:$0xff]
      %v2972 = vld [vmem:[%s2217 + $0x189] sm:$0xff]
      %v2973 = vld [vmem:[%s2217 + $0x191] sm:$0xff]
      %v2974 = vld [vmem:[%s2217 + $0x1a1] sm:$0xff]
      %v2975 = vld [vmem:[%s2217 + $0x1a9] sm:$0xff]
      %v2976 = vld [vmem:[%s2217 + $0x1b1] sm:$0xff]
      %v2977 = vld [vmem:[%s2217 + $0x1c1] sm:$0xff]
      %v2978 = vld [vmem:[%s2217 + $0x1c9] sm:$0xff]
      %v2979 = vld [vmem:[%s2217 + $0x1d1] sm:$0xff]
      %v2980 = vld [vmem:[%s2217 + $0x1e1] sm:$0xff]
      %v2981 = vld [vmem:[%s2217 + $0x1e9] sm:$0xff]
      %v2982 = vld [vmem:[%s2217 + $0x1f1] sm:$0xff]
      %v2983 = vld [vmem:[%s2217 + $0x201] sm:$0xff]
      %v2984 = vld [vmem:[%s2217 + $0x209] sm:$0xff]
      %v2985 = vld [vmem:[%s2217 + $0x211] sm:$0xff]
      %v2986 = vld [vmem:[%s2217 + $0x221] sm:$0xff]
      %v2987 = vld [vmem:[%s2217 + $0x229] sm:$0xff]
      %v2988 = vld [vmem:[%s2217 + $0x231] sm:$0xff]
      %v2989 = vld [vmem:[%s1 + $0x10] sm:$0xf]
      %v2991 = vsel %vm226, %v2935, 0
      %v2994 = vsel %vm226, %v2936, 0
      %v2997 = vsel %vm226, %v2937, 0
      %v3000 = vsel %vm226, %v2938, 0
      %v3003 = vsel %vm226, %v2939, 0
      %v3006 = vsel %vm226, %v2940, 0
      %v3009 = vsel %vm226, %v2941, 0
      %v3012 = vsel %vm226, %v2942, 0
      %v3015 = vsel %vm226, %v2943, 0
      %v3018 = vsel %vm226, %v2944, 0
      %v3021 = vsel %vm226, %v2945, 0
      %v3024 = vsel %vm226, %v2946, 0
      %v3027 = vsel %vm226, %v2947, 0
      %v3030 = vsel %vm226, %v2948, 0
      %v3033 = vsel %vm226, %v2949, 0
      %v3036 = vsel %vm226, %v2950, 0
      %v3039 = vsel %vm226, %v2951, 0
      %v3042 = vsel %vm226, %v2952, 0
      %v3045 = vsel %vm226, %v2953, 0
      %v3048 = vsel %vm226, %v2954, 0
      %v3051 = vsel %vm226, %v2955, 0
      %v3054 = vsel %vm226, %v2956, 0
      %v3057 = vsel %vm226, %v2957, 0
      %v3060 = vsel %vm226, %v2958, 0
      %v3063 = vsel %vm226, %v2959, 0
      %v3066 = vsel %vm226, %v2960, 0
      %v3069 = vsel %vm226, %v2961, 0
      %v3072 = vsel %vm226, %v2962, 0
      %v3075 = vsel %vm226, %v2963, 0
      %v3078 = vsel %vm226, %v2964, 0
      %v3081 = vsel %vm226, %v2965, 0
      %v3084 = vsel %vm226, %v2966, 0
      %v3087 = vsel %vm226, %v2967, 0
      %v3090 = vsel %vm226, %v2968, 0
      %v3093 = vsel %vm226, %v2969, 0
      %v3096 = vsel %vm226, %v2970, 0
      %v3099 = vsel %vm226, %v2971, 0
      %v3102 = vsel %vm226, %v2972, 0
      %v3105 = vsel %vm226, %v2973, 0
      %v3108 = vsel %vm226, %v2974, 0
      %v3111 = vsel %vm226, %v2975, 0
      %v3114 = vsel %vm226, %v2976, 0
      %v3117 = vsel %vm226, %v2977, 0
      %v3120 = vsel %vm226, %v2978, 0
      %v3123 = vsel %vm226, %v2979, 0
      %v3126 = vsel %vm226, %v2980, 0
      %v3129 = vsel %vm226, %v2981, 0
      %v3132 = vsel %vm226, %v2982, 0
      %v3135 = vsel %vm226, %v2983, 0
      %v3138 = vsel %vm226, %v2984, 0
      %v3141 = vsel %vm226, %v2985, 0
      %v3144 = vsel %vm226, %v2986, 0
      %v3147 = vsel %vm226, %v2987, 0
      %v3150 = vsel %vm226, %v2988, 0
      %v3153 = vsel %vm389, %v2989, 0
      %3155 = vmatprep.subr.mxu0 0.0
      %3156 = vmatpush1.msra.mxu0 %v3153
      %3157 = vmatprep.subr.mxu0 0.0
      %3158 = vmatpush1.msra.mxu0 0.0
      %3159 = vmatprep.subr.mxu0 0.0
      %3160 = vmatpush1.msra.mxu0 0.0
      %3161 = vmatprep.subr.mxu0 0.0
      %3162 = vmatpush1.msra.mxu0 0.0
      %3163 = vmatprep.subr.mxu0 0.0
      %3164 = vmatpush1.msra.mxu0 0.0
      %3165 = vmatprep.subr.mxu0 0.0
      %3166 = vmatpush1.msra.mxu0 0.0
      %3167 = vmatprep.subr.mxu0 0.0
      %3168 = vmatpush1.msra.mxu0 0.0
      %3169 = vmatprep.subr.mxu0 0.0
      %3170 = vmatpush1.msra.mxu0 0.0
      %3171 = vmatprep.subr.mxu0 0.0
      %3172 = vmatpush1.msra.mxu0 0.0
      %3173 = vmatprep.subr.mxu0 0.0
      %3174 = vmatpush1.msra.mxu0 0.0
      %3175 = vmatprep.subr.mxu0 0.0
      %3176 = vmatpush1.msra.mxu0 0.0
      %3177 = vmatprep.subr.mxu0 0.0
      %3178 = vmatpush1.msra.mxu0 0.0
      %3179 = vmatprep.subr.mxu0 0.0
      %3180 = vmatpush1.msra.mxu0 0.0
      %3181 = vmatprep.subr.mxu0 0.0
      %3182 = vmatpush1.msra.mxu0 0.0
      %3183 = vmatprep.subr.mxu0 0.0
      %3184 = vmatpush1.msra.mxu0 0.0
      %3185 = vmatprep.subr.mxu0 0.0
      %3186 = vmatpush1.msra.mxu0 0.0
      %3187 = vmatprep.subr.mxu0 0.0
      %3188 = vmatpush1.msra.mxu0 0.0
      %3189 = vmatprep.subr.mxu0 0.0
      %3190 = vmatpush1.msra.mxu0 0.0
      %3191 = vmatprep.subr.mxu0 0.0
      %3192 = vmatpush1.msra.mxu0 0.0
      %3193 = vmatprep.subr.mxu0 0.0
      %3194 = vmatpush1.msra.mxu0 0.0
      %3195 = vmatprep.subr.mxu0 0.0
      %3196 = vmatpush1.msra.mxu0 0.0
      %3197 = vmatprep.subr.mxu0 0.0
      %3198 = vmatpush1.msra.mxu0 0.0
      %3199 = vmatprep.subr.mxu0 0.0
      %3200 = vmatpush1.msra.mxu0 0.0
      %3201 = vmatprep.subr.mxu0 0.0
      %3202 = vmatpush1.msra.mxu0 0.0
      %3203 = vmatprep.subr.mxu0 0.0
      %3204 = vmatpush1.msra.mxu0 0.0
      %3205 = vmatprep.subr.mxu0 0.0
      %3206 = vmatpush1.msra.mxu0 0.0
      %3207 = vmatprep.subr.mxu0 0.0
      %3208 = vmatpush1.msra.mxu0 0.0
      %3209 = vmatprep.subr.mxu0 0.0
      %3210 = vmatpush1.msra.mxu0 0.0
      %3211 = vmatprep.subr.mxu0 0.0
      %3212 = vmatpush1.msra.mxu0 0.0
      %3213 = vmatprep.subr.mxu0 0.0
      %3214 = vmatpush1.msra.mxu0 0.0
      %3215 = vmatprep.subr.mxu0 0.0
      %3216 = vmatpush1.msra.mxu0 0.0
      %3217 = vmatprep.subr.mxu0 0.0
      %3218 = vmatpush1.msra.mxu0 0.0
      %3219 = vmatprep.mubr.f32.mxu0 0.0
      %3220 = vmatmul.mubr.f32.gmra.mrb[0].mxu0 %v2991
      %v3221 = vpop.f32.mrb[0].mxu0
      %v3222 = vadd.f32 0.0, %v3221
      %v3223 = vpop.f32.mrb[0].mxu0
      %3224 = vmatprep.mubr.f32.mxu0 0.0
      %3225 = vmatmul.mubr.f32.gmra.mrb[0].mxu0 %v2994
      %v3226 = vpop.f32.mrb[0].mxu0
      %v3227 = vadd.f32 0.0, %v3226
      %v3228 = vpop.f32.mrb[0].mxu0
      %3229 = vmatprep.mubr.f32.mxu0 0.0
      %3230 = vmatmul.mubr.f32.gmra.mrb[0].mxu0 %v2997
      %v3231 = vpop.f32.mrb[0].mxu0
      %v3232 = vadd.f32 0.0, %v3231
      %v3233 = vpop.f32.mrb[0].mxu0
      %3234 = vmatprep.mubr.f32.mxu0 0.0
      %3235 = vmatmul.mubr.f32.gmra.mrb[0].mxu0 %v3000
      %v3236 = vpop.f32.mrb[0].mxu0
      %v3237 = vadd.f32 0.0, %v3236
      %v3238 = vpop.f32.mrb[0].mxu0
      %3239 = vmatprep.mubr.f32.mxu0 0.0
      %3240 = vmatmul.mubr.f32.gmra.mrb[0].mxu0 %v3003
      %v3241 = vpop.f32.mrb[0].mxu0
      %v3242 = vadd.f32 0.0, %v3241
      %v3243 = vpop.f32.mrb[0].mxu0
      %3244 = vmatprep.mubr.f32.mxu0 0.0
      %3245 = vmatmul.mubr.f32.gmra.mrb[0].mxu0 %v3006
      %v3246 = vpop.f32.mrb[0].mxu0
      %v3247 = vadd.f32 0.0, %v3246
      %v3248 = vpop.f32.mrb[0].mxu0
      %3249 = vmatprep.mubr.f32.mxu0 0.0
      %3250 = vmatmul.mubr.f32.gmra.mrb[0].mxu0 %v3009
      %v3251 = vpop.f32.mrb[0].mxu0
      %v3252 = vadd.f32 0.0, %v3251
      %v3253 = vpop.f32.mrb[0].mxu0
      %3254 = vmatprep.mubr.f32.mxu0 0.0
      %3255 = vmatmul.mubr.f32.gmra.mrb[0].mxu0 %v3012
      %v3256 = vpop.f32.mrb[0].mxu0
      %v3257 = vadd.f32 0.0, %v3256
      %v3258 = vpop.f32.mrb[0].mxu0
      %3259 = vmatprep.mubr.f32.mxu0 0.0
      %3260 = vmatmul.mubr.f32.gmra.mrb[0].mxu0 %v3015
      %v3261 = vpop.f32.mrb[0].mxu0
      %v3262 = vadd.f32 0.0, %v3261
      %v3263 = vpop.f32.mrb[0].mxu0
      %3264 = vmatprep.mubr.f32.mxu0 0.0
      %3265 = vmatmul.mubr.f32.gmra.mrb[0].mxu0 %v3018
      %v3266 = vpop.f32.mrb[0].mxu0
      %v3267 = vadd.f32 0.0, %v3266
      %v3268 = vpop.f32.mrb[0].mxu0
      %3269 = vmatprep.mubr.f32.mxu0 0.0
      %3270 = vmatmul.mubr.f32.gmra.mrb[0].mxu0 %v3021
      %v3271 = vpop.f32.mrb[0].mxu0
      %v3272 = vadd.f32 0.0, %v3271
      %v3273 = vpop.f32.mrb[0].mxu0
      %3274 = vmatprep.mubr.f32.mxu0 0.0
      %3275 = vmatmul.mubr.f32.gmra.mrb[0].mxu0 %v3024
      %v3276 = vpop.f32.mrb[0].mxu0
      %v3277 = vadd.f32 0.0, %v3276
      %v3278 = vpop.f32.mrb[0].mxu0
      %3279 = vmatprep.mubr.f32.mxu0 0.0
      %3280 = vmatmul.mubr.f32.gmra.mrb[0].mxu0 %v3027
      %v3281 = vpop.f32.mrb[0].mxu0
      %v3282 = vadd.f32 0.0, %v3281
      %v3283 = vpop.f32.mrb[0].mxu0
      %3284 = vmatprep.mubr.f32.mxu0 0.0
      %3285 = vmatmul.mubr.f32.gmra.mrb[0].mxu0 %v3030
      %v3286 = vpop.f32.mrb[0].mxu0
      %v3287 = vadd.f32 0.0, %v3286
      %v3288 = vpop.f32.mrb[0].mxu0
      %3289 = vmatprep.mubr.f32.mxu0 0.0
      %3290 = vmatmul.mubr.f32.gmra.mrb[0].mxu0 %v3033
      %v3291 = vpop.f32.mrb[0].mxu0
      %v3292 = vadd.f32 0.0, %v3291
      %v3293 = vpop.f32.mrb[0].mxu0
      %3294 = vmatprep.mubr.f32.mxu0 0.0
      %3295 = vmatmul.mubr.f32.gmra.mrb[0].mxu0 %v3036
      %v3296 = vpop.f32.mrb[0].mxu0
      %v3297 = vadd.f32 0.0, %v3296
      %v3298 = vpop.f32.mrb[0].mxu0
      %3299 = vmatprep.mubr.f32.mxu0 0.0
      %3300 = vmatmul.mubr.f32.gmra.mrb[0].mxu0 %v3039
      %v3301 = vpop.f32.mrb[0].mxu0
      %v3302 = vadd.f32 0.0, %v3301
      %v3303 = vpop.f32.mrb[0].mxu0
      %3304 = vmatprep.mubr.f32.mxu0 0.0
      %3305 = vmatmul.mubr.f32.gmra.mrb[0].mxu0 %v3042
      %v3306 = vpop.f32.mrb[0].mxu0
      %v3307 = vadd.f32 0.0, %v3306
      %v3308 = vpop.f32.mrb[0].mxu0
      %3309 = vmatprep.mubr.f32.mxu0 0.0
      %3310 = vmatmul.mubr.f32.gmra.mrb[0].mxu0 %v3045
      %v3311 = vpop.f32.mrb[0].mxu0
      %v3312 = vadd.f32 0.0, %v3311
      %v3313 = vpop.f32.mrb[0].mxu0
      %3314 = vmatprep.mubr.f32.mxu0 0.0
      %3315 = vmatmul.mubr.f32.gmra.mrb[0].mxu0 %v3048
      %v3316 = vpop.f32.mrb[0].mxu0
      %v3317 = vadd.f32 0.0, %v3316
      %v3318 = vpop.f32.mrb[0].mxu0
      %3319 = vmatprep.mubr.f32.mxu0 0.0
      %3320 = vmatmul.mubr.f32.gmra.mrb[0].mxu0 %v3051
      %v3321 = vpop.f32.mrb[0].mxu0
      %v3322 = vadd.f32 0.0, %v3321
      %v3323 = vpop.f32.mrb[0].mxu0
      %3324 = vmatprep.mubr.f32.mxu0 0.0
      %3325 = vmatmul.mubr.f32.gmra.mrb[0].mxu0 %v3054
      %v3326 = vpop.f32.mrb[0].mxu0
      %v3327 = vadd.f32 0.0, %v3326
      %v3328 = vpop.f32.mrb[0].mxu0
      %3329 = vmatprep.mubr.f32.mxu0 0.0
      %3330 = vmatmul.mubr.f32.gmra.mrb[0].mxu0 %v3057
      %v3331 = vpop.f32.mrb[0].mxu0
      %v3332 = vadd.f32 0.0, %v3331
      %v3333 = vpop.f32.mrb[0].mxu0
      %3334 = vmatprep.mubr.f32.mxu0 0.0
      %3335 = vmatmul.mubr.f32.gmra.mrb[0].mxu0 %v3060
      %v3336 = vpop.f32.mrb[0].mxu0
      %v3337 = vadd.f32 0.0, %v3336
      %v3338 = vpop.f32.mrb[0].mxu0
      %3339 = vmatprep.mubr.f32.mxu0 0.0
      %3340 = vmatmul.mubr.f32.gmra.mrb[0].mxu0 %v3063
      %v3341 = vpop.f32.mrb[0].mxu0
      %v3342 = vadd.f32 0.0, %v3341
      %v3343 = vpop.f32.mrb[0].mxu0
      %3344 = vmatprep.mubr.f32.mxu0 0.0
      %3345 = vmatmul.mubr.f32.gmra.mrb[0].mxu0 %v3066
      %v3346 = vpop.f32.mrb[0].mxu0
      %v3347 = vadd.f32 0.0, %v3346
      %v3348 = vpop.f32.mrb[0].mxu0
      %3349 = vmatprep.mubr.f32.mxu0 0.0
      %3350 = vmatmul.mubr.f32.gmra.mrb[0].mxu0 %v3069
      %v3351 = vpop.f32.mrb[0].mxu0
      %v3352 = vadd.f32 0.0, %v3351
      %v3353 = vpop.f32.mrb[0].mxu0
      %3354 = vmatprep.mubr.f32.mxu0 0.0
      %3355 = vmatmul.mubr.f32.gmra.mrb[0].mxu0 %v3072
      %v3356 = vpop.f32.mrb[0].mxu0
      %v3357 = vadd.f32 0.0, %v3356
      %v3358 = vpop.f32.mrb[0].mxu0
      %3359 = vmatprep.mubr.f32.mxu0 0.0
      %3360 = vmatmul.mubr.f32.gmra.mrb[0].mxu0 %v3075
      %v3361 = vpop.f32.mrb[0].mxu0
      %v3362 = vadd.f32 0.0, %v3361
      %v3363 = vpop.f32.mrb[0].mxu0
      %3364 = vmatprep.mubr.f32.mxu0 0.0
      %3365 = vmatmul.mubr.f32.gmra.mrb[0].mxu0 %v3078
      %v3366 = vpop.f32.mrb[0].mxu0
      %v3367 = vadd.f32 0.0, %v3366
      %v3368 = vpop.f32.mrb[0].mxu0
      %3369 = vmatprep.mubr.f32.mxu0 0.0
      %3370 = vmatmul.mubr.f32.gmra.mrb[0].mxu0 %v3081
      %v3371 = vpop.f32.mrb[0].mxu0
      %v3372 = vadd.f32 0.0, %v3371
      %v3373 = vpop.f32.mrb[0].mxu0
      %3374 = vmatprep.mubr.f32.mxu0 0.0
      %3375 = vmatmul.mubr.f32.gmra.mrb[0].mxu0 %v3084
      %v3376 = vpop.f32.mrb[0].mxu0
      %v3377 = vadd.f32 0.0, %v3376
      %v3378 = vpop.f32.mrb[0].mxu0
      %3379 = vmatprep.mubr.f32.mxu0 0.0
      %3380 = vmatmul.mubr.f32.gmra.mrb[0].mxu0 %v3087
      %v3381 = vpop.f32.mrb[0].mxu0
      %v3382 = vadd.f32 0.0, %v3381
      %v3383 = vpop.f32.mrb[0].mxu0
      %3384 = vmatprep.mubr.f32.mxu0 0.0
      %3385 = vmatmul.mubr.f32.gmra.mrb[0].mxu0 %v3090
      %v3386 = vpop.f32.mrb[0].mxu0
      %v3387 = vadd.f32 0.0, %v3386
      %v3388 = vpop.f32.mrb[0].mxu0
      %3389 = vmatprep.mubr.f32.mxu0 0.0
      %3390 = vmatmul.mubr.f32.gmra.mrb[0].mxu0 %v3093
      %v3391 = vpop.f32.mrb[0].mxu0
      %v3392 = vadd.f32 0.0, %v3391
      %v3393 = vpop.f32.mrb[0].mxu0
      %3394 = vmatprep.mubr.f32.mxu0 0.0
      %3395 = vmatmul.mubr.f32.gmra.mrb[0].mxu0 %v3096
      %v3396 = vpop.f32.mrb[0].mxu0
      %v3397 = vadd.f32 0.0, %v3396
      %v3398 = vpop.f32.mrb[0].mxu0
      %3399 = vmatprep.mubr.f32.mxu0 0.0
      %3400 = vmatmul.mubr.f32.gmra.mrb[0].mxu0 %v3099
      %v3401 = vpop.f32.mrb[0].mxu0
      %v3402 = vadd.f32 0.0, %v3401
      %v3403 = vpop.f32.mrb[0].mxu0
      %3404 = vmatprep.mubr.f32.mxu0 0.0
      %3405 = vmatmul.mubr.f32.gmra.mrb[0].mxu0 %v3102
      %v3406 = vpop.f32.mrb[0].mxu0
      %v3407 = vadd.f32 0.0, %v3406
      %v3408 = vpop.f32.mrb[0].mxu0
      %3409 = vmatprep.mubr.f32.mxu0 0.0
      %3410 = vmatmul.mubr.f32.gmra.mrb[0].mxu0 %v3105
      %v3411 = vpop.f32.mrb[0].mxu0
      %v3412 = vadd.f32 0.0, %v3411
      %v3413 = vpop.f32.mrb[0].mxu0
      %3414 = vmatprep.mubr.f32.mxu0 0.0
      %3415 = vmatmul.mubr.f32.gmra.mrb[0].mxu0 %v3108
      %v3416 = vpop.f32.mrb[0].mxu0
      %v3417 = vadd.f32 0.0, %v3416
      %v3418 = vpop.f32.mrb[0].mxu0
      %3419 = vmatprep.mubr.f32.mxu0 0.0
      %3420 = vmatmul.mubr.f32.gmra.mrb[0].mxu0 %v3111
      %v3421 = vpop.f32.mrb[0].mxu0
      %v3422 = vadd.f32 0.0, %v3421
      %v3423 = vpop.f32.mrb[0].mxu0
      %3424 = vmatprep.mubr.f32.mxu0 0.0
      %3425 = vmatmul.mubr.f32.gmra.mrb[0].mxu0 %v3114
      %v3426 = vpop.f32.mrb[0].mxu0
      %v3427 = vadd.f32 0.0, %v3426
      %v3428 = vpop.f32.mrb[0].mxu0
      %3429 = vmatprep.mubr.f32.mxu0 0.0
      %3430 = vmatmul.mubr.f32.gmra.mrb[0].mxu0 %v3117
      %v3431 = vpop.f32.mrb[0].mxu0
      %v3432 = vadd.f32 0.0, %v3431
      %v3433 = vpop.f32.mrb[0].mxu0
      %3434 = vmatprep.mubr.f32.mxu0 0.0
      %3435 = vmatmul.mubr.f32.gmra.mrb[0].mxu0 %v3120
      %v3436 = vpop.f32.mrb[0].mxu0
      %v3437 = vadd.f32 0.0, %v3436
      %v3438 = vpop.f32.mrb[0].mxu0
      %3439 = vmatprep.mubr.f32.mxu0 0.0
      %3440 = vmatmul.mubr.f32.gmra.mrb[0].mxu0 %v3123
      %v3441 = vpop.f32.mrb[0].mxu0
      %v3442 = vadd.f32 0.0, %v3441
      %v3443 = vpop.f32.mrb[0].mxu0
      %3444 = vmatprep.mubr.f32.mxu0 0.0
      %3445 = vmatmul.mubr.f32.gmra.mrb[0].mxu0 %v3126
      %v3446 = vpop.f32.mrb[0].mxu0
      %v3447 = vadd.f32 0.0, %v3446
      %v3448 = vpop.f32.mrb[0].mxu0
      %3449 = vmatprep.mubr.f32.mxu0 0.0
      %3450 = vmatmul.mubr.f32.gmra.mrb[0].mxu0 %v3129
      %v3451 = vpop.f32.mrb[0].mxu0
      %v3452 = vadd.f32 0.0, %v3451
      %v3453 = vpop.f32.mrb[0].mxu0
      %3454 = vmatprep.mubr.f32.mxu0 0.0
      %3455 = vmatmul.mubr.f32.gmra.mrb[0].mxu0 %v3132
      %v3456 = vpop.f32.mrb[0].mxu0
      %v3457 = vadd.f32 0.0, %v3456
      %v3458 = vpop.f32.mrb[0].mxu0
      %3459 = vmatprep.mubr.f32.mxu0 0.0
      %3460 = vmatmul.mubr.f32.gmra.mrb[0].mxu0 %v3135
      %v3461 = vpop.f32.mrb[0].mxu0
      %v3462 = vadd.f32 0.0, %v3461
      %v3463 = vpop.f32.mrb[0].mxu0
      %3464 = vmatprep.mubr.f32.mxu0 0.0
      %3465 = vmatmul.mubr.f32.gmra.mrb[0].mxu0 %v3138
      %v3466 = vpop.f32.mrb[0].mxu0
      %v3467 = vadd.f32 0.0, %v3466
      %v3468 = vpop.f32.mrb[0].mxu0
      %3469 = vmatprep.mubr.f32.mxu0 0.0
      %3470 = vmatmul.mubr.f32.gmra.mrb[0].mxu0 %v3141
      %v3471 = vpop.f32.mrb[0].mxu0
      %v3472 = vadd.f32 0.0, %v3471
      %v3473 = vpop.f32.mrb[0].mxu0
      %3474 = vmatprep.mubr.f32.mxu0 0.0
      %3475 = vmatmul.mubr.f32.gmra.mrb[0].mxu0 %v3144
      %v3476 = vpop.f32.mrb[0].mxu0
      %v3477 = vadd.f32 0.0, %v3476
      %v3478 = vpop.f32.mrb[0].mxu0
      %3479 = vmatprep.mubr.f32.mxu0 0.0
      %3480 = vmatmul.mubr.f32.gmra.mrb[0].mxu0 %v3147
      %v3481 = vpop.f32.mrb[0].mxu0
      %v3482 = vadd.f32 0.0, %v3481
      %v3483 = vpop.f32.mrb[0].mxu0
      %3484 = vmatprep.mubr.f32.mxu0 0.0
      %3485 = vmatmul.mubr.f32.gmra.mrb[0].mxu0 %v3150
      %v3486 = vpop.f32.mrb[0].mxu0
      %v3487 = vadd.f32 0.0, %v3486
      %v3488 = vpop.f32.mrb[0].mxu0
      %3489 = vdwg.mxu0
      %v3490 = vld [vmem:[#allocation3] sm:$0xff]
      %v3491 = vld [vmem:[#allocation3 + $0x8] sm:$0xff]
      %v3492 = vld [vmem:[#allocation3 + $0x10] sm:$0xff]
      %v3493 = vld [vmem:[#allocation3 + $0x18] sm:$0xff]
      %v3494 = vld [vmem:[#allocation3 + $0x20] sm:$0xff]
      %v3495 = vld [vmem:[#allocation3 + $0x28] sm:$0xff]
      %v3496 = vld [vmem:[#allocation3 + $0x30] sm:$0xff]
      %v3497 = vld [vmem:[#allocation3 + $0x38] sm:$0xff]
      %v3498 = vld [vmem:[#allocation3 + $0x40] sm:$0xff]
      %v3499 = vld [vmem:[#allocation3 + $0x48] sm:$0xff]
      %v3500 = vld [vmem:[#allocation3 + $0x50] sm:$0xff]
      %v3501 = vld [vmem:[#allocation3 + $0x58] sm:$0xff]
      %v3502 = vld [vmem:[#allocation3 + $0x60] sm:$0xff]
      %v3503 = vld [vmem:[#allocation3 + $0x68] sm:$0xff]
      %v3504 = vld [vmem:[#allocation3 + $0x70] sm:$0xff]
      %v3505 = vld [vmem:[#allocation3 + $0x78] sm:$0xff]
      %v3506 = vld [vmem:[#allocation3 + $0x80] sm:$0xff]
      %v3507 = vld [vmem:[#allocation3 + $0x88] sm:$0xff]
      %v3508 = vld [vmem:[#allocation3 + $0x90] sm:$0xff]
      %v3509 = vld [vmem:[#allocation3 + $0x98] sm:$0xff]
      %v3510 = vld [vmem:[#allocation3 + $0xa0] sm:$0xff]
      %v3511 = vld [vmem:[#allocation3 + $0xa8] sm:$0xff]
      %v3512 = vld [vmem:[#allocation3 + $0xb0] sm:$0xff]
      %v3513 = vld [vmem:[#allocation3 + $0xb8] sm:$0xff]
      %v3514 = vld [vmem:[#allocation3 + $0xc0] sm:$0xff]
      %v3515 = vld [vmem:[#allocation3 + $0xc8] sm:$0xff]
      %v3516 = vld [vmem:[#allocation3 + $0xd0] sm:$0xff]
      %v3517 = vld [vmem:[#allocation3 + $0xd8] sm:$0xff]
      %v3518 = vld [vmem:[#allocation3 + $0xe0] sm:$0xff]
      %v3519 = vld [vmem:[#allocation3 + $0xe8] sm:$0xff]
      %v3520 = vld [vmem:[#allocation3 + $0xf0] sm:$0xff]
      %v3521 = vld [vmem:[#allocation3 + $0xf8] sm:$0xff]
      %v3522 = vld [vmem:[#allocation3 + $0x100] sm:$0xff]
      %v3523 = vld [vmem:[#allocation3 + $0x108] sm:$0xff]
      %v3524 = vld [vmem:[#allocation3 + $0x110] sm:$0xff]
      %v3525 = vld [vmem:[#allocation3 + $0x118] sm:$0xff]
      %v3526 = vld [vmem:[#allocation3 + $0x120] sm:$0xff]
      %v3527 = vld [vmem:[#allocation3 + $0x128] sm:$0xff]
      %v3528 = vld [vmem:[#allocation3 + $0x130] sm:$0xff]
      %v3529 = vld [vmem:[#allocation3 + $0x138] sm:$0xff]
      %v3530 = vld [vmem:[#allocation3 + $0x140] sm:$0xff]
      %v3531 = vld [vmem:[#allocation3 + $0x148] sm:$0xff]
      %v3532 = vld [vmem:[#allocation3 + $0x150] sm:$0xff]
      %v3533 = vld [vmem:[#allocation3 + $0x158] sm:$0xff]
      %v3534 = vld [vmem:[#allocation3 + $0x160] sm:$0xff]
      %v3535 = vld [vmem:[#allocation3 + $0x168] sm:$0xff]
      %v3536 = vld [vmem:[#allocation3 + $0x170] sm:$0xff]
      %v3537 = vld [vmem:[#allocation3 + $0x178] sm:$0xff]
      %v3538 = vld [vmem:[#allocation3 + $0x180] sm:$0xff]
      %v3539 = vld [vmem:[#allocation3 + $0x188] sm:$0xff]
      %v3540 = vld [vmem:[#allocation3 + $0x190] sm:$0xff]
      %v3541 = vld [vmem:[#allocation3 + $0x198] sm:$0xff]
      %v3542 = vld [vmem:[#allocation3 + $0x1a0] sm:$0xff]
      %v3543 = vld [vmem:[#allocation3 + $0x1a8] sm:$0xff]
      %v3544 = vadd.f32 %v3490, %v3222
      %v3545 = vadd.f32 %v3491, %v3227
      %v3546 = vadd.f32 %v3492, %v3232
      %v3547 = vadd.f32 %v3493, %v3237
      %v3548 = vadd.f32 %v3494, %v3242
      %v3549 = vadd.f32 %v3495, %v3247
      %v3550 = vadd.f32 %v3496, %v3252
      %v3551 = vadd.f32 %v3497, %v3257
      %v3552 = vadd.f32 %v3498, %v3262
      %v3553 = vadd.f32 %v3499, %v3267
      %v3554 = vadd.f32 %v3500, %v3272
      %v3555 = vadd.f32 %v3501, %v3277
      %v3556 = vadd.f32 %v3502, %v3282
      %v3557 = vadd.f32 %v3503, %v3287
      %v3558 = vadd.f32 %v3504, %v3292
      %v3559 = vadd.f32 %v3505, %v3297
      %v3560 = vadd.f32 %v3506, %v3302
      %v3561 = vadd.f32 %v3507, %v3307
      %v3562 = vadd.f32 %v3508, %v3312
      %v3563 = vadd.f32 %v3509, %v3317
      %v3564 = vadd.f32 %v3510, %v3322
      %v3565 = vadd.f32 %v3511, %v3327
      %v3566 = vadd.f32 %v3512, %v3332
      %v3567 = vadd.f32 %v3513, %v3337
      %v3568 = vadd.f32 %v3514, %v3342
      %v3569 = vadd.f32 %v3515, %v3347
      %v3570 = vadd.f32 %v3516, %v3352
      %v3571 = vadd.f32 %v3517, %v3357
      %v3572 = vadd.f32 %v3518, %v3362
      %v3573 = vadd.f32 %v3519, %v3367
      %v3574 = vadd.f32 %v3520, %v3372
      %v3575 = vadd.f32 %v3521, %v3377
      %v3576 = vadd.f32 %v3522, %v3382
      %v3577 = vadd.f32 %v3523, %v3387
      %v3578 = vadd.f32 %v3524, %v3392
      %v3579 = vadd.f32 %v3525, %v3397
      %v3580 = vadd.f32 %v3526, %v3402
      %v3581 = vadd.f32 %v3527, %v3407
      %v3582 = vadd.f32 %v3528, %v3412
      %v3583 = vadd.f32 %v3529, %v3417
      %v3584 = vadd.f32 %v3530, %v3422
      %v3585 = vadd.f32 %v3531, %v3427
      %v3586 = vadd.f32 %v3532, %v3432
      %v3587 = vadd.f32 %v3533, %v3437
      %v3588 = vadd.f32 %v3534, %v3442
      %v3589 = vadd.f32 %v3535, %v3447
      %v3590 = vadd.f32 %v3536, %v3452
      %v3591 = vadd.f32 %v3537, %v3457
      %v3592 = vadd.f32 %v3538, %v3462
      %v3593 = vadd.f32 %v3539, %v3467
      %v3594 = vadd.f32 %v3540, %v3472
      %v3595 = vadd.f32 %v3541, %v3477
      %v3596 = vadd.f32 %v3542, %v3482
      %v3597 = vadd.f32 %v3543, %v3487
      %3598 = vst.msk [vmem:[#allocation3] sm:$0xff] %vm728, %v3544
      %3599 = vst.msk [vmem:[#allocation3 + $0x8] sm:$0xff] %vm728, %v3545
      %3600 = vst.msk [vmem:[#allocation3 + $0x10] sm:$0xff] %vm728, %v3546
      %3601 = vst.msk [vmem:[#allocation3 + $0x18] sm:$0xff] %vm728, %v3547
      %3602 = vst.msk [vmem:[#allocation3 + $0x20] sm:$0xff] %vm728, %v3548
      %3603 = vst.msk [vmem:[#allocation3 + $0x28] sm:$0xff] %vm728, %v3549
      %3604 = vst.msk [vmem:[#allocation3 + $0x30] sm:$0xff] %vm728, %v3550
      %3605 = vst.msk [vmem:[#allocation3 + $0x38] sm:$0xff] %vm728, %v3551
      %3606 = vst.msk [vmem:[#allocation3 + $0x40] sm:$0xff] %vm728, %v3552
      %3607 = vst.msk [vmem:[#allocation3 + $0x48] sm:$0xff] %vm728, %v3553
      %3608 = vst.msk [vmem:[#allocation3 + $0x50] sm:$0xff] %vm728, %v3554
      %3609 = vst.msk [vmem:[#allocation3 + $0x58] sm:$0xff] %vm728, %v3555
      %3610 = vst.msk [vmem:[#allocation3 + $0x60] sm:$0xff] %vm728, %v3556
      %3611 = vst.msk [vmem:[#allocation3 + $0x68] sm:$0xff] %vm728, %v3557
      %3612 = vst.msk [vmem:[#allocation3 + $0x70] sm:$0xff] %vm728, %v3558
      %3613 = vst.msk [vmem:[#allocation3 + $0x78] sm:$0xff] %vm728, %v3559
      %3614 = vst.msk [vmem:[#allocation3 + $0x80] sm:$0xff] %vm728, %v3560
      %3615 = vst.msk [vmem:[#allocation3 + $0x88] sm:$0xff] %vm728, %v3561
      %3616 = vst.msk [vmem:[#allocation3 + $0x90] sm:$0xff] %vm728, %v3562
      %3617 = vst.msk [vmem:[#allocation3 + $0x98] sm:$0xff] %vm728, %v3563
      %3618 = vst.msk [vmem:[#allocation3 + $0xa0] sm:$0xff] %vm728, %v3564
      %3619 = vst.msk [vmem:[#allocation3 + $0xa8] sm:$0xff] %vm728, %v3565
      %3620 = vst.msk [vmem:[#allocation3 + $0xb0] sm:$0xff] %vm728, %v3566
      %3621 = vst.msk [vmem:[#allocation3 + $0xb8] sm:$0xff] %vm728, %v3567
      %3622 = vst.msk [vmem:[#allocation3 + $0xc0] sm:$0xff] %vm728, %v3568
      %3623 = vst.msk [vmem:[#allocation3 + $0xc8] sm:$0xff] %vm728, %v3569
      %3624 = vst.msk [vmem:[#allocation3 + $0xd0] sm:$0xff] %vm728, %v3570
      %3625 = vst.msk [vmem:[#allocation3 + $0xd8] sm:$0xff] %vm728, %v3571
      %3626 = vst.msk [vmem:[#allocation3 + $0xe0] sm:$0xff] %vm728, %v3572
      %3627 = vst.msk [vmem:[#allocation3 + $0xe8] sm:$0xff] %vm728, %v3573
      %3628 = vst.msk [vmem:[#allocation3 + $0xf0] sm:$0xff] %vm728, %v3574
      %3629 = vst.msk [vmem:[#allocation3 + $0xf8] sm:$0xff] %vm728, %v3575
      %3630 = vst.msk [vmem:[#allocation3 + $0x100] sm:$0xff] %vm728, %v3576
      %3631 = vst.msk [vmem:[#allocation3 + $0x108] sm:$0xff] %vm728, %v3577
      %3632 = vst.msk [vmem:[#allocation3 + $0x110] sm:$0xff] %vm728, %v3578
      %3633 = vst.msk [vmem:[#allocation3 + $0x118] sm:$0xff] %vm728, %v3579
      %3634 = vst.msk [vmem:[#allocation3 + $0x120] sm:$0xff] %vm728, %v3580
      %3635 = vst.msk [vmem:[#allocation3 + $0x128] sm:$0xff] %vm728, %v3581
      %3636 = vst.msk [vmem:[#allocation3 + $0x130] sm:$0xff] %vm728, %v3582
      %3637 = vst.msk [vmem:[#allocation3 + $0x138] sm:$0xff] %vm728, %v3583
      %3638 = vst.msk [vmem:[#allocation3 + $0x140] sm:$0xff] %vm728, %v3584
      %3639 = vst.msk [vmem:[#allocation3 + $0x148] sm:$0xff] %vm728, %v3585
      %3640 = vst.msk [vmem:[#allocation3 + $0x150] sm:$0xff] %vm728, %v3586
      %3641 = vst.msk [vmem:[#allocation3 + $0x158] sm:$0xff] %vm728, %v3587
      %3642 = vst.msk [vmem:[#allocation3 + $0x160] sm:$0xff] %vm728, %v3588
      %3643 = vst.msk [vmem:[#allocation3 + $0x168] sm:$0xff] %vm728, %v3589
      %3644 = vst.msk [vmem:[#allocation3 + $0x170] sm:$0xff] %vm728, %v3590
      %3645 = vst.msk [vmem:[#allocation3 + $0x178] sm:$0xff] %vm728, %v3591
      %3646 = vst.msk [vmem:[#allocation3 + $0x180] sm:$0xff] %vm728, %v3592
      %3647 = vst.msk [vmem:[#allocation3 + $0x188] sm:$0xff] %vm728, %v3593
      %3648 = vst.msk [vmem:[#allocation3 + $0x190] sm:$0xff] %vm728, %v3594
      %3649 = vst.msk [vmem:[#allocation3 + $0x198] sm:$0xff] %vm728, %v3595
      %3650 = vst.msk [vmem:[#allocation3 + $0x1a0] sm:$0xff] %vm728, %v3596
      %3651 = vst.msk [vmem:[#allocation3 + $0x1a8] sm:$0xff] %vm728, %v3597
      %v3652 = vld [vmem:[%s2217 + $0x2] sm:$0xff]
      %v3653 = vld [vmem:[%s2217 + $0xa] sm:$0xff]
      %v3654 = vld [vmem:[%s2217 + $0x12] sm:$0xff]
      %v3655 = vld [vmem:[%s2217 + $0x22] sm:$0xff]
      %v3656 = vld [vmem:[%s2217 + $0x2a] sm:$0xff]
      %v3657 = vld [vmem:[%s2217 + $0x32] sm:$0xff]
      %v3658 = vld [vmem:[%s2217 + $0x42] sm:$0xff]
      %v3659 = vld [vmem:[%s2217 + $0x4a] sm:$0xff]
      %v3660 = vld [vmem:[%s2217 + $0x52] sm:$0xff]
      %v3661 = vld [vmem:[%s2217 + $0x62] sm:$0xff]
      %v3662 = vld [vmem:[%s2217 + $0x6a] sm:$0xff]
      %v3663 = vld [vmem:[%s2217 + $0x72] sm:$0xff]
      %v3664 = vld [vmem:[%s2217 + $0x82] sm:$0xff]
      %v3665 = vld [vmem:[%s2217 + $0x8a] sm:$0xff]
      %v3666 = vld [vmem:[%s2217 + $0x92] sm:$0xff]
      %v3667 = vld [vmem:[%s2217 + $0xa2] sm:$0xff]
      %v3668 = vld [vmem:[%s2217 + $0xaa] sm:$0xff]
      %v3669 = vld [vmem:[%s2217 + $0xb2] sm:$0xff]
      %v3670 = vld [vmem:[%s2217 + $0xc2] sm:$0xff]
      %v3671 = vld [vmem:[%s2217 + $0xca] sm:$0xff]
      %v3672 = vld [vmem:[%s2217 + $0xd2] sm:$0xff]
      %v3673 = vld [vmem:[%s2217 + $0xe2] sm:$0xff]
      %v3674 = vld [vmem:[%s2217 + $0xea] sm:$0xff]
      %v3675 = vld [vmem:[%s2217 + $0xf2] sm:$0xff]
      %v3676 = vld [vmem:[%s2217 + $0x102] sm:$0xff]
      %v3677 = vld [vmem:[%s2217 + $0x10a] sm:$0xff]
      %v3678 = vld [vmem:[%s2217 + $0x112] sm:$0xff]
      %v3679 = vld [vmem:[%s2217 + $0x122] sm:$0xff]
      %v3680 = vld [vmem:[%s2217 + $0x12a] sm:$0xff]
      %v3681 = vld [vmem:[%s2217 + $0x132] sm:$0xff]
      %v3682 = vld [vmem:[%s2217 + $0x142] sm:$0xff]
      %v3683 = vld [vmem:[%s2217 + $0x14a] sm:$0xff]
      %v3684 = vld [vmem:[%s2217 + $0x152] sm:$0xff]
      %v3685 = vld [vmem:[%s2217 + $0x162] sm:$0xff]
      %v3686 = vld [vmem:[%s2217 + $0x16a] sm:$0xff]
      %v3687 = vld [vmem:[%s2217 + $0x172] sm:$0xff]
      %v3688 = vld [vmem:[%s2217 + $0x182] sm:$0xff]
      %v3689 = vld [vmem:[%s2217 + $0x18a] sm:$0xff]
      %v3690 = vld [vmem:[%s2217 + $0x192] sm:$0xff]
      %v3691 = vld [vmem:[%s2217 + $0x1a2] sm:$0xff]
      %v3692 = vld [vmem:[%s2217 + $0x1aa] sm:$0xff]
      %v3693 = vld [vmem:[%s2217 + $0x1b2] sm:$0xff]
      %v3694 = vld [vmem:[%s2217 + $0x1c2] sm:$0xff]
      %v3695 = vld [vmem:[%s2217 + $0x1ca] sm:$0xff]
      %v3696 = vld [vmem:[%s2217 + $0x1d2] sm:$0xff]
      %v3697 = vld [vmem:[%s2217 + $0x1e2] sm:$0xff]
      %v3698 = vld [vmem:[%s2217 + $0x1ea] sm:$0xff]
      %v3699 = vld [vmem:[%s2217 + $0x1f2] sm:$0xff]
      %v3700 = vld [vmem:[%s2217 + $0x202] sm:$0xff]
      %v3701 = vld [vmem:[%s2217 + $0x20a] sm:$0xff]
      %v3702 = vld [vmem:[%s2217 + $0x212] sm:$0xff]
      %v3703 = vld [vmem:[%s2217 + $0x222] sm:$0xff]
      %v3704 = vld [vmem:[%s2217 + $0x22a] sm:$0xff]
      %v3705 = vld [vmem:[%s2217 + $0x232] sm:$0xff]
      %v3706 = vld [vmem:[%s1 + $0x14] sm:$0xf]
      %v3708 = vsel %vm226, %v3652, 0
      %v3711 = vsel %vm226, %v3653, 0
      %v3714 = vsel %vm226, %v3654, 0
      %v3717 = vsel %vm226, %v3655, 0
      %v3720 = vsel %vm226, %v3656, 0
      %v3723 = vsel %vm226, %v3657, 0
      %v3726 = vsel %vm226, %v3658, 0
      %v3729 = vsel %vm226, %v3659, 0
      %v3732 = vsel %vm226, %v3660, 0
      %v3735 = vsel %vm226, %v3661, 0
      %v3738 = vsel %vm226, %v3662, 0
      %v3741 = vsel %vm226, %v3663, 0
      %v3744 = vsel %vm226, %v3664, 0
      %v3747 = vsel %vm226, %v3665, 0
      %v3750 = vsel %vm226, %v3666, 0
      %v3753 = vsel %vm226, %v3667, 0
      %v3756 = vsel %vm226, %v3668, 0
      %v3759 = vsel %vm226, %v3669, 0
      %v3762 = vsel %vm226, %v3670, 0
      %v3765 = vsel %vm226, %v3671, 0
      %v3768 = vsel %vm226, %v3672, 0
      %v3771 = vsel %vm226, %v3673, 0
      %v3774 = vsel %vm226, %v3674, 0
      %v3777 = vsel %vm226, %v3675, 0
      %v3780 = vsel %vm226, %v3676, 0
      %v3783 = vsel %vm226, %v3677, 0
      %v3786 = vsel %vm226, %v3678, 0
      %v3789 = vsel %vm226, %v3679, 0
      %v3792 = vsel %vm226, %v3680, 0
      %v3795 = vsel %vm226, %v3681, 0
      %v3798 = vsel %vm226, %v3682, 0
      %v3801 = vsel %vm226, %v3683, 0
      %v3804 = vsel %vm226, %v3684, 0
      %v3807 = vsel %vm226, %v3685, 0
      %v3810 = vsel %vm226, %v3686, 0
      %v3813 = vsel %vm226, %v3687, 0
      %v3816 = vsel %vm226, %v3688, 0
      %v3819 = vsel %vm226, %v3689, 0
      %v3822 = vsel %vm226, %v3690, 0
      %v3825 = vsel %vm226, %v3691, 0
      %v3828 = vsel %vm226, %v3692, 0
      %v3831 = vsel %vm226, %v3693, 0
      %v3834 = vsel %vm226, %v3694, 0
      %v3837 = vsel %vm226, %v3695, 0
      %v3840 = vsel %vm226, %v3696, 0
      %v3843 = vsel %vm226, %v3697, 0
      %v3846 = vsel %vm226, %v3698, 0
      %v3849 = vsel %vm226, %v3699, 0
      %v3852 = vsel %vm226, %v3700, 0
      %v3855 = vsel %vm226, %v3701, 0
      %v3858 = vsel %vm226, %v3702, 0
      %v3861 = vsel %vm226, %v3703, 0
      %v3864 = vsel %vm226, %v3704, 0
      %v3867 = vsel %vm226, %v3705, 0
      %v3870 = vsel %vm389, %v3706, 0
      %3872 = vmatprep.subr.mxu0 0.0
      %3873 = vmatpush1.msra.mxu0 %v3870
      %3874 = vmatprep.subr.mxu0 0.0
      %3875 = vmatpush1.msra.mxu0 0.0
      %3876 = vmatprep.subr.mxu0 0.0
      %3877 = vmatpush1.msra.mxu0 0.0
      %3878 = vmatprep.subr.mxu0 0.0
      %3879 = vmatpush1.msra.mxu0 0.0
      %3880 = vmatprep.subr.mxu0 0.0
      %3881 = vmatpush1.msra.mxu0 0.0
      %3882 = vmatprep.subr.mxu0 0.0
      %3883 = vmatpush1.msra.mxu0 0.0
      %3884 = vmatprep.subr.mxu0 0.0
      %3885 = vmatpush1.msra.mxu0 0.0
      %3886 = vmatprep.subr.mxu0 0.0
      %3887 = vmatpush1.msra.mxu0 0.0
      %3888 = vmatprep.subr.mxu0 0.0
      %3889 = vmatpush1.msra.mxu0 0.0
      %3890 = vmatprep.subr.mxu0 0.0
      %3891 = vmatpush1.msra.mxu0 0.0
      %3892 = vmatprep.subr.mxu0 0.0
      %3893 = vmatpush1.msra.mxu0 0.0
      %3894 = vmatprep.subr.mxu0 0.0
      %3895 = vmatpush1.msra.mxu0 0.0
      %3896 = vmatprep.subr.mxu0 0.0
      %3897 = vmatpush1.msra.mxu0 0.0
      %3898 = vmatprep.subr.mxu0 0.0
      %3899 = vmatpush1.msra.mxu0 0.0
      %3900 = vmatprep.subr.mxu0 0.0
      %3901 = vmatpush1.msra.mxu0 0.0
      %3902 = vmatprep.subr.mxu0 0.0
      %3903 = vmatpush1.msra.mxu0 0.0
      %3904 = vmatprep.subr.mxu0 0.0
      %3905 = vmatpush1.msra.mxu0 0.0
      %3906 = vmatprep.subr.mxu0 0.0
      %3907 = vmatpush1.msra.mxu0 0.0
      %3908 = vmatprep.subr.mxu0 0.0
      %3909 = vmatpush1.msra.mxu0 0.0
      %3910 = vmatprep.subr.mxu0 0.0
      %3911 = vmatpush1.msra.mxu0 0.0
      %3912 = vmatprep.subr.mxu0 0.0
      %3913 = vmatpush1.msra.mxu0 0.0
      %3914 = vmatprep.subr.mxu0 0.0
      %3915 = vmatpush1.msra.mxu0 0.0
      %3916 = vmatprep.subr.mxu0 0.0
      %3917 = vmatpush1.msra.mxu0 0.0
      %3918 = vmatprep.subr.mxu0 0.0
      %3919 = vmatpush1.msra.mxu0 0.0
      %3920 = vmatprep.subr.mxu0 0.0
      %3921 = vmatpush1.msra.mxu0 0.0
      %3922 = vmatprep.subr.mxu0 0.0
      %3923 = vmatpush1.msra.mxu0 0.0
      %3924 = vmatprep.subr.mxu0 0.0
      %3925 = vmatpush1.msra.mxu0 0.0
      %3926 = vmatprep.subr.mxu0 0.0
      %3927 = vmatpush1.msra.mxu0 0.0
      %3928 = vmatprep.subr.mxu0 0.0
      %3929 = vmatpush1.msra.mxu0 0.0
      %3930 = vmatprep.subr.mxu0 0.0
      %3931 = vmatpush1.msra.mxu0 0.0
      %3932 = vmatprep.subr.mxu0 0.0
      %3933 = vmatpush1.msra.mxu0 0.0
      %3934 = vmatprep.subr.mxu0 0.0
      %3935 = vmatpush1.msra.mxu0 0.0
      %3936 = vmatprep.mubr.f32.mxu0 0.0
      %3937 = vmatmul.mubr.f32.gmra.mrb[0].mxu0 %v3708
      %v3938 = vpop.f32.mrb[0].mxu0
      %v3939 = vadd.f32 0.0, %v3938
      %v3940 = vpop.f32.mrb[0].mxu0
      %3941 = vmatprep.mubr.f32.mxu0 0.0
      %3942 = vmatmul.mubr.f32.gmra.mrb[0].mxu0 %v3711
      %v3943 = vpop.f32.mrb[0].mxu0
      %v3944 = vadd.f32 0.0, %v3943
      %v3945 = vpop.f32.mrb[0].mxu0
      %3946 = vmatprep.mubr.f32.mxu0 0.0
      %3947 = vmatmul.mubr.f32.gmra.mrb[0].mxu0 %v3714
      %v3948 = vpop.f32.mrb[0].mxu0
      %v3949 = vadd.f32 0.0, %v3948
      %v3950 = vpop.f32.mrb[0].mxu0
      %3951 = vmatprep.mubr.f32.mxu0 0.0
      %3952 = vmatmul.mubr.f32.gmra.mrb[0].mxu0 %v3717
      %v3953 = vpop.f32.mrb[0].mxu0
      %v3954 = vadd.f32 0.0, %v3953
      %v3955 = vpop.f32.mrb[0].mxu0
      %3956 = vmatprep.mubr.f32.mxu0 0.0
      %3957 = vmatmul.mubr.f32.gmra.mrb[0].mxu0 %v3720
      %v3958 = vpop.f32.mrb[0].mxu0
      %v3959 = vadd.f32 0.0, %v3958
      %v3960 = vpop.f32.mrb[0].mxu0
      %3961 = vmatprep.mubr.f32.mxu0 0.0
      %3962 = vmatmul.mubr.f32.gmra.mrb[0].mxu0 %v3723
      %v3963 = vpop.f32.mrb[0].mxu0
      %v3964 = vadd.f32 0.0, %v3963
      %v3965 = vpop.f32.mrb[0].mxu0
      %3966 = vmatprep.mubr.f32.mxu0 0.0
      %3967 = vmatmul.mubr.f32.gmra.mrb[0].mxu0 %v3726
      %v3968 = vpop.f32.mrb[0].mxu0
      %v3969 = vadd.f32 0.0, %v3968
      %v3970 = vpop.f32.mrb[0].mxu0
      %3971 = vmatprep.mubr.f32.mxu0 0.0
      %3972 = vmatmul.mubr.f32.gmra.mrb[0].mxu0 %v3729
      %v3973 = vpop.f32.mrb[0].mxu0
      %v3974 = vadd.f32 0.0, %v3973
      %v3975 = vpop.f32.mrb[0].mxu0
      %3976 = vmatprep.mubr.f32.mxu0 0.0
      %3977 = vmatmul.mubr.f32.gmra.mrb[0].mxu0 %v3732
      %v3978 = vpop.f32.mrb[0].mxu0
      %v3979 = vadd.f32 0.0, %v3978
      %v3980 = vpop.f32.mrb[0].mxu0
      %3981 = vmatprep.mubr.f32.mxu0 0.0
      %3982 = vmatmul.mubr.f32.gmra.mrb[0].mxu0 %v3735
      %v3983 = vpop.f32.mrb[0].mxu0
      %v3984 = vadd.f32 0.0, %v3983
      %v3985 = vpop.f32.mrb[0].mxu0
      %3986 = vmatprep.mubr.f32.mxu0 0.0
      %3987 = vmatmul.mubr.f32.gmra.mrb[0].mxu0 %v3738
      %v3988 = vpop.f32.mrb[0].mxu0
      %v3989 = vadd.f32 0.0, %v3988
      %v3990 = vpop.f32.mrb[0].mxu0
      %3991 = vmatprep.mubr.f32.mxu0 0.0
      %3992 = vmatmul.mubr.f32.gmra.mrb[0].mxu0 %v3741
      %v3993 = vpop.f32.mrb[0].mxu0
      %v3994 = vadd.f32 0.0, %v3993
      %v3995 = vpop.f32.mrb[0].mxu0
      %3996 = vmatprep.mubr.f32.mxu0 0.0
      %3997 = vmatmul.mubr.f32.gmra.mrb[0].mxu0 %v3744
      %v3998 = vpop.f32.mrb[0].mxu0
      %v3999 = vadd.f32 0.0, %v3998
      %v4000 = vpop.f32.mrb[0].mxu0
      %4001 = vmatprep.mubr.f32.mxu0 0.0
      %4002 = vmatmul.mubr.f32.gmra.mrb[0].mxu0 %v3747
      %v4003 = vpop.f32.mrb[0].mxu0
      %v4004 = vadd.f32 0.0, %v4003
      %v4005 = vpop.f32.mrb[0].mxu0
      %4006 = vmatprep.mubr.f32.mxu0 0.0
      %4007 = vmatmul.mubr.f32.gmra.mrb[0].mxu0 %v3750
      %v4008 = vpop.f32.mrb[0].mxu0
      %v4009 = vadd.f32 0.0, %v4008
      %v4010 = vpop.f32.mrb[0].mxu0
      %4011 = vmatprep.mubr.f32.mxu0 0.0
      %4012 = vmatmul.mubr.f32.gmra.mrb[0].mxu0 %v3753
      %v4013 = vpop.f32.mrb[0].mxu0
      %v4014 = vadd.f32 0.0, %v4013
      %v4015 = vpop.f32.mrb[0].mxu0
      %4016 = vmatprep.mubr.f32.mxu0 0.0
      %4017 = vmatmul.mubr.f32.gmra.mrb[0].mxu0 %v3756
      %v4018 = vpop.f32.mrb[0].mxu0
      %v4019 = vadd.f32 0.0, %v4018
      %v4020 = vpop.f32.mrb[0].mxu0
      %4021 = vmatprep.mubr.f32.mxu0 0.0
      %4022 = vmatmul.mubr.f32.gmra.mrb[0].mxu0 %v3759
      %v4023 = vpop.f32.mrb[0].mxu0
      %v4024 = vadd.f32 0.0, %v4023
      %v4025 = vpop.f32.mrb[0].mxu0
      %4026 = vmatprep.mubr.f32.mxu0 0.0
      %4027 = vmatmul.mubr.f32.gmra.mrb[0].mxu0 %v3762
      %v4028 = vpop.f32.mrb[0].mxu0
      %v4029 = vadd.f32 0.0, %v4028
      %v4030 = vpop.f32.mrb[0].mxu0
      %4031 = vmatprep.mubr.f32.mxu0 0.0
      %4032 = vmatmul.mubr.f32.gmra.mrb[0].mxu0 %v3765
      %v4033 = vpop.f32.mrb[0].mxu0
      %v4034 = vadd.f32 0.0, %v4033
      %v4035 = vpop.f32.mrb[0].mxu0
      %4036 = vmatprep.mubr.f32.mxu0 0.0
      %4037 = vmatmul.mubr.f32.gmra.mrb[0].mxu0 %v3768
      %v4038 = vpop.f32.mrb[0].mxu0
      %v4039 = vadd.f32 0.0, %v4038
      %v4040 = vpop.f32.mrb[0].mxu0
      %4041 = vmatprep.mubr.f32.mxu0 0.0
      %4042 = vmatmul.mubr.f32.gmra.mrb[0].mxu0 %v3771
      %v4043 = vpop.f32.mrb[0].mxu0
      %v4044 = vadd.f32 0.0, %v4043
      %v4045 = vpop.f32.mrb[0].mxu0
      %4046 = vmatprep.mubr.f32.mxu0 0.0
      %4047 = vmatmul.mubr.f32.gmra.mrb[0].mxu0 %v3774
      %v4048 = vpop.f32.mrb[0].mxu0
      %v4049 = vadd.f32 0.0, %v4048
      %v4050 = vpop.f32.mrb[0].mxu0
      %4051 = vmatprep.mubr.f32.mxu0 0.0
      %4052 = vmatmul.mubr.f32.gmra.mrb[0].mxu0 %v3777
      %v4053 = vpop.f32.mrb[0].mxu0
      %v4054 = vadd.f32 0.0, %v4053
      %v4055 = vpop.f32.mrb[0].mxu0
      %4056 = vmatprep.mubr.f32.mxu0 0.0
      %4057 = vmatmul.mubr.f32.gmra.mrb[0].mxu0 %v3780
      %v4058 = vpop.f32.mrb[0].mxu0
      %v4059 = vadd.f32 0.0, %v4058
      %v4060 = vpop.f32.mrb[0].mxu0
      %4061 = vmatprep.mubr.f32.mxu0 0.0
      %4062 = vmatmul.mubr.f32.gmra.mrb[0].mxu0 %v3783
      %v4063 = vpop.f32.mrb[0].mxu0
      %v4064 = vadd.f32 0.0, %v4063
      %v4065 = vpop.f32.mrb[0].mxu0
      %4066 = vmatprep.mubr.f32.mxu0 0.0
      %4067 = vmatmul.mubr.f32.gmra.mrb[0].mxu0 %v3786
      %v4068 = vpop.f32.mrb[0].mxu0
      %v4069 = vadd.f32 0.0, %v4068
      %v4070 = vpop.f32.mrb[0].mxu0
      %4071 = vmatprep.mubr.f32.mxu0 0.0
      %4072 = vmatmul.mubr.f32.gmra.mrb[0].mxu0 %v3789
      %v4073 = vpop.f32.mrb[0].mxu0
      %v4074 = vadd.f32 0.0, %v4073
      %v4075 = vpop.f32.mrb[0].mxu0
      %4076 = vmatprep.mubr.f32.mxu0 0.0
      %4077 = vmatmul.mubr.f32.gmra.mrb[0].mxu0 %v3792
      %v4078 = vpop.f32.mrb[0].mxu0
      %v4079 = vadd.f32 0.0, %v4078
      %v4080 = vpop.f32.mrb[0].mxu0
      %4081 = vmatprep.mubr.f32.mxu0 0.0
      %4082 = vmatmul.mubr.f32.gmra.mrb[0].mxu0 %v3795
      %v4083 = vpop.f32.mrb[0].mxu0
      %v4084 = vadd.f32 0.0, %v4083
      %v4085 = vpop.f32.mrb[0].mxu0
      %4086 = vmatprep.mubr.f32.mxu0 0.0
      %4087 = vmatmul.mubr.f32.gmra.mrb[0].mxu0 %v3798
      %v4088 = vpop.f32.mrb[0].mxu0
      %v4089 = vadd.f32 0.0, %v4088
      %v4090 = vpop.f32.mrb[0].mxu0
      %4091 = vmatprep.mubr.f32.mxu0 0.0
      %4092 = vmatmul.mubr.f32.gmra.mrb[0].mxu0 %v3801
      %v4093 = vpop.f32.mrb[0].mxu0
      %v4094 = vadd.f32 0.0, %v4093
      %v4095 = vpop.f32.mrb[0].mxu0
      %4096 = vmatprep.mubr.f32.mxu0 0.0
      %4097 = vmatmul.mubr.f32.gmra.mrb[0].mxu0 %v3804
      %v4098 = vpop.f32.mrb[0].mxu0
      %v4099 = vadd.f32 0.0, %v4098
      %v4100 = vpop.f32.mrb[0].mxu0
      %4101 = vmatprep.mubr.f32.mxu0 0.0
      %4102 = vmatmul.mubr.f32.gmra.mrb[0].mxu0 %v3807
      %v4103 = vpop.f32.mrb[0].mxu0
      %v4104 = vadd.f32 0.0, %v4103
      %v4105 = vpop.f32.mrb[0].mxu0
      %4106 = vmatprep.mubr.f32.mxu0 0.0
      %4107 = vmatmul.mubr.f32.gmra.mrb[0].mxu0 %v3810
      %v4108 = vpop.f32.mrb[0].mxu0
      %v4109 = vadd.f32 0.0, %v4108
      %v4110 = vpop.f32.mrb[0].mxu0
      %4111 = vmatprep.mubr.f32.mxu0 0.0
      %4112 = vmatmul.mubr.f32.gmra.mrb[0].mxu0 %v3813
      %v4113 = vpop.f32.mrb[0].mxu0
      %v4114 = vadd.f32 0.0, %v4113
      %v4115 = vpop.f32.mrb[0].mxu0
      %4116 = vmatprep.mubr.f32.mxu0 0.0
      %4117 = vmatmul.mubr.f32.gmra.mrb[0].mxu0 %v3816
      %v4118 = vpop.f32.mrb[0].mxu0
      %v4119 = vadd.f32 0.0, %v4118
      %v4120 = vpop.f32.mrb[0].mxu0
      %4121 = vmatprep.mubr.f32.mxu0 0.0
      %4122 = vmatmul.mubr.f32.gmra.mrb[0].mxu0 %v3819
      %v4123 = vpop.f32.mrb[0].mxu0
      %v4124 = vadd.f32 0.0, %v4123
      %v4125 = vpop.f32.mrb[0].mxu0
      %4126 = vmatprep.mubr.f32.mxu0 0.0
      %4127 = vmatmul.mubr.f32.gmra.mrb[0].mxu0 %v3822
      %v4128 = vpop.f32.mrb[0].mxu0
      %v4129 = vadd.f32 0.0, %v4128
      %v4130 = vpop.f32.mrb[0].mxu0
      %4131 = vmatprep.mubr.f32.mxu0 0.0
      %4132 = vmatmul.mubr.f32.gmra.mrb[0].mxu0 %v3825
      %v4133 = vpop.f32.mrb[0].mxu0
      %v4134 = vadd.f32 0.0, %v4133
      %v4135 = vpop.f32.mrb[0].mxu0
      %4136 = vmatprep.mubr.f32.mxu0 0.0
      %4137 = vmatmul.mubr.f32.gmra.mrb[0].mxu0 %v3828
      %v4138 = vpop.f32.mrb[0].mxu0
      %v4139 = vadd.f32 0.0, %v4138
      %v4140 = vpop.f32.mrb[0].mxu0
      %4141 = vmatprep.mubr.f32.mxu0 0.0
      %4142 = vmatmul.mubr.f32.gmra.mrb[0].mxu0 %v3831
      %v4143 = vpop.f32.mrb[0].mxu0
      %v4144 = vadd.f32 0.0, %v4143
      %v4145 = vpop.f32.mrb[0].mxu0
      %4146 = vmatprep.mubr.f32.mxu0 0.0
      %4147 = vmatmul.mubr.f32.gmra.mrb[0].mxu0 %v3834
      %v4148 = vpop.f32.mrb[0].mxu0
      %v4149 = vadd.f32 0.0, %v4148
      %v4150 = vpop.f32.mrb[0].mxu0
      %4151 = vmatprep.mubr.f32.mxu0 0.0
      %4152 = vmatmul.mubr.f32.gmra.mrb[0].mxu0 %v3837
      %v4153 = vpop.f32.mrb[0].mxu0
      %v4154 = vadd.f32 0.0, %v4153
      %v4155 = vpop.f32.mrb[0].mxu0
      %4156 = vmatprep.mubr.f32.mxu0 0.0
      %4157 = vmatmul.mubr.f32.gmra.mrb[0].mxu0 %v3840
      %v4158 = vpop.f32.mrb[0].mxu0
      %v4159 = vadd.f32 0.0, %v4158
      %v4160 = vpop.f32.mrb[0].mxu0
      %4161 = vmatprep.mubr.f32.mxu0 0.0
      %4162 = vmatmul.mubr.f32.gmra.mrb[0].mxu0 %v3843
      %v4163 = vpop.f32.mrb[0].mxu0
      %v4164 = vadd.f32 0.0, %v4163
      %v4165 = vpop.f32.mrb[0].mxu0
      %4166 = vmatprep.mubr.f32.mxu0 0.0
      %4167 = vmatmul.mubr.f32.gmra.mrb[0].mxu0 %v3846
      %v4168 = vpop.f32.mrb[0].mxu0
      %v4169 = vadd.f32 0.0, %v4168
      %v4170 = vpop.f32.mrb[0].mxu0
      %4171 = vmatprep.mubr.f32.mxu0 0.0
      %4172 = vmatmul.mubr.f32.gmra.mrb[0].mxu0 %v3849
      %v4173 = vpop.f32.mrb[0].mxu0
      %v4174 = vadd.f32 0.0, %v4173
      %v4175 = vpop.f32.mrb[0].mxu0
      %4176 = vmatprep.mubr.f32.mxu0 0.0
      %4177 = vmatmul.mubr.f32.gmra.mrb[0].mxu0 %v3852
      %v4178 = vpop.f32.mrb[0].mxu0
      %v4179 = vadd.f32 0.0, %v4178
      %v4180 = vpop.f32.mrb[0].mxu0
      %4181 = vmatprep.mubr.f32.mxu0 0.0
      %4182 = vmatmul.mubr.f32.gmra.mrb[0].mxu0 %v3855
      %v4183 = vpop.f32.mrb[0].mxu0
      %v4184 = vadd.f32 0.0, %v4183
      %v4185 = vpop.f32.mrb[0].mxu0
      %4186 = vmatprep.mubr.f32.mxu0 0.0
      %4187 = vmatmul.mubr.f32.gmra.mrb[0].mxu0 %v3858
      %v4188 = vpop.f32.mrb[0].mxu0
      %v4189 = vadd.f32 0.0, %v4188
      %v4190 = vpop.f32.mrb[0].mxu0
      %4191 = vmatprep.mubr.f32.mxu0 0.0
      %4192 = vmatmul.mubr.f32.gmra.mrb[0].mxu0 %v3861
      %v4193 = vpop.f32.mrb[0].mxu0
      %v4194 = vadd.f32 0.0, %v4193
      %v4195 = vpop.f32.mrb[0].mxu0
      %4196 = vmatprep.mubr.f32.mxu0 0.0
      %4197 = vmatmul.mubr.f32.gmra.mrb[0].mxu0 %v3864
      %v4198 = vpop.f32.mrb[0].mxu0
      %v4199 = vadd.f32 0.0, %v4198
      %v4200 = vpop.f32.mrb[0].mxu0
      %4201 = vmatprep.mubr.f32.mxu0 0.0
      %4202 = vmatmul.mubr.f32.gmra.mrb[0].mxu0 %v3867
      %v4203 = vpop.f32.mrb[0].mxu0
      %v4204 = vadd.f32 0.0, %v4203
      %v4205 = vpop.f32.mrb[0].mxu0
      %4206 = vdwg.mxu0
      %v4207 = vld [vmem:[#allocation3] sm:$0xff]
      %v4208 = vld [vmem:[#allocation3 + $0x8] sm:$0xff]
      %v4209 = vld [vmem:[#allocation3 + $0x10] sm:$0xff]
      %v4210 = vld [vmem:[#allocation3 + $0x18] sm:$0xff]
      %v4211 = vld [vmem:[#allocation3 + $0x20] sm:$0xff]
      %v4212 = vld [vmem:[#allocation3 + $0x28] sm:$0xff]
      %v4213 = vld [vmem:[#allocation3 + $0x30] sm:$0xff]
      %v4214 = vld [vmem:[#allocation3 + $0x38] sm:$0xff]
      %v4215 = vld [vmem:[#allocation3 + $0x40] sm:$0xff]
      %v4216 = vld [vmem:[#allocation3 + $0x48] sm:$0xff]
      %v4217 = vld [vmem:[#allocation3 + $0x50] sm:$0xff]
      %v4218 = vld [vmem:[#allocation3 + $0x58] sm:$0xff]
      %v4219 = vld [vmem:[#allocation3 + $0x60] sm:$0xff]
      %v4220 = vld [vmem:[#allocation3 + $0x68] sm:$0xff]
      %v4221 = vld [vmem:[#allocation3 + $0x70] sm:$0xff]
      %v4222 = vld [vmem:[#allocation3 + $0x78] sm:$0xff]
      %v4223 = vld [vmem:[#allocation3 + $0x80] sm:$0xff]
      %v4224 = vld [vmem:[#allocation3 + $0x88] sm:$0xff]
      %v4225 = vld [vmem:[#allocation3 + $0x90] sm:$0xff]
      %v4226 = vld [vmem:[#allocation3 + $0x98] sm:$0xff]
      %v4227 = vld [vmem:[#allocation3 + $0xa0] sm:$0xff]
      %v4228 = vld [vmem:[#allocation3 + $0xa8] sm:$0xff]
      %v4229 = vld [vmem:[#allocation3 + $0xb0] sm:$0xff]
      %v4230 = vld [vmem:[#allocation3 + $0xb8] sm:$0xff]
      %v4231 = vld [vmem:[#allocation3 + $0xc0] sm:$0xff]
      %v4232 = vld [vmem:[#allocation3 + $0xc8] sm:$0xff]
      %v4233 = vld [vmem:[#allocation3 + $0xd0] sm:$0xff]
      %v4234 = vld [vmem:[#allocation3 + $0xd8] sm:$0xff]
      %v4235 = vld [vmem:[#allocation3 + $0xe0] sm:$0xff]
      %v4236 = vld [vmem:[#allocation3 + $0xe8] sm:$0xff]
      %v4237 = vld [vmem:[#allocation3 + $0xf0] sm:$0xff]
      %v4238 = vld [vmem:[#allocation3 + $0xf8] sm:$0xff]
      %v4239 = vld [vmem:[#allocation3 + $0x100] sm:$0xff]
      %v4240 = vld [vmem:[#allocation3 + $0x108] sm:$0xff]
      %v4241 = vld [vmem:[#allocation3 + $0x110] sm:$0xff]
      %v4242 = vld [vmem:[#allocation3 + $0x118] sm:$0xff]
      %v4243 = vld [vmem:[#allocation3 + $0x120] sm:$0xff]
      %v4244 = vld [vmem:[#allocation3 + $0x128] sm:$0xff]
      %v4245 = vld [vmem:[#allocation3 + $0x130] sm:$0xff]
      %v4246 = vld [vmem:[#allocation3 + $0x138] sm:$0xff]
      %v4247 = vld [vmem:[#allocation3 + $0x140] sm:$0xff]
      %v4248 = vld [vmem:[#allocation3 + $0x148] sm:$0xff]
      %v4249 = vld [vmem:[#allocation3 + $0x150] sm:$0xff]
      %v4250 = vld [vmem:[#allocation3 + $0x158] sm:$0xff]
      %v4251 = vld [vmem:[#allocation3 + $0x160] sm:$0xff]
      %v4252 = vld [vmem:[#allocation3 + $0x168] sm:$0xff]
      %v4253 = vld [vmem:[#allocation3 + $0x170] sm:$0xff]
      %v4254 = vld [vmem:[#allocation3 + $0x178] sm:$0xff]
      %v4255 = vld [vmem:[#allocation3 + $0x180] sm:$0xff]
      %v4256 = vld [vmem:[#allocation3 + $0x188] sm:$0xff]
      %v4257 = vld [vmem:[#allocation3 + $0x190] sm:$0xff]
      %v4258 = vld [vmem:[#allocation3 + $0x198] sm:$0xff]
      %v4259 = vld [vmem:[#allocation3 + $0x1a0] sm:$0xff]
      %v4260 = vld [vmem:[#allocation3 + $0x1a8] sm:$0xff]
      %v4261 = vadd.f32 %v4207, %v3939
      %v4262 = vadd.f32 %v4208, %v3944
      %v4263 = vadd.f32 %v4209, %v3949
      %v4264 = vadd.f32 %v4210, %v3954
      %v4265 = vadd.f32 %v4211, %v3959
      %v4266 = vadd.f32 %v4212, %v3964
      %v4267 = vadd.f32 %v4213, %v3969
      %v4268 = vadd.f32 %v4214, %v3974
      %v4269 = vadd.f32 %v4215, %v3979
      %v4270 = vadd.f32 %v4216, %v3984
      %v4271 = vadd.f32 %v4217, %v3989
      %v4272 = vadd.f32 %v4218, %v3994
      %v4273 = vadd.f32 %v4219, %v3999
      %v4274 = vadd.f32 %v4220, %v4004
      %v4275 = vadd.f32 %v4221, %v4009
      %v4276 = vadd.f32 %v4222, %v4014
      %v4277 = vadd.f32 %v4223, %v4019
      %v4278 = vadd.f32 %v4224, %v4024
      %v4279 = vadd.f32 %v4225, %v4029
      %v4280 = vadd.f32 %v4226, %v4034
      %v4281 = vadd.f32 %v4227, %v4039
      %v4282 = vadd.f32 %v4228, %v4044
      %v4283 = vadd.f32 %v4229, %v4049
      %v4284 = vadd.f32 %v4230, %v4054
      %v4285 = vadd.f32 %v4231, %v4059
      %v4286 = vadd.f32 %v4232, %v4064
      %v4287 = vadd.f32 %v4233, %v4069
      %v4288 = vadd.f32 %v4234, %v4074
      %v4289 = vadd.f32 %v4235, %v4079
      %v4290 = vadd.f32 %v4236, %v4084
      %v4291 = vadd.f32 %v4237, %v4089
      %v4292 = vadd.f32 %v4238, %v4094
      %v4293 = vadd.f32 %v4239, %v4099
      %v4294 = vadd.f32 %v4240, %v4104
      %v4295 = vadd.f32 %v4241, %v4109
      %v4296 = vadd.f32 %v4242, %v4114
      %v4297 = vadd.f32 %v4243, %v4119
      %v4298 = vadd.f32 %v4244, %v4124
      %v4299 = vadd.f32 %v4245, %v4129
      %v4300 = vadd.f32 %v4246, %v4134
      %v4301 = vadd.f32 %v4247, %v4139
      %v4302 = vadd.f32 %v4248, %v4144
      %v4303 = vadd.f32 %v4249, %v4149
      %v4304 = vadd.f32 %v4250, %v4154
      %v4305 = vadd.f32 %v4251, %v4159
      %v4306 = vadd.f32 %v4252, %v4164
      %v4307 = vadd.f32 %v4253, %v4169
      %v4308 = vadd.f32 %v4254, %v4174
      %v4309 = vadd.f32 %v4255, %v4179
      %v4310 = vadd.f32 %v4256, %v4184
      %v4311 = vadd.f32 %v4257, %v4189
      %v4312 = vadd.f32 %v4258, %v4194
      %v4313 = vadd.f32 %v4259, %v4199
      %v4314 = vadd.f32 %v4260, %v4204
      %4315 = vst.msk [vmem:[#allocation3] sm:$0xff] %vm728, %v4261
      %4316 = vst.msk [vmem:[#allocation3 + $0x8] sm:$0xff] %vm728, %v4262
      %4317 = vst.msk [vmem:[#allocation3 + $0x10] sm:$0xff] %vm728, %v4263
      %4318 = vst.msk [vmem:[#allocation3 + $0x18] sm:$0xff] %vm728, %v4264
      %4319 = vst.msk [vmem:[#allocation3 + $0x20] sm:$0xff] %vm728, %v4265
      %4320 = vst.msk [vmem:[#allocation3 + $0x28] sm:$0xff] %vm728, %v4266
      %4321 = vst.msk [vmem:[#allocation3 + $0x30] sm:$0xff] %vm728, %v4267
      %4322 = vst.msk [vmem:[#allocation3 + $0x38] sm:$0xff] %vm728, %v4268
      %4323 = vst.msk [vmem:[#allocation3 + $0x40] sm:$0xff] %vm728, %v4269
      %4324 = vst.msk [vmem:[#allocation3 + $0x48] sm:$0xff] %vm728, %v4270
      %4325 = vst.msk [vmem:[#allocation3 + $0x50] sm:$0xff] %vm728, %v4271
      %4326 = vst.msk [vmem:[#allocation3 + $0x58] sm:$0xff] %vm728, %v4272
      %4327 = vst.msk [vmem:[#allocation3 + $0x60] sm:$0xff] %vm728, %v4273
      %4328 = vst.msk [vmem:[#allocation3 + $0x68] sm:$0xff] %vm728, %v4274
      %4329 = vst.msk [vmem:[#allocation3 + $0x70] sm:$0xff] %vm728, %v4275
      %4330 = vst.msk [vmem:[#allocation3 + $0x78] sm:$0xff] %vm728, %v4276
      %4331 = vst.msk [vmem:[#allocation3 + $0x80] sm:$0xff] %vm728, %v4277
      %4332 = vst.msk [vmem:[#allocation3 + $0x88] sm:$0xff] %vm728, %v4278
      %4333 = vst.msk [vmem:[#allocation3 + $0x90] sm:$0xff] %vm728, %v4279
      %4334 = vst.msk [vmem:[#allocation3 + $0x98] sm:$0xff] %vm728, %v4280
      %4335 = vst.msk [vmem:[#allocation3 + $0xa0] sm:$0xff] %vm728, %v4281
      %4336 = vst.msk [vmem:[#allocation3 + $0xa8] sm:$0xff] %vm728, %v4282
      %4337 = vst.msk [vmem:[#allocation3 + $0xb0] sm:$0xff] %vm728, %v4283
      %4338 = vst.msk [vmem:[#allocation3 + $0xb8] sm:$0xff] %vm728, %v4284
      %4339 = vst.msk [vmem:[#allocation3 + $0xc0] sm:$0xff] %vm728, %v4285
      %4340 = vst.msk [vmem:[#allocation3 + $0xc8] sm:$0xff] %vm728, %v4286
      %4341 = vst.msk [vmem:[#allocation3 + $0xd0] sm:$0xff] %vm728, %v4287
      %4342 = vst.msk [vmem:[#allocation3 + $0xd8] sm:$0xff] %vm728, %v4288
      %4343 = vst.msk [vmem:[#allocation3 + $0xe0] sm:$0xff] %vm728, %v4289
      %4344 = vst.msk [vmem:[#allocation3 + $0xe8] sm:$0xff] %vm728, %v4290
      %4345 = vst.msk [vmem:[#allocation3 + $0xf0] sm:$0xff] %vm728, %v4291
      %4346 = vst.msk [vmem:[#allocation3 + $0xf8] sm:$0xff] %vm728, %v4292
      %4347 = vst.msk [vmem:[#allocation3 + $0x100] sm:$0xff] %vm728, %v4293
      %4348 = vst.msk [vmem:[#allocation3 + $0x108] sm:$0xff] %vm728, %v4294
      %4349 = vst.msk [vmem:[#allocation3 + $0x110] sm:$0xff] %vm728, %v4295
      %4350 = vst.msk [vmem:[#allocation3 + $0x118] sm:$0xff] %vm728, %v4296
      %4351 = vst.msk [vmem:[#allocation3 + $0x120] sm:$0xff] %vm728, %v4297
      %4352 = vst.msk [vmem:[#allocation3 + $0x128] sm:$0xff] %vm728, %v4298
      %4353 = vst.msk [vmem:[#allocation3 + $0x130] sm:$0xff] %vm728, %v4299
      %4354 = vst.msk [vmem:[#allocation3 + $0x138] sm:$0xff] %vm728, %v4300
      %4355 = vst.msk [vmem:[#allocation3 + $0x140] sm:$0xff] %vm728, %v4301
      %4356 = vst.msk [vmem:[#allocation3 + $0x148] sm:$0xff] %vm728, %v4302
      %4357 = vst.msk [vmem:[#allocation3 + $0x150] sm:$0xff] %vm728, %v4303
      %4358 = vst.msk [vmem:[#allocation3 + $0x158] sm:$0xff] %vm728, %v4304
      %4359 = vst.msk [vmem:[#allocation3 + $0x160] sm:$0xff] %vm728, %v4305
      %4360 = vst.msk [vmem:[#allocation3 + $0x168] sm:$0xff] %vm728, %v4306
      %4361 = vst.msk [vmem:[#allocation3 + $0x170] sm:$0xff] %vm728, %v4307
      %4362 = vst.msk [vmem:[#allocation3 + $0x178] sm:$0xff] %vm728, %v4308
      %4363 = vst.msk [vmem:[#allocation3 + $0x180] sm:$0xff] %vm728, %v4309
      %4364 = vst.msk [vmem:[#allocation3 + $0x188] sm:$0xff] %vm728, %v4310
      %4365 = vst.msk [vmem:[#allocation3 + $0x190] sm:$0xff] %vm728, %v4311
      %4366 = vst.msk [vmem:[#allocation3 + $0x198] sm:$0xff] %vm728, %v4312
      %4367 = vst.msk [vmem:[#allocation3 + $0x1a0] sm:$0xff] %vm728, %v4313
      %4368 = vst.msk [vmem:[#allocation3 + $0x1a8] sm:$0xff] %vm728, %v4314
      %s4369 = scalar_lea.vmem %s165, 64
      %v4370 = vld [vmem:[%s4369] sm:$0xff]
      %v4371 = vld [vmem:[%s4369 + $0x8] sm:$0xff]
      %v4372 = vld [vmem:[%s4369 + $0x10] sm:$0xff]
      %v4373 = vld [vmem:[%s4369 + $0x20] sm:$0xff]
      %v4374 = vld [vmem:[%s4369 + $0x28] sm:$0xff]
      %v4375 = vld [vmem:[%s4369 + $0x30] sm:$0xff]
      %v4376 = vld [vmem:[%s4369 + $0x40] sm:$0xff]
      %v4377 = vld [vmem:[%s4369 + $0x48] sm:$0xff]
      %v4378 = vld [vmem:[%s4369 + $0x50] sm:$0xff]
      %v4379 = vld [vmem:[%s4369 + $0x60] sm:$0xff]
      %v4380 = vld [vmem:[%s4369 + $0x68] sm:$0xff]
      %v4381 = vld [vmem:[%s4369 + $0x70] sm:$0xff]
      %v4382 = vld [vmem:[%s4369 + $0x80] sm:$0xff]
      %v4383 = vld [vmem:[%s4369 + $0x88] sm:$0xff]
      %v4384 = vld [vmem:[%s4369 + $0x90] sm:$0xff]
      %v4385 = vld [vmem:[%s4369 + $0xa0] sm:$0xff]
      %v4386 = vld [vmem:[%s4369 + $0xa8] sm:$0xff]
      %v4387 = vld [vmem:[%s4369 + $0xb0] sm:$0xff]
      %v4388 = vld [vmem:[%s4369 + $0xc0] sm:$0xff]
      %v4389 = vld [vmem:[%s4369 + $0xc8] sm:$0xff]
      %v4390 = vld [vmem:[%s4369 + $0xd0] sm:$0xff]
      %v4391 = vld [vmem:[%s4369 + $0xe0] sm:$0xff]
      %v4392 = vld [vmem:[%s4369 + $0xe8] sm:$0xff]
      %v4393 = vld [vmem:[%s4369 + $0xf0] sm:$0xff]
      %v4394 = vld [vmem:[%s4369 + $0x100] sm:$0xff]
      %v4395 = vld [vmem:[%s4369 + $0x108] sm:$0xff]
      %v4396 = vld [vmem:[%s4369 + $0x110] sm:$0xff]
      %v4397 = vld [vmem:[%s4369 + $0x120] sm:$0xff]
      %v4398 = vld [vmem:[%s4369 + $0x128] sm:$0xff]
      %v4399 = vld [vmem:[%s4369 + $0x130] sm:$0xff]
      %v4400 = vld [vmem:[%s4369 + $0x140] sm:$0xff]
      %v4401 = vld [vmem:[%s4369 + $0x148] sm:$0xff]
      %v4402 = vld [vmem:[%s4369 + $0x150] sm:$0xff]
      %v4403 = vld [vmem:[%s4369 + $0x160] sm:$0xff]
      %v4404 = vld [vmem:[%s4369 + $0x168] sm:$0xff]
      %v4405 = vld [vmem:[%s4369 + $0x170] sm:$0xff]
      %v4406 = vld [vmem:[%s4369 + $0x180] sm:$0xff]
      %v4407 = vld [vmem:[%s4369 + $0x188] sm:$0xff]
      %v4408 = vld [vmem:[%s4369 + $0x190] sm:$0xff]
      %v4409 = vld [vmem:[%s4369 + $0x1a0] sm:$0xff]
      %v4410 = vld [vmem:[%s4369 + $0x1a8] sm:$0xff]
      %v4411 = vld [vmem:[%s4369 + $0x1b0] sm:$0xff]
      %v4412 = vld [vmem:[%s4369 + $0x1c0] sm:$0xff]
      %v4413 = vld [vmem:[%s4369 + $0x1c8] sm:$0xff]
      %v4414 = vld [vmem:[%s4369 + $0x1d0] sm:$0xff]
      %v4415 = vld [vmem:[%s4369 + $0x1e0] sm:$0xff]
      %v4416 = vld [vmem:[%s4369 + $0x1e8] sm:$0xff]
      %v4417 = vld [vmem:[%s4369 + $0x1f0] sm:$0xff]
      %v4418 = vld [vmem:[%s4369 + $0x200] sm:$0xff]
      %v4419 = vld [vmem:[%s4369 + $0x208] sm:$0xff]
      %v4420 = vld [vmem:[%s4369 + $0x210] sm:$0xff]
      %v4421 = vld [vmem:[%s4369 + $0x220] sm:$0xff]
      %v4422 = vld [vmem:[%s4369 + $0x228] sm:$0xff]
      %v4423 = vld [vmem:[%s4369 + $0x230] sm:$0xff]
      %v4424 = vld [vmem:[%s1 + $0x18] sm:$0xf]
      %v4426 = vsel %vm226, %v4370, 0
      %v4429 = vsel %vm226, %v4371, 0
      %v4432 = vsel %vm226, %v4372, 0
      %v4435 = vsel %vm226, %v4373, 0
      %v4438 = vsel %vm226, %v4374, 0
      %v4441 = vsel %vm226, %v4375, 0
      %v4444 = vsel %vm226, %v4376, 0
      %v4447 = vsel %vm226, %v4377, 0
      %v4450 = vsel %vm226, %v4378, 0
      %v4453 = vsel %vm226, %v4379, 0
      %v4456 = vsel %vm226, %v4380, 0
      %v4459 = vsel %vm226, %v4381, 0
      %v4462 = vsel %vm226, %v4382, 0
      %v4465 = vsel %vm226, %v4383, 0
      %v4468 = vsel %vm226, %v4384, 0
      %v4471 = vsel %vm226, %v4385, 0
      %v4474 = vsel %vm226, %v4386, 0
      %v4477 = vsel %vm226, %v4387, 0
      %v4480 = vsel %vm226, %v4388, 0
      %v4483 = vsel %vm226, %v4389, 0
      %v4486 = vsel %vm226, %v4390, 0
      %v4489 = vsel %vm226, %v4391, 0
      %v4492 = vsel %vm226, %v4392, 0
      %v4495 = vsel %vm226, %v4393, 0
      %v4498 = vsel %vm226, %v4394, 0
      %v4501 = vsel %vm226, %v4395, 0
      %v4504 = vsel %vm226, %v4396, 0
      %v4507 = vsel %vm226, %v4397, 0
      %v4510 = vsel %vm226, %v4398, 0
      %v4513 = vsel %vm226, %v4399, 0
      %v4516 = vsel %vm226, %v4400, 0
      %v4519 = vsel %vm226, %v4401, 0
      %v4522 = vsel %vm226, %v4402, 0
      %v4525 = vsel %vm226, %v4403, 0
      %v4528 = vsel %vm226, %v4404, 0
      %v4531 = vsel %vm226, %v4405, 0
      %v4534 = vsel %vm226, %v4406, 0
      %v4537 = vsel %vm226, %v4407, 0
      %v4540 = vsel %vm226, %v4408, 0
      %v4543 = vsel %vm226, %v4409, 0
      %v4546 = vsel %vm226, %v4410, 0
      %v4549 = vsel %vm226, %v4411, 0
      %v4552 = vsel %vm226, %v4412, 0
      %v4555 = vsel %vm226, %v4413, 0
      %v4558 = vsel %vm226, %v4414, 0
      %v4561 = vsel %vm226, %v4415, 0
      %v4564 = vsel %vm226, %v4416, 0
      %v4567 = vsel %vm226, %v4417, 0
      %v4570 = vsel %vm226, %v4418, 0
      %v4573 = vsel %vm226, %v4419, 0
      %v4576 = vsel %vm226, %v4420, 0
      %v4579 = vsel %vm226, %v4421, 0
      %v4582 = vsel %vm226, %v4422, 0
      %v4585 = vsel %vm226, %v4423, 0
      %v4588 = vsel %vm389, %v4424, 0
      %4590 = vmatprep.subr.mxu0 0.0
      %4591 = vmatpush1.msra.mxu0 %v4588
      %4592 = vmatprep.subr.mxu0 0.0
      %4593 = vmatpush1.msra.mxu0 0.0
      %4594 = vmatprep.subr.mxu0 0.0
      %4595 = vmatpush1.msra.mxu0 0.0
      %4596 = vmatprep.subr.mxu0 0.0
      %4597 = vmatpush1.msra.mxu0 0.0
      %4598 = vmatprep.subr.mxu0 0.0
      %4599 = vmatpush1.msra.mxu0 0.0
      %4600 = vmatprep.subr.mxu0 0.0
      %4601 = vmatpush1.msra.mxu0 0.0
      %4602 = vmatprep.subr.mxu0 0.0
      %4603 = vmatpush1.msra.mxu0 0.0
      %4604 = vmatprep.subr.mxu0 0.0
      %4605 = vmatpush1.msra.mxu0 0.0
      %4606 = vmatprep.subr.mxu0 0.0
      %4607 = vmatpush1.msra.mxu0 0.0
      %4608 = vmatprep.subr.mxu0 0.0
      %4609 = vmatpush1.msra.mxu0 0.0
      %4610 = vmatprep.subr.mxu0 0.0
      %4611 = vmatpush1.msra.mxu0 0.0
      %4612 = vmatprep.subr.mxu0 0.0
      %4613 = vmatpush1.msra.mxu0 0.0
      %4614 = vmatprep.subr.mxu0 0.0
      %4615 = vmatpush1.msra.mxu0 0.0
      %4616 = vmatprep.subr.mxu0 0.0
      %4617 = vmatpush1.msra.mxu0 0.0
      %4618 = vmatprep.subr.mxu0 0.0
      %4619 = vmatpush1.msra.mxu0 0.0
      %4620 = vmatprep.subr.mxu0 0.0
      %4621 = vmatpush1.msra.mxu0 0.0
      %4622 = vmatprep.subr.mxu0 0.0
      %4623 = vmatpush1.msra.mxu0 0.0
      %4624 = vmatprep.subr.mxu0 0.0
      %4625 = vmatpush1.msra.mxu0 0.0
      %4626 = vmatprep.subr.mxu0 0.0
      %4627 = vmatpush1.msra.mxu0 0.0
      %4628 = vmatprep.subr.mxu0 0.0
      %4629 = vmatpush1.msra.mxu0 0.0
      %4630 = vmatprep.subr.mxu0 0.0
      %4631 = vmatpush1.msra.mxu0 0.0
      %4632 = vmatprep.subr.mxu0 0.0
      %4633 = vmatpush1.msra.mxu0 0.0
      %4634 = vmatprep.subr.mxu0 0.0
      %4635 = vmatpush1.msra.mxu0 0.0
      %4636 = vmatprep.subr.mxu0 0.0
      %4637 = vmatpush1.msra.mxu0 0.0
      %4638 = vmatprep.subr.mxu0 0.0
      %4639 = vmatpush1.msra.mxu0 0.0
      %4640 = vmatprep.subr.mxu0 0.0
      %4641 = vmatpush1.msra.mxu0 0.0
      %4642 = vmatprep.subr.mxu0 0.0
      %4643 = vmatpush1.msra.mxu0 0.0
      %4644 = vmatprep.subr.mxu0 0.0
      %4645 = vmatpush1.msra.mxu0 0.0
      %4646 = vmatprep.subr.mxu0 0.0
      %4647 = vmatpush1.msra.mxu0 0.0
      %4648 = vmatprep.subr.mxu0 0.0
      %4649 = vmatpush1.msra.mxu0 0.0
      %4650 = vmatprep.subr.mxu0 0.0
      %4651 = vmatpush1.msra.mxu0 0.0
      %4652 = vmatprep.subr.mxu0 0.0
      %4653 = vmatpush1.msra.mxu0 0.0
      %4654 = vmatprep.mubr.f32.mxu0 0.0
      %4655 = vmatmul.mubr.f32.gmra.mrb[0].mxu0 %v4426
      %v4656 = vpop.f32.mrb[0].mxu0
      %v4657 = vadd.f32 0.0, %v4656
      %v4658 = vpop.f32.mrb[0].mxu0
      %4659 = vmatprep.mubr.f32.mxu0 0.0
      %4660 = vmatmul.mubr.f32.gmra.mrb[0].mxu0 %v4429
      %v4661 = vpop.f32.mrb[0].mxu0
      %v4662 = vadd.f32 0.0, %v4661
      %v4663 = vpop.f32.mrb[0].mxu0
      %4664 = vmatprep.mubr.f32.mxu0 0.0
      %4665 = vmatmul.mubr.f32.gmra.mrb[0].mxu0 %v4432
      %v4666 = vpop.f32.mrb[0].mxu0
      %v4667 = vadd.f32 0.0, %v4666
      %v4668 = vpop.f32.mrb[0].mxu0
      %4669 = vmatprep.mubr.f32.mxu0 0.0
      %4670 = vmatmul.mubr.f32.gmra.mrb[0].mxu0 %v4435
      %v4671 = vpop.f32.mrb[0].mxu0
      %v4672 = vadd.f32 0.0, %v4671
      %v4673 = vpop.f32.mrb[0].mxu0
      %4674 = vmatprep.mubr.f32.mxu0 0.0
      %4675 = vmatmul.mubr.f32.gmra.mrb[0].mxu0 %v4438
      %v4676 = vpop.f32.mrb[0].mxu0
      %v4677 = vadd.f32 0.0, %v4676
      %v4678 = vpop.f32.mrb[0].mxu0
      %4679 = vmatprep.mubr.f32.mxu0 0.0
      %4680 = vmatmul.mubr.f32.gmra.mrb[0].mxu0 %v4441
      %v4681 = vpop.f32.mrb[0].mxu0
      %v4682 = vadd.f32 0.0, %v4681
      %v4683 = vpop.f32.mrb[0].mxu0
      %4684 = vmatprep.mubr.f32.mxu0 0.0
      %4685 = vmatmul.mubr.f32.gmra.mrb[0].mxu0 %v4444
      %v4686 = vpop.f32.mrb[0].mxu0
      %v4687 = vadd.f32 0.0, %v4686
      %v4688 = vpop.f32.mrb[0].mxu0
      %4689 = vmatprep.mubr.f32.mxu0 0.0
      %4690 = vmatmul.mubr.f32.gmra.mrb[0].mxu0 %v4447
      %v4691 = vpop.f32.mrb[0].mxu0
      %v4692 = vadd.f32 0.0, %v4691
      %v4693 = vpop.f32.mrb[0].mxu0
      %4694 = vmatprep.mubr.f32.mxu0 0.0
      %4695 = vmatmul.mubr.f32.gmra.mrb[0].mxu0 %v4450
      %v4696 = vpop.f32.mrb[0].mxu0
      %v4697 = vadd.f32 0.0, %v4696
      %v4698 = vpop.f32.mrb[0].mxu0
      %4699 = vmatprep.mubr.f32.mxu0 0.0
      %4700 = vmatmul.mubr.f32.gmra.mrb[0].mxu0 %v4453
      %v4701 = vpop.f32.mrb[0].mxu0
      %v4702 = vadd.f32 0.0, %v4701
      %v4703 = vpop.f32.mrb[0].mxu0
      %4704 = vmatprep.mubr.f32.mxu0 0.0
      %4705 = vmatmul.mubr.f32.gmra.mrb[0].mxu0 %v4456
      %v4706 = vpop.f32.mrb[0].mxu0
      %v4707 = vadd.f32 0.0, %v4706
      %v4708 = vpop.f32.mrb[0].mxu0
      %4709 = vmatprep.mubr.f32.mxu0 0.0
      %4710 = vmatmul.mubr.f32.gmra.mrb[0].mxu0 %v4459
      %v4711 = vpop.f32.mrb[0].mxu0
      %v4712 = vadd.f32 0.0, %v4711
      %v4713 = vpop.f32.mrb[0].mxu0
      %4714 = vmatprep.mubr.f32.mxu0 0.0
      %4715 = vmatmul.mubr.f32.gmra.mrb[0].mxu0 %v4462
      %v4716 = vpop.f32.mrb[0].mxu0
      %v4717 = vadd.f32 0.0, %v4716
      %v4718 = vpop.f32.mrb[0].mxu0
      %4719 = vmatprep.mubr.f32.mxu0 0.0
      %4720 = vmatmul.mubr.f32.gmra.mrb[0].mxu0 %v4465
      %v4721 = vpop.f32.mrb[0].mxu0
      %v4722 = vadd.f32 0.0, %v4721
      %v4723 = vpop.f32.mrb[0].mxu0
      %4724 = vmatprep.mubr.f32.mxu0 0.0
      %4725 = vmatmul.mubr.f32.gmra.mrb[0].mxu0 %v4468
      %v4726 = vpop.f32.mrb[0].mxu0
      %v4727 = vadd.f32 0.0, %v4726
      %v4728 = vpop.f32.mrb[0].mxu0
      %4729 = vmatprep.mubr.f32.mxu0 0.0
      %4730 = vmatmul.mubr.f32.gmra.mrb[0].mxu0 %v4471
      %v4731 = vpop.f32.mrb[0].mxu0
      %v4732 = vadd.f32 0.0, %v4731
      %v4733 = vpop.f32.mrb[0].mxu0
      %4734 = vmatprep.mubr.f32.mxu0 0.0
      %4735 = vmatmul.mubr.f32.gmra.mrb[0].mxu0 %v4474
      %v4736 = vpop.f32.mrb[0].mxu0
      %v4737 = vadd.f32 0.0, %v4736
      %v4738 = vpop.f32.mrb[0].mxu0
      %4739 = vmatprep.mubr.f32.mxu0 0.0
      %4740 = vmatmul.mubr.f32.gmra.mrb[0].mxu0 %v4477
      %v4741 = vpop.f32.mrb[0].mxu0
      %v4742 = vadd.f32 0.0, %v4741
      %v4743 = vpop.f32.mrb[0].mxu0
      %4744 = vmatprep.mubr.f32.mxu0 0.0
      %4745 = vmatmul.mubr.f32.gmra.mrb[0].mxu0 %v4480
      %v4746 = vpop.f32.mrb[0].mxu0
      %v4747 = vadd.f32 0.0, %v4746
      %v4748 = vpop.f32.mrb[0].mxu0
      %4749 = vmatprep.mubr.f32.mxu0 0.0
      %4750 = vmatmul.mubr.f32.gmra.mrb[0].mxu0 %v4483
      %v4751 = vpop.f32.mrb[0].mxu0
      %v4752 = vadd.f32 0.0, %v4751
      %v4753 = vpop.f32.mrb[0].mxu0
      %4754 = vmatprep.mubr.f32.mxu0 0.0
      %4755 = vmatmul.mubr.f32.gmra.mrb[0].mxu0 %v4486
      %v4756 = vpop.f32.mrb[0].mxu0
      %v4757 = vadd.f32 0.0, %v4756
      %v4758 = vpop.f32.mrb[0].mxu0
      %4759 = vmatprep.mubr.f32.mxu0 0.0
      %4760 = vmatmul.mubr.f32.gmra.mrb[0].mxu0 %v4489
      %v4761 = vpop.f32.mrb[0].mxu0
      %v4762 = vadd.f32 0.0, %v4761
      %v4763 = vpop.f32.mrb[0].mxu0
      %4764 = vmatprep.mubr.f32.mxu0 0.0
      %4765 = vmatmul.mubr.f32.gmra.mrb[0].mxu0 %v4492
      %v4766 = vpop.f32.mrb[0].mxu0
      %v4767 = vadd.f32 0.0, %v4766
      %v4768 = vpop.f32.mrb[0].mxu0
      %4769 = vmatprep.mubr.f32.mxu0 0.0
      %4770 = vmatmul.mubr.f32.gmra.mrb[0].mxu0 %v4495
      %v4771 = vpop.f32.mrb[0].mxu0
      %v4772 = vadd.f32 0.0, %v4771
      %v4773 = vpop.f32.mrb[0].mxu0
      %4774 = vmatprep.mubr.f32.mxu0 0.0
      %4775 = vmatmul.mubr.f32.gmra.mrb[0].mxu0 %v4498
      %v4776 = vpop.f32.mrb[0].mxu0
      %v4777 = vadd.f32 0.0, %v4776
      %v4778 = vpop.f32.mrb[0].mxu0
      %4779 = vmatprep.mubr.f32.mxu0 0.0
      %4780 = vmatmul.mubr.f32.gmra.mrb[0].mxu0 %v4501
      %v4781 = vpop.f32.mrb[0].mxu0
      %v4782 = vadd.f32 0.0, %v4781
      %v4783 = vpop.f32.mrb[0].mxu0
      %4784 = vmatprep.mubr.f32.mxu0 0.0
      %4785 = vmatmul.mubr.f32.gmra.mrb[0].mxu0 %v4504
      %v4786 = vpop.f32.mrb[0].mxu0
      %v4787 = vadd.f32 0.0, %v4786
      %v4788 = vpop.f32.mrb[0].mxu0
      %4789 = vmatprep.mubr.f32.mxu0 0.0
      %4790 = vmatmul.mubr.f32.gmra.mrb[0].mxu0 %v4507
      %v4791 = vpop.f32.mrb[0].mxu0
      %v4792 = vadd.f32 0.0, %v4791
      %v4793 = vpop.f32.mrb[0].mxu0
      %4794 = vmatprep.mubr.f32.mxu0 0.0
      %4795 = vmatmul.mubr.f32.gmra.mrb[0].mxu0 %v4510
      %v4796 = vpop.f32.mrb[0].mxu0
      %v4797 = vadd.f32 0.0, %v4796
      %v4798 = vpop.f32.mrb[0].mxu0
      %4799 = vmatprep.mubr.f32.mxu0 0.0
      %4800 = vmatmul.mubr.f32.gmra.mrb[0].mxu0 %v4513
      %v4801 = vpop.f32.mrb[0].mxu0
      %v4802 = vadd.f32 0.0, %v4801
      %v4803 = vpop.f32.mrb[0].mxu0
      %4804 = vmatprep.mubr.f32.mxu0 0.0
      %4805 = vmatmul.mubr.f32.gmra.mrb[0].mxu0 %v4516
      %v4806 = vpop.f32.mrb[0].mxu0
      %v4807 = vadd.f32 0.0, %v4806
      %v4808 = vpop.f32.mrb[0].mxu0
      %4809 = vmatprep.mubr.f32.mxu0 0.0
      %4810 = vmatmul.mubr.f32.gmra.mrb[0].mxu0 %v4519
      %v4811 = vpop.f32.mrb[0].mxu0
      %v4812 = vadd.f32 0.0, %v4811
      %v4813 = vpop.f32.mrb[0].mxu0
      %4814 = vmatprep.mubr.f32.mxu0 0.0
      %4815 = vmatmul.mubr.f32.gmra.mrb[0].mxu0 %v4522
      %v4816 = vpop.f32.mrb[0].mxu0
      %v4817 = vadd.f32 0.0, %v4816
      %v4818 = vpop.f32.mrb[0].mxu0
      %4819 = vmatprep.mubr.f32.mxu0 0.0
      %4820 = vmatmul.mubr.f32.gmra.mrb[0].mxu0 %v4525
      %v4821 = vpop.f32.mrb[0].mxu0
      %v4822 = vadd.f32 0.0, %v4821
      %v4823 = vpop.f32.mrb[0].mxu0
      %4824 = vmatprep.mubr.f32.mxu0 0.0
      %4825 = vmatmul.mubr.f32.gmra.mrb[0].mxu0 %v4528
      %v4826 = vpop.f32.mrb[0].mxu0
      %v4827 = vadd.f32 0.0, %v4826
      %v4828 = vpop.f32.mrb[0].mxu0
      %4829 = vmatprep.mubr.f32.mxu0 0.0
      %4830 = vmatmul.mubr.f32.gmra.mrb[0].mxu0 %v4531
      %v4831 = vpop.f32.mrb[0].mxu0
      %v4832 = vadd.f32 0.0, %v4831
      %v4833 = vpop.f32.mrb[0].mxu0
      %4834 = vmatprep.mubr.f32.mxu0 0.0
      %4835 = vmatmul.mubr.f32.gmra.mrb[0].mxu0 %v4534
      %v4836 = vpop.f32.mrb[0].mxu0
      %v4837 = vadd.f32 0.0, %v4836
      %v4838 = vpop.f32.mrb[0].mxu0
      %4839 = vmatprep.mubr.f32.mxu0 0.0
      %4840 = vmatmul.mubr.f32.gmra.mrb[0].mxu0 %v4537
      %v4841 = vpop.f32.mrb[0].mxu0
      %v4842 = vadd.f32 0.0, %v4841
      %v4843 = vpop.f32.mrb[0].mxu0
      %4844 = vmatprep.mubr.f32.mxu0 0.0
      %4845 = vmatmul.mubr.f32.gmra.mrb[0].mxu0 %v4540
      %v4846 = vpop.f32.mrb[0].mxu0
      %v4847 = vadd.f32 0.0, %v4846
      %v4848 = vpop.f32.mrb[0].mxu0
      %4849 = vmatprep.mubr.f32.mxu0 0.0
      %4850 = vmatmul.mubr.f32.gmra.mrb[0].mxu0 %v4543
      %v4851 = vpop.f32.mrb[0].mxu0
      %v4852 = vadd.f32 0.0, %v4851
      %v4853 = vpop.f32.mrb[0].mxu0
      %4854 = vmatprep.mubr.f32.mxu0 0.0
      %4855 = vmatmul.mubr.f32.gmra.mrb[0].mxu0 %v4546
      %v4856 = vpop.f32.mrb[0].mxu0
      %v4857 = vadd.f32 0.0, %v4856
      %v4858 = vpop.f32.mrb[0].mxu0
      %4859 = vmatprep.mubr.f32.mxu0 0.0
      %4860 = vmatmul.mubr.f32.gmra.mrb[0].mxu0 %v4549
      %v4861 = vpop.f32.mrb[0].mxu0
      %v4862 = vadd.f32 0.0, %v4861
      %v4863 = vpop.f32.mrb[0].mxu0
      %4864 = vmatprep.mubr.f32.mxu0 0.0
      %4865 = vmatmul.mubr.f32.gmra.mrb[0].mxu0 %v4552
      %v4866 = vpop.f32.mrb[0].mxu0
      %v4867 = vadd.f32 0.0, %v4866
      %v4868 = vpop.f32.mrb[0].mxu0
      %4869 = vmatprep.mubr.f32.mxu0 0.0
      %4870 = vmatmul.mubr.f32.gmra.mrb[0].mxu0 %v4555
      %v4871 = vpop.f32.mrb[0].mxu0
      %v4872 = vadd.f32 0.0, %v4871
      %v4873 = vpop.f32.mrb[0].mxu0
      %4874 = vmatprep.mubr.f32.mxu0 0.0
      %4875 = vmatmul.mubr.f32.gmra.mrb[0].mxu0 %v4558
      %v4876 = vpop.f32.mrb[0].mxu0
      %v4877 = vadd.f32 0.0, %v4876
      %v4878 = vpop.f32.mrb[0].mxu0
      %4879 = vmatprep.mubr.f32.mxu0 0.0
      %4880 = vmatmul.mubr.f32.gmra.mrb[0].mxu0 %v4561
      %v4881 = vpop.f32.mrb[0].mxu0
      %v4882 = vadd.f32 0.0, %v4881
      %v4883 = vpop.f32.mrb[0].mxu0
      %4884 = vmatprep.mubr.f32.mxu0 0.0
      %4885 = vmatmul.mubr.f32.gmra.mrb[0].mxu0 %v4564
      %v4886 = vpop.f32.mrb[0].mxu0
      %v4887 = vadd.f32 0.0, %v4886
      %v4888 = vpop.f32.mrb[0].mxu0
      %4889 = vmatprep.mubr.f32.mxu0 0.0
      %4890 = vmatmul.mubr.f32.gmra.mrb[0].mxu0 %v4567
      %v4891 = vpop.f32.mrb[0].mxu0
      %v4892 = vadd.f32 0.0, %v4891
      %v4893 = vpop.f32.mrb[0].mxu0
      %4894 = vmatprep.mubr.f32.mxu0 0.0
      %4895 = vmatmul.mubr.f32.gmra.mrb[0].mxu0 %v4570
      %v4896 = vpop.f32.mrb[0].mxu0
      %v4897 = vadd.f32 0.0, %v4896
      %v4898 = vpop.f32.mrb[0].mxu0
      %4899 = vmatprep.mubr.f32.mxu0 0.0
      %4900 = vmatmul.mubr.f32.gmra.mrb[0].mxu0 %v4573
      %v4901 = vpop.f32.mrb[0].mxu0
      %v4902 = vadd.f32 0.0, %v4901
      %v4903 = vpop.f32.mrb[0].mxu0
      %4904 = vmatprep.mubr.f32.mxu0 0.0
      %4905 = vmatmul.mubr.f32.gmra.mrb[0].mxu0 %v4576
      %v4906 = vpop.f32.mrb[0].mxu0
      %v4907 = vadd.f32 0.0, %v4906
      %v4908 = vpop.f32.mrb[0].mxu0
      %4909 = vmatprep.mubr.f32.mxu0 0.0
      %4910 = vmatmul.mubr.f32.gmra.mrb[0].mxu0 %v4579
      %v4911 = vpop.f32.mrb[0].mxu0
      %v4912 = vadd.f32 0.0, %v4911
      %v4913 = vpop.f32.mrb[0].mxu0
      %4914 = vmatprep.mubr.f32.mxu0 0.0
      %4915 = vmatmul.mubr.f32.gmra.mrb[0].mxu0 %v4582
      %v4916 = vpop.f32.mrb[0].mxu0
      %v4917 = vadd.f32 0.0, %v4916
      %v4918 = vpop.f32.mrb[0].mxu0
      %4919 = vmatprep.mubr.f32.mxu0 0.0
      %4920 = vmatmul.mubr.f32.gmra.mrb[0].mxu0 %v4585
      %v4921 = vpop.f32.mrb[0].mxu0
      %v4922 = vadd.f32 0.0, %v4921
      %v4923 = vpop.f32.mrb[0].mxu0
      %4924 = vdwg.mxu0
      %v4925 = vld [vmem:[#allocation3] sm:$0xff]
      %v4926 = vld [vmem:[#allocation3 + $0x8] sm:$0xff]
      %v4927 = vld [vmem:[#allocation3 + $0x10] sm:$0xff]
      %v4928 = vld [vmem:[#allocation3 + $0x18] sm:$0xff]
      %v4929 = vld [vmem:[#allocation3 + $0x20] sm:$0xff]
      %v4930 = vld [vmem:[#allocation3 + $0x28] sm:$0xff]
      %v4931 = vld [vmem:[#allocation3 + $0x30] sm:$0xff]
      %v4932 = vld [vmem:[#allocation3 + $0x38] sm:$0xff]
      %v4933 = vld [vmem:[#allocation3 + $0x40] sm:$0xff]
      %v4934 = vld [vmem:[#allocation3 + $0x48] sm:$0xff]
      %v4935 = vld [vmem:[#allocation3 + $0x50] sm:$0xff]
      %v4936 = vld [vmem:[#allocation3 + $0x58] sm:$0xff]
      %v4937 = vld [vmem:[#allocation3 + $0x60] sm:$0xff]
      %v4938 = vld [vmem:[#allocation3 + $0x68] sm:$0xff]
      %v4939 = vld [vmem:[#allocation3 + $0x70] sm:$0xff]
      %v4940 = vld [vmem:[#allocation3 + $0x78] sm:$0xff]
      %v4941 = vld [vmem:[#allocation3 + $0x80] sm:$0xff]
      %v4942 = vld [vmem:[#allocation3 + $0x88] sm:$0xff]
      %v4943 = vld [vmem:[#allocation3 + $0x90] sm:$0xff]
      %v4944 = vld [vmem:[#allocation3 + $0x98] sm:$0xff]
      %v4945 = vld [vmem:[#allocation3 + $0xa0] sm:$0xff]
      %v4946 = vld [vmem:[#allocation3 + $0xa8] sm:$0xff]
      %v4947 = vld [vmem:[#allocation3 + $0xb0] sm:$0xff]
      %v4948 = vld [vmem:[#allocation3 + $0xb8] sm:$0xff]
      %v4949 = vld [vmem:[#allocation3 + $0xc0] sm:$0xff]
      %v4950 = vld [vmem:[#allocation3 + $0xc8] sm:$0xff]
      %v4951 = vld [vmem:[#allocation3 + $0xd0] sm:$0xff]
      %v4952 = vld [vmem:[#allocation3 + $0xd8] sm:$0xff]
      %v4953 = vld [vmem:[#allocation3 + $0xe0] sm:$0xff]
      %v4954 = vld [vmem:[#allocation3 + $0xe8] sm:$0xff]
      %v4955 = vld [vmem:[#allocation3 + $0xf0] sm:$0xff]
      %v4956 = vld [vmem:[#allocation3 + $0xf8] sm:$0xff]
      %v4957 = vld [vmem:[#allocation3 + $0x100] sm:$0xff]
      %v4958 = vld [vmem:[#allocation3 + $0x108] sm:$0xff]
      %v4959 = vld [vmem:[#allocation3 + $0x110] sm:$0xff]
      %v4960 = vld [vmem:[#allocation3 + $0x118] sm:$0xff]
      %v4961 = vld [vmem:[#allocation3 + $0x120] sm:$0xff]
      %v4962 = vld [vmem:[#allocation3 + $0x128] sm:$0xff]
      %v4963 = vld [vmem:[#allocation3 + $0x130] sm:$0xff]
      %v4964 = vld [vmem:[#allocation3 + $0x138] sm:$0xff]
      %v4965 = vld [vmem:[#allocation3 + $0x140] sm:$0xff]
      %v4966 = vld [vmem:[#allocation3 + $0x148] sm:$0xff]
      %v4967 = vld [vmem:[#allocation3 + $0x150] sm:$0xff]
      %v4968 = vld [vmem:[#allocation3 + $0x158] sm:$0xff]
      %v4969 = vld [vmem:[#allocation3 + $0x160] sm:$0xff]
      %v4970 = vld [vmem:[#allocation3 + $0x168] sm:$0xff]
      %v4971 = vld [vmem:[#allocation3 + $0x170] sm:$0xff]
      %v4972 = vld [vmem:[#allocation3 + $0x178] sm:$0xff]
      %v4973 = vld [vmem:[#allocation3 + $0x180] sm:$0xff]
      %v4974 = vld [vmem:[#allocation3 + $0x188] sm:$0xff]
      %v4975 = vld [vmem:[#allocation3 + $0x190] sm:$0xff]
      %v4976 = vld [vmem:[#allocation3 + $0x198] sm:$0xff]
      %v4977 = vld [vmem:[#allocation3 + $0x1a0] sm:$0xff]
      %v4978 = vld [vmem:[#allocation3 + $0x1a8] sm:$0xff]
      %v4979 = vadd.f32 %v4925, %v4657
      %v4980 = vadd.f32 %v4926, %v4662
      %v4981 = vadd.f32 %v4927, %v4667
      %v4982 = vadd.f32 %v4928, %v4672
      %v4983 = vadd.f32 %v4929, %v4677
      %v4984 = vadd.f32 %v4930, %v4682
      %v4985 = vadd.f32 %v4931, %v4687
      %v4986 = vadd.f32 %v4932, %v4692
      %v4987 = vadd.f32 %v4933, %v4697
      %v4988 = vadd.f32 %v4934, %v4702
      %v4989 = vadd.f32 %v4935, %v4707
      %v4990 = vadd.f32 %v4936, %v4712
      %v4991 = vadd.f32 %v4937, %v4717
      %v4992 = vadd.f32 %v4938, %v4722
      %v4993 = vadd.f32 %v4939, %v4727
      %v4994 = vadd.f32 %v4940, %v4732
      %v4995 = vadd.f32 %v4941, %v4737
      %v4996 = vadd.f32 %v4942, %v4742
      %v4997 = vadd.f32 %v4943, %v4747
      %v4998 = vadd.f32 %v4944, %v4752
      %v4999 = vadd.f32 %v4945, %v4757
      %v5000 = vadd.f32 %v4946, %v4762
      %v5001 = vadd.f32 %v4947, %v4767
      %v5002 = vadd.f32 %v4948, %v4772
      %v5003 = vadd.f32 %v4949, %v4777
      %v5004 = vadd.f32 %v4950, %v4782
      %v5005 = vadd.f32 %v4951, %v4787
      %v5006 = vadd.f32 %v4952, %v4792
      %v5007 = vadd.f32 %v4953, %v4797
      %v5008 = vadd.f32 %v4954, %v4802
      %v5009 = vadd.f32 %v4955, %v4807
      %v5010 = vadd.f32 %v4956, %v4812
      %v5011 = vadd.f32 %v4957, %v4817
      %v5012 = vadd.f32 %v4958, %v4822
      %v5013 = vadd.f32 %v4959, %v4827
      %v5014 = vadd.f32 %v4960, %v4832
      %v5015 = vadd.f32 %v4961, %v4837
      %v5016 = vadd.f32 %v4962, %v4842
      %v5017 = vadd.f32 %v4963, %v4847
      %v5018 = vadd.f32 %v4964, %v4852
      %v5019 = vadd.f32 %v4965, %v4857
      %v5020 = vadd.f32 %v4966, %v4862
      %v5021 = vadd.f32 %v4967, %v4867
      %v5022 = vadd.f32 %v4968, %v4872
      %v5023 = vadd.f32 %v4969, %v4877
      %v5024 = vadd.f32 %v4970, %v4882
      %v5025 = vadd.f32 %v4971, %v4887
      %v5026 = vadd.f32 %v4972, %v4892
      %v5027 = vadd.f32 %v4973, %v4897
      %v5028 = vadd.f32 %v4974, %v4902
      %v5029 = vadd.f32 %v4975, %v4907
      %v5030 = vadd.f32 %v4976, %v4912
      %v5031 = vadd.f32 %v4977, %v4917
      %v5032 = vadd.f32 %v4978, %v4922
      %5033 = vst.msk [vmem:[#allocation3] sm:$0xff] %vm728, %v4979
      %5034 = vst.msk [vmem:[#allocation3 + $0x8] sm:$0xff] %vm728, %v4980
      %5035 = vst.msk [vmem:[#allocation3 + $0x10] sm:$0xff] %vm728, %v4981
      %5036 = vst.msk [vmem:[#allocation3 + $0x18] sm:$0xff] %vm728, %v4982
      %5037 = vst.msk [vmem:[#allocation3 + $0x20] sm:$0xff] %vm728, %v4983
      %5038 = vst.msk [vmem:[#allocation3 + $0x28] sm:$0xff] %vm728, %v4984
      %5039 = vst.msk [vmem:[#allocation3 + $0x30] sm:$0xff] %vm728, %v4985
      %5040 = vst.msk [vmem:[#allocation3 + $0x38] sm:$0xff] %vm728, %v4986
      %5041 = vst.msk [vmem:[#allocation3 + $0x40] sm:$0xff] %vm728, %v4987
      %5042 = vst.msk [vmem:[#allocation3 + $0x48] sm:$0xff] %vm728, %v4988
      %5043 = vst.msk [vmem:[#allocation3 + $0x50] sm:$0xff] %vm728, %v4989
      %5044 = vst.msk [vmem:[#allocation3 + $0x58] sm:$0xff] %vm728, %v4990
      %5045 = vst.msk [vmem:[#allocation3 + $0x60] sm:$0xff] %vm728, %v4991
      %5046 = vst.msk [vmem:[#allocation3 + $0x68] sm:$0xff] %vm728, %v4992
      %5047 = vst.msk [vmem:[#allocation3 + $0x70] sm:$0xff] %vm728, %v4993
      %5048 = vst.msk [vmem:[#allocation3 + $0x78] sm:$0xff] %vm728, %v4994
      %5049 = vst.msk [vmem:[#allocation3 + $0x80] sm:$0xff] %vm728, %v4995
      %5050 = vst.msk [vmem:[#allocation3 + $0x88] sm:$0xff] %vm728, %v4996
      %5051 = vst.msk [vmem:[#allocation3 + $0x90] sm:$0xff] %vm728, %v4997
      %5052 = vst.msk [vmem:[#allocation3 + $0x98] sm:$0xff] %vm728, %v4998
      %5053 = vst.msk [vmem:[#allocation3 + $0xa0] sm:$0xff] %vm728, %v4999
      %5054 = vst.msk [vmem:[#allocation3 + $0xa8] sm:$0xff] %vm728, %v5000
      %5055 = vst.msk [vmem:[#allocation3 + $0xb0] sm:$0xff] %vm728, %v5001
      %5056 = vst.msk [vmem:[#allocation3 + $0xb8] sm:$0xff] %vm728, %v5002
      %5057 = vst.msk [vmem:[#allocation3 + $0xc0] sm:$0xff] %vm728, %v5003
      %5058 = vst.msk [vmem:[#allocation3 + $0xc8] sm:$0xff] %vm728, %v5004
      %5059 = vst.msk [vmem:[#allocation3 + $0xd0] sm:$0xff] %vm728, %v5005
      %5060 = vst.msk [vmem:[#allocation3 + $0xd8] sm:$0xff] %vm728, %v5006
      %5061 = vst.msk [vmem:[#allocation3 + $0xe0] sm:$0xff] %vm728, %v5007
      %5062 = vst.msk [vmem:[#allocation3 + $0xe8] sm:$0xff] %vm728, %v5008
      %5063 = vst.msk [vmem:[#allocation3 + $0xf0] sm:$0xff] %vm728, %v5009
      %5064 = vst.msk [vmem:[#allocation3 + $0xf8] sm:$0xff] %vm728, %v5010
      %5065 = vst.msk [vmem:[#allocation3 + $0x100] sm:$0xff] %vm728, %v5011
      %5066 = vst.msk [vmem:[#allocation3 + $0x108] sm:$0xff] %vm728, %v5012
      %5067 = vst.msk [vmem:[#allocation3 + $0x110] sm:$0xff] %vm728, %v5013
      %5068 = vst.msk [vmem:[#allocation3 + $0x118] sm:$0xff] %vm728, %v5014
      %5069 = vst.msk [vmem:[#allocation3 + $0x120] sm:$0xff] %vm728, %v5015
      %5070 = vst.msk [vmem:[#allocation3 + $0x128] sm:$0xff] %vm728, %v5016
      %5071 = vst.msk [vmem:[#allocation3 + $0x130] sm:$0xff] %vm728, %v5017
      %5072 = vst.msk [vmem:[#allocation3 + $0x138] sm:$0xff] %vm728, %v5018
      %5073 = vst.msk [vmem:[#allocation3 + $0x140] sm:$0xff] %vm728, %v5019
      %5074 = vst.msk [vmem:[#allocation3 + $0x148] sm:$0xff] %vm728, %v5020
      %5075 = vst.msk [vmem:[#allocation3 + $0x150] sm:$0xff] %vm728, %v5021
      %5076 = vst.msk [vmem:[#allocation3 + $0x158] sm:$0xff] %vm728, %v5022
      %5077 = vst.msk [vmem:[#allocation3 + $0x160] sm:$0xff] %vm728, %v5023
      %5078 = vst.msk [vmem:[#allocation3 + $0x168] sm:$0xff] %vm728, %v5024
      %5079 = vst.msk [vmem:[#allocation3 + $0x170] sm:$0xff] %vm728, %v5025
      %5080 = vst.msk [vmem:[#allocation3 + $0x178] sm:$0xff] %vm728, %v5026
      %5081 = vst.msk [vmem:[#allocation3 + $0x180] sm:$0xff] %vm728, %v5027
      %5082 = vst.msk [vmem:[#allocation3 + $0x188] sm:$0xff] %vm728, %v5028
      %5083 = vst.msk [vmem:[#allocation3 + $0x190] sm:$0xff] %vm728, %v5029
      %5084 = vst.msk [vmem:[#allocation3 + $0x198] sm:$0xff] %vm728, %v5030
      %5085 = vst.msk [vmem:[#allocation3 + $0x1a0] sm:$0xff] %vm728, %v5031
      %5086 = vst.msk [vmem:[#allocation3 + $0x1a8] sm:$0xff] %vm728, %v5032
      %v5087 = vld [vmem:[%s4369 + $0x1] sm:$0xff]
      %v5088 = vld [vmem:[%s4369 + $0x9] sm:$0xff]
      %v5089 = vld [vmem:[%s4369 + $0x11] sm:$0xff]
      %v5090 = vld [vmem:[%s4369 + $0x21] sm:$0xff]
      %v5091 = vld [vmem:[%s4369 + $0x29] sm:$0xff]
      %v5092 = vld [vmem:[%s4369 + $0x31] sm:$0xff]
      %v5093 = vld [vmem:[%s4369 + $0x41] sm:$0xff]
      %v5094 = vld [vmem:[%s4369 + $0x49] sm:$0xff]
      %v5095 = vld [vmem:[%s4369 + $0x51] sm:$0xff]
      %v5096 = vld [vmem:[%s4369 + $0x61] sm:$0xff]
      %v5097 = vld [vmem:[%s4369 + $0x69] sm:$0xff]
      %v5098 = vld [vmem:[%s4369 + $0x71] sm:$0xff]
      %v5099 = vld [vmem:[%s4369 + $0x81] sm:$0xff]
      %v5100 = vld [vmem:[%s4369 + $0x89] sm:$0xff]
      %v5101 = vld [vmem:[%s4369 + $0x91] sm:$0xff]
      %v5102 = vld [vmem:[%s4369 + $0xa1] sm:$0xff]
      %v5103 = vld [vmem:[%s4369 + $0xa9] sm:$0xff]
      %v5104 = vld [vmem:[%s4369 + $0xb1] sm:$0xff]
      %v5105 = vld [vmem:[%s4369 + $0xc1] sm:$0xff]
      %v5106 = vld [vmem:[%s4369 + $0xc9] sm:$0xff]
      %v5107 = vld [vmem:[%s4369 + $0xd1] sm:$0xff]
      %v5108 = vld [vmem:[%s4369 + $0xe1] sm:$0xff]
      %v5109 = vld [vmem:[%s4369 + $0xe9] sm:$0xff]
      %v5110 = vld [vmem:[%s4369 + $0xf1] sm:$0xff]
      %v5111 = vld [vmem:[%s4369 + $0x101] sm:$0xff]
      %v5112 = vld [vmem:[%s4369 + $0x109] sm:$0xff]
      %v5113 = vld [vmem:[%s4369 + $0x111] sm:$0xff]
      %v5114 = vld [vmem:[%s4369 + $0x121] sm:$0xff]
      %v5115 = vld [vmem:[%s4369 + $0x129] sm:$0xff]
      %v5116 = vld [vmem:[%s4369 + $0x131] sm:$0xff]
      %v5117 = vld [vmem:[%s4369 + $0x141] sm:$0xff]
      %v5118 = vld [vmem:[%s4369 + $0x149] sm:$0xff]
      %v5119 = vld [vmem:[%s4369 + $0x151] sm:$0xff]
      %v5120 = vld [vmem:[%s4369 + $0x161] sm:$0xff]
      %v5121 = vld [vmem:[%s4369 + $0x169] sm:$0xff]
      %v5122 = vld [vmem:[%s4369 + $0x171] sm:$0xff]
      %v5123 = vld [vmem:[%s4369 + $0x181] sm:$0xff]
      %v5124 = vld [vmem:[%s4369 + $0x189] sm:$0xff]
      %v5125 = vld [vmem:[%s4369 + $0x191] sm:$0xff]
      %v5126 = vld [vmem:[%s4369 + $0x1a1] sm:$0xff]
      %v5127 = vld [vmem:[%s4369 + $0x1a9] sm:$0xff]
      %v5128 = vld [vmem:[%s4369 + $0x1b1] sm:$0xff]
      %v5129 = vld [vmem:[%s4369 + $0x1c1] sm:$0xff]
      %v5130 = vld [vmem:[%s4369 + $0x1c9] sm:$0xff]
      %v5131 = vld [vmem:[%s4369 + $0x1d1] sm:$0xff]
      %v5132 = vld [vmem:[%s4369 + $0x1e1] sm:$0xff]
      %v5133 = vld [vmem:[%s4369 + $0x1e9] sm:$0xff]
      %v5134 = vld [vmem:[%s4369 + $0x1f1] sm:$0xff]
      %v5135 = vld [vmem:[%s4369 + $0x201] sm:$0xff]
      %v5136 = vld [vmem:[%s4369 + $0x209] sm:$0xff]
      %v5137 = vld [vmem:[%s4369 + $0x211] sm:$0xff]
      %v5138 = vld [vmem:[%s4369 + $0x221] sm:$0xff]
      %v5139 = vld [vmem:[%s4369 + $0x229] sm:$0xff]
      %v5140 = vld [vmem:[%s4369 + $0x231] sm:$0xff]
      %v5141 = vld [vmem:[%s1 + $0x1c] sm:$0xf]
      %v5143 = vsel %vm226, %v5087, 0
      %v5146 = vsel %vm226, %v5088, 0
      %v5149 = vsel %vm226, %v5089, 0
      %v5152 = vsel %vm226, %v5090, 0
      %v5155 = vsel %vm226, %v5091, 0
      %v5158 = vsel %vm226, %v5092, 0
      %v5161 = vsel %vm226, %v5093, 0
      %v5164 = vsel %vm226, %v5094, 0
      %v5167 = vsel %vm226, %v5095, 0
      %v5170 = vsel %vm226, %v5096, 0
      %v5173 = vsel %vm226, %v5097, 0
      %v5176 = vsel %vm226, %v5098, 0
      %v5179 = vsel %vm226, %v5099, 0
      %v5182 = vsel %vm226, %v5100, 0
      %v5185 = vsel %vm226, %v5101, 0
      %v5188 = vsel %vm226, %v5102, 0
      %v5191 = vsel %vm226, %v5103, 0
      %v5194 = vsel %vm226, %v5104, 0
      %v5197 = vsel %vm226, %v5105, 0
      %v5200 = vsel %vm226, %v5106, 0
      %v5203 = vsel %vm226, %v5107, 0
      %v5206 = vsel %vm226, %v5108, 0
      %v5209 = vsel %vm226, %v5109, 0
      %v5212 = vsel %vm226, %v5110, 0
      %v5215 = vsel %vm226, %v5111, 0
      %v5218 = vsel %vm226, %v5112, 0
      %v5221 = vsel %vm226, %v5113, 0
      %v5224 = vsel %vm226, %v5114, 0
      %v5227 = vsel %vm226, %v5115, 0
      %v5230 = vsel %vm226, %v5116, 0
      %v5233 = vsel %vm226, %v5117, 0
      %v5236 = vsel %vm226, %v5118, 0
      %v5239 = vsel %vm226, %v5119, 0
      %v5242 = vsel %vm226, %v5120, 0
      %v5245 = vsel %vm226, %v5121, 0
      %v5248 = vsel %vm226, %v5122, 0
      %v5251 = vsel %vm226, %v5123, 0
      %v5254 = vsel %vm226, %v5124, 0
      %v5257 = vsel %vm226, %v5125, 0
      %v5260 = vsel %vm226, %v5126, 0
      %v5263 = vsel %vm226, %v5127, 0
      %v5266 = vsel %vm226, %v5128, 0
      %v5269 = vsel %vm226, %v5129, 0
      %v5272 = vsel %vm226, %v5130, 0
      %v5275 = vsel %vm226, %v5131, 0
      %v5278 = vsel %vm226, %v5132, 0
      %v5281 = vsel %vm226, %v5133, 0
      %v5284 = vsel %vm226, %v5134, 0
      %v5287 = vsel %vm226, %v5135, 0
      %v5290 = vsel %vm226, %v5136, 0
      %v5293 = vsel %vm226, %v5137, 0
      %v5296 = vsel %vm226, %v5138, 0
      %v5299 = vsel %vm226, %v5139, 0
      %v5302 = vsel %vm226, %v5140, 0
      %v5305 = vsel %vm389, %v5141, 0
      %5307 = vmatprep.subr.mxu0 0.0
      %5308 = vmatpush1.msra.mxu0 %v5305
      %5309 = vmatprep.subr.mxu0 0.0
      %5310 = vmatpush1.msra.mxu0 0.0
      %5311 = vmatprep.subr.mxu0 0.0
      %5312 = vmatpush1.msra.mxu0 0.0
      %5313 = vmatprep.subr.mxu0 0.0
      %5314 = vmatpush1.msra.mxu0 0.0
      %5315 = vmatprep.subr.mxu0 0.0
      %5316 = vmatpush1.msra.mxu0 0.0
      %5317 = vmatprep.subr.mxu0 0.0
      %5318 = vmatpush1.msra.mxu0 0.0
      %5319 = vmatprep.subr.mxu0 0.0
      %5320 = vmatpush1.msra.mxu0 0.0
      %5321 = vmatprep.subr.mxu0 0.0
      %5322 = vmatpush1.msra.mxu0 0.0
      %5323 = vmatprep.subr.mxu0 0.0
      %5324 = vmatpush1.msra.mxu0 0.0
      %5325 = vmatprep.subr.mxu0 0.0
      %5326 = vmatpush1.msra.mxu0 0.0
      %5327 = vmatprep.subr.mxu0 0.0
      %5328 = vmatpush1.msra.mxu0 0.0
      %5329 = vmatprep.subr.mxu0 0.0
      %5330 = vmatpush1.msra.mxu0 0.0
      %5331 = vmatprep.subr.mxu0 0.0
      %5332 = vmatpush1.msra.mxu0 0.0
      %5333 = vmatprep.subr.mxu0 0.0
      %5334 = vmatpush1.msra.mxu0 0.0
      %5335 = vmatprep.subr.mxu0 0.0
      %5336 = vmatpush1.msra.mxu0 0.0
      %5337 = vmatprep.subr.mxu0 0.0
      %5338 = vmatpush1.msra.mxu0 0.0
      %5339 = vmatprep.subr.mxu0 0.0
      %5340 = vmatpush1.msra.mxu0 0.0
      %5341 = vmatprep.subr.mxu0 0.0
      %5342 = vmatpush1.msra.mxu0 0.0
      %5343 = vmatprep.subr.mxu0 0.0
      %5344 = vmatpush1.msra.mxu0 0.0
      %5345 = vmatprep.subr.mxu0 0.0
      %5346 = vmatpush1.msra.mxu0 0.0
      %5347 = vmatprep.subr.mxu0 0.0
      %5348 = vmatpush1.msra.mxu0 0.0
      %5349 = vmatprep.subr.mxu0 0.0
      %5350 = vmatpush1.msra.mxu0 0.0
      %5351 = vmatprep.subr.mxu0 0.0
      %5352 = vmatpush1.msra.mxu0 0.0
      %5353 = vmatprep.subr.mxu0 0.0
      %5354 = vmatpush1.msra.mxu0 0.0
      %5355 = vmatprep.subr.mxu0 0.0
      %5356 = vmatpush1.msra.mxu0 0.0
      %5357 = vmatprep.subr.mxu0 0.0
      %5358 = vmatpush1.msra.mxu0 0.0
      %5359 = vmatprep.subr.mxu0 0.0
      %5360 = vmatpush1.msra.mxu0 0.0
      %5361 = vmatprep.subr.mxu0 0.0
      %5362 = vmatpush1.msra.mxu0 0.0
      %5363 = vmatprep.subr.mxu0 0.0
      %5364 = vmatpush1.msra.mxu0 0.0
      %5365 = vmatprep.subr.mxu0 0.0
      %5366 = vmatpush1.msra.mxu0 0.0
      %5367 = vmatprep.subr.mxu0 0.0
      %5368 = vmatpush1.msra.mxu0 0.0
      %5369 = vmatprep.subr.mxu0 0.0
      %5370 = vmatpush1.msra.mxu0 0.0
      %5371 = vmatprep.mubr.f32.mxu0 0.0
      %5372 = vmatmul.mubr.f32.gmra.mrb[0].mxu0 %v5143
      %v5373 = vpop.f32.mrb[0].mxu0
      %v5374 = vadd.f32 0.0, %v5373
      %v5375 = vpop.f32.mrb[0].mxu0
      %5376 = vmatprep.mubr.f32.mxu0 0.0
      %5377 = vmatmul.mubr.f32.gmra.mrb[0].mxu0 %v5146
      %v5378 = vpop.f32.mrb[0].mxu0
      %v5379 = vadd.f32 0.0, %v5378
      %v5380 = vpop.f32.mrb[0].mxu0
      %5381 = vmatprep.mubr.f32.mxu0 0.0
      %5382 = vmatmul.mubr.f32.gmra.mrb[0].mxu0 %v5149
      %v5383 = vpop.f32.mrb[0].mxu0
      %v5384 = vadd.f32 0.0, %v5383
      %v5385 = vpop.f32.mrb[0].mxu0
      %5386 = vmatprep.mubr.f32.mxu0 0.0
      %5387 = vmatmul.mubr.f32.gmra.mrb[0].mxu0 %v5152
      %v5388 = vpop.f32.mrb[0].mxu0
      %v5389 = vadd.f32 0.0, %v5388
      %v5390 = vpop.f32.mrb[0].mxu0
      %5391 = vmatprep.mubr.f32.mxu0 0.0
      %5392 = vmatmul.mubr.f32.gmra.mrb[0].mxu0 %v5155
      %v5393 = vpop.f32.mrb[0].mxu0
      %v5394 = vadd.f32 0.0, %v5393
      %v5395 = vpop.f32.mrb[0].mxu0
      %5396 = vmatprep.mubr.f32.mxu0 0.0
      %5397 = vmatmul.mubr.f32.gmra.mrb[0].mxu0 %v5158
      %v5398 = vpop.f32.mrb[0].mxu0
      %v5399 = vadd.f32 0.0, %v5398
      %v5400 = vpop.f32.mrb[0].mxu0
      %5401 = vmatprep.mubr.f32.mxu0 0.0
      %5402 = vmatmul.mubr.f32.gmra.mrb[0].mxu0 %v5161
      %v5403 = vpop.f32.mrb[0].mxu0
      %v5404 = vadd.f32 0.0, %v5403
      %v5405 = vpop.f32.mrb[0].mxu0
      %5406 = vmatprep.mubr.f32.mxu0 0.0
      %5407 = vmatmul.mubr.f32.gmra.mrb[0].mxu0 %v5164
      %v5408 = vpop.f32.mrb[0].mxu0
      %v5409 = vadd.f32 0.0, %v5408
      %v5410 = vpop.f32.mrb[0].mxu0
      %5411 = vmatprep.mubr.f32.mxu0 0.0
      %5412 = vmatmul.mubr.f32.gmra.mrb[0].mxu0 %v5167
      %v5413 = vpop.f32.mrb[0].mxu0
      %v5414 = vadd.f32 0.0, %v5413
      %v5415 = vpop.f32.mrb[0].mxu0
      %5416 = vmatprep.mubr.f32.mxu0 0.0
      %5417 = vmatmul.mubr.f32.gmra.mrb[0].mxu0 %v5170
      %v5418 = vpop.f32.mrb[0].mxu0
      %v5419 = vadd.f32 0.0, %v5418
      %v5420 = vpop.f32.mrb[0].mxu0
      %5421 = vmatprep.mubr.f32.mxu0 0.0
      %5422 = vmatmul.mubr.f32.gmra.mrb[0].mxu0 %v5173
      %v5423 = vpop.f32.mrb[0].mxu0
      %v5424 = vadd.f32 0.0, %v5423
      %v5425 = vpop.f32.mrb[0].mxu0
      %5426 = vmatprep.mubr.f32.mxu0 0.0
      %5427 = vmatmul.mubr.f32.gmra.mrb[0].mxu0 %v5176
      %v5428 = vpop.f32.mrb[0].mxu0
      %v5429 = vadd.f32 0.0, %v5428
      %v5430 = vpop.f32.mrb[0].mxu0
      %5431 = vmatprep.mubr.f32.mxu0 0.0
      %5432 = vmatmul.mubr.f32.gmra.mrb[0].mxu0 %v5179
      %v5433 = vpop.f32.mrb[0].mxu0
      %v5434 = vadd.f32 0.0, %v5433
      %v5435 = vpop.f32.mrb[0].mxu0
      %5436 = vmatprep.mubr.f32.mxu0 0.0
      %5437 = vmatmul.mubr.f32.gmra.mrb[0].mxu0 %v5182
      %v5438 = vpop.f32.mrb[0].mxu0
      %v5439 = vadd.f32 0.0, %v5438
      %v5440 = vpop.f32.mrb[0].mxu0
      %5441 = vmatprep.mubr.f32.mxu0 0.0
      %5442 = vmatmul.mubr.f32.gmra.mrb[0].mxu0 %v5185
      %v5443 = vpop.f32.mrb[0].mxu0
      %v5444 = vadd.f32 0.0, %v5443
      %v5445 = vpop.f32.mrb[0].mxu0
      %5446 = vmatprep.mubr.f32.mxu0 0.0
      %5447 = vmatmul.mubr.f32.gmra.mrb[0].mxu0 %v5188
      %v5448 = vpop.f32.mrb[0].mxu0
      %v5449 = vadd.f32 0.0, %v5448
      %v5450 = vpop.f32.mrb[0].mxu0
      %5451 = vmatprep.mubr.f32.mxu0 0.0
      %5452 = vmatmul.mubr.f32.gmra.mrb[0].mxu0 %v5191
      %v5453 = vpop.f32.mrb[0].mxu0
      %v5454 = vadd.f32 0.0, %v5453
      %v5455 = vpop.f32.mrb[0].mxu0
      %5456 = vmatprep.mubr.f32.mxu0 0.0
      %5457 = vmatmul.mubr.f32.gmra.mrb[0].mxu0 %v5194
      %v5458 = vpop.f32.mrb[0].mxu0
      %v5459 = vadd.f32 0.0, %v5458
      %v5460 = vpop.f32.mrb[0].mxu0
      %5461 = vmatprep.mubr.f32.mxu0 0.0
      %5462 = vmatmul.mubr.f32.gmra.mrb[0].mxu0 %v5197
      %v5463 = vpop.f32.mrb[0].mxu0
      %v5464 = vadd.f32 0.0, %v5463
      %v5465 = vpop.f32.mrb[0].mxu0
      %5466 = vmatprep.mubr.f32.mxu0 0.0
      %5467 = vmatmul.mubr.f32.gmra.mrb[0].mxu0 %v5200
      %v5468 = vpop.f32.mrb[0].mxu0
      %v5469 = vadd.f32 0.0, %v5468
      %v5470 = vpop.f32.mrb[0].mxu0
      %5471 = vmatprep.mubr.f32.mxu0 0.0
      %5472 = vmatmul.mubr.f32.gmra.mrb[0].mxu0 %v5203
      %v5473 = vpop.f32.mrb[0].mxu0
      %v5474 = vadd.f32 0.0, %v5473
      %v5475 = vpop.f32.mrb[0].mxu0
      %5476 = vmatprep.mubr.f32.mxu0 0.0
      %5477 = vmatmul.mubr.f32.gmra.mrb[0].mxu0 %v5206
      %v5478 = vpop.f32.mrb[0].mxu0
      %v5479 = vadd.f32 0.0, %v5478
      %v5480 = vpop.f32.mrb[0].mxu0
      %5481 = vmatprep.mubr.f32.mxu0 0.0
      %5482 = vmatmul.mubr.f32.gmra.mrb[0].mxu0 %v5209
      %v5483 = vpop.f32.mrb[0].mxu0
      %v5484 = vadd.f32 0.0, %v5483
      %v5485 = vpop.f32.mrb[0].mxu0
      %5486 = vmatprep.mubr.f32.mxu0 0.0
      %5487 = vmatmul.mubr.f32.gmra.mrb[0].mxu0 %v5212
      %v5488 = vpop.f32.mrb[0].mxu0
      %v5489 = vadd.f32 0.0, %v5488
      %v5490 = vpop.f32.mrb[0].mxu0
      %5491 = vmatprep.mubr.f32.mxu0 0.0
      %5492 = vmatmul.mubr.f32.gmra.mrb[0].mxu0 %v5215
      %v5493 = vpop.f32.mrb[0].mxu0
      %v5494 = vadd.f32 0.0, %v5493
      %v5495 = vpop.f32.mrb[0].mxu0
      %5496 = vmatprep.mubr.f32.mxu0 0.0
      %5497 = vmatmul.mubr.f32.gmra.mrb[0].mxu0 %v5218
      %v5498 = vpop.f32.mrb[0].mxu0
      %v5499 = vadd.f32 0.0, %v5498
      %v5500 = vpop.f32.mrb[0].mxu0
      %5501 = vmatprep.mubr.f32.mxu0 0.0
      %5502 = vmatmul.mubr.f32.gmra.mrb[0].mxu0 %v5221
      %v5503 = vpop.f32.mrb[0].mxu0
      %v5504 = vadd.f32 0.0, %v5503
      %v5505 = vpop.f32.mrb[0].mxu0
      %5506 = vmatprep.mubr.f32.mxu0 0.0
      %5507 = vmatmul.mubr.f32.gmra.mrb[0].mxu0 %v5224
      %v5508 = vpop.f32.mrb[0].mxu0
      %v5509 = vadd.f32 0.0, %v5508
      %v5510 = vpop.f32.mrb[0].mxu0
      %5511 = vmatprep.mubr.f32.mxu0 0.0
      %5512 = vmatmul.mubr.f32.gmra.mrb[0].mxu0 %v5227
      %v5513 = vpop.f32.mrb[0].mxu0
      %v5514 = vadd.f32 0.0, %v5513
      %v5515 = vpop.f32.mrb[0].mxu0
      %5516 = vmatprep.mubr.f32.mxu0 0.0
      %5517 = vmatmul.mubr.f32.gmra.mrb[0].mxu0 %v5230
      %v5518 = vpop.f32.mrb[0].mxu0
      %v5519 = vadd.f32 0.0, %v5518
      %v5520 = vpop.f32.mrb[0].mxu0
      %5521 = vmatprep.mubr.f32.mxu0 0.0
      %5522 = vmatmul.mubr.f32.gmra.mrb[0].mxu0 %v5233
      %v5523 = vpop.f32.mrb[0].mxu0
      %v5524 = vadd.f32 0.0, %v5523
      %v5525 = vpop.f32.mrb[0].mxu0
      %5526 = vmatprep.mubr.f32.mxu0 0.0
      %5527 = vmatmul.mubr.f32.gmra.mrb[0].mxu0 %v5236
      %v5528 = vpop.f32.mrb[0].mxu0
      %v5529 = vadd.f32 0.0, %v5528
      %v5530 = vpop.f32.mrb[0].mxu0
      %5531 = vmatprep.mubr.f32.mxu0 0.0
      %5532 = vmatmul.mubr.f32.gmra.mrb[0].mxu0 %v5239
      %v5533 = vpop.f32.mrb[0].mxu0
      %v5534 = vadd.f32 0.0, %v5533
      %v5535 = vpop.f32.mrb[0].mxu0
      %5536 = vmatprep.mubr.f32.mxu0 0.0
      %5537 = vmatmul.mubr.f32.gmra.mrb[0].mxu0 %v5242
      %v5538 = vpop.f32.mrb[0].mxu0
      %v5539 = vadd.f32 0.0, %v5538
      %v5540 = vpop.f32.mrb[0].mxu0
      %5541 = vmatprep.mubr.f32.mxu0 0.0
      %5542 = vmatmul.mubr.f32.gmra.mrb[0].mxu0 %v5245
      %v5543 = vpop.f32.mrb[0].mxu0
      %v5544 = vadd.f32 0.0, %v5543
      %v5545 = vpop.f32.mrb[0].mxu0
      %5546 = vmatprep.mubr.f32.mxu0 0.0
      %5547 = vmatmul.mubr.f32.gmra.mrb[0].mxu0 %v5248
      %v5548 = vpop.f32.mrb[0].mxu0
      %v5549 = vadd.f32 0.0, %v5548
      %v5550 = vpop.f32.mrb[0].mxu0
      %5551 = vmatprep.mubr.f32.mxu0 0.0
      %5552 = vmatmul.mubr.f32.gmra.mrb[0].mxu0 %v5251
      %v5553 = vpop.f32.mrb[0].mxu0
      %v5554 = vadd.f32 0.0, %v5553
      %v5555 = vpop.f32.mrb[0].mxu0
      %5556 = vmatprep.mubr.f32.mxu0 0.0
      %5557 = vmatmul.mubr.f32.gmra.mrb[0].mxu0 %v5254
      %v5558 = vpop.f32.mrb[0].mxu0
      %v5559 = vadd.f32 0.0, %v5558
      %v5560 = vpop.f32.mrb[0].mxu0
      %5561 = vmatprep.mubr.f32.mxu0 0.0
      %5562 = vmatmul.mubr.f32.gmra.mrb[0].mxu0 %v5257
      %v5563 = vpop.f32.mrb[0].mxu0
      %v5564 = vadd.f32 0.0, %v5563
      %v5565 = vpop.f32.mrb[0].mxu0
      %5566 = vmatprep.mubr.f32.mxu0 0.0
      %5567 = vmatmul.mubr.f32.gmra.mrb[0].mxu0 %v5260
      %v5568 = vpop.f32.mrb[0].mxu0
      %v5569 = vadd.f32 0.0, %v5568
      %v5570 = vpop.f32.mrb[0].mxu0
      %5571 = vmatprep.mubr.f32.mxu0 0.0
      %5572 = vmatmul.mubr.f32.gmra.mrb[0].mxu0 %v5263
      %v5573 = vpop.f32.mrb[0].mxu0
      %v5574 = vadd.f32 0.0, %v5573
      %v5575 = vpop.f32.mrb[0].mxu0
      %5576 = vmatprep.mubr.f32.mxu0 0.0
      %5577 = vmatmul.mubr.f32.gmra.mrb[0].mxu0 %v5266
      %v5578 = vpop.f32.mrb[0].mxu0
      %v5579 = vadd.f32 0.0, %v5578
      %v5580 = vpop.f32.mrb[0].mxu0
      %5581 = vmatprep.mubr.f32.mxu0 0.0
      %5582 = vmatmul.mubr.f32.gmra.mrb[0].mxu0 %v5269
      %v5583 = vpop.f32.mrb[0].mxu0
      %v5584 = vadd.f32 0.0, %v5583
      %v5585 = vpop.f32.mrb[0].mxu0
      %5586 = vmatprep.mubr.f32.mxu0 0.0
      %5587 = vmatmul.mubr.f32.gmra.mrb[0].mxu0 %v5272
      %v5588 = vpop.f32.mrb[0].mxu0
      %v5589 = vadd.f32 0.0, %v5588
      %v5590 = vpop.f32.mrb[0].mxu0
      %5591 = vmatprep.mubr.f32.mxu0 0.0
      %5592 = vmatmul.mubr.f32.gmra.mrb[0].mxu0 %v5275
      %v5593 = vpop.f32.mrb[0].mxu0
      %v5594 = vadd.f32 0.0, %v5593
      %v5595 = vpop.f32.mrb[0].mxu0
      %5596 = vmatprep.mubr.f32.mxu0 0.0
      %5597 = vmatmul.mubr.f32.gmra.mrb[0].mxu0 %v5278
      %v5598 = vpop.f32.mrb[0].mxu0
      %v5599 = vadd.f32 0.0, %v5598
      %v5600 = vpop.f32.mrb[0].mxu0
      %5601 = vmatprep.mubr.f32.mxu0 0.0
      %5602 = vmatmul.mubr.f32.gmra.mrb[0].mxu0 %v5281
      %v5603 = vpop.f32.mrb[0].mxu0
      %v5604 = vadd.f32 0.0, %v5603
      %v5605 = vpop.f32.mrb[0].mxu0
      %5606 = vmatprep.mubr.f32.mxu0 0.0
      %5607 = vmatmul.mubr.f32.gmra.mrb[0].mxu0 %v5284
      %v5608 = vpop.f32.mrb[0].mxu0
      %v5609 = vadd.f32 0.0, %v5608
      %v5610 = vpop.f32.mrb[0].mxu0
      %5611 = vmatprep.mubr.f32.mxu0 0.0
      %5612 = vmatmul.mubr.f32.gmra.mrb[0].mxu0 %v5287
      %v5613 = vpop.f32.mrb[0].mxu0
      %v5614 = vadd.f32 0.0, %v5613
      %v5615 = vpop.f32.mrb[0].mxu0
      %5616 = vmatprep.mubr.f32.mxu0 0.0
      %5617 = vmatmul.mubr.f32.gmra.mrb[0].mxu0 %v5290
      %v5618 = vpop.f32.mrb[0].mxu0
      %v5619 = vadd.f32 0.0, %v5618
      %v5620 = vpop.f32.mrb[0].mxu0
      %5621 = vmatprep.mubr.f32.mxu0 0.0
      %5622 = vmatmul.mubr.f32.gmra.mrb[0].mxu0 %v5293
      %v5623 = vpop.f32.mrb[0].mxu0
      %v5624 = vadd.f32 0.0, %v5623
      %v5625 = vpop.f32.mrb[0].mxu0
      %5626 = vmatprep.mubr.f32.mxu0 0.0
      %5627 = vmatmul.mubr.f32.gmra.mrb[0].mxu0 %v5296
      %v5628 = vpop.f32.mrb[0].mxu0
      %v5629 = vadd.f32 0.0, %v5628
      %v5630 = vpop.f32.mrb[0].mxu0
      %5631 = vmatprep.mubr.f32.mxu0 0.0
      %5632 = vmatmul.mubr.f32.gmra.mrb[0].mxu0 %v5299
      %v5633 = vpop.f32.mrb[0].mxu0
      %v5634 = vadd.f32 0.0, %v5633
      %v5635 = vpop.f32.mrb[0].mxu0
      %5636 = vmatprep.mubr.f32.mxu0 0.0
      %5637 = vmatmul.mubr.f32.gmra.mrb[0].mxu0 %v5302
      %v5638 = vpop.f32.mrb[0].mxu0
      %v5639 = vadd.f32 0.0, %v5638
      %v5640 = vpop.f32.mrb[0].mxu0
      %5641 = vdwg.mxu0
      %v5642 = vld [vmem:[#allocation3] sm:$0xff]
      %v5643 = vld [vmem:[#allocation3 + $0x8] sm:$0xff]
      %v5644 = vld [vmem:[#allocation3 + $0x10] sm:$0xff]
      %v5645 = vld [vmem:[#allocation3 + $0x18] sm:$0xff]
      %v5646 = vld [vmem:[#allocation3 + $0x20] sm:$0xff]
      %v5647 = vld [vmem:[#allocation3 + $0x28] sm:$0xff]
      %v5648 = vld [vmem:[#allocation3 + $0x30] sm:$0xff]
      %v5649 = vld [vmem:[#allocation3 + $0x38] sm:$0xff]
      %v5650 = vld [vmem:[#allocation3 + $0x40] sm:$0xff]
      %v5651 = vld [vmem:[#allocation3 + $0x48] sm:$0xff]
      %v5652 = vld [vmem:[#allocation3 + $0x50] sm:$0xff]
      %v5653 = vld [vmem:[#allocation3 + $0x58] sm:$0xff]
      %v5654 = vld [vmem:[#allocation3 + $0x60] sm:$0xff]
      %v5655 = vld [vmem:[#allocation3 + $0x68] sm:$0xff]
      %v5656 = vld [vmem:[#allocation3 + $0x70] sm:$0xff]
      %v5657 = vld [vmem:[#allocation3 + $0x78] sm:$0xff]
      %v5658 = vld [vmem:[#allocation3 + $0x80] sm:$0xff]
      %v5659 = vld [vmem:[#allocation3 + $0x88] sm:$0xff]
      %v5660 = vld [vmem:[#allocation3 + $0x90] sm:$0xff]
      %v5661 = vld [vmem:[#allocation3 + $0x98] sm:$0xff]
      %v5662 = vld [vmem:[#allocation3 + $0xa0] sm:$0xff]
      %v5663 = vld [vmem:[#allocation3 + $0xa8] sm:$0xff]
      %v5664 = vld [vmem:[#allocation3 + $0xb0] sm:$0xff]
      %v5665 = vld [vmem:[#allocation3 + $0xb8] sm:$0xff]
      %v5666 = vld [vmem:[#allocation3 + $0xc0] sm:$0xff]
      %v5667 = vld [vmem:[#allocation3 + $0xc8] sm:$0xff]
      %v5668 = vld [vmem:[#allocation3 + $0xd0] sm:$0xff]
      %v5669 = vld [vmem:[#allocation3 + $0xd8] sm:$0xff]
      %v5670 = vld [vmem:[#allocation3 + $0xe0] sm:$0xff]
      %v5671 = vld [vmem:[#allocation3 + $0xe8] sm:$0xff]
      %v5672 = vld [vmem:[#allocation3 + $0xf0] sm:$0xff]
      %v5673 = vld [vmem:[#allocation3 + $0xf8] sm:$0xff]
      %v5674 = vld [vmem:[#allocation3 + $0x100] sm:$0xff]
      %v5675 = vld [vmem:[#allocation3 + $0x108] sm:$0xff]
      %v5676 = vld [vmem:[#allocation3 + $0x110] sm:$0xff]
      %v5677 = vld [vmem:[#allocation3 + $0x118] sm:$0xff]
      %v5678 = vld [vmem:[#allocation3 + $0x120] sm:$0xff]
      %v5679 = vld [vmem:[#allocation3 + $0x128] sm:$0xff]
      %v5680 = vld [vmem:[#allocation3 + $0x130] sm:$0xff]
      %v5681 = vld [vmem:[#allocation3 + $0x138] sm:$0xff]
      %v5682 = vld [vmem:[#allocation3 + $0x140] sm:$0xff]
      %v5683 = vld [vmem:[#allocation3 + $0x148] sm:$0xff]
      %v5684 = vld [vmem:[#allocation3 + $0x150] sm:$0xff]
      %v5685 = vld [vmem:[#allocation3 + $0x158] sm:$0xff]
      %v5686 = vld [vmem:[#allocation3 + $0x160] sm:$0xff]
      %v5687 = vld [vmem:[#allocation3 + $0x168] sm:$0xff]
      %v5688 = vld [vmem:[#allocation3 + $0x170] sm:$0xff]
      %v5689 = vld [vmem:[#allocation3 + $0x178] sm:$0xff]
      %v5690 = vld [vmem:[#allocation3 + $0x180] sm:$0xff]
      %v5691 = vld [vmem:[#allocation3 + $0x188] sm:$0xff]
      %v5692 = vld [vmem:[#allocation3 + $0x190] sm:$0xff]
      %v5693 = vld [vmem:[#allocation3 + $0x198] sm:$0xff]
      %v5694 = vld [vmem:[#allocation3 + $0x1a0] sm:$0xff]
      %v5695 = vld [vmem:[#allocation3 + $0x1a8] sm:$0xff]
      %v5696 = vadd.f32 %v5642, %v5374
      %v5697 = vadd.f32 %v5643, %v5379
      %v5698 = vadd.f32 %v5644, %v5384
      %v5699 = vadd.f32 %v5645, %v5389
      %v5700 = vadd.f32 %v5646, %v5394
      %v5701 = vadd.f32 %v5647, %v5399
      %v5702 = vadd.f32 %v5648, %v5404
      %v5703 = vadd.f32 %v5649, %v5409
      %v5704 = vadd.f32 %v5650, %v5414
      %v5705 = vadd.f32 %v5651, %v5419
      %v5706 = vadd.f32 %v5652, %v5424
      %v5707 = vadd.f32 %v5653, %v5429
      %v5708 = vadd.f32 %v5654, %v5434
      %v5709 = vadd.f32 %v5655, %v5439
      %v5710 = vadd.f32 %v5656, %v5444
      %v5711 = vadd.f32 %v5657, %v5449
      %v5712 = vadd.f32 %v5658, %v5454
      %v5713 = vadd.f32 %v5659, %v5459
      %v5714 = vadd.f32 %v5660, %v5464
      %v5715 = vadd.f32 %v5661, %v5469
      %v5716 = vadd.f32 %v5662, %v5474
      %v5717 = vadd.f32 %v5663, %v5479
      %v5718 = vadd.f32 %v5664, %v5484
      %v5719 = vadd.f32 %v5665, %v5489
      %v5720 = vadd.f32 %v5666, %v5494
      %v5721 = vadd.f32 %v5667, %v5499
      %v5722 = vadd.f32 %v5668, %v5504
      %v5723 = vadd.f32 %v5669, %v5509
      %v5724 = vadd.f32 %v5670, %v5514
      %v5725 = vadd.f32 %v5671, %v5519
      %v5726 = vadd.f32 %v5672, %v5524
      %v5727 = vadd.f32 %v5673, %v5529
      %v5728 = vadd.f32 %v5674, %v5534
      %v5729 = vadd.f32 %v5675, %v5539
      %v5730 = vadd.f32 %v5676, %v5544
      %v5731 = vadd.f32 %v5677, %v5549
      %v5732 = vadd.f32 %v5678, %v5554
      %v5733 = vadd.f32 %v5679, %v5559
      %v5734 = vadd.f32 %v5680, %v5564
      %v5735 = vadd.f32 %v5681, %v5569
      %v5736 = vadd.f32 %v5682, %v5574
      %v5737 = vadd.f32 %v5683, %v5579
      %v5738 = vadd.f32 %v5684, %v5584
      %v5739 = vadd.f32 %v5685, %v5589
      %v5740 = vadd.f32 %v5686, %v5594
      %v5741 = vadd.f32 %v5687, %v5599
      %v5742 = vadd.f32 %v5688, %v5604
      %v5743 = vadd.f32 %v5689, %v5609
      %v5744 = vadd.f32 %v5690, %v5614
      %v5745 = vadd.f32 %v5691, %v5619
      %v5746 = vadd.f32 %v5692, %v5624
      %v5747 = vadd.f32 %v5693, %v5629
      %v5748 = vadd.f32 %v5694, %v5634
      %v5749 = vadd.f32 %v5695, %v5639
      %5750 = vst.msk [vmem:[#allocation3] sm:$0xff] %vm728, %v5696
      %5751 = vst.msk [vmem:[#allocation3 + $0x8] sm:$0xff] %vm728, %v5697
      %5752 = vst.msk [vmem:[#allocation3 + $0x10] sm:$0xff] %vm728, %v5698
      %5753 = vst.msk [vmem:[#allocation3 + $0x18] sm:$0xff] %vm728, %v5699
      %5754 = vst.msk [vmem:[#allocation3 + $0x20] sm:$0xff] %vm728, %v5700
      %5755 = vst.msk [vmem:[#allocation3 + $0x28] sm:$0xff] %vm728, %v5701
      %5756 = vst.msk [vmem:[#allocation3 + $0x30] sm:$0xff] %vm728, %v5702
      %5757 = vst.msk [vmem:[#allocation3 + $0x38] sm:$0xff] %vm728, %v5703
      %5758 = vst.msk [vmem:[#allocation3 + $0x40] sm:$0xff] %vm728, %v5704
      %5759 = vst.msk [vmem:[#allocation3 + $0x48] sm:$0xff] %vm728, %v5705
      %5760 = vst.msk [vmem:[#allocation3 + $0x50] sm:$0xff] %vm728, %v5706
      %5761 = vst.msk [vmem:[#allocation3 + $0x58] sm:$0xff] %vm728, %v5707
      %5762 = vst.msk [vmem:[#allocation3 + $0x60] sm:$0xff] %vm728, %v5708
      %5763 = vst.msk [vmem:[#allocation3 + $0x68] sm:$0xff] %vm728, %v5709
      %5764 = vst.msk [vmem:[#allocation3 + $0x70] sm:$0xff] %vm728, %v5710
      %5765 = vst.msk [vmem:[#allocation3 + $0x78] sm:$0xff] %vm728, %v5711
      %5766 = vst.msk [vmem:[#allocation3 + $0x80] sm:$0xff] %vm728, %v5712
      %5767 = vst.msk [vmem:[#allocation3 + $0x88] sm:$0xff] %vm728, %v5713
      %5768 = vst.msk [vmem:[#allocation3 + $0x90] sm:$0xff] %vm728, %v5714
      %5769 = vst.msk [vmem:[#allocation3 + $0x98] sm:$0xff] %vm728, %v5715
      %5770 = vst.msk [vmem:[#allocation3 + $0xa0] sm:$0xff] %vm728, %v5716
      %5771 = vst.msk [vmem:[#allocation3 + $0xa8] sm:$0xff] %vm728, %v5717
      %5772 = vst.msk [vmem:[#allocation3 + $0xb0] sm:$0xff] %vm728, %v5718
      %5773 = vst.msk [vmem:[#allocation3 + $0xb8] sm:$0xff] %vm728, %v5719
      %5774 = vst.msk [vmem:[#allocation3 + $0xc0] sm:$0xff] %vm728, %v5720
      %5775 = vst.msk [vmem:[#allocation3 + $0xc8] sm:$0xff] %vm728, %v5721
      %5776 = vst.msk [vmem:[#allocation3 + $0xd0] sm:$0xff] %vm728, %v5722
      %5777 = vst.msk [vmem:[#allocation3 + $0xd8] sm:$0xff] %vm728, %v5723
      %5778 = vst.msk [vmem:[#allocation3 + $0xe0] sm:$0xff] %vm728, %v5724
      %5779 = vst.msk [vmem:[#allocation3 + $0xe8] sm:$0xff] %vm728, %v5725
      %5780 = vst.msk [vmem:[#allocation3 + $0xf0] sm:$0xff] %vm728, %v5726
      %5781 = vst.msk [vmem:[#allocation3 + $0xf8] sm:$0xff] %vm728, %v5727
      %5782 = vst.msk [vmem:[#allocation3 + $0x100] sm:$0xff] %vm728, %v5728
      %5783 = vst.msk [vmem:[#allocation3 + $0x108] sm:$0xff] %vm728, %v5729
      %5784 = vst.msk [vmem:[#allocation3 + $0x110] sm:$0xff] %vm728, %v5730
      %5785 = vst.msk [vmem:[#allocation3 + $0x118] sm:$0xff] %vm728, %v5731
      %5786 = vst.msk [vmem:[#allocation3 + $0x120] sm:$0xff] %vm728, %v5732
      %5787 = vst.msk [vmem:[#allocation3 + $0x128] sm:$0xff] %vm728, %v5733
      %5788 = vst.msk [vmem:[#allocation3 + $0x130] sm:$0xff] %vm728, %v5734
      %5789 = vst.msk [vmem:[#allocation3 + $0x138] sm:$0xff] %vm728, %v5735
      %5790 = vst.msk [vmem:[#allocation3 + $0x140] sm:$0xff] %vm728, %v5736
      %5791 = vst.msk [vmem:[#allocation3 + $0x148] sm:$0xff] %vm728, %v5737
      %5792 = vst.msk [vmem:[#allocation3 + $0x150] sm:$0xff] %vm728, %v5738
      %5793 = vst.msk [vmem:[#allocation3 + $0x158] sm:$0xff] %vm728, %v5739
      %5794 = vst.msk [vmem:[#allocation3 + $0x160] sm:$0xff] %vm728, %v5740
      %5795 = vst.msk [vmem:[#allocation3 + $0x168] sm:$0xff] %vm728, %v5741
      %5796 = vst.msk [vmem:[#allocation3 + $0x170] sm:$0xff] %vm728, %v5742
      %5797 = vst.msk [vmem:[#allocation3 + $0x178] sm:$0xff] %vm728, %v5743
      %5798 = vst.msk [vmem:[#allocation3 + $0x180] sm:$0xff] %vm728, %v5744
      %5799 = vst.msk [vmem:[#allocation3 + $0x188] sm:$0xff] %vm728, %v5745
      %5800 = vst.msk [vmem:[#allocation3 + $0x190] sm:$0xff] %vm728, %v5746
      %5801 = vst.msk [vmem:[#allocation3 + $0x198] sm:$0xff] %vm728, %v5747
      %5802 = vst.msk [vmem:[#allocation3 + $0x1a0] sm:$0xff] %vm728, %v5748
      %5803 = vst.msk [vmem:[#allocation3 + $0x1a8] sm:$0xff] %vm728, %v5749
      %v5804 = vld [vmem:[%s4369 + $0x2] sm:$0xff]
      %v5805 = vld [vmem:[%s4369 + $0xa] sm:$0xff]
      %v5806 = vld [vmem:[%s4369 + $0x12] sm:$0xff]
      %v5807 = vld [vmem:[%s4369 + $0x22] sm:$0xff]
      %v5808 = vld [vmem:[%s4369 + $0x2a] sm:$0xff]
      %v5809 = vld [vmem:[%s4369 + $0x32] sm:$0xff]
      %v5810 = vld [vmem:[%s4369 + $0x42] sm:$0xff]
      %v5811 = vld [vmem:[%s4369 + $0x4a] sm:$0xff]
      %v5812 = vld [vmem:[%s4369 + $0x52] sm:$0xff]
      %v5813 = vld [vmem:[%s4369 + $0x62] sm:$0xff]
      %v5814 = vld [vmem:[%s4369 + $0x6a] sm:$0xff]
      %v5815 = vld [vmem:[%s4369 + $0x72] sm:$0xff]
      %v5816 = vld [vmem:[%s4369 + $0x82] sm:$0xff]
      %v5817 = vld [vmem:[%s4369 + $0x8a] sm:$0xff]
      %v5818 = vld [vmem:[%s4369 + $0x92] sm:$0xff]
      %v5819 = vld [vmem:[%s4369 + $0xa2] sm:$0xff]
      %v5820 = vld [vmem:[%s4369 + $0xaa] sm:$0xff]
      %v5821 = vld [vmem:[%s4369 + $0xb2] sm:$0xff]
      %v5822 = vld [vmem:[%s4369 + $0xc2] sm:$0xff]
      %v5823 = vld [vmem:[%s4369 + $0xca] sm:$0xff]
      %v5824 = vld [vmem:[%s4369 + $0xd2] sm:$0xff]
      %v5825 = vld [vmem:[%s4369 + $0xe2] sm:$0xff]
      %v5826 = vld [vmem:[%s4369 + $0xea] sm:$0xff]
      %v5827 = vld [vmem:[%s4369 + $0xf2] sm:$0xff]
      %v5828 = vld [vmem:[%s4369 + $0x102] sm:$0xff]
      %v5829 = vld [vmem:[%s4369 + $0x10a] sm:$0xff]
      %v5830 = vld [vmem:[%s4369 + $0x112] sm:$0xff]
      %v5831 = vld [vmem:[%s4369 + $0x122] sm:$0xff]
      %v5832 = vld [vmem:[%s4369 + $0x12a] sm:$0xff]
      %v5833 = vld [vmem:[%s4369 + $0x132] sm:$0xff]
      %v5834 = vld [vmem:[%s4369 + $0x142] sm:$0xff]
      %v5835 = vld [vmem:[%s4369 + $0x14a] sm:$0xff]
      %v5836 = vld [vmem:[%s4369 + $0x152] sm:$0xff]
      %v5837 = vld [vmem:[%s4369 + $0x162] sm:$0xff]
      %v5838 = vld [vmem:[%s4369 + $0x16a] sm:$0xff]
      %v5839 = vld [vmem:[%s4369 + $0x172] sm:$0xff]
      %v5840 = vld [vmem:[%s4369 + $0x182] sm:$0xff]
      %v5841 = vld [vmem:[%s4369 + $0x18a] sm:$0xff]
      %v5842 = vld [vmem:[%s4369 + $0x192] sm:$0xff]
      %v5843 = vld [vmem:[%s4369 + $0x1a2] sm:$0xff]
      %v5844 = vld [vmem:[%s4369 + $0x1aa] sm:$0xff]
      %v5845 = vld [vmem:[%s4369 + $0x1b2] sm:$0xff]
      %v5846 = vld [vmem:[%s4369 + $0x1c2] sm:$0xff]
      %v5847 = vld [vmem:[%s4369 + $0x1ca] sm:$0xff]
      %v5848 = vld [vmem:[%s4369 + $0x1d2] sm:$0xff]
      %v5849 = vld [vmem:[%s4369 + $0x1e2] sm:$0xff]
      %v5850 = vld [vmem:[%s4369 + $0x1ea] sm:$0xff]
      %v5851 = vld [vmem:[%s4369 + $0x1f2] sm:$0xff]
      %v5852 = vld [vmem:[%s4369 + $0x202] sm:$0xff]
      %v5853 = vld [vmem:[%s4369 + $0x20a] sm:$0xff]
      %v5854 = vld [vmem:[%s4369 + $0x212] sm:$0xff]
      %v5855 = vld [vmem:[%s4369 + $0x222] sm:$0xff]
      %v5856 = vld [vmem:[%s4369 + $0x22a] sm:$0xff]
      %v5857 = vld [vmem:[%s4369 + $0x232] sm:$0xff]
      %v5858 = vld [vmem:[%s1 + $0x20] sm:$0xf]
      %v5860 = vsel %vm226, %v5804, 0
      %v5863 = vsel %vm226, %v5805, 0
      %v5866 = vsel %vm226, %v5806, 0
      %v5869 = vsel %vm226, %v5807, 0
      %v5872 = vsel %vm226, %v5808, 0
      %v5875 = vsel %vm226, %v5809, 0
      %v5878 = vsel %vm226, %v5810, 0
      %v5881 = vsel %vm226, %v5811, 0
      %v5884 = vsel %vm226, %v5812, 0
      %v5887 = vsel %vm226, %v5813, 0
      %v5890 = vsel %vm226, %v5814, 0
      %v5893 = vsel %vm226, %v5815, 0
      %v5896 = vsel %vm226, %v5816, 0
      %v5899 = vsel %vm226, %v5817, 0
      %v5902 = vsel %vm226, %v5818, 0
      %v5905 = vsel %vm226, %v5819, 0
      %v5908 = vsel %vm226, %v5820, 0
      %v5911 = vsel %vm226, %v5821, 0
      %v5914 = vsel %vm226, %v5822, 0
      %v5917 = vsel %vm226, %v5823, 0
      %v5920 = vsel %vm226, %v5824, 0
      %v5923 = vsel %vm226, %v5825, 0
      %v5926 = vsel %vm226, %v5826, 0
      %v5929 = vsel %vm226, %v5827, 0
      %v5932 = vsel %vm226, %v5828, 0
      %v5935 = vsel %vm226, %v5829, 0
      %v5938 = vsel %vm226, %v5830, 0
      %v5941 = vsel %vm226, %v5831, 0
      %v5944 = vsel %vm226, %v5832, 0
      %v5947 = vsel %vm226, %v5833, 0
      %v5950 = vsel %vm226, %v5834, 0
      %v5953 = vsel %vm226, %v5835, 0
      %v5956 = vsel %vm226, %v5836, 0
      %v5959 = vsel %vm226, %v5837, 0
      %v5962 = vsel %vm226, %v5838, 0
      %v5965 = vsel %vm226, %v5839, 0
      %v5968 = vsel %vm226, %v5840, 0
      %v5971 = vsel %vm226, %v5841, 0
      %v5974 = vsel %vm226, %v5842, 0
      %v5977 = vsel %vm226, %v5843, 0
      %v5980 = vsel %vm226, %v5844, 0
      %v5983 = vsel %vm226, %v5845, 0
      %v5986 = vsel %vm226, %v5846, 0
      %v5989 = vsel %vm226, %v5847, 0
      %v5992 = vsel %vm226, %v5848, 0
      %v5995 = vsel %vm226, %v5849, 0
      %v5998 = vsel %vm226, %v5850, 0
      %v6001 = vsel %vm226, %v5851, 0
      %v6004 = vsel %vm226, %v5852, 0
      %v6007 = vsel %vm226, %v5853, 0
      %v6010 = vsel %vm226, %v5854, 0
      %v6013 = vsel %vm226, %v5855, 0
      %v6016 = vsel %vm226, %v5856, 0
      %v6019 = vsel %vm226, %v5857, 0
      %v6022 = vsel %vm389, %v5858, 0
      %6024 = vmatprep.subr.mxu0 0.0
      %6025 = vmatpush1.msra.mxu0 %v6022
      %6026 = vmatprep.subr.mxu0 0.0
      %6027 = vmatpush1.msra.mxu0 0.0
      %6028 = vmatprep.subr.mxu0 0.0
      %6029 = vmatpush1.msra.mxu0 0.0
      %6030 = vmatprep.subr.mxu0 0.0
      %6031 = vmatpush1.msra.mxu0 0.0
      %6032 = vmatprep.subr.mxu0 0.0
      %6033 = vmatpush1.msra.mxu0 0.0
      %6034 = vmatprep.subr.mxu0 0.0
      %6035 = vmatpush1.msra.mxu0 0.0
      %6036 = vmatprep.subr.mxu0 0.0
      %6037 = vmatpush1.msra.mxu0 0.0
      %6038 = vmatprep.subr.mxu0 0.0
      %6039 = vmatpush1.msra.mxu0 0.0
      %6040 = vmatprep.subr.mxu0 0.0
      %6041 = vmatpush1.msra.mxu0 0.0
      %6042 = vmatprep.subr.mxu0 0.0
      %6043 = vmatpush1.msra.mxu0 0.0
      %6044 = vmatprep.subr.mxu0 0.0
      %6045 = vmatpush1.msra.mxu0 0.0
      %6046 = vmatprep.subr.mxu0 0.0
      %6047 = vmatpush1.msra.mxu0 0.0
      %6048 = vmatprep.subr.mxu0 0.0
      %6049 = vmatpush1.msra.mxu0 0.0
      %6050 = vmatprep.subr.mxu0 0.0
      %6051 = vmatpush1.msra.mxu0 0.0
      %6052 = vmatprep.subr.mxu0 0.0
      %6053 = vmatpush1.msra.mxu0 0.0
      %6054 = vmatprep.subr.mxu0 0.0
      %6055 = vmatpush1.msra.mxu0 0.0
      %6056 = vmatprep.subr.mxu0 0.0
      %6057 = vmatpush1.msra.mxu0 0.0
      %6058 = vmatprep.subr.mxu0 0.0
      %6059 = vmatpush1.msra.mxu0 0.0
      %6060 = vmatprep.subr.mxu0 0.0
      %6061 = vmatpush1.msra.mxu0 0.0
      %6062 = vmatprep.subr.mxu0 0.0
      %6063 = vmatpush1.msra.mxu0 0.0
      %6064 = vmatprep.subr.mxu0 0.0
      %6065 = vmatpush1.msra.mxu0 0.0
      %6066 = vmatprep.subr.mxu0 0.0
      %6067 = vmatpush1.msra.mxu0 0.0
      %6068 = vmatprep.subr.mxu0 0.0
      %6069 = vmatpush1.msra.mxu0 0.0
      %6070 = vmatprep.subr.mxu0 0.0
      %6071 = vmatpush1.msra.mxu0 0.0
      %6072 = vmatprep.subr.mxu0 0.0
      %6073 = vmatpush1.msra.mxu0 0.0
      %6074 = vmatprep.subr.mxu0 0.0
      %6075 = vmatpush1.msra.mxu0 0.0
      %6076 = vmatprep.subr.mxu0 0.0
      %6077 = vmatpush1.msra.mxu0 0.0
      %6078 = vmatprep.subr.mxu0 0.0
      %6079 = vmatpush1.msra.mxu0 0.0
      %6080 = vmatprep.subr.mxu0 0.0
      %6081 = vmatpush1.msra.mxu0 0.0
      %6082 = vmatprep.subr.mxu0 0.0
      %6083 = vmatpush1.msra.mxu0 0.0
      %6084 = vmatprep.subr.mxu0 0.0
      %6085 = vmatpush1.msra.mxu0 0.0
      %6086 = vmatprep.subr.mxu0 0.0
      %6087 = vmatpush1.msra.mxu0 0.0
      %6088 = vmatprep.mubr.f32.mxu0 0.0
      %6089 = vmatmul.mubr.f32.gmra.mrb[0].mxu0 %v5860
      %v6090 = vpop.f32.mrb[0].mxu0
      %v6091 = vadd.f32 0.0, %v6090
      %v6092 = vpop.f32.mrb[0].mxu0
      %6093 = vmatprep.mubr.f32.mxu0 0.0
      %6094 = vmatmul.mubr.f32.gmra.mrb[0].mxu0 %v5863
      %v6095 = vpop.f32.mrb[0].mxu0
      %v6096 = vadd.f32 0.0, %v6095
      %v6097 = vpop.f32.mrb[0].mxu0
      %6098 = vmatprep.mubr.f32.mxu0 0.0
      %6099 = vmatmul.mubr.f32.gmra.mrb[0].mxu0 %v5866
      %v6100 = vpop.f32.mrb[0].mxu0
      %v6101 = vadd.f32 0.0, %v6100
      %v6102 = vpop.f32.mrb[0].mxu0
      %6103 = vmatprep.mubr.f32.mxu0 0.0
      %6104 = vmatmul.mubr.f32.gmra.mrb[0].mxu0 %v5869
      %v6105 = vpop.f32.mrb[0].mxu0
      %v6106 = vadd.f32 0.0, %v6105
      %v6107 = vpop.f32.mrb[0].mxu0
      %6108 = vmatprep.mubr.f32.mxu0 0.0
      %6109 = vmatmul.mubr.f32.gmra.mrb[0].mxu0 %v5872
      %v6110 = vpop.f32.mrb[0].mxu0
      %v6111 = vadd.f32 0.0, %v6110
      %v6112 = vpop.f32.mrb[0].mxu0
      %6113 = vmatprep.mubr.f32.mxu0 0.0
      %6114 = vmatmul.mubr.f32.gmra.mrb[0].mxu0 %v5875
      %v6115 = vpop.f32.mrb[0].mxu0
      %v6116 = vadd.f32 0.0, %v6115
      %v6117 = vpop.f32.mrb[0].mxu0
      %6118 = vmatprep.mubr.f32.mxu0 0.0
      %6119 = vmatmul.mubr.f32.gmra.mrb[0].mxu0 %v5878
      %v6120 = vpop.f32.mrb[0].mxu0
      %v6121 = vadd.f32 0.0, %v6120
      %v6122 = vpop.f32.mrb[0].mxu0
      %6123 = vmatprep.mubr.f32.mxu0 0.0
      %6124 = vmatmul.mubr.f32.gmra.mrb[0].mxu0 %v5881
      %v6125 = vpop.f32.mrb[0].mxu0
      %v6126 = vadd.f32 0.0, %v6125
      %v6127 = vpop.f32.mrb[0].mxu0
      %6128 = vmatprep.mubr.f32.mxu0 0.0
      %6129 = vmatmul.mubr.f32.gmra.mrb[0].mxu0 %v5884
      %v6130 = vpop.f32.mrb[0].mxu0
      %v6131 = vadd.f32 0.0, %v6130
      %v6132 = vpop.f32.mrb[0].mxu0
      %6133 = vmatprep.mubr.f32.mxu0 0.0
      %6134 = vmatmul.mubr.f32.gmra.mrb[0].mxu0 %v5887
      %v6135 = vpop.f32.mrb[0].mxu0
      %v6136 = vadd.f32 0.0, %v6135
      %v6137 = vpop.f32.mrb[0].mxu0
      %6138 = vmatprep.mubr.f32.mxu0 0.0
      %6139 = vmatmul.mubr.f32.gmra.mrb[0].mxu0 %v5890
      %v6140 = vpop.f32.mrb[0].mxu0
      %v6141 = vadd.f32 0.0, %v6140
      %v6142 = vpop.f32.mrb[0].mxu0
      %6143 = vmatprep.mubr.f32.mxu0 0.0
      %6144 = vmatmul.mubr.f32.gmra.mrb[0].mxu0 %v5893
      %v6145 = vpop.f32.mrb[0].mxu0
      %v6146 = vadd.f32 0.0, %v6145
      %v6147 = vpop.f32.mrb[0].mxu0
      %6148 = vmatprep.mubr.f32.mxu0 0.0
      %6149 = vmatmul.mubr.f32.gmra.mrb[0].mxu0 %v5896
      %v6150 = vpop.f32.mrb[0].mxu0
      %v6151 = vadd.f32 0.0, %v6150
      %v6152 = vpop.f32.mrb[0].mxu0
      %6153 = vmatprep.mubr.f32.mxu0 0.0
      %6154 = vmatmul.mubr.f32.gmra.mrb[0].mxu0 %v5899
      %v6155 = vpop.f32.mrb[0].mxu0
      %v6156 = vadd.f32 0.0, %v6155
      %v6157 = vpop.f32.mrb[0].mxu0
      %6158 = vmatprep.mubr.f32.mxu0 0.0
      %6159 = vmatmul.mubr.f32.gmra.mrb[0].mxu0 %v5902
      %v6160 = vpop.f32.mrb[0].mxu0
      %v6161 = vadd.f32 0.0, %v6160
      %v6162 = vpop.f32.mrb[0].mxu0
      %6163 = vmatprep.mubr.f32.mxu0 0.0
      %6164 = vmatmul.mubr.f32.gmra.mrb[0].mxu0 %v5905
      %v6165 = vpop.f32.mrb[0].mxu0
      %v6166 = vadd.f32 0.0, %v6165
      %v6167 = vpop.f32.mrb[0].mxu0
      %6168 = vmatprep.mubr.f32.mxu0 0.0
      %6169 = vmatmul.mubr.f32.gmra.mrb[0].mxu0 %v5908
      %v6170 = vpop.f32.mrb[0].mxu0
      %v6171 = vadd.f32 0.0, %v6170
      %v6172 = vpop.f32.mrb[0].mxu0
      %6173 = vmatprep.mubr.f32.mxu0 0.0
      %6174 = vmatmul.mubr.f32.gmra.mrb[0].mxu0 %v5911
      %v6175 = vpop.f32.mrb[0].mxu0
      %v6176 = vadd.f32 0.0, %v6175
      %v6177 = vpop.f32.mrb[0].mxu0
      %6178 = vmatprep.mubr.f32.mxu0 0.0
      %6179 = vmatmul.mubr.f32.gmra.mrb[0].mxu0 %v5914
      %v6180 = vpop.f32.mrb[0].mxu0
      %v6181 = vadd.f32 0.0, %v6180
      %v6182 = vpop.f32.mrb[0].mxu0
      %6183 = vmatprep.mubr.f32.mxu0 0.0
      %6184 = vmatmul.mubr.f32.gmra.mrb[0].mxu0 %v5917
      %v6185 = vpop.f32.mrb[0].mxu0
      %v6186 = vadd.f32 0.0, %v6185
      %v6187 = vpop.f32.mrb[0].mxu0
      %6188 = vmatprep.mubr.f32.mxu0 0.0
      %6189 = vmatmul.mubr.f32.gmra.mrb[0].mxu0 %v5920
      %v6190 = vpop.f32.mrb[0].mxu0
      %v6191 = vadd.f32 0.0, %v6190
      %v6192 = vpop.f32.mrb[0].mxu0
      %6193 = vmatprep.mubr.f32.mxu0 0.0
      %6194 = vmatmul.mubr.f32.gmra.mrb[0].mxu0 %v5923
      %v6195 = vpop.f32.mrb[0].mxu0
      %v6196 = vadd.f32 0.0, %v6195
      %v6197 = vpop.f32.mrb[0].mxu0
      %6198 = vmatprep.mubr.f32.mxu0 0.0
      %6199 = vmatmul.mubr.f32.gmra.mrb[0].mxu0 %v5926
      %v6200 = vpop.f32.mrb[0].mxu0
      %v6201 = vadd.f32 0.0, %v6200
      %v6202 = vpop.f32.mrb[0].mxu0
      %6203 = vmatprep.mubr.f32.mxu0 0.0
      %6204 = vmatmul.mubr.f32.gmra.mrb[0].mxu0 %v5929
      %v6205 = vpop.f32.mrb[0].mxu0
      %v6206 = vadd.f32 0.0, %v6205
      %v6207 = vpop.f32.mrb[0].mxu0
      %6208 = vmatprep.mubr.f32.mxu0 0.0
      %6209 = vmatmul.mubr.f32.gmra.mrb[0].mxu0 %v5932
      %v6210 = vpop.f32.mrb[0].mxu0
      %v6211 = vadd.f32 0.0, %v6210
      %v6212 = vpop.f32.mrb[0].mxu0
      %6213 = vmatprep.mubr.f32.mxu0 0.0
      %6214 = vmatmul.mubr.f32.gmra.mrb[0].mxu0 %v5935
      %v6215 = vpop.f32.mrb[0].mxu0
      %v6216 = vadd.f32 0.0, %v6215
      %v6217 = vpop.f32.mrb[0].mxu0
      %6218 = vmatprep.mubr.f32.mxu0 0.0
      %6219 = vmatmul.mubr.f32.gmra.mrb[0].mxu0 %v5938
      %v6220 = vpop.f32.mrb[0].mxu0
      %v6221 = vadd.f32 0.0, %v6220
      %v6222 = vpop.f32.mrb[0].mxu0
      %6223 = vmatprep.mubr.f32.mxu0 0.0
      %6224 = vmatmul.mubr.f32.gmra.mrb[0].mxu0 %v5941
      %v6225 = vpop.f32.mrb[0].mxu0
      %v6226 = vadd.f32 0.0, %v6225
      %v6227 = vpop.f32.mrb[0].mxu0
      %6228 = vmatprep.mubr.f32.mxu0 0.0
      %6229 = vmatmul.mubr.f32.gmra.mrb[0].mxu0 %v5944
      %v6230 = vpop.f32.mrb[0].mxu0
      %v6231 = vadd.f32 0.0, %v6230
      %v6232 = vpop.f32.mrb[0].mxu0
      %6233 = vmatprep.mubr.f32.mxu0 0.0
      %6234 = vmatmul.mubr.f32.gmra.mrb[0].mxu0 %v5947
      %v6235 = vpop.f32.mrb[0].mxu0
      %v6236 = vadd.f32 0.0, %v6235
      %v6237 = vpop.f32.mrb[0].mxu0
      %6238 = vmatprep.mubr.f32.mxu0 0.0
      %6239 = vmatmul.mubr.f32.gmra.mrb[0].mxu0 %v5950
      %v6240 = vpop.f32.mrb[0].mxu0
      %v6241 = vadd.f32 0.0, %v6240
      %v6242 = vpop.f32.mrb[0].mxu0
      %6243 = vmatprep.mubr.f32.mxu0 0.0
      %6244 = vmatmul.mubr.f32.gmra.mrb[0].mxu0 %v5953
      %v6245 = vpop.f32.mrb[0].mxu0
      %v6246 = vadd.f32 0.0, %v6245
      %v6247 = vpop.f32.mrb[0].mxu0
      %6248 = vmatprep.mubr.f32.mxu0 0.0
      %6249 = vmatmul.mubr.f32.gmra.mrb[0].mxu0 %v5956
      %v6250 = vpop.f32.mrb[0].mxu0
      %v6251 = vadd.f32 0.0, %v6250
      %v6252 = vpop.f32.mrb[0].mxu0
      %6253 = vmatprep.mubr.f32.mxu0 0.0
      %6254 = vmatmul.mubr.f32.gmra.mrb[0].mxu0 %v5959
      %v6255 = vpop.f32.mrb[0].mxu0
      %v6256 = vadd.f32 0.0, %v6255
      %v6257 = vpop.f32.mrb[0].mxu0
      %6258 = vmatprep.mubr.f32.mxu0 0.0
      %6259 = vmatmul.mubr.f32.gmra.mrb[0].mxu0 %v5962
      %v6260 = vpop.f32.mrb[0].mxu0
      %v6261 = vadd.f32 0.0, %v6260
      %v6262 = vpop.f32.mrb[0].mxu0
      %6263 = vmatprep.mubr.f32.mxu0 0.0
      %6264 = vmatmul.mubr.f32.gmra.mrb[0].mxu0 %v5965
      %v6265 = vpop.f32.mrb[0].mxu0
      %v6266 = vadd.f32 0.0, %v6265
      %v6267 = vpop.f32.mrb[0].mxu0
      %6268 = vmatprep.mubr.f32.mxu0 0.0
      %6269 = vmatmul.mubr.f32.gmra.mrb[0].mxu0 %v5968
      %v6270 = vpop.f32.mrb[0].mxu0
      %v6271 = vadd.f32 0.0, %v6270
      %v6272 = vpop.f32.mrb[0].mxu0
      %6273 = vmatprep.mubr.f32.mxu0 0.0
      %6274 = vmatmul.mubr.f32.gmra.mrb[0].mxu0 %v5971
      %v6275 = vpop.f32.mrb[0].mxu0
      %v6276 = vadd.f32 0.0, %v6275
      %v6277 = vpop.f32.mrb[0].mxu0
      %6278 = vmatprep.mubr.f32.mxu0 0.0
      %6279 = vmatmul.mubr.f32.gmra.mrb[0].mxu0 %v5974
      %v6280 = vpop.f32.mrb[0].mxu0
      %v6281 = vadd.f32 0.0, %v6280
      %v6282 = vpop.f32.mrb[0].mxu0
      %6283 = vmatprep.mubr.f32.mxu0 0.0
      %6284 = vmatmul.mubr.f32.gmra.mrb[0].mxu0 %v5977
      %v6285 = vpop.f32.mrb[0].mxu0
      %v6286 = vadd.f32 0.0, %v6285
      %v6287 = vpop.f32.mrb[0].mxu0
      %6288 = vmatprep.mubr.f32.mxu0 0.0
      %6289 = vmatmul.mubr.f32.gmra.mrb[0].mxu0 %v5980
      %v6290 = vpop.f32.mrb[0].mxu0
      %v6291 = vadd.f32 0.0, %v6290
      %v6292 = vpop.f32.mrb[0].mxu0
      %6293 = vmatprep.mubr.f32.mxu0 0.0
      %6294 = vmatmul.mubr.f32.gmra.mrb[0].mxu0 %v5983
      %v6295 = vpop.f32.mrb[0].mxu0
      %v6296 = vadd.f32 0.0, %v6295
      %v6297 = vpop.f32.mrb[0].mxu0
      %6298 = vmatprep.mubr.f32.mxu0 0.0
      %6299 = vmatmul.mubr.f32.gmra.mrb[0].mxu0 %v5986
      %v6300 = vpop.f32.mrb[0].mxu0
      %v6301 = vadd.f32 0.0, %v6300
      %v6302 = vpop.f32.mrb[0].mxu0
      %6303 = vmatprep.mubr.f32.mxu0 0.0
      %6304 = vmatmul.mubr.f32.gmra.mrb[0].mxu0 %v5989
      %v6305 = vpop.f32.mrb[0].mxu0
      %v6306 = vadd.f32 0.0, %v6305
      %v6307 = vpop.f32.mrb[0].mxu0
      %6308 = vmatprep.mubr.f32.mxu0 0.0
      %6309 = vmatmul.mubr.f32.gmra.mrb[0].mxu0 %v5992
      %v6310 = vpop.f32.mrb[0].mxu0
      %v6311 = vadd.f32 0.0, %v6310
      %v6312 = vpop.f32.mrb[0].mxu0
      %6313 = vmatprep.mubr.f32.mxu0 0.0
      %6314 = vmatmul.mubr.f32.gmra.mrb[0].mxu0 %v5995
      %v6315 = vpop.f32.mrb[0].mxu0
      %v6316 = vadd.f32 0.0, %v6315
      %v6317 = vpop.f32.mrb[0].mxu0
      %6318 = vmatprep.mubr.f32.mxu0 0.0
      %6319 = vmatmul.mubr.f32.gmra.mrb[0].mxu0 %v5998
      %v6320 = vpop.f32.mrb[0].mxu0
      %v6321 = vadd.f32 0.0, %v6320
      %v6322 = vpop.f32.mrb[0].mxu0
      %6323 = vmatprep.mubr.f32.mxu0 0.0
      %6324 = vmatmul.mubr.f32.gmra.mrb[0].mxu0 %v6001
      %v6325 = vpop.f32.mrb[0].mxu0
      %v6326 = vadd.f32 0.0, %v6325
      %v6327 = vpop.f32.mrb[0].mxu0
      %6328 = vmatprep.mubr.f32.mxu0 0.0
      %6329 = vmatmul.mubr.f32.gmra.mrb[0].mxu0 %v6004
      %v6330 = vpop.f32.mrb[0].mxu0
      %v6331 = vadd.f32 0.0, %v6330
      %v6332 = vpop.f32.mrb[0].mxu0
      %6333 = vmatprep.mubr.f32.mxu0 0.0
      %6334 = vmatmul.mubr.f32.gmra.mrb[0].mxu0 %v6007
      %v6335 = vpop.f32.mrb[0].mxu0
      %v6336 = vadd.f32 0.0, %v6335
      %v6337 = vpop.f32.mrb[0].mxu0
      %6338 = vmatprep.mubr.f32.mxu0 0.0
      %6339 = vmatmul.mubr.f32.gmra.mrb[0].mxu0 %v6010
      %v6340 = vpop.f32.mrb[0].mxu0
      %v6341 = vadd.f32 0.0, %v6340
      %v6342 = vpop.f32.mrb[0].mxu0
      %6343 = vmatprep.mubr.f32.mxu0 0.0
      %6344 = vmatmul.mubr.f32.gmra.mrb[0].mxu0 %v6013
      %v6345 = vpop.f32.mrb[0].mxu0
      %v6346 = vadd.f32 0.0, %v6345
      %v6347 = vpop.f32.mrb[0].mxu0
      %6348 = vmatprep.mubr.f32.mxu0 0.0
      %6349 = vmatmul.mubr.f32.gmra.mrb[0].mxu0 %v6016
      %v6350 = vpop.f32.mrb[0].mxu0
      %v6351 = vadd.f32 0.0, %v6350
      %v6352 = vpop.f32.mrb[0].mxu0
      %6353 = vmatprep.mubr.f32.mxu0 0.0
      %6354 = vmatmul.mubr.f32.gmra.mrb[0].mxu0 %v6019
      %v6355 = vpop.f32.mrb[0].mxu0
      %v6356 = vadd.f32 0.0, %v6355
      %v6357 = vpop.f32.mrb[0].mxu0
      %6358 = vdwg.mxu0
      %v6359 = vld [vmem:[#allocation3] sm:$0xff]
      %v6360 = vld [vmem:[#allocation3 + $0x8] sm:$0xff]
      %v6361 = vld [vmem:[#allocation3 + $0x10] sm:$0xff]
      %v6362 = vld [vmem:[#allocation3 + $0x18] sm:$0xff]
      %v6363 = vld [vmem:[#allocation3 + $0x20] sm:$0xff]
      %v6364 = vld [vmem:[#allocation3 + $0x28] sm:$0xff]
      %v6365 = vld [vmem:[#allocation3 + $0x30] sm:$0xff]
      %v6366 = vld [vmem:[#allocation3 + $0x38] sm:$0xff]
      %v6367 = vld [vmem:[#allocation3 + $0x40] sm:$0xff]
      %v6368 = vld [vmem:[#allocation3 + $0x48] sm:$0xff]
      %v6369 = vld [vmem:[#allocation3 + $0x50] sm:$0xff]
      %v6370 = vld [vmem:[#allocation3 + $0x58] sm:$0xff]
      %v6371 = vld [vmem:[#allocation3 + $0x60] sm:$0xff]
      %v6372 = vld [vmem:[#allocation3 + $0x68] sm:$0xff]
      %v6373 = vld [vmem:[#allocation3 + $0x70] sm:$0xff]
      %v6374 = vld [vmem:[#allocation3 + $0x78] sm:$0xff]
      %v6375 = vld [vmem:[#allocation3 + $0x80] sm:$0xff]
      %v6376 = vld [vmem:[#allocation3 + $0x88] sm:$0xff]
      %v6377 = vld [vmem:[#allocation3 + $0x90] sm:$0xff]
      %v6378 = vld [vmem:[#allocation3 + $0x98] sm:$0xff]
      %v6379 = vld [vmem:[#allocation3 + $0xa0] sm:$0xff]
      %v6380 = vld [vmem:[#allocation3 + $0xa8] sm:$0xff]
      %v6381 = vld [vmem:[#allocation3 + $0xb0] sm:$0xff]
      %v6382 = vld [vmem:[#allocation3 + $0xb8] sm:$0xff]
      %v6383 = vld [vmem:[#allocation3 + $0xc0] sm:$0xff]
      %v6384 = vld [vmem:[#allocation3 + $0xc8] sm:$0xff]
      %v6385 = vld [vmem:[#allocation3 + $0xd0] sm:$0xff]
      %v6386 = vld [vmem:[#allocation3 + $0xd8] sm:$0xff]
      %v6387 = vld [vmem:[#allocation3 + $0xe0] sm:$0xff]
      %v6388 = vld [vmem:[#allocation3 + $0xe8] sm:$0xff]
      %v6389 = vld [vmem:[#allocation3 + $0xf0] sm:$0xff]
      %v6390 = vld [vmem:[#allocation3 + $0xf8] sm:$0xff]
      %v6391 = vld [vmem:[#allocation3 + $0x100] sm:$0xff]
      %v6392 = vld [vmem:[#allocation3 + $0x108] sm:$0xff]
      %v6393 = vld [vmem:[#allocation3 + $0x110] sm:$0xff]
      %v6394 = vld [vmem:[#allocation3 + $0x118] sm:$0xff]
      %v6395 = vld [vmem:[#allocation3 + $0x120] sm:$0xff]
      %v6396 = vld [vmem:[#allocation3 + $0x128] sm:$0xff]
      %v6397 = vld [vmem:[#allocation3 + $0x130] sm:$0xff]
      %v6398 = vld [vmem:[#allocation3 + $0x138] sm:$0xff]
      %v6399 = vld [vmem:[#allocation3 + $0x140] sm:$0xff]
      %v6400 = vld [vmem:[#allocation3 + $0x148] sm:$0xff]
      %v6401 = vld [vmem:[#allocation3 + $0x150] sm:$0xff]
      %v6402 = vld [vmem:[#allocation3 + $0x158] sm:$0xff]
      %v6403 = vld [vmem:[#allocation3 + $0x160] sm:$0xff]
      %v6404 = vld [vmem:[#allocation3 + $0x168] sm:$0xff]
      %v6405 = vld [vmem:[#allocation3 + $0x170] sm:$0xff]
      %v6406 = vld [vmem:[#allocation3 + $0x178] sm:$0xff]
      %v6407 = vld [vmem:[#allocation3 + $0x180] sm:$0xff]
      %v6408 = vld [vmem:[#allocation3 + $0x188] sm:$0xff]
      %v6409 = vld [vmem:[#allocation3 + $0x190] sm:$0xff]
      %v6410 = vld [vmem:[#allocation3 + $0x198] sm:$0xff]
      %v6411 = vld [vmem:[#allocation3 + $0x1a0] sm:$0xff]
      %v6412 = vld [vmem:[#allocation3 + $0x1a8] sm:$0xff]
      %v6413 = vadd.f32 %v6359, %v6091
      %v6414 = vadd.f32 %v6360, %v6096
      %v6415 = vadd.f32 %v6361, %v6101
      %v6416 = vadd.f32 %v6362, %v6106
      %v6417 = vadd.f32 %v6363, %v6111
      %v6418 = vadd.f32 %v6364, %v6116
      %v6419 = vadd.f32 %v6365, %v6121
      %v6420 = vadd.f32 %v6366, %v6126
      %v6421 = vadd.f32 %v6367, %v6131
      %v6422 = vadd.f32 %v6368, %v6136
      %v6423 = vadd.f32 %v6369, %v6141
      %v6424 = vadd.f32 %v6370, %v6146
      %v6425 = vadd.f32 %v6371, %v6151
      %v6426 = vadd.f32 %v6372, %v6156
      %v6427 = vadd.f32 %v6373, %v6161
      %v6428 = vadd.f32 %v6374, %v6166
      %v6429 = vadd.f32 %v6375, %v6171
      %v6430 = vadd.f32 %v6376, %v6176
      %v6431 = vadd.f32 %v6377, %v6181
      %v6432 = vadd.f32 %v6378, %v6186
      %v6433 = vadd.f32 %v6379, %v6191
      %v6434 = vadd.f32 %v6380, %v6196
      %v6435 = vadd.f32 %v6381, %v6201
      %v6436 = vadd.f32 %v6382, %v6206
      %v6437 = vadd.f32 %v6383, %v6211
      %v6438 = vadd.f32 %v6384, %v6216
      %v6439 = vadd.f32 %v6385, %v6221
      %v6440 = vadd.f32 %v6386, %v6226
      %v6441 = vadd.f32 %v6387, %v6231
      %v6442 = vadd.f32 %v6388, %v6236
      %v6443 = vadd.f32 %v6389, %v6241
      %v6444 = vadd.f32 %v6390, %v6246
      %v6445 = vadd.f32 %v6391, %v6251
      %v6446 = vadd.f32 %v6392, %v6256
      %v6447 = vadd.f32 %v6393, %v6261
      %v6448 = vadd.f32 %v6394, %v6266
      %v6449 = vadd.f32 %v6395, %v6271
      %v6450 = vadd.f32 %v6396, %v6276
      %v6451 = vadd.f32 %v6397, %v6281
      %v6452 = vadd.f32 %v6398, %v6286
      %v6453 = vadd.f32 %v6399, %v6291
      %v6454 = vadd.f32 %v6400, %v6296
      %v6455 = vadd.f32 %v6401, %v6301
      %v6456 = vadd.f32 %v6402, %v6306
      %v6457 = vadd.f32 %v6403, %v6311
      %v6458 = vadd.f32 %v6404, %v6316
      %v6459 = vadd.f32 %v6405, %v6321
      %v6460 = vadd.f32 %v6406, %v6326
      %v6461 = vadd.f32 %v6407, %v6331
      %v6462 = vadd.f32 %v6408, %v6336
      %v6463 = vadd.f32 %v6409, %v6341
      %v6464 = vadd.f32 %v6410, %v6346
      %v6465 = vadd.f32 %v6411, %v6351
      %v6466 = vadd.f32 %v6412, %v6356
      %6467 = vst.msk [vmem:[#allocation3] sm:$0xff] %vm728, %v6413
      %6468 = vst.msk [vmem:[#allocation3 + $0x8] sm:$0xff] %vm728, %v6414
      %6469 = vst.msk [vmem:[#allocation3 + $0x10] sm:$0xff] %vm728, %v6415
      %6470 = vst.msk [vmem:[#allocation3 + $0x18] sm:$0xff] %vm728, %v6416
      %6471 = vst.msk [vmem:[#allocation3 + $0x20] sm:$0xff] %vm728, %v6417
      %6472 = vst.msk [vmem:[#allocation3 + $0x28] sm:$0xff] %vm728, %v6418
      %6473 = vst.msk [vmem:[#allocation3 + $0x30] sm:$0xff] %vm728, %v6419
      %6474 = vst.msk [vmem:[#allocation3 + $0x38] sm:$0xff] %vm728, %v6420
      %6475 = vst.msk [vmem:[#allocation3 + $0x40] sm:$0xff] %vm728, %v6421
      %6476 = vst.msk [vmem:[#allocation3 + $0x48] sm:$0xff] %vm728, %v6422
      %6477 = vst.msk [vmem:[#allocation3 + $0x50] sm:$0xff] %vm728, %v6423
      %6478 = vst.msk [vmem:[#allocation3 + $0x58] sm:$0xff] %vm728, %v6424
      %6479 = vst.msk [vmem:[#allocation3 + $0x60] sm:$0xff] %vm728, %v6425
      %6480 = vst.msk [vmem:[#allocation3 + $0x68] sm:$0xff] %vm728, %v6426
      %6481 = vst.msk [vmem:[#allocation3 + $0x70] sm:$0xff] %vm728, %v6427
      %6482 = vst.msk [vmem:[#allocation3 + $0x78] sm:$0xff] %vm728, %v6428
      %6483 = vst.msk [vmem:[#allocation3 + $0x80] sm:$0xff] %vm728, %v6429
      %6484 = vst.msk [vmem:[#allocation3 + $0x88] sm:$0xff] %vm728, %v6430
      %6485 = vst.msk [vmem:[#allocation3 + $0x90] sm:$0xff] %vm728, %v6431
      %6486 = vst.msk [vmem:[#allocation3 + $0x98] sm:$0xff] %vm728, %v6432
      %6487 = vst.msk [vmem:[#allocation3 + $0xa0] sm:$0xff] %vm728, %v6433
      %6488 = vst.msk [vmem:[#allocation3 + $0xa8] sm:$0xff] %vm728, %v6434
      %6489 = vst.msk [vmem:[#allocation3 + $0xb0] sm:$0xff] %vm728, %v6435
      %6490 = vst.msk [vmem:[#allocation3 + $0xb8] sm:$0xff] %vm728, %v6436
      %6491 = vst.msk [vmem:[#allocation3 + $0xc0] sm:$0xff] %vm728, %v6437
      %6492 = vst.msk [vmem:[#allocation3 + $0xc8] sm:$0xff] %vm728, %v6438
      %6493 = vst.msk [vmem:[#allocation3 + $0xd0] sm:$0xff] %vm728, %v6439
      %6494 = vst.msk [vmem:[#allocation3 + $0xd8] sm:$0xff] %vm728, %v6440
      %6495 = vst.msk [vmem:[#allocation3 + $0xe0] sm:$0xff] %vm728, %v6441
      %6496 = vst.msk [vmem:[#allocation3 + $0xe8] sm:$0xff] %vm728, %v6442
      %6497 = vst.msk [vmem:[#allocation3 + $0xf0] sm:$0xff] %vm728, %v6443
      %6498 = vst.msk [vmem:[#allocation3 + $0xf8] sm:$0xff] %vm728, %v6444
      %6499 = vst.msk [vmem:[#allocation3 + $0x100] sm:$0xff] %vm728, %v6445
      %6500 = vst.msk [vmem:[#allocation3 + $0x108] sm:$0xff] %vm728, %v6446
      %6501 = vst.msk [vmem:[#allocation3 + $0x110] sm:$0xff] %vm728, %v6447
      %6502 = vst.msk [vmem:[#allocation3 + $0x118] sm:$0xff] %vm728, %v6448
      %6503 = vst.msk [vmem:[#allocation3 + $0x120] sm:$0xff] %vm728, %v6449
      %6504 = vst.msk [vmem:[#allocation3 + $0x128] sm:$0xff] %vm728, %v6450
      %6505 = vst.msk [vmem:[#allocation3 + $0x130] sm:$0xff] %vm728, %v6451
      %6506 = vst.msk [vmem:[#allocation3 + $0x138] sm:$0xff] %vm728, %v6452
      %6507 = vst.msk [vmem:[#allocation3 + $0x140] sm:$0xff] %vm728, %v6453
      %6508 = vst.msk [vmem:[#allocation3 + $0x148] sm:$0xff] %vm728, %v6454
      %6509 = vst.msk [vmem:[#allocation3 + $0x150] sm:$0xff] %vm728, %v6455
      %6510 = vst.msk [vmem:[#allocation3 + $0x158] sm:$0xff] %vm728, %v6456
      %6511 = vst.msk [vmem:[#allocation3 + $0x160] sm:$0xff] %vm728, %v6457
      %6512 = vst.msk [vmem:[#allocation3 + $0x168] sm:$0xff] %vm728, %v6458
      %6513 = vst.msk [vmem:[#allocation3 + $0x170] sm:$0xff] %vm728, %v6459
      %6514 = vst.msk [vmem:[#allocation3 + $0x178] sm:$0xff] %vm728, %v6460
      %6515 = vst.msk [vmem:[#allocation3 + $0x180] sm:$0xff] %vm728, %v6461
      %6516 = vst.msk [vmem:[#allocation3 + $0x188] sm:$0xff] %vm728, %v6462
      %6517 = vst.msk [vmem:[#allocation3 + $0x190] sm:$0xff] %vm728, %v6463
      %6518 = vst.msk [vmem:[#allocation3 + $0x198] sm:$0xff] %vm728, %v6464
      %6519 = vst.msk [vmem:[#allocation3 + $0x1a0] sm:$0xff] %vm728, %v6465
      %6520 = vst.msk [vmem:[#allocation3 + $0x1a8] sm:$0xff] %vm728, %v6466
      %v6521 = vld [vmem:[#allocation3] sm:$0xff]
      %v6522 = vld [vmem:[#allocation3 + $0x8] sm:$0xff]
      %v6523 = vld [vmem:[#allocation3 + $0x10] sm:$0xff]
      %v6524 = vld [vmem:[#allocation3 + $0x18] sm:$0xff]
      %v6525 = vld [vmem:[#allocation3 + $0x20] sm:$0xff]
      %v6526 = vld [vmem:[#allocation3 + $0x28] sm:$0xff]
      %v6527 = vld [vmem:[#allocation3 + $0x30] sm:$0xff]
      %v6528 = vld [vmem:[#allocation3 + $0x38] sm:$0xff]
      %v6529 = vld [vmem:[#allocation3 + $0x40] sm:$0xff]
      %v6530 = vld [vmem:[#allocation3 + $0x48] sm:$0xff]
      %v6531 = vld [vmem:[#allocation3 + $0x50] sm:$0xff]
      %v6532 = vld [vmem:[#allocation3 + $0x58] sm:$0xff]
      %v6533 = vld [vmem:[#allocation3 + $0x60] sm:$0xff]
      %v6534 = vld [vmem:[#allocation3 + $0x68] sm:$0xff]
      %v6535 = vld [vmem:[#allocation3 + $0x70] sm:$0xff]
      %v6536 = vld [vmem:[#allocation3 + $0x78] sm:$0xff]
      %v6537 = vld [vmem:[#allocation3 + $0x80] sm:$0xff]
      %v6538 = vld [vmem:[#allocation3 + $0x88] sm:$0xff]
      %v6539 = vld [vmem:[#allocation3 + $0x90] sm:$0xff]
      %v6540 = vld [vmem:[#allocation3 + $0x98] sm:$0xff]
      %v6541 = vld [vmem:[#allocation3 + $0xa0] sm:$0xff]
      %v6542 = vld [vmem:[#allocation3 + $0xa8] sm:$0xff]
      %v6543 = vld [vmem:[#allocation3 + $0xb0] sm:$0xff]
      %v6544 = vld [vmem:[#allocation3 + $0xb8] sm:$0xff]
      %v6545 = vld [vmem:[#allocation3 + $0xc0] sm:$0xff]
      %v6546 = vld [vmem:[#allocation3 + $0xc8] sm:$0xff]
      %v6547 = vld [vmem:[#allocation3 + $0xd0] sm:$0xff]
      %v6548 = vld [vmem:[#allocation3 + $0xd8] sm:$0xff]
      %v6549 = vld [vmem:[#allocation3 + $0xe0] sm:$0xff]
      %v6550 = vld [vmem:[#allocation3 + $0xe8] sm:$0xff]
      %v6551 = vld [vmem:[#allocation3 + $0xf0] sm:$0xff]
      %v6552 = vld [vmem:[#allocation3 + $0xf8] sm:$0xff]
      %v6553 = vld [vmem:[#allocation3 + $0x100] sm:$0xff]
      %v6554 = vld [vmem:[#allocation3 + $0x108] sm:$0xff]
      %v6555 = vld [vmem:[#allocation3 + $0x110] sm:$0xff]
      %v6556 = vld [vmem:[#allocation3 + $0x118] sm:$0xff]
      %v6557 = vld [vmem:[#allocation3 + $0x120] sm:$0xff]
      %v6558 = vld [vmem:[#allocation3 + $0x128] sm:$0xff]
      %v6559 = vld [vmem:[#allocation3 + $0x130] sm:$0xff]
      %v6560 = vld [vmem:[#allocation3 + $0x138] sm:$0xff]
      %v6561 = vld [vmem:[#allocation3 + $0x140] sm:$0xff]
      %v6562 = vld [vmem:[#allocation3 + $0x148] sm:$0xff]
      %v6563 = vld [vmem:[#allocation3 + $0x150] sm:$0xff]
      %v6564 = vld [vmem:[#allocation3 + $0x158] sm:$0xff]
      %v6565 = vld [vmem:[#allocation3 + $0x160] sm:$0xff]
      %v6566 = vld [vmem:[#allocation3 + $0x168] sm:$0xff]
      %v6567 = vld [vmem:[#allocation3 + $0x170] sm:$0xff]
      %v6568 = vld [vmem:[#allocation3 + $0x178] sm:$0xff]
      %v6569 = vld [vmem:[#allocation3 + $0x180] sm:$0xff]
      %v6570 = vld [vmem:[#allocation3 + $0x188] sm:$0xff]
      %v6571 = vld [vmem:[#allocation3 + $0x190] sm:$0xff]
      %v6572 = vld [vmem:[#allocation3 + $0x198] sm:$0xff]
      %v6573 = vld [vmem:[#allocation3 + $0x1a0] sm:$0xff]
      %v6574 = vld [vmem:[#allocation3 + $0x1a8] sm:$0xff]
      %v6575 = vmax.f32 %v6521, 0.0
      %v6576 = vmax.f32 %v6522, 0.0
      %v6577 = vmax.f32 %v6523, 0.0
      %v6578 = vmax.f32 %v6524, 0.0
      %v6579 = vmax.f32 %v6525, 0.0
      %v6580 = vmax.f32 %v6526, 0.0
      %v6581 = vmax.f32 %v6527, 0.0
      %v6582 = vmax.f32 %v6528, 0.0
      %v6583 = vmax.f32 %v6529, 0.0
      %v6584 = vmax.f32 %v6530, 0.0
      %v6585 = vmax.f32 %v6531, 0.0
      %v6586 = vmax.f32 %v6532, 0.0
      %v6587 = vmax.f32 %v6533, 0.0
      %v6588 = vmax.f32 %v6534, 0.0
      %v6589 = vmax.f32 %v6535, 0.0
      %v6590 = vmax.f32 %v6536, 0.0
      %v6591 = vmax.f32 %v6537, 0.0
      %v6592 = vmax.f32 %v6538, 0.0
      %v6593 = vmax.f32 %v6539, 0.0
      %v6594 = vmax.f32 %v6540, 0.0
      %v6595 = vmax.f32 %v6541, 0.0
      %v6596 = vmax.f32 %v6542, 0.0
      %v6597 = vmax.f32 %v6543, 0.0
      %v6598 = vmax.f32 %v6544, 0.0
      %v6599 = vmax.f32 %v6545, 0.0
      %v6600 = vmax.f32 %v6546, 0.0
      %v6601 = vmax.f32 %v6547, 0.0
      %v6602 = vmax.f32 %v6548, 0.0
      %v6603 = vmax.f32 %v6549, 0.0
      %v6604 = vmax.f32 %v6550, 0.0
      %v6605 = vmax.f32 %v6551, 0.0
      %v6606 = vmax.f32 %v6552, 0.0
      %v6607 = vmax.f32 %v6553, 0.0
      %v6608 = vmax.f32 %v6554, 0.0
      %v6609 = vmax.f32 %v6555, 0.0
      %v6610 = vmax.f32 %v6556, 0.0
      %v6611 = vmax.f32 %v6557, 0.0
      %v6612 = vmax.f32 %v6558, 0.0
      %v6613 = vmax.f32 %v6559, 0.0
      %v6614 = vmax.f32 %v6560, 0.0
      %v6615 = vmax.f32 %v6561, 0.0
      %v6616 = vmax.f32 %v6562, 0.0
      %v6617 = vmax.f32 %v6563, 0.0
      %v6618 = vmax.f32 %v6564, 0.0
      %v6619 = vmax.f32 %v6565, 0.0
      %v6620 = vmax.f32 %v6566, 0.0
      %v6621 = vmax.f32 %v6567, 0.0
      %v6622 = vmax.f32 %v6568, 0.0
      %v6623 = vmax.f32 %v6569, 0.0
      %v6624 = vmax.f32 %v6570, 0.0
      %v6625 = vmax.f32 %v6571, 0.0
      %v6626 = vmax.f32 %v6572, 0.0
      %v6627 = vmax.f32 %v6573, 0.0
      %v6628 = vmax.f32 %v6574, 0.0
      %v6629 = vlaneseq
      %v6630 = vshrl.u32 %v6629, 7
      %v6631 = vadd.s32 %v6630, 8
      %v6632 = vadd.s32 %v6630, 16
      %vm6633 = vcmp.ge.s32.totalorder %v6630, 1
      %vm6634 = vcmp.ge.s32.totalorder %v6631, 1
      %vm6635 = vcmp.ge.s32.totalorder %v6632, 1
      %vm6636 = vmand 0, %vm6633
      %vm6637 = vmand 0, %vm6634
      %vm6638 = vmand 0, %vm6635
      %vm6639 = vmand 1, %vm6633
      %vm6640 = vmand 1, %vm6634
      %vm6641 = vmand 1, %vm6635
      %vm6642 = vcmp.le.s32.totalorder %v6630, 16
      %vm6643 = vcmp.le.s32.totalorder %v6631, 16
      %vm6644 = vcmp.le.s32.totalorder %v6632, 16
      %vm6645 = vmand %vm6636, %vm6642
      %vm6646 = vmand %vm6637, %vm6643
      %vm6647 = vmand %vm6638, %vm6644
      %vm6648 = vmand %vm6639, %vm6642
      %vm6649 = vmand %vm6640, %vm6643
      %vm6650 = vmand %vm6641, %vm6644
      %v6651 = vsel %vm6645, %v6575, 0.0
      %v6652 = vsel %vm6646, %v6576, 0.0
      %v6653 = vsel %vm6647, %v6577, 0.0
      %v6654 = vsel %vm6648, %v6578, 0.0
      %v6655 = vsel %vm6649, %v6579, 0.0
      %v6656 = vsel %vm6650, %v6580, 0.0
      %v6657 = vsel %vm6648, %v6581, 0.0
      %v6658 = vsel %vm6649, %v6582, 0.0
      %v6659 = vsel %vm6650, %v6583, 0.0
      %v6660 = vsel %vm6648, %v6584, 0.0
      %v6661 = vsel %vm6649, %v6585, 0.0
      %v6662 = vsel %vm6650, %v6586, 0.0
      %v6663 = vsel %vm6648, %v6587, 0.0
      %v6664 = vsel %vm6649, %v6588, 0.0
      %v6665 = vsel %vm6650, %v6589, 0.0
      %v6666 = vsel %vm6648, %v6590, 0.0
      %v6667 = vsel %vm6649, %v6591, 0.0
      %v6668 = vsel %vm6650, %v6592, 0.0
      %v6669 = vsel %vm6648, %v6593, 0.0
      %v6670 = vsel %vm6649, %v6594, 0.0
      %v6671 = vsel %vm6650, %v6595, 0.0
      %v6672 = vsel %vm6648, %v6596, 0.0
      %v6673 = vsel %vm6649, %v6597, 0.0
      %v6674 = vsel %vm6650, %v6598, 0.0
      %v6675 = vsel %vm6648, %v6599, 0.0
      %v6676 = vsel %vm6649, %v6600, 0.0
      %v6677 = vsel %vm6650, %v6601, 0.0
      %v6678 = vsel %vm6648, %v6602, 0.0
      %v6679 = vsel %vm6649, %v6603, 0.0
      %v6680 = vsel %vm6650, %v6604, 0.0
      %v6681 = vsel %vm6648, %v6605, 0.0
      %v6682 = vsel %vm6649, %v6606, 0.0
      %v6683 = vsel %vm6650, %v6607, 0.0
      %v6684 = vsel %vm6648, %v6608, 0.0
      %v6685 = vsel %vm6649, %v6609, 0.0
      %v6686 = vsel %vm6650, %v6610, 0.0
      %v6687 = vsel %vm6648, %v6611, 0.0
      %v6688 = vsel %vm6649, %v6612, 0.0
      %v6689 = vsel %vm6650, %v6613, 0.0
      %v6690 = vsel %vm6648, %v6614, 0.0
      %v6691 = vsel %vm6649, %v6615, 0.0
      %v6692 = vsel %vm6650, %v6616, 0.0
      %v6693 = vsel %vm6648, %v6617, 0.0
      %v6694 = vsel %vm6649, %v6618, 0.0
      %v6695 = vsel %vm6650, %v6619, 0.0
      %v6696 = vsel %vm6648, %v6620, 0.0
      %v6697 = vsel %vm6649, %v6621, 0.0
      %v6698 = vsel %vm6650, %v6622, 0.0
      %v6699 = vsel %vm6648, %v6623, 0.0
      %v6700 = vsel %vm6649, %v6624, 0.0
      %v6701 = vsel %vm6650, %v6625, 0.0
      %v6702 = vsel %vm6645, %v6626, 0.0
      %v6703 = vsel %vm6646, %v6627, 0.0
      %v6704 = vsel %vm6647, %v6628, 0.0
      %6705 = vst.msk [vmem:[#allocation2] sm:$0xff] %vm728, %v6651
      %6706 = vst.msk [vmem:[#allocation2 + $0x8] sm:$0xff] %vm728, %v6652
      %6707 = vst.msk [vmem:[#allocation2 + $0x10] sm:$0xff] %vm728, %v6653
      %6708 = vst.msk [vmem:[#allocation2 + $0x18] sm:$0xff] %vm728, %v6654
      %6709 = vst.msk [vmem:[#allocation2 + $0x20] sm:$0xff] %vm728, %v6655
      %6710 = vst.msk [vmem:[#allocation2 + $0x28] sm:$0xff] %vm728, %v6656
      %6711 = vst.msk [vmem:[#allocation2 + $0x30] sm:$0xff] %vm728, %v6657
      %6712 = vst.msk [vmem:[#allocation2 + $0x38] sm:$0xff] %vm728, %v6658
      %6713 = vst.msk [vmem:[#allocation2 + $0x40] sm:$0xff] %vm728, %v6659
      %6714 = vst.msk [vmem:[#allocation2 + $0x48] sm:$0xff] %vm728, %v6660
      %6715 = vst.msk [vmem:[#allocation2 + $0x50] sm:$0xff] %vm728, %v6661
      %6716 = vst.msk [vmem:[#allocation2 + $0x58] sm:$0xff] %vm728, %v6662
      %6717 = vst.msk [vmem:[#allocation2 + $0x60] sm:$0xff] %vm728, %v6663
      %6718 = vst.msk [vmem:[#allocation2 + $0x68] sm:$0xff] %vm728, %v6664
      %6719 = vst.msk [vmem:[#allocation2 + $0x70] sm:$0xff] %vm728, %v6665
      %6720 = vst.msk [vmem:[#allocation2 + $0x78] sm:$0xff] %vm728, %v6666
      %6721 = vst.msk [vmem:[#allocation2 + $0x80] sm:$0xff] %vm728, %v6667
      %6722 = vst.msk [vmem:[#allocation2 + $0x88] sm:$0xff] %vm728, %v6668
      %6723 = vst.msk [vmem:[#allocation2 + $0x90] sm:$0xff] %vm728, %v6669
      %6724 = vst.msk [vmem:[#allocation2 + $0x98] sm:$0xff] %vm728, %v6670
      %6725 = vst.msk [vmem:[#allocation2 + $0xa0] sm:$0xff] %vm728, %v6671
      %6726 = vst.msk [vmem:[#allocation2 + $0xa8] sm:$0xff] %vm728, %v6672
      %6727 = vst.msk [vmem:[#allocation2 + $0xb0] sm:$0xff] %vm728, %v6673
      %6728 = vst.msk [vmem:[#allocation2 + $0xb8] sm:$0xff] %vm728, %v6674
      %6729 = vst.msk [vmem:[#allocation2 + $0xc0] sm:$0xff] %vm728, %v6675
      %6730 = vst.msk [vmem:[#allocation2 + $0xc8] sm:$0xff] %vm728, %v6676
      %6731 = vst.msk [vmem:[#allocation2 + $0xd0] sm:$0xff] %vm728, %v6677
      %6732 = vst.msk [vmem:[#allocation2 + $0xd8] sm:$0xff] %vm728, %v6678
      %6733 = vst.msk [vmem:[#allocation2 + $0xe0] sm:$0xff] %vm728, %v6679
      %6734 = vst.msk [vmem:[#allocation2 + $0xe8] sm:$0xff] %vm728, %v6680
      %6735 = vst.msk [vmem:[#allocation2 + $0xf0] sm:$0xff] %vm728, %v6681
      %6736 = vst.msk [vmem:[#allocation2 + $0xf8] sm:$0xff] %vm728, %v6682
      %6737 = vst.msk [vmem:[#allocation2 + $0x100] sm:$0xff] %vm728, %v6683
      %6738 = vst.msk [vmem:[#allocation2 + $0x108] sm:$0xff] %vm728, %v6684
      %6739 = vst.msk [vmem:[#allocation2 + $0x110] sm:$0xff] %vm728, %v6685
      %6740 = vst.msk [vmem:[#allocation2 + $0x118] sm:$0xff] %vm728, %v6686
      %6741 = vst.msk [vmem:[#allocation2 + $0x120] sm:$0xff] %vm728, %v6687
      %6742 = vst.msk [vmem:[#allocation2 + $0x128] sm:$0xff] %vm728, %v6688
      %6743 = vst.msk [vmem:[#allocation2 + $0x130] sm:$0xff] %vm728, %v6689
      %6744 = vst.msk [vmem:[#allocation2 + $0x138] sm:$0xff] %vm728, %v6690
      %6745 = vst.msk [vmem:[#allocation2 + $0x140] sm:$0xff] %vm728, %v6691
      %6746 = vst.msk [vmem:[#allocation2 + $0x148] sm:$0xff] %vm728, %v6692
      %6747 = vst.msk [vmem:[#allocation2 + $0x150] sm:$0xff] %vm728, %v6693
      %6748 = vst.msk [vmem:[#allocation2 + $0x158] sm:$0xff] %vm728, %v6694
      %6749 = vst.msk [vmem:[#allocation2 + $0x160] sm:$0xff] %vm728, %v6695
      %6750 = vst.msk [vmem:[#allocation2 + $0x168] sm:$0xff] %vm728, %v6696
      %6751 = vst.msk [vmem:[#allocation2 + $0x170] sm:$0xff] %vm728, %v6697
      %6752 = vst.msk [vmem:[#allocation2 + $0x178] sm:$0xff] %vm728, %v6698
      %6753 = vst.msk [vmem:[#allocation2 + $0x180] sm:$0xff] %vm728, %v6699
      %6754 = vst.msk [vmem:[#allocation2 + $0x188] sm:$0xff] %vm728, %v6700
      %6755 = vst.msk [vmem:[#allocation2 + $0x190] sm:$0xff] %vm728, %v6701
      %6756 = vst.msk [vmem:[#allocation2 + $0x198] sm:$0xff] %vm728, %v6702
      %6757 = vst.msk [vmem:[#allocation2 + $0x1a0] sm:$0xff] %vm728, %v6703
      %6758 = vst.msk [vmem:[#allocation2 + $0x1a8] sm:$0xff] %vm728, %v6704
      %v6759 = vld [vmem:[#allocation2] sm:$0xff]
      %v6760 = vld [vmem:[#allocation2 + $0x8] sm:$0xff]
      %v6761 = vld [vmem:[#allocation2 + $0x18] sm:$0xff]
      %v6762 = vld [vmem:[#allocation2 + $0x20] sm:$0xff]
      %v6763 = vld [vmem:[#allocation2 + $0x30] sm:$0xff]
      %v6764 = vld [vmem:[#allocation2 + $0x38] sm:$0xff]
      %v6765 = vld [vmem:[#allocation2 + $0x48] sm:$0xff]
      %v6766 = vld [vmem:[#allocation2 + $0x50] sm:$0xff]
      %v6767 = vld [vmem:[#allocation2 + $0x60] sm:$0xff]
      %v6768 = vld [vmem:[#allocation2 + $0x68] sm:$0xff]
      %v6769 = vld [vmem:[#allocation2 + $0x78] sm:$0xff]
      %v6770 = vld [vmem:[#allocation2 + $0x80] sm:$0xff]
      %v6771 = vld [vmem:[#allocation2 + $0x90] sm:$0xff]
      %v6772 = vld [vmem:[#allocation2 + $0x98] sm:$0xff]
      %v6773 = vld [vmem:[#allocation2 + $0xa8] sm:$0xff]
      %v6774 = vld [vmem:[#allocation2 + $0xb0] sm:$0xff]
      %v6775 = vld [vmem:[#allocation2 + $0xc0] sm:$0xff]
      %v6776 = vld [vmem:[#allocation2 + $0xc8] sm:$0xff]
      %v6777 = vld [vmem:[#allocation2 + $0xd8] sm:$0xff]
      %v6778 = vld [vmem:[#allocation2 + $0xe0] sm:$0xff]
      %v6779 = vld [vmem:[#allocation2 + $0xf0] sm:$0xff]
      %v6780 = vld [vmem:[#allocation2 + $0xf8] sm:$0xff]
      %v6781 = vld [vmem:[#allocation2 + $0x108] sm:$0xff]
      %v6782 = vld [vmem:[#allocation2 + $0x110] sm:$0xff]
      %v6783 = vld [vmem:[#allocation2 + $0x120] sm:$0xff]
      %v6784 = vld [vmem:[#allocation2 + $0x128] sm:$0xff]
      %v6785 = vld [vmem:[#allocation2 + $0x138] sm:$0xff]
      %v6786 = vld [vmem:[#allocation2 + $0x140] sm:$0xff]
      %v6787 = vld [vmem:[#allocation2 + $0x150] sm:$0xff]
      %v6788 = vld [vmem:[#allocation2 + $0x158] sm:$0xff]
      %v6789 = vld [vmem:[#allocation2 + $0x168] sm:$0xff]
      %v6790 = vld [vmem:[#allocation2 + $0x170] sm:$0xff]
      %v6791 = vld [vmem:[%s2] sm:$0xff]
      %v6793 = vsel %vm728, %v6759, 0
      %v6796 = vsel %vm728, %v6760, 0
      %v6799 = vsel %vm728, %v6761, 0
      %v6802 = vsel %vm728, %v6762, 0
      %v6805 = vsel %vm728, %v6763, 0
      %v6808 = vsel %vm728, %v6764, 0
      %v6811 = vsel %vm728, %v6765, 0
      %v6814 = vsel %vm728, %v6766, 0
      %v6817 = vsel %vm728, %v6767, 0
      %v6820 = vsel %vm728, %v6768, 0
      %v6823 = vsel %vm728, %v6769, 0
      %v6826 = vsel %vm728, %v6770, 0
      %v6829 = vsel %vm728, %v6771, 0
      %v6832 = vsel %vm728, %v6772, 0
      %v6835 = vsel %vm728, %v6773, 0
      %v6838 = vsel %vm728, %v6774, 0
      %v6841 = vsel %vm728, %v6775, 0
      %v6844 = vsel %vm728, %v6776, 0
      %v6847 = vsel %vm728, %v6777, 0
      %v6850 = vsel %vm728, %v6778, 0
      %v6853 = vsel %vm728, %v6779, 0
      %v6856 = vsel %vm728, %v6780, 0
      %v6859 = vsel %vm728, %v6781, 0
      %v6862 = vsel %vm728, %v6782, 0
      %v6865 = vsel %vm728, %v6783, 0
      %v6868 = vsel %vm728, %v6784, 0
      %v6871 = vsel %vm728, %v6785, 0
      %v6874 = vsel %vm728, %v6786, 0
      %v6877 = vsel %vm728, %v6787, 0
      %v6880 = vsel %vm728, %v6788, 0
      %v6883 = vsel %vm728, %v6789, 0
      %v6886 = vsel %vm728, %v6790, 0
      %6888 = vmatprep.subr.mxu0 0.0
      %6889 = vmatpush1.msra.mxu0 %v6791
      %6890 = vmatprep.subr.mxu0 0.0
      %6891 = vmatpush1.msra.mxu0 0.0
      %6892 = vmatprep.subr.mxu0 0.0
      %6893 = vmatpush1.msra.mxu0 0.0
      %6894 = vmatprep.subr.mxu0 0.0
      %6895 = vmatpush1.msra.mxu0 0.0
      %6896 = vmatprep.subr.mxu0 0.0
      %6897 = vmatpush1.msra.mxu0 0.0
      %6898 = vmatprep.subr.mxu0 0.0
      %6899 = vmatpush1.msra.mxu0 0.0
      %6900 = vmatprep.subr.mxu0 0.0
      %6901 = vmatpush1.msra.mxu0 0.0
      %6902 = vmatprep.subr.mxu0 0.0
      %6903 = vmatpush1.msra.mxu0 0.0
      %6904 = vmatprep.subr.mxu0 0.0
      %6905 = vmatpush1.msra.mxu0 0.0
      %6906 = vmatprep.subr.mxu0 0.0
      %6907 = vmatpush1.msra.mxu0 0.0
      %6908 = vmatprep.subr.mxu0 0.0
      %6909 = vmatpush1.msra.mxu0 0.0
      %6910 = vmatprep.subr.mxu0 0.0
      %6911 = vmatpush1.msra.mxu0 0.0
      %6912 = vmatprep.subr.mxu0 0.0
      %6913 = vmatpush1.msra.mxu0 0.0
      %6914 = vmatprep.subr.mxu0 0.0
      %6915 = vmatpush1.msra.mxu0 0.0
      %6916 = vmatprep.subr.mxu0 0.0
      %6917 = vmatpush1.msra.mxu0 0.0
      %6918 = vmatprep.subr.mxu0 0.0
      %6919 = vmatpush1.msra.mxu0 0.0
      %6920 = vmatprep.subr.mxu0 0.0
      %6921 = vmatpush1.msra.mxu0 0.0
      %6922 = vmatprep.subr.mxu0 0.0
      %6923 = vmatpush1.msra.mxu0 0.0
      %6924 = vmatprep.subr.mxu0 0.0
      %6925 = vmatpush1.msra.mxu0 0.0
      %6926 = vmatprep.subr.mxu0 0.0
      %6927 = vmatpush1.msra.mxu0 0.0
      %6928 = vmatprep.subr.mxu0 0.0
      %6929 = vmatpush1.msra.mxu0 0.0
      %6930 = vmatprep.subr.mxu0 0.0
      %6931 = vmatpush1.msra.mxu0 0.0
      %6932 = vmatprep.subr.mxu0 0.0
      %6933 = vmatpush1.msra.mxu0 0.0
      %6934 = vmatprep.subr.mxu0 0.0
      %6935 = vmatpush1.msra.mxu0 0.0
      %6936 = vmatprep.subr.mxu0 0.0
      %6937 = vmatpush1.msra.mxu0 0.0
      %6938 = vmatprep.subr.mxu0 0.0
      %6939 = vmatpush1.msra.mxu0 0.0
      %6940 = vmatprep.subr.mxu0 0.0
      %6941 = vmatpush1.msra.mxu0 0.0
      %6942 = vmatprep.subr.mxu0 0.0
      %6943 = vmatpush1.msra.mxu0 0.0
      %6944 = vmatprep.subr.mxu0 0.0
      %6945 = vmatpush1.msra.mxu0 0.0
      %6946 = vmatprep.subr.mxu0 0.0
      %6947 = vmatpush1.msra.mxu0 0.0
      %6948 = vmatprep.subr.mxu0 0.0
      %6949 = vmatpush1.msra.mxu0 0.0
      %6950 = vmatprep.subr.mxu0 0.0
      %6951 = vmatpush1.msra.mxu0 0.0
      %6952 = vmatprep.mubr.f32.mxu0 0.0
      %6953 = vmatmul.mubr.f32.gmra.mrb[0].mxu0 %v6793
      %v6954 = vpop.f32.mrb[0].mxu0
      %v6955 = vadd.f32 0.0, %v6954
      %v6956 = vpop.f32.mrb[0].mxu0
      %6957 = vmatprep.mubr.f32.mxu0 0.0
      %6958 = vmatmul.mubr.f32.gmra.mrb[0].mxu0 %v6796
      %v6959 = vpop.f32.mrb[0].mxu0
      %v6960 = vadd.f32 0.0, %v6959
      %v6961 = vpop.f32.mrb[0].mxu0
      %6962 = vmatprep.mubr.f32.mxu0 0.0
      %6963 = vmatmul.mubr.f32.gmra.mrb[0].mxu0 %v6799
      %v6964 = vpop.f32.mrb[0].mxu0
      %v6965 = vadd.f32 0.0, %v6964
      %v6966 = vpop.f32.mrb[0].mxu0
      %6967 = vmatprep.mubr.f32.mxu0 0.0
      %6968 = vmatmul.mubr.f32.gmra.mrb[0].mxu0 %v6802
      %v6969 = vpop.f32.mrb[0].mxu0
      %v6970 = vadd.f32 0.0, %v6969
      %v6971 = vpop.f32.mrb[0].mxu0
      %6972 = vmatprep.mubr.f32.mxu0 0.0
      %6973 = vmatmul.mubr.f32.gmra.mrb[0].mxu0 %v6805
      %v6974 = vpop.f32.mrb[0].mxu0
      %v6975 = vadd.f32 0.0, %v6974
      %v6976 = vpop.f32.mrb[0].mxu0
      %6977 = vmatprep.mubr.f32.mxu0 0.0
      %6978 = vmatmul.mubr.f32.gmra.mrb[0].mxu0 %v6808
      %v6979 = vpop.f32.mrb[0].mxu0
      %v6980 = vadd.f32 0.0, %v6979
      %v6981 = vpop.f32.mrb[0].mxu0
      %6982 = vmatprep.mubr.f32.mxu0 0.0
      %6983 = vmatmul.mubr.f32.gmra.mrb[0].mxu0 %v6811
      %v6984 = vpop.f32.mrb[0].mxu0
      %v6985 = vadd.f32 0.0, %v6984
      %v6986 = vpop.f32.mrb[0].mxu0
      %6987 = vmatprep.mubr.f32.mxu0 0.0
      %6988 = vmatmul.mubr.f32.gmra.mrb[0].mxu0 %v6814
      %v6989 = vpop.f32.mrb[0].mxu0
      %v6990 = vadd.f32 0.0, %v6989
      %v6991 = vpop.f32.mrb[0].mxu0
      %6992 = vmatprep.mubr.f32.mxu0 0.0
      %6993 = vmatmul.mubr.f32.gmra.mrb[0].mxu0 %v6817
      %v6994 = vpop.f32.mrb[0].mxu0
      %v6995 = vadd.f32 0.0, %v6994
      %v6996 = vpop.f32.mrb[0].mxu0
      %6997 = vmatprep.mubr.f32.mxu0 0.0
      %6998 = vmatmul.mubr.f32.gmra.mrb[0].mxu0 %v6820
      %v6999 = vpop.f32.mrb[0].mxu0
      %v7000 = vadd.f32 0.0, %v6999
      %v7001 = vpop.f32.mrb[0].mxu0
      %7002 = vmatprep.mubr.f32.mxu0 0.0
      %7003 = vmatmul.mubr.f32.gmra.mrb[0].mxu0 %v6823
      %v7004 = vpop.f32.mrb[0].mxu0
      %v7005 = vadd.f32 0.0, %v7004
      %v7006 = vpop.f32.mrb[0].mxu0
      %7007 = vmatprep.mubr.f32.mxu0 0.0
      %7008 = vmatmul.mubr.f32.gmra.mrb[0].mxu0 %v6826
      %v7009 = vpop.f32.mrb[0].mxu0
      %v7010 = vadd.f32 0.0, %v7009
      %v7011 = vpop.f32.mrb[0].mxu0
      %7012 = vmatprep.mubr.f32.mxu0 0.0
      %7013 = vmatmul.mubr.f32.gmra.mrb[0].mxu0 %v6829
      %v7014 = vpop.f32.mrb[0].mxu0
      %v7015 = vadd.f32 0.0, %v7014
      %v7016 = vpop.f32.mrb[0].mxu0
      %7017 = vmatprep.mubr.f32.mxu0 0.0
      %7018 = vmatmul.mubr.f32.gmra.mrb[0].mxu0 %v6832
      %v7019 = vpop.f32.mrb[0].mxu0
      %v7020 = vadd.f32 0.0, %v7019
      %v7021 = vpop.f32.mrb[0].mxu0
      %7022 = vmatprep.mubr.f32.mxu0 0.0
      %7023 = vmatmul.mubr.f32.gmra.mrb[0].mxu0 %v6835
      %v7024 = vpop.f32.mrb[0].mxu0
      %v7025 = vadd.f32 0.0, %v7024
      %v7026 = vpop.f32.mrb[0].mxu0
      %7027 = vmatprep.mubr.f32.mxu0 0.0
      %7028 = vmatmul.mubr.f32.gmra.mrb[0].mxu0 %v6838
      %v7029 = vpop.f32.mrb[0].mxu0
      %v7030 = vadd.f32 0.0, %v7029
      %v7031 = vpop.f32.mrb[0].mxu0
      %7032 = vmatprep.mubr.f32.mxu0 0.0
      %7033 = vmatmul.mubr.f32.gmra.mrb[0].mxu0 %v6841
      %v7034 = vpop.f32.mrb[0].mxu0
      %v7035 = vadd.f32 0.0, %v7034
      %v7036 = vpop.f32.mrb[0].mxu0
      %7037 = vmatprep.mubr.f32.mxu0 0.0
      %7038 = vmatmul.mubr.f32.gmra.mrb[0].mxu0 %v6844
      %v7039 = vpop.f32.mrb[0].mxu0
      %v7040 = vadd.f32 0.0, %v7039
      %v7041 = vpop.f32.mrb[0].mxu0
      %7042 = vmatprep.mubr.f32.mxu0 0.0
      %7043 = vmatmul.mubr.f32.gmra.mrb[0].mxu0 %v6847
      %v7044 = vpop.f32.mrb[0].mxu0
      %v7045 = vadd.f32 0.0, %v7044
      %v7046 = vpop.f32.mrb[0].mxu0
      %7047 = vmatprep.mubr.f32.mxu0 0.0
      %7048 = vmatmul.mubr.f32.gmra.mrb[0].mxu0 %v6850
      %v7049 = vpop.f32.mrb[0].mxu0
      %v7050 = vadd.f32 0.0, %v7049
      %v7051 = vpop.f32.mrb[0].mxu0
      %7052 = vmatprep.mubr.f32.mxu0 0.0
      %7053 = vmatmul.mubr.f32.gmra.mrb[0].mxu0 %v6853
      %v7054 = vpop.f32.mrb[0].mxu0
      %v7055 = vadd.f32 0.0, %v7054
      %v7056 = vpop.f32.mrb[0].mxu0
      %7057 = vmatprep.mubr.f32.mxu0 0.0
      %7058 = vmatmul.mubr.f32.gmra.mrb[0].mxu0 %v6856
      %v7059 = vpop.f32.mrb[0].mxu0
      %v7060 = vadd.f32 0.0, %v7059
      %v7061 = vpop.f32.mrb[0].mxu0
      %7062 = vmatprep.mubr.f32.mxu0 0.0
      %7063 = vmatmul.mubr.f32.gmra.mrb[0].mxu0 %v6859
      %v7064 = vpop.f32.mrb[0].mxu0
      %v7065 = vadd.f32 0.0, %v7064
      %v7066 = vpop.f32.mrb[0].mxu0
      %7067 = vmatprep.mubr.f32.mxu0 0.0
      %7068 = vmatmul.mubr.f32.gmra.mrb[0].mxu0 %v6862
      %v7069 = vpop.f32.mrb[0].mxu0
      %v7070 = vadd.f32 0.0, %v7069
      %v7071 = vpop.f32.mrb[0].mxu0
      %7072 = vmatprep.mubr.f32.mxu0 0.0
      %7073 = vmatmul.mubr.f32.gmra.mrb[0].mxu0 %v6865
      %v7074 = vpop.f32.mrb[0].mxu0
      %v7075 = vadd.f32 0.0, %v7074
      %v7076 = vpop.f32.mrb[0].mxu0
      %7077 = vmatprep.mubr.f32.mxu0 0.0
      %7078 = vmatmul.mubr.f32.gmra.mrb[0].mxu0 %v6868
      %v7079 = vpop.f32.mrb[0].mxu0
      %v7080 = vadd.f32 0.0, %v7079
      %v7081 = vpop.f32.mrb[0].mxu0
      %7082 = vmatprep.mubr.f32.mxu0 0.0
      %7083 = vmatmul.mubr.f32.gmra.mrb[0].mxu0 %v6871
      %v7084 = vpop.f32.mrb[0].mxu0
      %v7085 = vadd.f32 0.0, %v7084
      %v7086 = vpop.f32.mrb[0].mxu0
      %7087 = vmatprep.mubr.f32.mxu0 0.0
      %7088 = vmatmul.mubr.f32.gmra.mrb[0].mxu0 %v6874
      %v7089 = vpop.f32.mrb[0].mxu0
      %v7090 = vadd.f32 0.0, %v7089
      %v7091 = vpop.f32.mrb[0].mxu0
      %7092 = vmatprep.mubr.f32.mxu0 0.0
      %7093 = vmatmul.mubr.f32.gmra.mrb[0].mxu0 %v6877
      %v7094 = vpop.f32.mrb[0].mxu0
      %v7095 = vadd.f32 0.0, %v7094
      %v7096 = vpop.f32.mrb[0].mxu0
      %7097 = vmatprep.mubr.f32.mxu0 0.0
      %7098 = vmatmul.mubr.f32.gmra.mrb[0].mxu0 %v6880
      %v7099 = vpop.f32.mrb[0].mxu0
      %v7100 = vadd.f32 0.0, %v7099
      %v7101 = vpop.f32.mrb[0].mxu0
      %7102 = vmatprep.mubr.f32.mxu0 0.0
      %7103 = vmatmul.mubr.f32.gmra.mrb[0].mxu0 %v6883
      %v7104 = vpop.f32.mrb[0].mxu0
      %v7105 = vadd.f32 0.0, %v7104
      %v7106 = vpop.f32.mrb[0].mxu0
      %7107 = vmatprep.mubr.f32.mxu0 0.0
      %7108 = vmatmul.mubr.f32.gmra.mrb[0].mxu0 %v6886
      %v7109 = vpop.f32.mrb[0].mxu0
      %v7110 = vadd.f32 0.0, %v7109
      %v7111 = vpop.f32.mrb[0].mxu0
      %7112 = vdwg.mxu0
      %7113 = vst.msk [vmem:[#allocation3] sm:$0xff] %vm728, %v6955
      %7114 = vst.msk [vmem:[#allocation3 + $0x8] sm:$0xff] %vm728, %v6960
      %7115 = vst.msk [vmem:[#allocation3 + $0x10] sm:$0xff] %vm728, %v6965
      %7116 = vst.msk [vmem:[#allocation3 + $0x18] sm:$0xff] %vm728, %v6970
      %7117 = vst.msk [vmem:[#allocation3 + $0x20] sm:$0xff] %vm728, %v6975
      %7118 = vst.msk [vmem:[#allocation3 + $0x28] sm:$0xff] %vm728, %v6980
      %7119 = vst.msk [vmem:[#allocation3 + $0x30] sm:$0xff] %vm728, %v6985
      %7120 = vst.msk [vmem:[#allocation3 + $0x38] sm:$0xff] %vm728, %v6990
      %7121 = vst.msk [vmem:[#allocation3 + $0x40] sm:$0xff] %vm728, %v6995
      %7122 = vst.msk [vmem:[#allocation3 + $0x48] sm:$0xff] %vm728, %v7000
      %7123 = vst.msk [vmem:[#allocation3 + $0x50] sm:$0xff] %vm728, %v7005
      %7124 = vst.msk [vmem:[#allocation3 + $0x58] sm:$0xff] %vm728, %v7010
      %7125 = vst.msk [vmem:[#allocation3 + $0x60] sm:$0xff] %vm728, %v7015
      %7126 = vst.msk [vmem:[#allocation3 + $0x68] sm:$0xff] %vm728, %v7020
      %7127 = vst.msk [vmem:[#allocation3 + $0x70] sm:$0xff] %vm728, %v7025
      %7128 = vst.msk [vmem:[#allocation3 + $0x78] sm:$0xff] %vm728, %v7030
      %7129 = vst.msk [vmem:[#allocation3 + $0x80] sm:$0xff] %vm728, %v7035
      %7130 = vst.msk [vmem:[#allocation3 + $0x88] sm:$0xff] %vm728, %v7040
      %7131 = vst.msk [vmem:[#allocation3 + $0x90] sm:$0xff] %vm728, %v7045
      %7132 = vst.msk [vmem:[#allocation3 + $0x98] sm:$0xff] %vm728, %v7050
      %7133 = vst.msk [vmem:[#allocation3 + $0xa0] sm:$0xff] %vm728, %v7055
      %7134 = vst.msk [vmem:[#allocation3 + $0xa8] sm:$0xff] %vm728, %v7060
      %7135 = vst.msk [vmem:[#allocation3 + $0xb0] sm:$0xff] %vm728, %v7065
      %7136 = vst.msk [vmem:[#allocation3 + $0xb8] sm:$0xff] %vm728, %v7070
      %7137 = vst.msk [vmem:[#allocation3 + $0xc0] sm:$0xff] %vm728, %v7075
      %7138 = vst.msk [vmem:[#allocation3 + $0xc8] sm:$0xff] %vm728, %v7080
      %7139 = vst.msk [vmem:[#allocation3 + $0xd0] sm:$0xff] %vm728, %v7085
      %7140 = vst.msk [vmem:[#allocation3 + $0xd8] sm:$0xff] %vm728, %v7090
      %7141 = vst.msk [vmem:[#allocation3 + $0xe0] sm:$0xff] %vm728, %v7095
      %7142 = vst.msk [vmem:[#allocation3 + $0xe8] sm:$0xff] %vm728, %v7100
      %7143 = vst.msk [vmem:[#allocation3 + $0xf0] sm:$0xff] %vm728, %v7105
      %7144 = vst.msk [vmem:[#allocation3 + $0xf8] sm:$0xff] %vm728, %v7110
      %v7145 = vld [vmem:[#allocation2 + $0x1] sm:$0xff]
      %v7146 = vld [vmem:[#allocation2 + $0x9] sm:$0xff]
      %v7147 = vld [vmem:[#allocation2 + $0x19] sm:$0xff]
      %v7148 = vld [vmem:[#allocation2 + $0x21] sm:$0xff]
      %v7149 = vld [vmem:[#allocation2 + $0x31] sm:$0xff]
      %v7150 = vld [vmem:[#allocation2 + $0x39] sm:$0xff]
      %v7151 = vld [vmem:[#allocation2 + $0x49] sm:$0xff]
      %v7152 = vld [vmem:[#allocation2 + $0x51] sm:$0xff]
      %v7153 = vld [vmem:[#allocation2 + $0x61] sm:$0xff]
      %v7154 = vld [vmem:[#allocation2 + $0x69] sm:$0xff]
      %v7155 = vld [vmem:[#allocation2 + $0x79] sm:$0xff]
      %v7156 = vld [vmem:[#allocation2 + $0x81] sm:$0xff]
      %v7157 = vld [vmem:[#allocation2 + $0x91] sm:$0xff]
      %v7158 = vld [vmem:[#allocation2 + $0x99] sm:$0xff]
      %v7159 = vld [vmem:[#allocation2 + $0xa9] sm:$0xff]
      %v7160 = vld [vmem:[#allocation2 + $0xb1] sm:$0xff]
      %v7161 = vld [vmem:[#allocation2 + $0xc1] sm:$0xff]
      %v7162 = vld [vmem:[#allocation2 + $0xc9] sm:$0xff]
      %v7163 = vld [vmem:[#allocation2 + $0xd9] sm:$0xff]
      %v7164 = vld [vmem:[#allocation2 + $0xe1] sm:$0xff]
      %v7165 = vld [vmem:[#allocation2 + $0xf1] sm:$0xff]
      %v7166 = vld [vmem:[#allocation2 + $0xf9] sm:$0xff]
      %v7167 = vld [vmem:[#allocation2 + $0x109] sm:$0xff]
      %v7168 = vld [vmem:[#allocation2 + $0x111] sm:$0xff]
      %v7169 = vld [vmem:[#allocation2 + $0x121] sm:$0xff]
      %v7170 = vld [vmem:[#allocation2 + $0x129] sm:$0xff]
      %v7171 = vld [vmem:[#allocation2 + $0x139] sm:$0xff]
      %v7172 = vld [vmem:[#allocation2 + $0x141] sm:$0xff]
      %v7173 = vld [vmem:[#allocation2 + $0x151] sm:$0xff]
      %v7174 = vld [vmem:[#allocation2 + $0x159] sm:$0xff]
      %v7175 = vld [vmem:[#allocation2 + $0x169] sm:$0xff]
      %v7176 = vld [vmem:[#allocation2 + $0x171] sm:$0xff]
      %v7177 = vld [vmem:[%s2 + $0x8] sm:$0xff]
      %v7179 = vsel %vm728, %v7145, 0
      %v7182 = vsel %vm728, %v7146, 0
      %v7185 = vsel %vm728, %v7147, 0
      %v7188 = vsel %vm728, %v7148, 0
      %v7191 = vsel %vm728, %v7149, 0
      %v7194 = vsel %vm728, %v7150, 0
      %v7197 = vsel %vm728, %v7151, 0
      %v7200 = vsel %vm728, %v7152, 0
      %v7203 = vsel %vm728, %v7153, 0
      %v7206 = vsel %vm728, %v7154, 0
      %v7209 = vsel %vm728, %v7155, 0
      %v7212 = vsel %vm728, %v7156, 0
      %v7215 = vsel %vm728, %v7157, 0
      %v7218 = vsel %vm728, %v7158, 0
      %v7221 = vsel %vm728, %v7159, 0
      %v7224 = vsel %vm728, %v7160, 0
      %v7227 = vsel %vm728, %v7161, 0
      %v7230 = vsel %vm728, %v7162, 0
      %v7233 = vsel %vm728, %v7163, 0
      %v7236 = vsel %vm728, %v7164, 0
      %v7239 = vsel %vm728, %v7165, 0
      %v7242 = vsel %vm728, %v7166, 0
      %v7245 = vsel %vm728, %v7167, 0
      %v7248 = vsel %vm728, %v7168, 0
      %v7251 = vsel %vm728, %v7169, 0
      %v7254 = vsel %vm728, %v7170, 0
      %v7257 = vsel %vm728, %v7171, 0
      %v7260 = vsel %vm728, %v7172, 0
      %v7263 = vsel %vm728, %v7173, 0
      %v7266 = vsel %vm728, %v7174, 0
      %v7269 = vsel %vm728, %v7175, 0
      %v7272 = vsel %vm728, %v7176, 0
      %7274 = vmatprep.subr.mxu0 0.0
      %7275 = vmatpush1.msra.mxu0 %v7177
      %7276 = vmatprep.subr.mxu0 0.0
      %7277 = vmatpush1.msra.mxu0 0.0
      %7278 = vmatprep.subr.mxu0 0.0
      %7279 = vmatpush1.msra.mxu0 0.0
      %7280 = vmatprep.subr.mxu0 0.0
      %7281 = vmatpush1.msra.mxu0 0.0
      %7282 = vmatprep.subr.mxu0 0.0
      %7283 = vmatpush1.msra.mxu0 0.0
      %7284 = vmatprep.subr.mxu0 0.0
      %7285 = vmatpush1.msra.mxu0 0.0
      %7286 = vmatprep.subr.mxu0 0.0
      %7287 = vmatpush1.msra.mxu0 0.0
      %7288 = vmatprep.subr.mxu0 0.0
      %7289 = vmatpush1.msra.mxu0 0.0
      %7290 = vmatprep.subr.mxu0 0.0
      %7291 = vmatpush1.msra.mxu0 0.0
      %7292 = vmatprep.subr.mxu0 0.0
      %7293 = vmatpush1.msra.mxu0 0.0
      %7294 = vmatprep.subr.mxu0 0.0
      %7295 = vmatpush1.msra.mxu0 0.0
      %7296 = vmatprep.subr.mxu0 0.0
      %7297 = vmatpush1.msra.mxu0 0.0
      %7298 = vmatprep.subr.mxu0 0.0
      %7299 = vmatpush1.msra.mxu0 0.0
      %7300 = vmatprep.subr.mxu0 0.0
      %7301 = vmatpush1.msra.mxu0 0.0
      %7302 = vmatprep.subr.mxu0 0.0
      %7303 = vmatpush1.msra.mxu0 0.0
      %7304 = vmatprep.subr.mxu0 0.0
      %7305 = vmatpush1.msra.mxu0 0.0
      %7306 = vmatprep.subr.mxu0 0.0
      %7307 = vmatpush1.msra.mxu0 0.0
      %7308 = vmatprep.subr.mxu0 0.0
      %7309 = vmatpush1.msra.mxu0 0.0
      %7310 = vmatprep.subr.mxu0 0.0
      %7311 = vmatpush1.msra.mxu0 0.0
      %7312 = vmatprep.subr.mxu0 0.0
      %7313 = vmatpush1.msra.mxu0 0.0
      %7314 = vmatprep.subr.mxu0 0.0
      %7315 = vmatpush1.msra.mxu0 0.0
      %7316 = vmatprep.subr.mxu0 0.0
      %7317 = vmatpush1.msra.mxu0 0.0
      %7318 = vmatprep.subr.mxu0 0.0
      %7319 = vmatpush1.msra.mxu0 0.0
      %7320 = vmatprep.subr.mxu0 0.0
      %7321 = vmatpush1.msra.mxu0 0.0
      %7322 = vmatprep.subr.mxu0 0.0
      %7323 = vmatpush1.msra.mxu0 0.0
      %7324 = vmatprep.subr.mxu0 0.0
      %7325 = vmatpush1.msra.mxu0 0.0
      %7326 = vmatprep.subr.mxu0 0.0
      %7327 = vmatpush1.msra.mxu0 0.0
      %7328 = vmatprep.subr.mxu0 0.0
      %7329 = vmatpush1.msra.mxu0 0.0
      %7330 = vmatprep.subr.mxu0 0.0
      %7331 = vmatpush1.msra.mxu0 0.0
      %7332 = vmatprep.subr.mxu0 0.0
      %7333 = vmatpush1.msra.mxu0 0.0
      %7334 = vmatprep.subr.mxu0 0.0
      %7335 = vmatpush1.msra.mxu0 0.0
      %7336 = vmatprep.subr.mxu0 0.0
      %7337 = vmatpush1.msra.mxu0 0.0
      %7338 = vmatprep.mubr.f32.mxu0 0.0
      %7339 = vmatmul.mubr.f32.gmra.mrb[0].mxu0 %v7179
      %v7340 = vpop.f32.mrb[0].mxu0
      %v7341 = vadd.f32 0.0, %v7340
      %v7342 = vpop.f32.mrb[0].mxu0
      %7343 = vmatprep.mubr.f32.mxu0 0.0
      %7344 = vmatmul.mubr.f32.gmra.mrb[0].mxu0 %v7182
      %v7345 = vpop.f32.mrb[0].mxu0
      %v7346 = vadd.f32 0.0, %v7345
      %v7347 = vpop.f32.mrb[0].mxu0
      %7348 = vmatprep.mubr.f32.mxu0 0.0
      %7349 = vmatmul.mubr.f32.gmra.mrb[0].mxu0 %v7185
      %v7350 = vpop.f32.mrb[0].mxu0
      %v7351 = vadd.f32 0.0, %v7350
      %v7352 = vpop.f32.mrb[0].mxu0
      %7353 = vmatprep.mubr.f32.mxu0 0.0
      %7354 = vmatmul.mubr.f32.gmra.mrb[0].mxu0 %v7188
      %v7355 = vpop.f32.mrb[0].mxu0
      %v7356 = vadd.f32 0.0, %v7355
      %v7357 = vpop.f32.mrb[0].mxu0
      %7358 = vmatprep.mubr.f32.mxu0 0.0
      %7359 = vmatmul.mubr.f32.gmra.mrb[0].mxu0 %v7191
      %v7360 = vpop.f32.mrb[0].mxu0
      %v7361 = vadd.f32 0.0, %v7360
      %v7362 = vpop.f32.mrb[0].mxu0
      %7363 = vmatprep.mubr.f32.mxu0 0.0
      %7364 = vmatmul.mubr.f32.gmra.mrb[0].mxu0 %v7194
      %v7365 = vpop.f32.mrb[0].mxu0
      %v7366 = vadd.f32 0.0, %v7365
      %v7367 = vpop.f32.mrb[0].mxu0
      %7368 = vmatprep.mubr.f32.mxu0 0.0
      %7369 = vmatmul.mubr.f32.gmra.mrb[0].mxu0 %v7197
      %v7370 = vpop.f32.mrb[0].mxu0
      %v7371 = vadd.f32 0.0, %v7370
      %v7372 = vpop.f32.mrb[0].mxu0
      %7373 = vmatprep.mubr.f32.mxu0 0.0
      %7374 = vmatmul.mubr.f32.gmra.mrb[0].mxu0 %v7200
      %v7375 = vpop.f32.mrb[0].mxu0
      %v7376 = vadd.f32 0.0, %v7375
      %v7377 = vpop.f32.mrb[0].mxu0
      %7378 = vmatprep.mubr.f32.mxu0 0.0
      %7379 = vmatmul.mubr.f32.gmra.mrb[0].mxu0 %v7203
      %v7380 = vpop.f32.mrb[0].mxu0
      %v7381 = vadd.f32 0.0, %v7380
      %v7382 = vpop.f32.mrb[0].mxu0
      %7383 = vmatprep.mubr.f32.mxu0 0.0
      %7384 = vmatmul.mubr.f32.gmra.mrb[0].mxu0 %v7206
      %v7385 = vpop.f32.mrb[0].mxu0
      %v7386 = vadd.f32 0.0, %v7385
      %v7387 = vpop.f32.mrb[0].mxu0
      %7388 = vmatprep.mubr.f32.mxu0 0.0
      %7389 = vmatmul.mubr.f32.gmra.mrb[0].mxu0 %v7209
      %v7390 = vpop.f32.mrb[0].mxu0
      %v7391 = vadd.f32 0.0, %v7390
      %v7392 = vpop.f32.mrb[0].mxu0
      %7393 = vmatprep.mubr.f32.mxu0 0.0
      %7394 = vmatmul.mubr.f32.gmra.mrb[0].mxu0 %v7212
      %v7395 = vpop.f32.mrb[0].mxu0
      %v7396 = vadd.f32 0.0, %v7395
      %v7397 = vpop.f32.mrb[0].mxu0
      %7398 = vmatprep.mubr.f32.mxu0 0.0
      %7399 = vmatmul.mubr.f32.gmra.mrb[0].mxu0 %v7215
      %v7400 = vpop.f32.mrb[0].mxu0
      %v7401 = vadd.f32 0.0, %v7400
      %v7402 = vpop.f32.mrb[0].mxu0
      %7403 = vmatprep.mubr.f32.mxu0 0.0
      %7404 = vmatmul.mubr.f32.gmra.mrb[0].mxu0 %v7218
      %v7405 = vpop.f32.mrb[0].mxu0
      %v7406 = vadd.f32 0.0, %v7405
      %v7407 = vpop.f32.mrb[0].mxu0
      %7408 = vmatprep.mubr.f32.mxu0 0.0
      %7409 = vmatmul.mubr.f32.gmra.mrb[0].mxu0 %v7221
      %v7410 = vpop.f32.mrb[0].mxu0
      %v7411 = vadd.f32 0.0, %v7410
      %v7412 = vpop.f32.mrb[0].mxu0
      %7413 = vmatprep.mubr.f32.mxu0 0.0
      %7414 = vmatmul.mubr.f32.gmra.mrb[0].mxu0 %v7224
      %v7415 = vpop.f32.mrb[0].mxu0
      %v7416 = vadd.f32 0.0, %v7415
      %v7417 = vpop.f32.mrb[0].mxu0
      %7418 = vmatprep.mubr.f32.mxu0 0.0
      %7419 = vmatmul.mubr.f32.gmra.mrb[0].mxu0 %v7227
      %v7420 = vpop.f32.mrb[0].mxu0
      %v7421 = vadd.f32 0.0, %v7420
      %v7422 = vpop.f32.mrb[0].mxu0
      %7423 = vmatprep.mubr.f32.mxu0 0.0
      %7424 = vmatmul.mubr.f32.gmra.mrb[0].mxu0 %v7230
      %v7425 = vpop.f32.mrb[0].mxu0
      %v7426 = vadd.f32 0.0, %v7425
      %v7427 = vpop.f32.mrb[0].mxu0
      %7428 = vmatprep.mubr.f32.mxu0 0.0
      %7429 = vmatmul.mubr.f32.gmra.mrb[0].mxu0 %v7233
      %v7430 = vpop.f32.mrb[0].mxu0
      %v7431 = vadd.f32 0.0, %v7430
      %v7432 = vpop.f32.mrb[0].mxu0
      %7433 = vmatprep.mubr.f32.mxu0 0.0
      %7434 = vmatmul.mubr.f32.gmra.mrb[0].mxu0 %v7236
      %v7435 = vpop.f32.mrb[0].mxu0
      %v7436 = vadd.f32 0.0, %v7435
      %v7437 = vpop.f32.mrb[0].mxu0
      %7438 = vmatprep.mubr.f32.mxu0 0.0
      %7439 = vmatmul.mubr.f32.gmra.mrb[0].mxu0 %v7239
      %v7440 = vpop.f32.mrb[0].mxu0
      %v7441 = vadd.f32 0.0, %v7440
      %v7442 = vpop.f32.mrb[0].mxu0
      %7443 = vmatprep.mubr.f32.mxu0 0.0
      %7444 = vmatmul.mubr.f32.gmra.mrb[0].mxu0 %v7242
      %v7445 = vpop.f32.mrb[0].mxu0
      %v7446 = vadd.f32 0.0, %v7445
      %v7447 = vpop.f32.mrb[0].mxu0
      %7448 = vmatprep.mubr.f32.mxu0 0.0
      %7449 = vmatmul.mubr.f32.gmra.mrb[0].mxu0 %v7245
      %v7450 = vpop.f32.mrb[0].mxu0
      %v7451 = vadd.f32 0.0, %v7450
      %v7452 = vpop.f32.mrb[0].mxu0
      %7453 = vmatprep.mubr.f32.mxu0 0.0
      %7454 = vmatmul.mubr.f32.gmra.mrb[0].mxu0 %v7248
      %v7455 = vpop.f32.mrb[0].mxu0
      %v7456 = vadd.f32 0.0, %v7455
      %v7457 = vpop.f32.mrb[0].mxu0
      %7458 = vmatprep.mubr.f32.mxu0 0.0
      %7459 = vmatmul.mubr.f32.gmra.mrb[0].mxu0 %v7251
      %v7460 = vpop.f32.mrb[0].mxu0
      %v7461 = vadd.f32 0.0, %v7460
      %v7462 = vpop.f32.mrb[0].mxu0
      %7463 = vmatprep.mubr.f32.mxu0 0.0
      %7464 = vmatmul.mubr.f32.gmra.mrb[0].mxu0 %v7254
      %v7465 = vpop.f32.mrb[0].mxu0
      %v7466 = vadd.f32 0.0, %v7465
      %v7467 = vpop.f32.mrb[0].mxu0
      %7468 = vmatprep.mubr.f32.mxu0 0.0
      %7469 = vmatmul.mubr.f32.gmra.mrb[0].mxu0 %v7257
      %v7470 = vpop.f32.mrb[0].mxu0
      %v7471 = vadd.f32 0.0, %v7470
      %v7472 = vpop.f32.mrb[0].mxu0
      %7473 = vmatprep.mubr.f32.mxu0 0.0
      %7474 = vmatmul.mubr.f32.gmra.mrb[0].mxu0 %v7260
      %v7475 = vpop.f32.mrb[0].mxu0
      %v7476 = vadd.f32 0.0, %v7475
      %v7477 = vpop.f32.mrb[0].mxu0
      %7478 = vmatprep.mubr.f32.mxu0 0.0
      %7479 = vmatmul.mubr.f32.gmra.mrb[0].mxu0 %v7263
      %v7480 = vpop.f32.mrb[0].mxu0
      %v7481 = vadd.f32 0.0, %v7480
      %v7482 = vpop.f32.mrb[0].mxu0
      %7483 = vmatprep.mubr.f32.mxu0 0.0
      %7484 = vmatmul.mubr.f32.gmra.mrb[0].mxu0 %v7266
      %v7485 = vpop.f32.mrb[0].mxu0
      %v7486 = vadd.f32 0.0, %v7485
      %v7487 = vpop.f32.mrb[0].mxu0
      %7488 = vmatprep.mubr.f32.mxu0 0.0
      %7489 = vmatmul.mubr.f32.gmra.mrb[0].mxu0 %v7269
      %v7490 = vpop.f32.mrb[0].mxu0
      %v7491 = vadd.f32 0.0, %v7490
      %v7492 = vpop.f32.mrb[0].mxu0
      %7493 = vmatprep.mubr.f32.mxu0 0.0
      %7494 = vmatmul.mubr.f32.gmra.mrb[0].mxu0 %v7272
      %v7495 = vpop.f32.mrb[0].mxu0
      %v7496 = vadd.f32 0.0, %v7495
      %v7497 = vpop.f32.mrb[0].mxu0
      %7498 = vdwg.mxu0
      %v7499 = vld [vmem:[#allocation3] sm:$0xff]
      %v7500 = vld [vmem:[#allocation3 + $0x8] sm:$0xff]
      %v7501 = vld [vmem:[#allocation3 + $0x10] sm:$0xff]
      %v7502 = vld [vmem:[#allocation3 + $0x18] sm:$0xff]
      %v7503 = vld [vmem:[#allocation3 + $0x20] sm:$0xff]
      %v7504 = vld [vmem:[#allocation3 + $0x28] sm:$0xff]
      %v7505 = vld [vmem:[#allocation3 + $0x30] sm:$0xff]
      %v7506 = vld [vmem:[#allocation3 + $0x38] sm:$0xff]
      %v7507 = vld [vmem:[#allocation3 + $0x40] sm:$0xff]
      %v7508 = vld [vmem:[#allocation3 + $0x48] sm:$0xff]
      %v7509 = vld [vmem:[#allocation3 + $0x50] sm:$0xff]
      %v7510 = vld [vmem:[#allocation3 + $0x58] sm:$0xff]
      %v7511 = vld [vmem:[#allocation3 + $0x60] sm:$0xff]
      %v7512 = vld [vmem:[#allocation3 + $0x68] sm:$0xff]
      %v7513 = vld [vmem:[#allocation3 + $0x70] sm:$0xff]
      %v7514 = vld [vmem:[#allocation3 + $0x78] sm:$0xff]
      %v7515 = vld [vmem:[#allocation3 + $0x80] sm:$0xff]
      %v7516 = vld [vmem:[#allocation3 + $0x88] sm:$0xff]
      %v7517 = vld [vmem:[#allocation3 + $0x90] sm:$0xff]
      %v7518 = vld [vmem:[#allocation3 + $0x98] sm:$0xff]
      %v7519 = vld [vmem:[#allocation3 + $0xa0] sm:$0xff]
      %v7520 = vld [vmem:[#allocation3 + $0xa8] sm:$0xff]
      %v7521 = vld [vmem:[#allocation3 + $0xb0] sm:$0xff]
      %v7522 = vld [vmem:[#allocation3 + $0xb8] sm:$0xff]
      %v7523 = vld [vmem:[#allocation3 + $0xc0] sm:$0xff]
      %v7524 = vld [vmem:[#allocation3 + $0xc8] sm:$0xff]
      %v7525 = vld [vmem:[#allocation3 + $0xd0] sm:$0xff]
      %v7526 = vld [vmem:[#allocation3 + $0xd8] sm:$0xff]
      %v7527 = vld [vmem:[#allocation3 + $0xe0] sm:$0xff]
      %v7528 = vld [vmem:[#allocation3 + $0xe8] sm:$0xff]
      %v7529 = vld [vmem:[#allocation3 + $0xf0] sm:$0xff]
      %v7530 = vld [vmem:[#allocation3 + $0xf8] sm:$0xff]
      %v7531 = vadd.f32 %v7499, %v7341
      %v7532 = vadd.f32 %v7500, %v7346
      %v7533 = vadd.f32 %v7501, %v7351
      %v7534 = vadd.f32 %v7502, %v7356
      %v7535 = vadd.f32 %v7503, %v7361
      %v7536 = vadd.f32 %v7504, %v7366
      %v7537 = vadd.f32 %v7505, %v7371
      %v7538 = vadd.f32 %v7506, %v7376
      %v7539 = vadd.f32 %v7507, %v7381
      %v7540 = vadd.f32 %v7508, %v7386
      %v7541 = vadd.f32 %v7509, %v7391
      %v7542 = vadd.f32 %v7510, %v7396
      %v7543 = vadd.f32 %v7511, %v7401
      %v7544 = vadd.f32 %v7512, %v7406
      %v7545 = vadd.f32 %v7513, %v7411
      %v7546 = vadd.f32 %v7514, %v7416
      %v7547 = vadd.f32 %v7515, %v7421
      %v7548 = vadd.f32 %v7516, %v7426
      %v7549 = vadd.f32 %v7517, %v7431
      %v7550 = vadd.f32 %v7518, %v7436
      %v7551 = vadd.f32 %v7519, %v7441
      %v7552 = vadd.f32 %v7520, %v7446
      %v7553 = vadd.f32 %v7521, %v7451
      %v7554 = vadd.f32 %v7522, %v7456
      %v7555 = vadd.f32 %v7523, %v7461
      %v7556 = vadd.f32 %v7524, %v7466
      %v7557 = vadd.f32 %v7525, %v7471
      %v7558 = vadd.f32 %v7526, %v7476
      %v7559 = vadd.f32 %v7527, %v7481
      %v7560 = vadd.f32 %v7528, %v7486
      %v7561 = vadd.f32 %v7529, %v7491
      %v7562 = vadd.f32 %v7530, %v7496
      %7563 = vst.msk [vmem:[#allocation3] sm:$0xff] %vm728, %v7531
      %7564 = vst.msk [vmem:[#allocation3 + $0x8] sm:$0xff] %vm728, %v7532
      %7565 = vst.msk [vmem:[#allocation3 + $0x10] sm:$0xff] %vm728, %v7533
      %7566 = vst.msk [vmem:[#allocation3 + $0x18] sm:$0xff] %vm728, %v7534
      %7567 = vst.msk [vmem:[#allocation3 + $0x20] sm:$0xff] %vm728, %v7535
      %7568 = vst.msk [vmem:[#allocation3 + $0x28] sm:$0xff] %vm728, %v7536
      %7569 = vst.msk [vmem:[#allocation3 + $0x30] sm:$0xff] %vm728, %v7537
      %7570 = vst.msk [vmem:[#allocation3 + $0x38] sm:$0xff] %vm728, %v7538
      %7571 = vst.msk [vmem:[#allocation3 + $0x40] sm:$0xff] %vm728, %v7539
      %7572 = vst.msk [vmem:[#allocation3 + $0x48] sm:$0xff] %vm728, %v7540
      %7573 = vst.msk [vmem:[#allocation3 + $0x50] sm:$0xff] %vm728, %v7541
      %7574 = vst.msk [vmem:[#allocation3 + $0x58] sm:$0xff] %vm728, %v7542
      %7575 = vst.msk [vmem:[#allocation3 + $0x60] sm:$0xff] %vm728, %v7543
      %7576 = vst.msk [vmem:[#allocation3 + $0x68] sm:$0xff] %vm728, %v7544
      %7577 = vst.msk [vmem:[#allocation3 + $0x70] sm:$0xff] %vm728, %v7545
      %7578 = vst.msk [vmem:[#allocation3 + $0x78] sm:$0xff] %vm728, %v7546
      %7579 = vst.msk [vmem:[#allocation3 + $0x80] sm:$0xff] %vm728, %v7547
      %7580 = vst.msk [vmem:[#allocation3 + $0x88] sm:$0xff] %vm728, %v7548
      %7581 = vst.msk [vmem:[#allocation3 + $0x90] sm:$0xff] %vm728, %v7549
      %7582 = vst.msk [vmem:[#allocation3 + $0x98] sm:$0xff] %vm728, %v7550
      %7583 = vst.msk [vmem:[#allocation3 + $0xa0] sm:$0xff] %vm728, %v7551
      %7584 = vst.msk [vmem:[#allocation3 + $0xa8] sm:$0xff] %vm728, %v7552
      %7585 = vst.msk [vmem:[#allocation3 + $0xb0] sm:$0xff] %vm728, %v7553
      %7586 = vst.msk [vmem:[#allocation3 + $0xb8] sm:$0xff] %vm728, %v7554
      %7587 = vst.msk [vmem:[#allocation3 + $0xc0] sm:$0xff] %vm728, %v7555
      %7588 = vst.msk [vmem:[#allocation3 + $0xc8] sm:$0xff] %vm728, %v7556
      %7589 = vst.msk [vmem:[#allocation3 + $0xd0] sm:$0xff] %vm728, %v7557
      %7590 = vst.msk [vmem:[#allocation3 + $0xd8] sm:$0xff] %vm728, %v7558
      %7591 = vst.msk [vmem:[#allocation3 + $0xe0] sm:$0xff] %vm728, %v7559
      %7592 = vst.msk [vmem:[#allocation3 + $0xe8] sm:$0xff] %vm728, %v7560
      %7593 = vst.msk [vmem:[#allocation3 + $0xf0] sm:$0xff] %vm728, %v7561
      %7594 = vst.msk [vmem:[#allocation3 + $0xf8] sm:$0xff] %vm728, %v7562
      %v7595 = vld [vmem:[#allocation2 + $0x2] sm:$0xff]
      %v7596 = vld [vmem:[#allocation2 + $0xa] sm:$0xff]
      %v7597 = vld [vmem:[#allocation2 + $0x1a] sm:$0xff]
      %v7598 = vld [vmem:[#allocation2 + $0x22] sm:$0xff]
      %v7599 = vld [vmem:[#allocation2 + $0x32] sm:$0xff]
      %v7600 = vld [vmem:[#allocation2 + $0x3a] sm:$0xff]
      %v7601 = vld [vmem:[#allocation2 + $0x4a] sm:$0xff]
      %v7602 = vld [vmem:[#allocation2 + $0x52] sm:$0xff]
      %v7603 = vld [vmem:[#allocation2 + $0x62] sm:$0xff]
      %v7604 = vld [vmem:[#allocation2 + $0x6a] sm:$0xff]
      %v7605 = vld [vmem:[#allocation2 + $0x7a] sm:$0xff]
      %v7606 = vld [vmem:[#allocation2 + $0x82] sm:$0xff]
      %v7607 = vld [vmem:[#allocation2 + $0x92] sm:$0xff]
      %v7608 = vld [vmem:[#allocation2 + $0x9a] sm:$0xff]
      %v7609 = vld [vmem:[#allocation2 + $0xaa] sm:$0xff]
      %v7610 = vld [vmem:[#allocation2 + $0xb2] sm:$0xff]
      %v7611 = vld [vmem:[#allocation2 + $0xc2] sm:$0xff]
      %v7612 = vld [vmem:[#allocation2 + $0xca] sm:$0xff]
      %v7613 = vld [vmem:[#allocation2 + $0xda] sm:$0xff]
      %v7614 = vld [vmem:[#allocation2 + $0xe2] sm:$0xff]
      %v7615 = vld [vmem:[#allocation2 + $0xf2] sm:$0xff]
      %v7616 = vld [vmem:[#allocation2 + $0xfa] sm:$0xff]
      %v7617 = vld [vmem:[#allocation2 + $0x10a] sm:$0xff]
      %v7618 = vld [vmem:[#allocation2 + $0x112] sm:$0xff]
      %v7619 = vld [vmem:[#allocation2 + $0x122] sm:$0xff]
      %v7620 = vld [vmem:[#allocation2 + $0x12a] sm:$0xff]
      %v7621 = vld [vmem:[#allocation2 + $0x13a] sm:$0xff]
      %v7622 = vld [vmem:[#allocation2 + $0x142] sm:$0xff]
      %v7623 = vld [vmem:[#allocation2 + $0x152] sm:$0xff]
      %v7624 = vld [vmem:[#allocation2 + $0x15a] sm:$0xff]
      %v7625 = vld [vmem:[#allocation2 + $0x16a] sm:$0xff]
      %v7626 = vld [vmem:[#allocation2 + $0x172] sm:$0xff]
      %v7627 = vld [vmem:[%s2 + $0x10] sm:$0xff]
      %v7629 = vsel %vm728, %v7595, 0
      %v7632 = vsel %vm728, %v7596, 0
      %v7635 = vsel %vm728, %v7597, 0
      %v7638 = vsel %vm728, %v7598, 0
      %v7641 = vsel %vm728, %v7599, 0
      %v7644 = vsel %vm728, %v7600, 0
      %v7647 = vsel %vm728, %v7601, 0
      %v7650 = vsel %vm728, %v7602, 0
      %v7653 = vsel %vm728, %v7603, 0
      %v7656 = vsel %vm728, %v7604, 0
      %v7659 = vsel %vm728, %v7605, 0
      %v7662 = vsel %vm728, %v7606, 0
      %v7665 = vsel %vm728, %v7607, 0
      %v7668 = vsel %vm728, %v7608, 0
      %v7671 = vsel %vm728, %v7609, 0
      %v7674 = vsel %vm728, %v7610, 0
      %v7677 = vsel %vm728, %v7611, 0
      %v7680 = vsel %vm728, %v7612, 0
      %v7683 = vsel %vm728, %v7613, 0
      %v7686 = vsel %vm728, %v7614, 0
      %v7689 = vsel %vm728, %v7615, 0
      %v7692 = vsel %vm728, %v7616, 0
      %v7695 = vsel %vm728, %v7617, 0
      %v7698 = vsel %vm728, %v7618, 0
      %v7701 = vsel %vm728, %v7619, 0
      %v7704 = vsel %vm728, %v7620, 0
      %v7707 = vsel %vm728, %v7621, 0
      %v7710 = vsel %vm728, %v7622, 0
      %v7713 = vsel %vm728, %v7623, 0
      %v7716 = vsel %vm728, %v7624, 0
      %v7719 = vsel %vm728, %v7625, 0
      %v7722 = vsel %vm728, %v7626, 0
      %7724 = vmatprep.subr.mxu0 0.0
      %7725 = vmatpush1.msra.mxu0 %v7627
      %7726 = vmatprep.subr.mxu0 0.0
      %7727 = vmatpush1.msra.mxu0 0.0
      %7728 = vmatprep.subr.mxu0 0.0
      %7729 = vmatpush1.msra.mxu0 0.0
      %7730 = vmatprep.subr.mxu0 0.0
      %7731 = vmatpush1.msra.mxu0 0.0
      %7732 = vmatprep.subr.mxu0 0.0
      %7733 = vmatpush1.msra.mxu0 0.0
      %7734 = vmatprep.subr.mxu0 0.0
      %7735 = vmatpush1.msra.mxu0 0.0
      %7736 = vmatprep.subr.mxu0 0.0
      %7737 = vmatpush1.msra.mxu0 0.0
      %7738 = vmatprep.subr.mxu0 0.0
      %7739 = vmatpush1.msra.mxu0 0.0
      %7740 = vmatprep.subr.mxu0 0.0
      %7741 = vmatpush1.msra.mxu0 0.0
      %7742 = vmatprep.subr.mxu0 0.0
      %7743 = vmatpush1.msra.mxu0 0.0
      %7744 = vmatprep.subr.mxu0 0.0
      %7745 = vmatpush1.msra.mxu0 0.0
      %7746 = vmatprep.subr.mxu0 0.0
      %7747 = vmatpush1.msra.mxu0 0.0
      %7748 = vmatprep.subr.mxu0 0.0
      %7749 = vmatpush1.msra.mxu0 0.0
      %7750 = vmatprep.subr.mxu0 0.0
      %7751 = vmatpush1.msra.mxu0 0.0
      %7752 = vmatprep.subr.mxu0 0.0
      %7753 = vmatpush1.msra.mxu0 0.0
      %7754 = vmatprep.subr.mxu0 0.0
      %7755 = vmatpush1.msra.mxu0 0.0
      %7756 = vmatprep.subr.mxu0 0.0
      %7757 = vmatpush1.msra.mxu0 0.0
      %7758 = vmatprep.subr.mxu0 0.0
      %7759 = vmatpush1.msra.mxu0 0.0
      %7760 = vmatprep.subr.mxu0 0.0
      %7761 = vmatpush1.msra.mxu0 0.0
      %7762 = vmatprep.subr.mxu0 0.0
      %7763 = vmatpush1.msra.mxu0 0.0
      %7764 = vmatprep.subr.mxu0 0.0
      %7765 = vmatpush1.msra.mxu0 0.0
      %7766 = vmatprep.subr.mxu0 0.0
      %7767 = vmatpush1.msra.mxu0 0.0
      %7768 = vmatprep.subr.mxu0 0.0
      %7769 = vmatpush1.msra.mxu0 0.0
      %7770 = vmatprep.subr.mxu0 0.0
      %7771 = vmatpush1.msra.mxu0 0.0
      %7772 = vmatprep.subr.mxu0 0.0
      %7773 = vmatpush1.msra.mxu0 0.0
      %7774 = vmatprep.subr.mxu0 0.0
      %7775 = vmatpush1.msra.mxu0 0.0
      %7776 = vmatprep.subr.mxu0 0.0
      %7777 = vmatpush1.msra.mxu0 0.0
      %7778 = vmatprep.subr.mxu0 0.0
      %7779 = vmatpush1.msra.mxu0 0.0
      %7780 = vmatprep.subr.mxu0 0.0
      %7781 = vmatpush1.msra.mxu0 0.0
      %7782 = vmatprep.subr.mxu0 0.0
      %7783 = vmatpush1.msra.mxu0 0.0
      %7784 = vmatprep.subr.mxu0 0.0
      %7785 = vmatpush1.msra.mxu0 0.0
      %7786 = vmatprep.subr.mxu0 0.0
      %7787 = vmatpush1.msra.mxu0 0.0
      %7788 = vmatprep.mubr.f32.mxu0 0.0
      %7789 = vmatmul.mubr.f32.gmra.mrb[0].mxu0 %v7629
      %v7790 = vpop.f32.mrb[0].mxu0
      %v7791 = vadd.f32 0.0, %v7790
      %v7792 = vpop.f32.mrb[0].mxu0
      %7793 = vmatprep.mubr.f32.mxu0 0.0
      %7794 = vmatmul.mubr.f32.gmra.mrb[0].mxu0 %v7632
      %v7795 = vpop.f32.mrb[0].mxu0
      %v7796 = vadd.f32 0.0, %v7795
      %v7797 = vpop.f32.mrb[0].mxu0
      %7798 = vmatprep.mubr.f32.mxu0 0.0
      %7799 = vmatmul.mubr.f32.gmra.mrb[0].mxu0 %v7635
      %v7800 = vpop.f32.mrb[0].mxu0
      %v7801 = vadd.f32 0.0, %v7800
      %v7802 = vpop.f32.mrb[0].mxu0
      %7803 = vmatprep.mubr.f32.mxu0 0.0
      %7804 = vmatmul.mubr.f32.gmra.mrb[0].mxu0 %v7638
      %v7805 = vpop.f32.mrb[0].mxu0
      %v7806 = vadd.f32 0.0, %v7805
      %v7807 = vpop.f32.mrb[0].mxu0
      %7808 = vmatprep.mubr.f32.mxu0 0.0
      %7809 = vmatmul.mubr.f32.gmra.mrb[0].mxu0 %v7641
      %v7810 = vpop.f32.mrb[0].mxu0
      %v7811 = vadd.f32 0.0, %v7810
      %v7812 = vpop.f32.mrb[0].mxu0
      %7813 = vmatprep.mubr.f32.mxu0 0.0
      %7814 = vmatmul.mubr.f32.gmra.mrb[0].mxu0 %v7644
      %v7815 = vpop.f32.mrb[0].mxu0
      %v7816 = vadd.f32 0.0, %v7815
      %v7817 = vpop.f32.mrb[0].mxu0
      %7818 = vmatprep.mubr.f32.mxu0 0.0
      %7819 = vmatmul.mubr.f32.gmra.mrb[0].mxu0 %v7647
      %v7820 = vpop.f32.mrb[0].mxu0
      %v7821 = vadd.f32 0.0, %v7820
      %v7822 = vpop.f32.mrb[0].mxu0
      %7823 = vmatprep.mubr.f32.mxu0 0.0
      %7824 = vmatmul.mubr.f32.gmra.mrb[0].mxu0 %v7650
      %v7825 = vpop.f32.mrb[0].mxu0
      %v7826 = vadd.f32 0.0, %v7825
      %v7827 = vpop.f32.mrb[0].mxu0
      %7828 = vmatprep.mubr.f32.mxu0 0.0
      %7829 = vmatmul.mubr.f32.gmra.mrb[0].mxu0 %v7653
      %v7830 = vpop.f32.mrb[0].mxu0
      %v7831 = vadd.f32 0.0, %v7830
      %v7832 = vpop.f32.mrb[0].mxu0
      %7833 = vmatprep.mubr.f32.mxu0 0.0
      %7834 = vmatmul.mubr.f32.gmra.mrb[0].mxu0 %v7656
      %v7835 = vpop.f32.mrb[0].mxu0
      %v7836 = vadd.f32 0.0, %v7835
      %v7837 = vpop.f32.mrb[0].mxu0
      %7838 = vmatprep.mubr.f32.mxu0 0.0
      %7839 = vmatmul.mubr.f32.gmra.mrb[0].mxu0 %v7659
      %v7840 = vpop.f32.mrb[0].mxu0
      %v7841 = vadd.f32 0.0, %v7840
      %v7842 = vpop.f32.mrb[0].mxu0
      %7843 = vmatprep.mubr.f32.mxu0 0.0
      %7844 = vmatmul.mubr.f32.gmra.mrb[0].mxu0 %v7662
      %v7845 = vpop.f32.mrb[0].mxu0
      %v7846 = vadd.f32 0.0, %v7845
      %v7847 = vpop.f32.mrb[0].mxu0
      %7848 = vmatprep.mubr.f32.mxu0 0.0
      %7849 = vmatmul.mubr.f32.gmra.mrb[0].mxu0 %v7665
      %v7850 = vpop.f32.mrb[0].mxu0
      %v7851 = vadd.f32 0.0, %v7850
      %v7852 = vpop.f32.mrb[0].mxu0
      %7853 = vmatprep.mubr.f32.mxu0 0.0
      %7854 = vmatmul.mubr.f32.gmra.mrb[0].mxu0 %v7668
      %v7855 = vpop.f32.mrb[0].mxu0
      %v7856 = vadd.f32 0.0, %v7855
      %v7857 = vpop.f32.mrb[0].mxu0
      %7858 = vmatprep.mubr.f32.mxu0 0.0
      %7859 = vmatmul.mubr.f32.gmra.mrb[0].mxu0 %v7671
      %v7860 = vpop.f32.mrb[0].mxu0
      %v7861 = vadd.f32 0.0, %v7860
      %v7862 = vpop.f32.mrb[0].mxu0
      %7863 = vmatprep.mubr.f32.mxu0 0.0
      %7864 = vmatmul.mubr.f32.gmra.mrb[0].mxu0 %v7674
      %v7865 = vpop.f32.mrb[0].mxu0
      %v7866 = vadd.f32 0.0, %v7865
      %v7867 = vpop.f32.mrb[0].mxu0
      %7868 = vmatprep.mubr.f32.mxu0 0.0
      %7869 = vmatmul.mubr.f32.gmra.mrb[0].mxu0 %v7677
      %v7870 = vpop.f32.mrb[0].mxu0
      %v7871 = vadd.f32 0.0, %v7870
      %v7872 = vpop.f32.mrb[0].mxu0
      %7873 = vmatprep.mubr.f32.mxu0 0.0
      %7874 = vmatmul.mubr.f32.gmra.mrb[0].mxu0 %v7680
      %v7875 = vpop.f32.mrb[0].mxu0
      %v7876 = vadd.f32 0.0, %v7875
      %v7877 = vpop.f32.mrb[0].mxu0
      %7878 = vmatprep.mubr.f32.mxu0 0.0
      %7879 = vmatmul.mubr.f32.gmra.mrb[0].mxu0 %v7683
      %v7880 = vpop.f32.mrb[0].mxu0
      %v7881 = vadd.f32 0.0, %v7880
      %v7882 = vpop.f32.mrb[0].mxu0
      %7883 = vmatprep.mubr.f32.mxu0 0.0
      %7884 = vmatmul.mubr.f32.gmra.mrb[0].mxu0 %v7686
      %v7885 = vpop.f32.mrb[0].mxu0
      %v7886 = vadd.f32 0.0, %v7885
      %v7887 = vpop.f32.mrb[0].mxu0
      %7888 = vmatprep.mubr.f32.mxu0 0.0
      %7889 = vmatmul.mubr.f32.gmra.mrb[0].mxu0 %v7689
      %v7890 = vpop.f32.mrb[0].mxu0
      %v7891 = vadd.f32 0.0, %v7890
      %v7892 = vpop.f32.mrb[0].mxu0
      %7893 = vmatprep.mubr.f32.mxu0 0.0
      %7894 = vmatmul.mubr.f32.gmra.mrb[0].mxu0 %v7692
      %v7895 = vpop.f32.mrb[0].mxu0
      %v7896 = vadd.f32 0.0, %v7895
      %v7897 = vpop.f32.mrb[0].mxu0
      %7898 = vmatprep.mubr.f32.mxu0 0.0
      %7899 = vmatmul.mubr.f32.gmra.mrb[0].mxu0 %v7695
      %v7900 = vpop.f32.mrb[0].mxu0
      %v7901 = vadd.f32 0.0, %v7900
      %v7902 = vpop.f32.mrb[0].mxu0
      %7903 = vmatprep.mubr.f32.mxu0 0.0
      %7904 = vmatmul.mubr.f32.gmra.mrb[0].mxu0 %v7698
      %v7905 = vpop.f32.mrb[0].mxu0
      %v7906 = vadd.f32 0.0, %v7905
      %v7907 = vpop.f32.mrb[0].mxu0
      %7908 = vmatprep.mubr.f32.mxu0 0.0
      %7909 = vmatmul.mubr.f32.gmra.mrb[0].mxu0 %v7701
      %v7910 = vpop.f32.mrb[0].mxu0
      %v7911 = vadd.f32 0.0, %v7910
      %v7912 = vpop.f32.mrb[0].mxu0
      %7913 = vmatprep.mubr.f32.mxu0 0.0
      %7914 = vmatmul.mubr.f32.gmra.mrb[0].mxu0 %v7704
      %v7915 = vpop.f32.mrb[0].mxu0
      %v7916 = vadd.f32 0.0, %v7915
      %v7917 = vpop.f32.mrb[0].mxu0
      %7918 = vmatprep.mubr.f32.mxu0 0.0
      %7919 = vmatmul.mubr.f32.gmra.mrb[0].mxu0 %v7707
      %v7920 = vpop.f32.mrb[0].mxu0
      %v7921 = vadd.f32 0.0, %v7920
      %v7922 = vpop.f32.mrb[0].mxu0
      %7923 = vmatprep.mubr.f32.mxu0 0.0
      %7924 = vmatmul.mubr.f32.gmra.mrb[0].mxu0 %v7710
      %v7925 = vpop.f32.mrb[0].mxu0
      %v7926 = vadd.f32 0.0, %v7925
      %v7927 = vpop.f32.mrb[0].mxu0
      %7928 = vmatprep.mubr.f32.mxu0 0.0
      %7929 = vmatmul.mubr.f32.gmra.mrb[0].mxu0 %v7713
      %v7930 = vpop.f32.mrb[0].mxu0
      %v7931 = vadd.f32 0.0, %v7930
      %v7932 = vpop.f32.mrb[0].mxu0
      %7933 = vmatprep.mubr.f32.mxu0 0.0
      %7934 = vmatmul.mubr.f32.gmra.mrb[0].mxu0 %v7716
      %v7935 = vpop.f32.mrb[0].mxu0
      %v7936 = vadd.f32 0.0, %v7935
      %v7937 = vpop.f32.mrb[0].mxu0
      %7938 = vmatprep.mubr.f32.mxu0 0.0
      %7939 = vmatmul.mubr.f32.gmra.mrb[0].mxu0 %v7719
      %v7940 = vpop.f32.mrb[0].mxu0
      %v7941 = vadd.f32 0.0, %v7940
      %v7942 = vpop.f32.mrb[0].mxu0
      %7943 = vmatprep.mubr.f32.mxu0 0.0
      %7944 = vmatmul.mubr.f32.gmra.mrb[0].mxu0 %v7722
      %v7945 = vpop.f32.mrb[0].mxu0
      %v7946 = vadd.f32 0.0, %v7945
      %v7947 = vpop.f32.mrb[0].mxu0
      %7948 = vdwg.mxu0
      %v7949 = vld [vmem:[#allocation3] sm:$0xff]
      %v7950 = vld [vmem:[#allocation3 + $0x8] sm:$0xff]
      %v7951 = vld [vmem:[#allocation3 + $0x10] sm:$0xff]
      %v7952 = vld [vmem:[#allocation3 + $0x18] sm:$0xff]
      %v7953 = vld [vmem:[#allocation3 + $0x20] sm:$0xff]
      %v7954 = vld [vmem:[#allocation3 + $0x28] sm:$0xff]
      %v7955 = vld [vmem:[#allocation3 + $0x30] sm:$0xff]
      %v7956 = vld [vmem:[#allocation3 + $0x38] sm:$0xff]
      %v7957 = vld [vmem:[#allocation3 + $0x40] sm:$0xff]
      %v7958 = vld [vmem:[#allocation3 + $0x48] sm:$0xff]
      %v7959 = vld [vmem:[#allocation3 + $0x50] sm:$0xff]
      %v7960 = vld [vmem:[#allocation3 + $0x58] sm:$0xff]
      %v7961 = vld [vmem:[#allocation3 + $0x60] sm:$0xff]
      %v7962 = vld [vmem:[#allocation3 + $0x68] sm:$0xff]
      %v7963 = vld [vmem:[#allocation3 + $0x70] sm:$0xff]
      %v7964 = vld [vmem:[#allocation3 + $0x78] sm:$0xff]
      %v7965 = vld [vmem:[#allocation3 + $0x80] sm:$0xff]
      %v7966 = vld [vmem:[#allocation3 + $0x88] sm:$0xff]
      %v7967 = vld [vmem:[#allocation3 + $0x90] sm:$0xff]
      %v7968 = vld [vmem:[#allocation3 + $0x98] sm:$0xff]
      %v7969 = vld [vmem:[#allocation3 + $0xa0] sm:$0xff]
      %v7970 = vld [vmem:[#allocation3 + $0xa8] sm:$0xff]
      %v7971 = vld [vmem:[#allocation3 + $0xb0] sm:$0xff]
      %v7972 = vld [vmem:[#allocation3 + $0xb8] sm:$0xff]
      %v7973 = vld [vmem:[#allocation3 + $0xc0] sm:$0xff]
      %v7974 = vld [vmem:[#allocation3 + $0xc8] sm:$0xff]
      %v7975 = vld [vmem:[#allocation3 + $0xd0] sm:$0xff]
      %v7976 = vld [vmem:[#allocation3 + $0xd8] sm:$0xff]
      %v7977 = vld [vmem:[#allocation3 + $0xe0] sm:$0xff]
      %v7978 = vld [vmem:[#allocation3 + $0xe8] sm:$0xff]
      %v7979 = vld [vmem:[#allocation3 + $0xf0] sm:$0xff]
      %v7980 = vld [vmem:[#allocation3 + $0xf8] sm:$0xff]
      %v7981 = vadd.f32 %v7949, %v7791
      %v7982 = vadd.f32 %v7950, %v7796
      %v7983 = vadd.f32 %v7951, %v7801
      %v7984 = vadd.f32 %v7952, %v7806
      %v7985 = vadd.f32 %v7953, %v7811
      %v7986 = vadd.f32 %v7954, %v7816
      %v7987 = vadd.f32 %v7955, %v7821
      %v7988 = vadd.f32 %v7956, %v7826
      %v7989 = vadd.f32 %v7957, %v7831
      %v7990 = vadd.f32 %v7958, %v7836
      %v7991 = vadd.f32 %v7959, %v7841
      %v7992 = vadd.f32 %v7960, %v7846
      %v7993 = vadd.f32 %v7961, %v7851
      %v7994 = vadd.f32 %v7962, %v7856
      %v7995 = vadd.f32 %v7963, %v7861
      %v7996 = vadd.f32 %v7964, %v7866
      %v7997 = vadd.f32 %v7965, %v7871
      %v7998 = vadd.f32 %v7966, %v7876
      %v7999 = vadd.f32 %v7967, %v7881
      %v8000 = vadd.f32 %v7968, %v7886
      %v8001 = vadd.f32 %v7969, %v7891
      %v8002 = vadd.f32 %v7970, %v7896
      %v8003 = vadd.f32 %v7971, %v7901
      %v8004 = vadd.f32 %v7972, %v7906
      %v8005 = vadd.f32 %v7973, %v7911
      %v8006 = vadd.f32 %v7974, %v7916
      %v8007 = vadd.f32 %v7975, %v7921
      %v8008 = vadd.f32 %v7976, %v7926
      %v8009 = vadd.f32 %v7977, %v7931
      %v8010 = vadd.f32 %v7978, %v7936
      %v8011 = vadd.f32 %v7979, %v7941
      %v8012 = vadd.f32 %v7980, %v7946
      %8013 = vst.msk [vmem:[#allocation3] sm:$0xff] %vm728, %v7981
      %8014 = vst.msk [vmem:[#allocation3 + $0x8] sm:$0xff] %vm728, %v7982
      %8015 = vst.msk [vmem:[#allocation3 + $0x10] sm:$0xff] %vm728, %v7983
      %8016 = vst.msk [vmem:[#allocation3 + $0x18] sm:$0xff] %vm728, %v7984
      %8017 = vst.msk [vmem:[#allocation3 + $0x20] sm:$0xff] %vm728, %v7985
      %8018 = vst.msk [vmem:[#allocation3 + $0x28] sm:$0xff] %vm728, %v7986
      %8019 = vst.msk [vmem:[#allocation3 + $0x30] sm:$0xff] %vm728, %v7987
      %8020 = vst.msk [vmem:[#allocation3 + $0x38] sm:$0xff] %vm728, %v7988
      %8021 = vst.msk [vmem:[#allocation3 + $0x40] sm:$0xff] %vm728, %v7989
      %8022 = vst.msk [vmem:[#allocation3 + $0x48] sm:$0xff] %vm728, %v7990
      %8023 = vst.msk [vmem:[#allocation3 + $0x50] sm:$0xff] %vm728, %v7991
      %8024 = vst.msk [vmem:[#allocation3 + $0x58] sm:$0xff] %vm728, %v7992
      %8025 = vst.msk [vmem:[#allocation3 + $0x60] sm:$0xff] %vm728, %v7993
      %8026 = vst.msk [vmem:[#allocation3 + $0x68] sm:$0xff] %vm728, %v7994
      %8027 = vst.msk [vmem:[#allocation3 + $0x70] sm:$0xff] %vm728, %v7995
      %8028 = vst.msk [vmem:[#allocation3 + $0x78] sm:$0xff] %vm728, %v7996
      %8029 = vst.msk [vmem:[#allocation3 + $0x80] sm:$0xff] %vm728, %v7997
      %8030 = vst.msk [vmem:[#allocation3 + $0x88] sm:$0xff] %vm728, %v7998
      %8031 = vst.msk [vmem:[#allocation3 + $0x90] sm:$0xff] %vm728, %v7999
      %8032 = vst.msk [vmem:[#allocation3 + $0x98] sm:$0xff] %vm728, %v8000
      %8033 = vst.msk [vmem:[#allocation3 + $0xa0] sm:$0xff] %vm728, %v8001
      %8034 = vst.msk [vmem:[#allocation3 + $0xa8] sm:$0xff] %vm728, %v8002
      %8035 = vst.msk [vmem:[#allocation3 + $0xb0] sm:$0xff] %vm728, %v8003
      %8036 = vst.msk [vmem:[#allocation3 + $0xb8] sm:$0xff] %vm728, %v8004
      %8037 = vst.msk [vmem:[#allocation3 + $0xc0] sm:$0xff] %vm728, %v8005
      %8038 = vst.msk [vmem:[#allocation3 + $0xc8] sm:$0xff] %vm728, %v8006
      %8039 = vst.msk [vmem:[#allocation3 + $0xd0] sm:$0xff] %vm728, %v8007
      %8040 = vst.msk [vmem:[#allocation3 + $0xd8] sm:$0xff] %vm728, %v8008
      %8041 = vst.msk [vmem:[#allocation3 + $0xe0] sm:$0xff] %vm728, %v8009
      %8042 = vst.msk [vmem:[#allocation3 + $0xe8] sm:$0xff] %vm728, %v8010
      %8043 = vst.msk [vmem:[#allocation3 + $0xf0] sm:$0xff] %vm728, %v8011
      %8044 = vst.msk [vmem:[#allocation3 + $0xf8] sm:$0xff] %vm728, %v8012
      %s8045 = scalar_lea.vmem [#allocation2], 24
      %v8046 = vld [vmem:[%s8045] sm:$0xff]
      %v8047 = vld [vmem:[%s8045 + $0x8] sm:$0xff]
      %v8048 = vld [vmem:[%s8045 + $0x18] sm:$0xff]
      %v8049 = vld [vmem:[%s8045 + $0x20] sm:$0xff]
      %v8050 = vld [vmem:[%s8045 + $0x30] sm:$0xff]
      %v8051 = vld [vmem:[%s8045 + $0x38] sm:$0xff]
      %v8052 = vld [vmem:[%s8045 + $0x48] sm:$0xff]
      %v8053 = vld [vmem:[%s8045 + $0x50] sm:$0xff]
      %v8054 = vld [vmem:[%s8045 + $0x60] sm:$0xff]
      %v8055 = vld [vmem:[%s8045 + $0x68] sm:$0xff]
      %v8056 = vld [vmem:[%s8045 + $0x78] sm:$0xff]
      %v8057 = vld [vmem:[%s8045 + $0x80] sm:$0xff]
      %v8058 = vld [vmem:[%s8045 + $0x90] sm:$0xff]
      %v8059 = vld [vmem:[%s8045 + $0x98] sm:$0xff]
      %v8060 = vld [vmem:[%s8045 + $0xa8] sm:$0xff]
      %v8061 = vld [vmem:[%s8045 + $0xb0] sm:$0xff]
      %v8062 = vld [vmem:[%s8045 + $0xc0] sm:$0xff]
      %v8063 = vld [vmem:[%s8045 + $0xc8] sm:$0xff]
      %v8064 = vld [vmem:[%s8045 + $0xd8] sm:$0xff]
      %v8065 = vld [vmem:[%s8045 + $0xe0] sm:$0xff]
      %v8066 = vld [vmem:[%s8045 + $0xf0] sm:$0xff]
      %v8067 = vld [vmem:[%s8045 + $0xf8] sm:$0xff]
      %v8068 = vld [vmem:[%s8045 + $0x108] sm:$0xff]
      %v8069 = vld [vmem:[%s8045 + $0x110] sm:$0xff]
      %v8070 = vld [vmem:[%s8045 + $0x120] sm:$0xff]
      %v8071 = vld [vmem:[%s8045 + $0x128] sm:$0xff]
      %v8072 = vld [vmem:[%s8045 + $0x138] sm:$0xff]
      %v8073 = vld [vmem:[%s8045 + $0x140] sm:$0xff]
      %v8074 = vld [vmem:[%s8045 + $0x150] sm:$0xff]
      %v8075 = vld [vmem:[%s8045 + $0x158] sm:$0xff]
      %v8076 = vld [vmem:[%s8045 + $0x168] sm:$0xff]
      %v8077 = vld [vmem:[%s8045 + $0x170] sm:$0xff]
      %v8078 = vld [vmem:[%s2 + $0x18] sm:$0xff]
      %v8080 = vsel %vm728, %v8046, 0
      %v8083 = vsel %vm728, %v8047, 0
      %v8086 = vsel %vm728, %v8048, 0
      %v8089 = vsel %vm728, %v8049, 0
      %v8092 = vsel %vm728, %v8050, 0
      %v8095 = vsel %vm728, %v8051, 0
      %v8098 = vsel %vm728, %v8052, 0
      %v8101 = vsel %vm728, %v8053, 0
      %v8104 = vsel %vm728, %v8054, 0
      %v8107 = vsel %vm728, %v8055, 0
      %v8110 = vsel %vm728, %v8056, 0
      %v8113 = vsel %vm728, %v8057, 0
      %v8116 = vsel %vm728, %v8058, 0
      %v8119 = vsel %vm728, %v8059, 0
      %v8122 = vsel %vm728, %v8060, 0
      %v8125 = vsel %vm728, %v8061, 0
      %v8128 = vsel %vm728, %v8062, 0
      %v8131 = vsel %vm728, %v8063, 0
      %v8134 = vsel %vm728, %v8064, 0
      %v8137 = vsel %vm728, %v8065, 0
      %v8140 = vsel %vm728, %v8066, 0
      %v8143 = vsel %vm728, %v8067, 0
      %v8146 = vsel %vm728, %v8068, 0
      %v8149 = vsel %vm728, %v8069, 0
      %v8152 = vsel %vm728, %v8070, 0
      %v8155 = vsel %vm728, %v8071, 0
      %v8158 = vsel %vm728, %v8072, 0
      %v8161 = vsel %vm728, %v8073, 0
      %v8164 = vsel %vm728, %v8074, 0
      %v8167 = vsel %vm728, %v8075, 0
      %v8170 = vsel %vm728, %v8076, 0
      %v8173 = vsel %vm728, %v8077, 0
      %8175 = vmatprep.subr.mxu0 0.0
      %8176 = vmatpush1.msra.mxu0 %v8078
      %8177 = vmatprep.subr.mxu0 0.0
      %8178 = vmatpush1.msra.mxu0 0.0
      %8179 = vmatprep.subr.mxu0 0.0
      %8180 = vmatpush1.msra.mxu0 0.0
      %8181 = vmatprep.subr.mxu0 0.0
      %8182 = vmatpush1.msra.mxu0 0.0
      %8183 = vmatprep.subr.mxu0 0.0
      %8184 = vmatpush1.msra.mxu0 0.0
      %8185 = vmatprep.subr.mxu0 0.0
      %8186 = vmatpush1.msra.mxu0 0.0
      %8187 = vmatprep.subr.mxu0 0.0
      %8188 = vmatpush1.msra.mxu0 0.0
      %8189 = vmatprep.subr.mxu0 0.0
      %8190 = vmatpush1.msra.mxu0 0.0
      %8191 = vmatprep.subr.mxu0 0.0
      %8192 = vmatpush1.msra.mxu0 0.0
      %8193 = vmatprep.subr.mxu0 0.0
      %8194 = vmatpush1.msra.mxu0 0.0
      %8195 = vmatprep.subr.mxu0 0.0
      %8196 = vmatpush1.msra.mxu0 0.0
      %8197 = vmatprep.subr.mxu0 0.0
      %8198 = vmatpush1.msra.mxu0 0.0
      %8199 = vmatprep.subr.mxu0 0.0
      %8200 = vmatpush1.msra.mxu0 0.0
      %8201 = vmatprep.subr.mxu0 0.0
      %8202 = vmatpush1.msra.mxu0 0.0
      %8203 = vmatprep.subr.mxu0 0.0
      %8204 = vmatpush1.msra.mxu0 0.0
      %8205 = vmatprep.subr.mxu0 0.0
      %8206 = vmatpush1.msra.mxu0 0.0
      %8207 = vmatprep.subr.mxu0 0.0
      %8208 = vmatpush1.msra.mxu0 0.0
      %8209 = vmatprep.subr.mxu0 0.0
      %8210 = vmatpush1.msra.mxu0 0.0
      %8211 = vmatprep.subr.mxu0 0.0
      %8212 = vmatpush1.msra.mxu0 0.0
      %8213 = vmatprep.subr.mxu0 0.0
      %8214 = vmatpush1.msra.mxu0 0.0
      %8215 = vmatprep.subr.mxu0 0.0
      %8216 = vmatpush1.msra.mxu0 0.0
      %8217 = vmatprep.subr.mxu0 0.0
      %8218 = vmatpush1.msra.mxu0 0.0
      %8219 = vmatprep.subr.mxu0 0.0
      %8220 = vmatpush1.msra.mxu0 0.0
      %8221 = vmatprep.subr.mxu0 0.0
      %8222 = vmatpush1.msra.mxu0 0.0
      %8223 = vmatprep.subr.mxu0 0.0
      %8224 = vmatpush1.msra.mxu0 0.0
      %8225 = vmatprep.subr.mxu0 0.0
      %8226 = vmatpush1.msra.mxu0 0.0
      %8227 = vmatprep.subr.mxu0 0.0
      %8228 = vmatpush1.msra.mxu0 0.0
      %8229 = vmatprep.subr.mxu0 0.0
      %8230 = vmatpush1.msra.mxu0 0.0
      %8231 = vmatprep.subr.mxu0 0.0
      %8232 = vmatpush1.msra.mxu0 0.0
      %8233 = vmatprep.subr.mxu0 0.0
      %8234 = vmatpush1.msra.mxu0 0.0
      %8235 = vmatprep.subr.mxu0 0.0
      %8236 = vmatpush1.msra.mxu0 0.0
      %8237 = vmatprep.subr.mxu0 0.0
      %8238 = vmatpush1.msra.mxu0 0.0
      %8239 = vmatprep.mubr.f32.mxu0 0.0
      %8240 = vmatmul.mubr.f32.gmra.mrb[0].mxu0 %v8080
      %v8241 = vpop.f32.mrb[0].mxu0
      %v8242 = vadd.f32 0.0, %v8241
      %v8243 = vpop.f32.mrb[0].mxu0
      %8244 = vmatprep.mubr.f32.mxu0 0.0
      %8245 = vmatmul.mubr.f32.gmra.mrb[0].mxu0 %v8083
      %v8246 = vpop.f32.mrb[0].mxu0
      %v8247 = vadd.f32 0.0, %v8246
      %v8248 = vpop.f32.mrb[0].mxu0
      %8249 = vmatprep.mubr.f32.mxu0 0.0
      %8250 = vmatmul.mubr.f32.gmra.mrb[0].mxu0 %v8086
      %v8251 = vpop.f32.mrb[0].mxu0
      %v8252 = vadd.f32 0.0, %v8251
      %v8253 = vpop.f32.mrb[0].mxu0
      %8254 = vmatprep.mubr.f32.mxu0 0.0
      %8255 = vmatmul.mubr.f32.gmra.mrb[0].mxu0 %v8089
      %v8256 = vpop.f32.mrb[0].mxu0
      %v8257 = vadd.f32 0.0, %v8256
      %v8258 = vpop.f32.mrb[0].mxu0
      %8259 = vmatprep.mubr.f32.mxu0 0.0
      %8260 = vmatmul.mubr.f32.gmra.mrb[0].mxu0 %v8092
      %v8261 = vpop.f32.mrb[0].mxu0
      %v8262 = vadd.f32 0.0, %v8261
      %v8263 = vpop.f32.mrb[0].mxu0
      %8264 = vmatprep.mubr.f32.mxu0 0.0
      %8265 = vmatmul.mubr.f32.gmra.mrb[0].mxu0 %v8095
      %v8266 = vpop.f32.mrb[0].mxu0
      %v8267 = vadd.f32 0.0, %v8266
      %v8268 = vpop.f32.mrb[0].mxu0
      %8269 = vmatprep.mubr.f32.mxu0 0.0
      %8270 = vmatmul.mubr.f32.gmra.mrb[0].mxu0 %v8098
      %v8271 = vpop.f32.mrb[0].mxu0
      %v8272 = vadd.f32 0.0, %v8271
      %v8273 = vpop.f32.mrb[0].mxu0
      %8274 = vmatprep.mubr.f32.mxu0 0.0
      %8275 = vmatmul.mubr.f32.gmra.mrb[0].mxu0 %v8101
      %v8276 = vpop.f32.mrb[0].mxu0
      %v8277 = vadd.f32 0.0, %v8276
      %v8278 = vpop.f32.mrb[0].mxu0
      %8279 = vmatprep.mubr.f32.mxu0 0.0
      %8280 = vmatmul.mubr.f32.gmra.mrb[0].mxu0 %v8104
      %v8281 = vpop.f32.mrb[0].mxu0
      %v8282 = vadd.f32 0.0, %v8281
      %v8283 = vpop.f32.mrb[0].mxu0
      %8284 = vmatprep.mubr.f32.mxu0 0.0
      %8285 = vmatmul.mubr.f32.gmra.mrb[0].mxu0 %v8107
      %v8286 = vpop.f32.mrb[0].mxu0
      %v8287 = vadd.f32 0.0, %v8286
      %v8288 = vpop.f32.mrb[0].mxu0
      %8289 = vmatprep.mubr.f32.mxu0 0.0
      %8290 = vmatmul.mubr.f32.gmra.mrb[0].mxu0 %v8110
      %v8291 = vpop.f32.mrb[0].mxu0
      %v8292 = vadd.f32 0.0, %v8291
      %v8293 = vpop.f32.mrb[0].mxu0
      %8294 = vmatprep.mubr.f32.mxu0 0.0
      %8295 = vmatmul.mubr.f32.gmra.mrb[0].mxu0 %v8113
      %v8296 = vpop.f32.mrb[0].mxu0
      %v8297 = vadd.f32 0.0, %v8296
      %v8298 = vpop.f32.mrb[0].mxu0
      %8299 = vmatprep.mubr.f32.mxu0 0.0
      %8300 = vmatmul.mubr.f32.gmra.mrb[0].mxu0 %v8116
      %v8301 = vpop.f32.mrb[0].mxu0
      %v8302 = vadd.f32 0.0, %v8301
      %v8303 = vpop.f32.mrb[0].mxu0
      %8304 = vmatprep.mubr.f32.mxu0 0.0
      %8305 = vmatmul.mubr.f32.gmra.mrb[0].mxu0 %v8119
      %v8306 = vpop.f32.mrb[0].mxu0
      %v8307 = vadd.f32 0.0, %v8306
      %v8308 = vpop.f32.mrb[0].mxu0
      %8309 = vmatprep.mubr.f32.mxu0 0.0
      %8310 = vmatmul.mubr.f32.gmra.mrb[0].mxu0 %v8122
      %v8311 = vpop.f32.mrb[0].mxu0
      %v8312 = vadd.f32 0.0, %v8311
      %v8313 = vpop.f32.mrb[0].mxu0
      %8314 = vmatprep.mubr.f32.mxu0 0.0
      %8315 = vmatmul.mubr.f32.gmra.mrb[0].mxu0 %v8125
      %v8316 = vpop.f32.mrb[0].mxu0
      %v8317 = vadd.f32 0.0, %v8316
      %v8318 = vpop.f32.mrb[0].mxu0
      %8319 = vmatprep.mubr.f32.mxu0 0.0
      %8320 = vmatmul.mubr.f32.gmra.mrb[0].mxu0 %v8128
      %v8321 = vpop.f32.mrb[0].mxu0
      %v8322 = vadd.f32 0.0, %v8321
      %v8323 = vpop.f32.mrb[0].mxu0
      %8324 = vmatprep.mubr.f32.mxu0 0.0
      %8325 = vmatmul.mubr.f32.gmra.mrb[0].mxu0 %v8131
      %v8326 = vpop.f32.mrb[0].mxu0
      %v8327 = vadd.f32 0.0, %v8326
      %v8328 = vpop.f32.mrb[0].mxu0
      %8329 = vmatprep.mubr.f32.mxu0 0.0
      %8330 = vmatmul.mubr.f32.gmra.mrb[0].mxu0 %v8134
      %v8331 = vpop.f32.mrb[0].mxu0
      %v8332 = vadd.f32 0.0, %v8331
      %v8333 = vpop.f32.mrb[0].mxu0
      %8334 = vmatprep.mubr.f32.mxu0 0.0
      %8335 = vmatmul.mubr.f32.gmra.mrb[0].mxu0 %v8137
      %v8336 = vpop.f32.mrb[0].mxu0
      %v8337 = vadd.f32 0.0, %v8336
      %v8338 = vpop.f32.mrb[0].mxu0
      %8339 = vmatprep.mubr.f32.mxu0 0.0
      %8340 = vmatmul.mubr.f32.gmra.mrb[0].mxu0 %v8140
      %v8341 = vpop.f32.mrb[0].mxu0
      %v8342 = vadd.f32 0.0, %v8341
      %v8343 = vpop.f32.mrb[0].mxu0
      %8344 = vmatprep.mubr.f32.mxu0 0.0
      %8345 = vmatmul.mubr.f32.gmra.mrb[0].mxu0 %v8143
      %v8346 = vpop.f32.mrb[0].mxu0
      %v8347 = vadd.f32 0.0, %v8346
      %v8348 = vpop.f32.mrb[0].mxu0
      %8349 = vmatprep.mubr.f32.mxu0 0.0
      %8350 = vmatmul.mubr.f32.gmra.mrb[0].mxu0 %v8146
      %v8351 = vpop.f32.mrb[0].mxu0
      %v8352 = vadd.f32 0.0, %v8351
      %v8353 = vpop.f32.mrb[0].mxu0
      %8354 = vmatprep.mubr.f32.mxu0 0.0
      %8355 = vmatmul.mubr.f32.gmra.mrb[0].mxu0 %v8149
      %v8356 = vpop.f32.mrb[0].mxu0
      %v8357 = vadd.f32 0.0, %v8356
      %v8358 = vpop.f32.mrb[0].mxu0
      %8359 = vmatprep.mubr.f32.mxu0 0.0
      %8360 = vmatmul.mubr.f32.gmra.mrb[0].mxu0 %v8152
      %v8361 = vpop.f32.mrb[0].mxu0
      %v8362 = vadd.f32 0.0, %v8361
      %v8363 = vpop.f32.mrb[0].mxu0
      %8364 = vmatprep.mubr.f32.mxu0 0.0
      %8365 = vmatmul.mubr.f32.gmra.mrb[0].mxu0 %v8155
      %v8366 = vpop.f32.mrb[0].mxu0
      %v8367 = vadd.f32 0.0, %v8366
      %v8368 = vpop.f32.mrb[0].mxu0
      %8369 = vmatprep.mubr.f32.mxu0 0.0
      %8370 = vmatmul.mubr.f32.gmra.mrb[0].mxu0 %v8158
      %v8371 = vpop.f32.mrb[0].mxu0
      %v8372 = vadd.f32 0.0, %v8371
      %v8373 = vpop.f32.mrb[0].mxu0
      %8374 = vmatprep.mubr.f32.mxu0 0.0
      %8375 = vmatmul.mubr.f32.gmra.mrb[0].mxu0 %v8161
      %v8376 = vpop.f32.mrb[0].mxu0
      %v8377 = vadd.f32 0.0, %v8376
      %v8378 = vpop.f32.mrb[0].mxu0
      %8379 = vmatprep.mubr.f32.mxu0 0.0
      %8380 = vmatmul.mubr.f32.gmra.mrb[0].mxu0 %v8164
      %v8381 = vpop.f32.mrb[0].mxu0
      %v8382 = vadd.f32 0.0, %v8381
      %v8383 = vpop.f32.mrb[0].mxu0
      %8384 = vmatprep.mubr.f32.mxu0 0.0
      %8385 = vmatmul.mubr.f32.gmra.mrb[0].mxu0 %v8167
      %v8386 = vpop.f32.mrb[0].mxu0
      %v8387 = vadd.f32 0.0, %v8386
      %v8388 = vpop.f32.mrb[0].mxu0
      %8389 = vmatprep.mubr.f32.mxu0 0.0
      %8390 = vmatmul.mubr.f32.gmra.mrb[0].mxu0 %v8170
      %v8391 = vpop.f32.mrb[0].mxu0
      %v8392 = vadd.f32 0.0, %v8391
      %v8393 = vpop.f32.mrb[0].mxu0
      %8394 = vmatprep.mubr.f32.mxu0 0.0
      %8395 = vmatmul.mubr.f32.gmra.mrb[0].mxu0 %v8173
      %v8396 = vpop.f32.mrb[0].mxu0
      %v8397 = vadd.f32 0.0, %v8396
      %v8398 = vpop.f32.mrb[0].mxu0
      %8399 = vdwg.mxu0
      %v8400 = vld [vmem:[#allocation3] sm:$0xff]
      %v8401 = vld [vmem:[#allocation3 + $0x8] sm:$0xff]
      %v8402 = vld [vmem:[#allocation3 + $0x10] sm:$0xff]
      %v8403 = vld [vmem:[#allocation3 + $0x18] sm:$0xff]
      %v8404 = vld [vmem:[#allocation3 + $0x20] sm:$0xff]
      %v8405 = vld [vmem:[#allocation3 + $0x28] sm:$0xff]
      %v8406 = vld [vmem:[#allocation3 + $0x30] sm:$0xff]
      %v8407 = vld [vmem:[#allocation3 + $0x38] sm:$0xff]
      %v8408 = vld [vmem:[#allocation3 + $0x40] sm:$0xff]
      %v8409 = vld [vmem:[#allocation3 + $0x48] sm:$0xff]
      %v8410 = vld [vmem:[#allocation3 + $0x50] sm:$0xff]
      %v8411 = vld [vmem:[#allocation3 + $0x58] sm:$0xff]
      %v8412 = vld [vmem:[#allocation3 + $0x60] sm:$0xff]
      %v8413 = vld [vmem:[#allocation3 + $0x68] sm:$0xff]
      %v8414 = vld [vmem:[#allocation3 + $0x70] sm:$0xff]
      %v8415 = vld [vmem:[#allocation3 + $0x78] sm:$0xff]
      %v8416 = vld [vmem:[#allocation3 + $0x80] sm:$0xff]
      %v8417 = vld [vmem:[#allocation3 + $0x88] sm:$0xff]
      %v8418 = vld [vmem:[#allocation3 + $0x90] sm:$0xff]
      %v8419 = vld [vmem:[#allocation3 + $0x98] sm:$0xff]
      %v8420 = vld [vmem:[#allocation3 + $0xa0] sm:$0xff]
      %v8421 = vld [vmem:[#allocation3 + $0xa8] sm:$0xff]
      %v8422 = vld [vmem:[#allocation3 + $0xb0] sm:$0xff]
      %v8423 = vld [vmem:[#allocation3 + $0xb8] sm:$0xff]
      %v8424 = vld [vmem:[#allocation3 + $0xc0] sm:$0xff]
      %v8425 = vld [vmem:[#allocation3 + $0xc8] sm:$0xff]
      %v8426 = vld [vmem:[#allocation3 + $0xd0] sm:$0xff]
      %v8427 = vld [vmem:[#allocation3 + $0xd8] sm:$0xff]
      %v8428 = vld [vmem:[#allocation3 + $0xe0] sm:$0xff]
      %v8429 = vld [vmem:[#allocation3 + $0xe8] sm:$0xff]
      %v8430 = vld [vmem:[#allocation3 + $0xf0] sm:$0xff]
      %v8431 = vld [vmem:[#allocation3 + $0xf8] sm:$0xff]
      %v8432 = vadd.f32 %v8400, %v8242
      %v8433 = vadd.f32 %v8401, %v8247
      %v8434 = vadd.f32 %v8402, %v8252
      %v8435 = vadd.f32 %v8403, %v8257
      %v8436 = vadd.f32 %v8404, %v8262
      %v8437 = vadd.f32 %v8405, %v8267
      %v8438 = vadd.f32 %v8406, %v8272
      %v8439 = vadd.f32 %v8407, %v8277
      %v8440 = vadd.f32 %v8408, %v8282
      %v8441 = vadd.f32 %v8409, %v8287
      %v8442 = vadd.f32 %v8410, %v8292
      %v8443 = vadd.f32 %v8411, %v8297
      %v8444 = vadd.f32 %v8412, %v8302
      %v8445 = vadd.f32 %v8413, %v8307
      %v8446 = vadd.f32 %v8414, %v8312
      %v8447 = vadd.f32 %v8415, %v8317
      %v8448 = vadd.f32 %v8416, %v8322
      %v8449 = vadd.f32 %v8417, %v8327
      %v8450 = vadd.f32 %v8418, %v8332
      %v8451 = vadd.f32 %v8419, %v8337
      %v8452 = vadd.f32 %v8420, %v8342
      %v8453 = vadd.f32 %v8421, %v8347
      %v8454 = vadd.f32 %v8422, %v8352
      %v8455 = vadd.f32 %v8423, %v8357
      %v8456 = vadd.f32 %v8424, %v8362
      %v8457 = vadd.f32 %v8425, %v8367
      %v8458 = vadd.f32 %v8426, %v8372
      %v8459 = vadd.f32 %v8427, %v8377
      %v8460 = vadd.f32 %v8428, %v8382
      %v8461 = vadd.f32 %v8429, %v8387
      %v8462 = vadd.f32 %v8430, %v8392
      %v8463 = vadd.f32 %v8431, %v8397
      %8464 = vst.msk [vmem:[#allocation3] sm:$0xff] %vm728, %v8432
      %8465 = vst.msk [vmem:[#allocation3 + $0x8] sm:$0xff] %vm728, %v8433
      %8466 = vst.msk [vmem:[#allocation3 + $0x10] sm:$0xff] %vm728, %v8434
      %8467 = vst.msk [vmem:[#allocation3 + $0x18] sm:$0xff] %vm728, %v8435
      %8468 = vst.msk [vmem:[#allocation3 + $0x20] sm:$0xff] %vm728, %v8436
      %8469 = vst.msk [vmem:[#allocation3 + $0x28] sm:$0xff] %vm728, %v8437
      %8470 = vst.msk [vmem:[#allocation3 + $0x30] sm:$0xff] %vm728, %v8438
      %8471 = vst.msk [vmem:[#allocation3 + $0x38] sm:$0xff] %vm728, %v8439
      %8472 = vst.msk [vmem:[#allocation3 + $0x40] sm:$0xff] %vm728, %v8440
      %8473 = vst.msk [vmem:[#allocation3 + $0x48] sm:$0xff] %vm728, %v8441
      %8474 = vst.msk [vmem:[#allocation3 + $0x50] sm:$0xff] %vm728, %v8442
      %8475 = vst.msk [vmem:[#allocation3 + $0x58] sm:$0xff] %vm728, %v8443
      %8476 = vst.msk [vmem:[#allocation3 + $0x60] sm:$0xff] %vm728, %v8444
      %8477 = vst.msk [vmem:[#allocation3 + $0x68] sm:$0xff] %vm728, %v8445
      %8478 = vst.msk [vmem:[#allocation3 + $0x70] sm:$0xff] %vm728, %v8446
      %8479 = vst.msk [vmem:[#allocation3 + $0x78] sm:$0xff] %vm728, %v8447
      %8480 = vst.msk [vmem:[#allocation3 + $0x80] sm:$0xff] %vm728, %v8448
      %8481 = vst.msk [vmem:[#allocation3 + $0x88] sm:$0xff] %vm728, %v8449
      %8482 = vst.msk [vmem:[#allocation3 + $0x90] sm:$0xff] %vm728, %v8450
      %8483 = vst.msk [vmem:[#allocation3 + $0x98] sm:$0xff] %vm728, %v8451
      %8484 = vst.msk [vmem:[#allocation3 + $0xa0] sm:$0xff] %vm728, %v8452
      %8485 = vst.msk [vmem:[#allocation3 + $0xa8] sm:$0xff] %vm728, %v8453
      %8486 = vst.msk [vmem:[#allocation3 + $0xb0] sm:$0xff] %vm728, %v8454
      %8487 = vst.msk [vmem:[#allocation3 + $0xb8] sm:$0xff] %vm728, %v8455
      %8488 = vst.msk [vmem:[#allocation3 + $0xc0] sm:$0xff] %vm728, %v8456
      %8489 = vst.msk [vmem:[#allocation3 + $0xc8] sm:$0xff] %vm728, %v8457
      %8490 = vst.msk [vmem:[#allocation3 + $0xd0] sm:$0xff] %vm728, %v8458
      %8491 = vst.msk [vmem:[#allocation3 + $0xd8] sm:$0xff] %vm728, %v8459
      %8492 = vst.msk [vmem:[#allocation3 + $0xe0] sm:$0xff] %vm728, %v8460
      %8493 = vst.msk [vmem:[#allocation3 + $0xe8] sm:$0xff] %vm728, %v8461
      %8494 = vst.msk [vmem:[#allocation3 + $0xf0] sm:$0xff] %vm728, %v8462
      %8495 = vst.msk [vmem:[#allocation3 + $0xf8] sm:$0xff] %vm728, %v8463
      %v8496 = vld [vmem:[%s8045 + $0x1] sm:$0xff]
      %v8497 = vld [vmem:[%s8045 + $0x9] sm:$0xff]
      %v8498 = vld [vmem:[%s8045 + $0x19] sm:$0xff]
      %v8499 = vld [vmem:[%s8045 + $0x21] sm:$0xff]
      %v8500 = vld [vmem:[%s8045 + $0x31] sm:$0xff]
      %v8501 = vld [vmem:[%s8045 + $0x39] sm:$0xff]
      %v8502 = vld [vmem:[%s8045 + $0x49] sm:$0xff]
      %v8503 = vld [vmem:[%s8045 + $0x51] sm:$0xff]
      %v8504 = vld [vmem:[%s8045 + $0x61] sm:$0xff]
      %v8505 = vld [vmem:[%s8045 + $0x69] sm:$0xff]
      %v8506 = vld [vmem:[%s8045 + $0x79] sm:$0xff]
      %v8507 = vld [vmem:[%s8045 + $0x81] sm:$0xff]
      %v8508 = vld [vmem:[%s8045 + $0x91] sm:$0xff]
      %v8509 = vld [vmem:[%s8045 + $0x99] sm:$0xff]
      %v8510 = vld [vmem:[%s8045 + $0xa9] sm:$0xff]
      %v8511 = vld [vmem:[%s8045 + $0xb1] sm:$0xff]
      %v8512 = vld [vmem:[%s8045 + $0xc1] sm:$0xff]
      %v8513 = vld [vmem:[%s8045 + $0xc9] sm:$0xff]
      %v8514 = vld [vmem:[%s8045 + $0xd9] sm:$0xff]
      %v8515 = vld [vmem:[%s8045 + $0xe1] sm:$0xff]
      %v8516 = vld [vmem:[%s8045 + $0xf1] sm:$0xff]
      %v8517 = vld [vmem:[%s8045 + $0xf9] sm:$0xff]
      %v8518 = vld [vmem:[%s8045 + $0x109] sm:$0xff]
      %v8519 = vld [vmem:[%s8045 + $0x111] sm:$0xff]
      %v8520 = vld [vmem:[%s8045 + $0x121] sm:$0xff]
      %v8521 = vld [vmem:[%s8045 + $0x129] sm:$0xff]
      %v8522 = vld [vmem:[%s8045 + $0x139] sm:$0xff]
      %v8523 = vld [vmem:[%s8045 + $0x141] sm:$0xff]
      %v8524 = vld [vmem:[%s8045 + $0x151] sm:$0xff]
      %v8525 = vld [vmem:[%s8045 + $0x159] sm:$0xff]
      %v8526 = vld [vmem:[%s8045 + $0x169] sm:$0xff]
      %v8527 = vld [vmem:[%s8045 + $0x171] sm:$0xff]
      %v8528 = vld [vmem:[%s2 + $0x20] sm:$0xff]
      %v8530 = vsel %vm728, %v8496, 0
      %v8533 = vsel %vm728, %v8497, 0
      %v8536 = vsel %vm728, %v8498, 0
      %v8539 = vsel %vm728, %v8499, 0
      %v8542 = vsel %vm728, %v8500, 0
      %v8545 = vsel %vm728, %v8501, 0
      %v8548 = vsel %vm728, %v8502, 0
      %v8551 = vsel %vm728, %v8503, 0
      %v8554 = vsel %vm728, %v8504, 0
      %v8557 = vsel %vm728, %v8505, 0
      %v8560 = vsel %vm728, %v8506, 0
      %v8563 = vsel %vm728, %v8507, 0
      %v8566 = vsel %vm728, %v8508, 0
      %v8569 = vsel %vm728, %v8509, 0
      %v8572 = vsel %vm728, %v8510, 0
      %v8575 = vsel %vm728, %v8511, 0
      %v8578 = vsel %vm728, %v8512, 0
      %v8581 = vsel %vm728, %v8513, 0
      %v8584 = vsel %vm728, %v8514, 0
      %v8587 = vsel %vm728, %v8515, 0
      %v8590 = vsel %vm728, %v8516, 0
      %v8593 = vsel %vm728, %v8517, 0
      %v8596 = vsel %vm728, %v8518, 0
      %v8599 = vsel %vm728, %v8519, 0
      %v8602 = vsel %vm728, %v8520, 0
      %v8605 = vsel %vm728, %v8521, 0
      %v8608 = vsel %vm728, %v8522, 0
      %v8611 = vsel %vm728, %v8523, 0
      %v8614 = vsel %vm728, %v8524, 0
      %v8617 = vsel %vm728, %v8525, 0
      %v8620 = vsel %vm728, %v8526, 0
      %v8623 = vsel %vm728, %v8527, 0
      %8625 = vmatprep.subr.mxu0 0.0
      %8626 = vmatpush1.msra.mxu0 %v8528
      %8627 = vmatprep.subr.mxu0 0.0
      %8628 = vmatpush1.msra.mxu0 0.0
      %8629 = vmatprep.subr.mxu0 0.0
      %8630 = vmatpush1.msra.mxu0 0.0
      %8631 = vmatprep.subr.mxu0 0.0
      %8632 = vmatpush1.msra.mxu0 0.0
      %8633 = vmatprep.subr.mxu0 0.0
      %8634 = vmatpush1.msra.mxu0 0.0
      %8635 = vmatprep.subr.mxu0 0.0
      %8636 = vmatpush1.msra.mxu0 0.0
      %8637 = vmatprep.subr.mxu0 0.0
      %8638 = vmatpush1.msra.mxu0 0.0
      %8639 = vmatprep.subr.mxu0 0.0
      %8640 = vmatpush1.msra.mxu0 0.0
      %8641 = vmatprep.subr.mxu0 0.0
      %8642 = vmatpush1.msra.mxu0 0.0
      %8643 = vmatprep.subr.mxu0 0.0
      %8644 = vmatpush1.msra.mxu0 0.0
      %8645 = vmatprep.subr.mxu0 0.0
      %8646 = vmatpush1.msra.mxu0 0.0
      %8647 = vmatprep.subr.mxu0 0.0
      %8648 = vmatpush1.msra.mxu0 0.0
      %8649 = vmatprep.subr.mxu0 0.0
      %8650 = vmatpush1.msra.mxu0 0.0
      %8651 = vmatprep.subr.mxu0 0.0
      %8652 = vmatpush1.msra.mxu0 0.0
      %8653 = vmatprep.subr.mxu0 0.0
      %8654 = vmatpush1.msra.mxu0 0.0
      %8655 = vmatprep.subr.mxu0 0.0
      %8656 = vmatpush1.msra.mxu0 0.0
      %8657 = vmatprep.subr.mxu0 0.0
      %8658 = vmatpush1.msra.mxu0 0.0
      %8659 = vmatprep.subr.mxu0 0.0
      %8660 = vmatpush1.msra.mxu0 0.0
      %8661 = vmatprep.subr.mxu0 0.0
      %8662 = vmatpush1.msra.mxu0 0.0
      %8663 = vmatprep.subr.mxu0 0.0
      %8664 = vmatpush1.msra.mxu0 0.0
      %8665 = vmatprep.subr.mxu0 0.0
      %8666 = vmatpush1.msra.mxu0 0.0
      %8667 = vmatprep.subr.mxu0 0.0
      %8668 = vmatpush1.msra.mxu0 0.0
      %8669 = vmatprep.subr.mxu0 0.0
      %8670 = vmatpush1.msra.mxu0 0.0
      %8671 = vmatprep.subr.mxu0 0.0
      %8672 = vmatpush1.msra.mxu0 0.0
      %8673 = vmatprep.subr.mxu0 0.0
      %8674 = vmatpush1.msra.mxu0 0.0
      %8675 = vmatprep.subr.mxu0 0.0
      %8676 = vmatpush1.msra.mxu0 0.0
      %8677 = vmatprep.subr.mxu0 0.0
      %8678 = vmatpush1.msra.mxu0 0.0
      %8679 = vmatprep.subr.mxu0 0.0
      %8680 = vmatpush1.msra.mxu0 0.0
      %8681 = vmatprep.subr.mxu0 0.0
      %8682 = vmatpush1.msra.mxu0 0.0
      %8683 = vmatprep.subr.mxu0 0.0
      %8684 = vmatpush1.msra.mxu0 0.0
      %8685 = vmatprep.subr.mxu0 0.0
      %8686 = vmatpush1.msra.mxu0 0.0
      %8687 = vmatprep.subr.mxu0 0.0
      %8688 = vmatpush1.msra.mxu0 0.0
      %8689 = vmatprep.mubr.f32.mxu0 0.0
      %8690 = vmatmul.mubr.f32.gmra.mrb[0].mxu0 %v8530
      %v8691 = vpop.f32.mrb[0].mxu0
      %v8692 = vadd.f32 0.0, %v8691
      %v8693 = vpop.f32.mrb[0].mxu0
      %8694 = vmatprep.mubr.f32.mxu0 0.0
      %8695 = vmatmul.mubr.f32.gmra.mrb[0].mxu0 %v8533
      %v8696 = vpop.f32.mrb[0].mxu0
      %v8697 = vadd.f32 0.0, %v8696
      %v8698 = vpop.f32.mrb[0].mxu0
      %8699 = vmatprep.mubr.f32.mxu0 0.0
      %8700 = vmatmul.mubr.f32.gmra.mrb[0].mxu0 %v8536
      %v8701 = vpop.f32.mrb[0].mxu0
      %v8702 = vadd.f32 0.0, %v8701
      %v8703 = vpop.f32.mrb[0].mxu0
      %8704 = vmatprep.mubr.f32.mxu0 0.0
      %8705 = vmatmul.mubr.f32.gmra.mrb[0].mxu0 %v8539
      %v8706 = vpop.f32.mrb[0].mxu0
      %v8707 = vadd.f32 0.0, %v8706
      %v8708 = vpop.f32.mrb[0].mxu0
      %8709 = vmatprep.mubr.f32.mxu0 0.0
      %8710 = vmatmul.mubr.f32.gmra.mrb[0].mxu0 %v8542
      %v8711 = vpop.f32.mrb[0].mxu0
      %v8712 = vadd.f32 0.0, %v8711
      %v8713 = vpop.f32.mrb[0].mxu0
      %8714 = vmatprep.mubr.f32.mxu0 0.0
      %8715 = vmatmul.mubr.f32.gmra.mrb[0].mxu0 %v8545
      %v8716 = vpop.f32.mrb[0].mxu0
      %v8717 = vadd.f32 0.0, %v8716
      %v8718 = vpop.f32.mrb[0].mxu0
      %8719 = vmatprep.mubr.f32.mxu0 0.0
      %8720 = vmatmul.mubr.f32.gmra.mrb[0].mxu0 %v8548
      %v8721 = vpop.f32.mrb[0].mxu0
      %v8722 = vadd.f32 0.0, %v8721
      %v8723 = vpop.f32.mrb[0].mxu0
      %8724 = vmatprep.mubr.f32.mxu0 0.0
      %8725 = vmatmul.mubr.f32.gmra.mrb[0].mxu0 %v8551
      %v8726 = vpop.f32.mrb[0].mxu0
      %v8727 = vadd.f32 0.0, %v8726
      %v8728 = vpop.f32.mrb[0].mxu0
      %8729 = vmatprep.mubr.f32.mxu0 0.0
      %8730 = vmatmul.mubr.f32.gmra.mrb[0].mxu0 %v8554
      %v8731 = vpop.f32.mrb[0].mxu0
      %v8732 = vadd.f32 0.0, %v8731
      %v8733 = vpop.f32.mrb[0].mxu0
      %8734 = vmatprep.mubr.f32.mxu0 0.0
      %8735 = vmatmul.mubr.f32.gmra.mrb[0].mxu0 %v8557
      %v8736 = vpop.f32.mrb[0].mxu0
      %v8737 = vadd.f32 0.0, %v8736
      %v8738 = vpop.f32.mrb[0].mxu0
      %8739 = vmatprep.mubr.f32.mxu0 0.0
      %8740 = vmatmul.mubr.f32.gmra.mrb[0].mxu0 %v8560
      %v8741 = vpop.f32.mrb[0].mxu0
      %v8742 = vadd.f32 0.0, %v8741
      %v8743 = vpop.f32.mrb[0].mxu0
      %8744 = vmatprep.mubr.f32.mxu0 0.0
      %8745 = vmatmul.mubr.f32.gmra.mrb[0].mxu0 %v8563
      %v8746 = vpop.f32.mrb[0].mxu0
      %v8747 = vadd.f32 0.0, %v8746
      %v8748 = vpop.f32.mrb[0].mxu0
      %8749 = vmatprep.mubr.f32.mxu0 0.0
      %8750 = vmatmul.mubr.f32.gmra.mrb[0].mxu0 %v8566
      %v8751 = vpop.f32.mrb[0].mxu0
      %v8752 = vadd.f32 0.0, %v8751
      %v8753 = vpop.f32.mrb[0].mxu0
      %8754 = vmatprep.mubr.f32.mxu0 0.0
      %8755 = vmatmul.mubr.f32.gmra.mrb[0].mxu0 %v8569
      %v8756 = vpop.f32.mrb[0].mxu0
      %v8757 = vadd.f32 0.0, %v8756
      %v8758 = vpop.f32.mrb[0].mxu0
      %8759 = vmatprep.mubr.f32.mxu0 0.0
      %8760 = vmatmul.mubr.f32.gmra.mrb[0].mxu0 %v8572
      %v8761 = vpop.f32.mrb[0].mxu0
      %v8762 = vadd.f32 0.0, %v8761
      %v8763 = vpop.f32.mrb[0].mxu0
      %8764 = vmatprep.mubr.f32.mxu0 0.0
      %8765 = vmatmul.mubr.f32.gmra.mrb[0].mxu0 %v8575
      %v8766 = vpop.f32.mrb[0].mxu0
      %v8767 = vadd.f32 0.0, %v8766
      %v8768 = vpop.f32.mrb[0].mxu0
      %8769 = vmatprep.mubr.f32.mxu0 0.0
      %8770 = vmatmul.mubr.f32.gmra.mrb[0].mxu0 %v8578
      %v8771 = vpop.f32.mrb[0].mxu0
      %v8772 = vadd.f32 0.0, %v8771
      %v8773 = vpop.f32.mrb[0].mxu0
      %8774 = vmatprep.mubr.f32.mxu0 0.0
      %8775 = vmatmul.mubr.f32.gmra.mrb[0].mxu0 %v8581
      %v8776 = vpop.f32.mrb[0].mxu0
      %v8777 = vadd.f32 0.0, %v8776
      %v8778 = vpop.f32.mrb[0].mxu0
      %8779 = vmatprep.mubr.f32.mxu0 0.0
      %8780 = vmatmul.mubr.f32.gmra.mrb[0].mxu0 %v8584
      %v8781 = vpop.f32.mrb[0].mxu0
      %v8782 = vadd.f32 0.0, %v8781
      %v8783 = vpop.f32.mrb[0].mxu0
      %8784 = vmatprep.mubr.f32.mxu0 0.0
      %8785 = vmatmul.mubr.f32.gmra.mrb[0].mxu0 %v8587
      %v8786 = vpop.f32.mrb[0].mxu0
      %v8787 = vadd.f32 0.0, %v8786
      %v8788 = vpop.f32.mrb[0].mxu0
      %8789 = vmatprep.mubr.f32.mxu0 0.0
      %8790 = vmatmul.mubr.f32.gmra.mrb[0].mxu0 %v8590
      %v8791 = vpop.f32.mrb[0].mxu0
      %v8792 = vadd.f32 0.0, %v8791
      %v8793 = vpop.f32.mrb[0].mxu0
      %8794 = vmatprep.mubr.f32.mxu0 0.0
      %8795 = vmatmul.mubr.f32.gmra.mrb[0].mxu0 %v8593
      %v8796 = vpop.f32.mrb[0].mxu0
      %v8797 = vadd.f32 0.0, %v8796
      %v8798 = vpop.f32.mrb[0].mxu0
      %8799 = vmatprep.mubr.f32.mxu0 0.0
      %8800 = vmatmul.mubr.f32.gmra.mrb[0].mxu0 %v8596
      %v8801 = vpop.f32.mrb[0].mxu0
      %v8802 = vadd.f32 0.0, %v8801
      %v8803 = vpop.f32.mrb[0].mxu0
      %8804 = vmatprep.mubr.f32.mxu0 0.0
      %8805 = vmatmul.mubr.f32.gmra.mrb[0].mxu0 %v8599
      %v8806 = vpop.f32.mrb[0].mxu0
      %v8807 = vadd.f32 0.0, %v8806
      %v8808 = vpop.f32.mrb[0].mxu0
      %8809 = vmatprep.mubr.f32.mxu0 0.0
      %8810 = vmatmul.mubr.f32.gmra.mrb[0].mxu0 %v8602
      %v8811 = vpop.f32.mrb[0].mxu0
      %v8812 = vadd.f32 0.0, %v8811
      %v8813 = vpop.f32.mrb[0].mxu0
      %8814 = vmatprep.mubr.f32.mxu0 0.0
      %8815 = vmatmul.mubr.f32.gmra.mrb[0].mxu0 %v8605
      %v8816 = vpop.f32.mrb[0].mxu0
      %v8817 = vadd.f32 0.0, %v8816
      %v8818 = vpop.f32.mrb[0].mxu0
      %8819 = vmatprep.mubr.f32.mxu0 0.0
      %8820 = vmatmul.mubr.f32.gmra.mrb[0].mxu0 %v8608
      %v8821 = vpop.f32.mrb[0].mxu0
      %v8822 = vadd.f32 0.0, %v8821
      %v8823 = vpop.f32.mrb[0].mxu0
      %8824 = vmatprep.mubr.f32.mxu0 0.0
      %8825 = vmatmul.mubr.f32.gmra.mrb[0].mxu0 %v8611
      %v8826 = vpop.f32.mrb[0].mxu0
      %v8827 = vadd.f32 0.0, %v8826
      %v8828 = vpop.f32.mrb[0].mxu0
      %8829 = vmatprep.mubr.f32.mxu0 0.0
      %8830 = vmatmul.mubr.f32.gmra.mrb[0].mxu0 %v8614
      %v8831 = vpop.f32.mrb[0].mxu0
      %v8832 = vadd.f32 0.0, %v8831
      %v8833 = vpop.f32.mrb[0].mxu0
      %8834 = vmatprep.mubr.f32.mxu0 0.0
      %8835 = vmatmul.mubr.f32.gmra.mrb[0].mxu0 %v8617
      %v8836 = vpop.f32.mrb[0].mxu0
      %v8837 = vadd.f32 0.0, %v8836
      %v8838 = vpop.f32.mrb[0].mxu0
      %8839 = vmatprep.mubr.f32.mxu0 0.0
      %8840 = vmatmul.mubr.f32.gmra.mrb[0].mxu0 %v8620
      %v8841 = vpop.f32.mrb[0].mxu0
      %v8842 = vadd.f32 0.0, %v8841
      %v8843 = vpop.f32.mrb[0].mxu0
      %8844 = vmatprep.mubr.f32.mxu0 0.0
      %8845 = vmatmul.mubr.f32.gmra.mrb[0].mxu0 %v8623
      %v8846 = vpop.f32.mrb[0].mxu0
      %v8847 = vadd.f32 0.0, %v8846
      %v8848 = vpop.f32.mrb[0].mxu0
      %8849 = vdwg.mxu0
      %v8850 = vld [vmem:[#allocation3] sm:$0xff]
      %v8851 = vld [vmem:[#allocation3 + $0x8] sm:$0xff]
      %v8852 = vld [vmem:[#allocation3 + $0x10] sm:$0xff]
      %v8853 = vld [vmem:[#allocation3 + $0x18] sm:$0xff]
      %v8854 = vld [vmem:[#allocation3 + $0x20] sm:$0xff]
      %v8855 = vld [vmem:[#allocation3 + $0x28] sm:$0xff]
      %v8856 = vld [vmem:[#allocation3 + $0x30] sm:$0xff]
      %v8857 = vld [vmem:[#allocation3 + $0x38] sm:$0xff]
      %v8858 = vld [vmem:[#allocation3 + $0x40] sm:$0xff]
      %v8859 = vld [vmem:[#allocation3 + $0x48] sm:$0xff]
      %v8860 = vld [vmem:[#allocation3 + $0x50] sm:$0xff]
      %v8861 = vld [vmem:[#allocation3 + $0x58] sm:$0xff]
      %v8862 = vld [vmem:[#allocation3 + $0x60] sm:$0xff]
      %v8863 = vld [vmem:[#allocation3 + $0x68] sm:$0xff]
      %v8864 = vld [vmem:[#allocation3 + $0x70] sm:$0xff]
      %v8865 = vld [vmem:[#allocation3 + $0x78] sm:$0xff]
      %v8866 = vld [vmem:[#allocation3 + $0x80] sm:$0xff]
      %v8867 = vld [vmem:[#allocation3 + $0x88] sm:$0xff]
      %v8868 = vld [vmem:[#allocation3 + $0x90] sm:$0xff]
      %v8869 = vld [vmem:[#allocation3 + $0x98] sm:$0xff]
      %v8870 = vld [vmem:[#allocation3 + $0xa0] sm:$0xff]
      %v8871 = vld [vmem:[#allocation3 + $0xa8] sm:$0xff]
      %v8872 = vld [vmem:[#allocation3 + $0xb0] sm:$0xff]
      %v8873 = vld [vmem:[#allocation3 + $0xb8] sm:$0xff]
      %v8874 = vld [vmem:[#allocation3 + $0xc0] sm:$0xff]
      %v8875 = vld [vmem:[#allocation3 + $0xc8] sm:$0xff]
      %v8876 = vld [vmem:[#allocation3 + $0xd0] sm:$0xff]
      %v8877 = vld [vmem:[#allocation3 + $0xd8] sm:$0xff]
      %v8878 = vld [vmem:[#allocation3 + $0xe0] sm:$0xff]
      %v8879 = vld [vmem:[#allocation3 + $0xe8] sm:$0xff]
      %v8880 = vld [vmem:[#allocation3 + $0xf0] sm:$0xff]
      %v8881 = vld [vmem:[#allocation3 + $0xf8] sm:$0xff]
      %v8882 = vadd.f32 %v8850, %v8692
      %v8883 = vadd.f32 %v8851, %v8697
      %v8884 = vadd.f32 %v8852, %v8702
      %v8885 = vadd.f32 %v8853, %v8707
      %v8886 = vadd.f32 %v8854, %v8712
      %v8887 = vadd.f32 %v8855, %v8717
      %v8888 = vadd.f32 %v8856, %v8722
      %v8889 = vadd.f32 %v8857, %v8727
      %v8890 = vadd.f32 %v8858, %v8732
      %v8891 = vadd.f32 %v8859, %v8737
      %v8892 = vadd.f32 %v8860, %v8742
      %v8893 = vadd.f32 %v8861, %v8747
      %v8894 = vadd.f32 %v8862, %v8752
      %v8895 = vadd.f32 %v8863, %v8757
      %v8896 = vadd.f32 %v8864, %v8762
      %v8897 = vadd.f32 %v8865, %v8767
      %v8898 = vadd.f32 %v8866, %v8772
      %v8899 = vadd.f32 %v8867, %v8777
      %v8900 = vadd.f32 %v8868, %v8782
      %v8901 = vadd.f32 %v8869, %v8787
      %v8902 = vadd.f32 %v8870, %v8792
      %v8903 = vadd.f32 %v8871, %v8797
      %v8904 = vadd.f32 %v8872, %v8802
      %v8905 = vadd.f32 %v8873, %v8807
      %v8906 = vadd.f32 %v8874, %v8812
      %v8907 = vadd.f32 %v8875, %v8817
      %v8908 = vadd.f32 %v8876, %v8822
      %v8909 = vadd.f32 %v8877, %v8827
      %v8910 = vadd.f32 %v8878, %v8832
      %v8911 = vadd.f32 %v8879, %v8837
      %v8912 = vadd.f32 %v8880, %v8842
      %v8913 = vadd.f32 %v8881, %v8847
      %8914 = vst.msk [vmem:[#allocation3] sm:$0xff] %vm728, %v8882
      %8915 = vst.msk [vmem:[#allocation3 + $0x8] sm:$0xff] %vm728, %v8883
      %8916 = vst.msk [vmem:[#allocation3 + $0x10] sm:$0xff] %vm728, %v8884
      %8917 = vst.msk [vmem:[#allocation3 + $0x18] sm:$0xff] %vm728, %v8885
      %8918 = vst.msk [vmem:[#allocation3 + $0x20] sm:$0xff] %vm728, %v8886
      %8919 = vst.msk [vmem:[#allocation3 + $0x28] sm:$0xff] %vm728, %v8887
      %8920 = vst.msk [vmem:[#allocation3 + $0x30] sm:$0xff] %vm728, %v8888
      %8921 = vst.msk [vmem:[#allocation3 + $0x38] sm:$0xff] %vm728, %v8889
      %8922 = vst.msk [vmem:[#allocation3 + $0x40] sm:$0xff] %vm728, %v8890
      %8923 = vst.msk [vmem:[#allocation3 + $0x48] sm:$0xff] %vm728, %v8891
      %8924 = vst.msk [vmem:[#allocation3 + $0x50] sm:$0xff] %vm728, %v8892
      %8925 = vst.msk [vmem:[#allocation3 + $0x58] sm:$0xff] %vm728, %v8893
      %8926 = vst.msk [vmem:[#allocation3 + $0x60] sm:$0xff] %vm728, %v8894
      %8927 = vst.msk [vmem:[#allocation3 + $0x68] sm:$0xff] %vm728, %v8895
      %8928 = vst.msk [vmem:[#allocation3 + $0x70] sm:$0xff] %vm728, %v8896
      %8929 = vst.msk [vmem:[#allocation3 + $0x78] sm:$0xff] %vm728, %v8897
      %8930 = vst.msk [vmem:[#allocation3 + $0x80] sm:$0xff] %vm728, %v8898
      %8931 = vst.msk [vmem:[#allocation3 + $0x88] sm:$0xff] %vm728, %v8899
      %8932 = vst.msk [vmem:[#allocation3 + $0x90] sm:$0xff] %vm728, %v8900
      %8933 = vst.msk [vmem:[#allocation3 + $0x98] sm:$0xff] %vm728, %v8901
      %8934 = vst.msk [vmem:[#allocation3 + $0xa0] sm:$0xff] %vm728, %v8902
      %8935 = vst.msk [vmem:[#allocation3 + $0xa8] sm:$0xff] %vm728, %v8903
      %8936 = vst.msk [vmem:[#allocation3 + $0xb0] sm:$0xff] %vm728, %v8904
      %8937 = vst.msk [vmem:[#allocation3 + $0xb8] sm:$0xff] %vm728, %v8905
      %8938 = vst.msk [vmem:[#allocation3 + $0xc0] sm:$0xff] %vm728, %v8906
      %8939 = vst.msk [vmem:[#allocation3 + $0xc8] sm:$0xff] %vm728, %v8907
      %8940 = vst.msk [vmem:[#allocation3 + $0xd0] sm:$0xff] %vm728, %v8908
      %8941 = vst.msk [vmem:[#allocation3 + $0xd8] sm:$0xff] %vm728, %v8909
      %8942 = vst.msk [vmem:[#allocation3 + $0xe0] sm:$0xff] %vm728, %v8910
      %8943 = vst.msk [vmem:[#allocation3 + $0xe8] sm:$0xff] %vm728, %v8911
      %8944 = vst.msk [vmem:[#allocation3 + $0xf0] sm:$0xff] %vm728, %v8912
      %8945 = vst.msk [vmem:[#allocation3 + $0xf8] sm:$0xff] %vm728, %v8913
      %v8946 = vld [vmem:[%s8045 + $0x2] sm:$0xff]
      %v8947 = vld [vmem:[%s8045 + $0xa] sm:$0xff]
      %v8948 = vld [vmem:[%s8045 + $0x1a] sm:$0xff]
      %v8949 = vld [vmem:[%s8045 + $0x22] sm:$0xff]
      %v8950 = vld [vmem:[%s8045 + $0x32] sm:$0xff]
      %v8951 = vld [vmem:[%s8045 + $0x3a] sm:$0xff]
      %v8952 = vld [vmem:[%s8045 + $0x4a] sm:$0xff]
      %v8953 = vld [vmem:[%s8045 + $0x52] sm:$0xff]
      %v8954 = vld [vmem:[%s8045 + $0x62] sm:$0xff]
      %v8955 = vld [vmem:[%s8045 + $0x6a] sm:$0xff]
      %v8956 = vld [vmem:[%s8045 + $0x7a] sm:$0xff]
      %v8957 = vld [vmem:[%s8045 + $0x82] sm:$0xff]
      %v8958 = vld [vmem:[%s8045 + $0x92] sm:$0xff]
      %v8959 = vld [vmem:[%s8045 + $0x9a] sm:$0xff]
      %v8960 = vld [vmem:[%s8045 + $0xaa] sm:$0xff]
      %v8961 = vld [vmem:[%s8045 + $0xb2] sm:$0xff]
      %v8962 = vld [vmem:[%s8045 + $0xc2] sm:$0xff]
      %v8963 = vld [vmem:[%s8045 + $0xca] sm:$0xff]
      %v8964 = vld [vmem:[%s8045 + $0xda] sm:$0xff]
      %v8965 = vld [vmem:[%s8045 + $0xe2] sm:$0xff]
      %v8966 = vld [vmem:[%s8045 + $0xf2] sm:$0xff]
      %v8967 = vld [vmem:[%s8045 + $0xfa] sm:$0xff]
      %v8968 = vld [vmem:[%s8045 + $0x10a] sm:$0xff]
      %v8969 = vld [vmem:[%s8045 + $0x112] sm:$0xff]
      %v8970 = vld [vmem:[%s8045 + $0x122] sm:$0xff]
      %v8971 = vld [vmem:[%s8045 + $0x12a] sm:$0xff]
      %v8972 = vld [vmem:[%s8045 + $0x13a] sm:$0xff]
      %v8973 = vld [vmem:[%s8045 + $0x142] sm:$0xff]
      %v8974 = vld [vmem:[%s8045 + $0x152] sm:$0xff]
      %v8975 = vld [vmem:[%s8045 + $0x15a] sm:$0xff]
      %v8976 = vld [vmem:[%s8045 + $0x16a] sm:$0xff]
      %v8977 = vld [vmem:[%s8045 + $0x172] sm:$0xff]
      %v8978 = vld [vmem:[%s2 + $0x28] sm:$0xff]
      %v8980 = vsel %vm728, %v8946, 0
      %v8983 = vsel %vm728, %v8947, 0
      %v8986 = vsel %vm728, %v8948, 0
      %v8989 = vsel %vm728, %v8949, 0
      %v8992 = vsel %vm728, %v8950, 0
      %v8995 = vsel %vm728, %v8951, 0
      %v8998 = vsel %vm728, %v8952, 0
      %v9001 = vsel %vm728, %v8953, 0
      %v9004 = vsel %vm728, %v8954, 0
      %v9007 = vsel %vm728, %v8955, 0
      %v9010 = vsel %vm728, %v8956, 0
      %v9013 = vsel %vm728, %v8957, 0
      %v9016 = vsel %vm728, %v8958, 0
      %v9019 = vsel %vm728, %v8959, 0
      %v9022 = vsel %vm728, %v8960, 0
      %v9025 = vsel %vm728, %v8961, 0
      %v9028 = vsel %vm728, %v8962, 0
      %v9031 = vsel %vm728, %v8963, 0
      %v9034 = vsel %vm728, %v8964, 0
      %v9037 = vsel %vm728, %v8965, 0
      %v9040 = vsel %vm728, %v8966, 0
      %v9043 = vsel %vm728, %v8967, 0
      %v9046 = vsel %vm728, %v8968, 0
      %v9049 = vsel %vm728, %v8969, 0
      %v9052 = vsel %vm728, %v8970, 0
      %v9055 = vsel %vm728, %v8971, 0
      %v9058 = vsel %vm728, %v8972, 0
      %v9061 = vsel %vm728, %v8973, 0
      %v9064 = vsel %vm728, %v8974, 0
      %v9067 = vsel %vm728, %v8975, 0
      %v9070 = vsel %vm728, %v8976, 0
      %v9073 = vsel %vm728, %v8977, 0
      %9075 = vmatprep.subr.mxu0 0.0
      %9076 = vmatpush1.msra.mxu0 %v8978
      %9077 = vmatprep.subr.mxu0 0.0
      %9078 = vmatpush1.msra.mxu0 0.0
      %9079 = vmatprep.subr.mxu0 0.0
      %9080 = vmatpush1.msra.mxu0 0.0
      %9081 = vmatprep.subr.mxu0 0.0
      %9082 = vmatpush1.msra.mxu0 0.0
      %9083 = vmatprep.subr.mxu0 0.0
      %9084 = vmatpush1.msra.mxu0 0.0
      %9085 = vmatprep.subr.mxu0 0.0
      %9086 = vmatpush1.msra.mxu0 0.0
      %9087 = vmatprep.subr.mxu0 0.0
      %9088 = vmatpush1.msra.mxu0 0.0
      %9089 = vmatprep.subr.mxu0 0.0
      %9090 = vmatpush1.msra.mxu0 0.0
      %9091 = vmatprep.subr.mxu0 0.0
      %9092 = vmatpush1.msra.mxu0 0.0
      %9093 = vmatprep.subr.mxu0 0.0
      %9094 = vmatpush1.msra.mxu0 0.0
      %9095 = vmatprep.subr.mxu0 0.0
      %9096 = vmatpush1.msra.mxu0 0.0
      %9097 = vmatprep.subr.mxu0 0.0
      %9098 = vmatpush1.msra.mxu0 0.0
      %9099 = vmatprep.subr.mxu0 0.0
      %9100 = vmatpush1.msra.mxu0 0.0
      %9101 = vmatprep.subr.mxu0 0.0
      %9102 = vmatpush1.msra.mxu0 0.0
      %9103 = vmatprep.subr.mxu0 0.0
      %9104 = vmatpush1.msra.mxu0 0.0
      %9105 = vmatprep.subr.mxu0 0.0
      %9106 = vmatpush1.msra.mxu0 0.0
      %9107 = vmatprep.subr.mxu0 0.0
      %9108 = vmatpush1.msra.mxu0 0.0
      %9109 = vmatprep.subr.mxu0 0.0
      %9110 = vmatpush1.msra.mxu0 0.0
      %9111 = vmatprep.subr.mxu0 0.0
      %9112 = vmatpush1.msra.mxu0 0.0
      %9113 = vmatprep.subr.mxu0 0.0
      %9114 = vmatpush1.msra.mxu0 0.0
      %9115 = vmatprep.subr.mxu0 0.0
      %9116 = vmatpush1.msra.mxu0 0.0
      %9117 = vmatprep.subr.mxu0 0.0
      %9118 = vmatpush1.msra.mxu0 0.0
      %9119 = vmatprep.subr.mxu0 0.0
      %9120 = vmatpush1.msra.mxu0 0.0
      %9121 = vmatprep.subr.mxu0 0.0
      %9122 = vmatpush1.msra.mxu0 0.0
      %9123 = vmatprep.subr.mxu0 0.0
      %9124 = vmatpush1.msra.mxu0 0.0
      %9125 = vmatprep.subr.mxu0 0.0
      %9126 = vmatpush1.msra.mxu0 0.0
      %9127 = vmatprep.subr.mxu0 0.0
      %9128 = vmatpush1.msra.mxu0 0.0
      %9129 = vmatprep.subr.mxu0 0.0
      %9130 = vmatpush1.msra.mxu0 0.0
      %9131 = vmatprep.subr.mxu0 0.0
      %9132 = vmatpush1.msra.mxu0 0.0
      %9133 = vmatprep.subr.mxu0 0.0
      %9134 = vmatpush1.msra.mxu0 0.0
      %9135 = vmatprep.subr.mxu0 0.0
      %9136 = vmatpush1.msra.mxu0 0.0
      %9137 = vmatprep.subr.mxu0 0.0
      %9138 = vmatpush1.msra.mxu0 0.0
      %9139 = vmatprep.mubr.f32.mxu0 0.0
      %9140 = vmatmul.mubr.f32.gmra.mrb[0].mxu0 %v8980
      %v9141 = vpop.f32.mrb[0].mxu0
      %v9142 = vadd.f32 0.0, %v9141
      %v9143 = vpop.f32.mrb[0].mxu0
      %9144 = vmatprep.mubr.f32.mxu0 0.0
      %9145 = vmatmul.mubr.f32.gmra.mrb[0].mxu0 %v8983
      %v9146 = vpop.f32.mrb[0].mxu0
      %v9147 = vadd.f32 0.0, %v9146
      %v9148 = vpop.f32.mrb[0].mxu0
      %9149 = vmatprep.mubr.f32.mxu0 0.0
      %9150 = vmatmul.mubr.f32.gmra.mrb[0].mxu0 %v8986
      %v9151 = vpop.f32.mrb[0].mxu0
      %v9152 = vadd.f32 0.0, %v9151
      %v9153 = vpop.f32.mrb[0].mxu0
      %9154 = vmatprep.mubr.f32.mxu0 0.0
      %9155 = vmatmul.mubr.f32.gmra.mrb[0].mxu0 %v8989
      %v9156 = vpop.f32.mrb[0].mxu0
      %v9157 = vadd.f32 0.0, %v9156
      %v9158 = vpop.f32.mrb[0].mxu0
      %9159 = vmatprep.mubr.f32.mxu0 0.0
      %9160 = vmatmul.mubr.f32.gmra.mrb[0].mxu0 %v8992
      %v9161 = vpop.f32.mrb[0].mxu0
      %v9162 = vadd.f32 0.0, %v9161
      %v9163 = vpop.f32.mrb[0].mxu0
      %9164 = vmatprep.mubr.f32.mxu0 0.0
      %9165 = vmatmul.mubr.f32.gmra.mrb[0].mxu0 %v8995
      %v9166 = vpop.f32.mrb[0].mxu0
      %v9167 = vadd.f32 0.0, %v9166
      %v9168 = vpop.f32.mrb[0].mxu0
      %9169 = vmatprep.mubr.f32.mxu0 0.0
      %9170 = vmatmul.mubr.f32.gmra.mrb[0].mxu0 %v8998
      %v9171 = vpop.f32.mrb[0].mxu0
      %v9172 = vadd.f32 0.0, %v9171
      %v9173 = vpop.f32.mrb[0].mxu0
      %9174 = vmatprep.mubr.f32.mxu0 0.0
      %9175 = vmatmul.mubr.f32.gmra.mrb[0].mxu0 %v9001
      %v9176 = vpop.f32.mrb[0].mxu0
      %v9177 = vadd.f32 0.0, %v9176
      %v9178 = vpop.f32.mrb[0].mxu0
      %9179 = vmatprep.mubr.f32.mxu0 0.0
      %9180 = vmatmul.mubr.f32.gmra.mrb[0].mxu0 %v9004
      %v9181 = vpop.f32.mrb[0].mxu0
      %v9182 = vadd.f32 0.0, %v9181
      %v9183 = vpop.f32.mrb[0].mxu0
      %9184 = vmatprep.mubr.f32.mxu0 0.0
      %9185 = vmatmul.mubr.f32.gmra.mrb[0].mxu0 %v9007
      %v9186 = vpop.f32.mrb[0].mxu0
      %v9187 = vadd.f32 0.0, %v9186
      %v9188 = vpop.f32.mrb[0].mxu0
      %9189 = vmatprep.mubr.f32.mxu0 0.0
      %9190 = vmatmul.mubr.f32.gmra.mrb[0].mxu0 %v9010
      %v9191 = vpop.f32.mrb[0].mxu0
      %v9192 = vadd.f32 0.0, %v9191
      %v9193 = vpop.f32.mrb[0].mxu0
      %9194 = vmatprep.mubr.f32.mxu0 0.0
      %9195 = vmatmul.mubr.f32.gmra.mrb[0].mxu0 %v9013
      %v9196 = vpop.f32.mrb[0].mxu0
      %v9197 = vadd.f32 0.0, %v9196
      %v9198 = vpop.f32.mrb[0].mxu0
      %9199 = vmatprep.mubr.f32.mxu0 0.0
      %9200 = vmatmul.mubr.f32.gmra.mrb[0].mxu0 %v9016
      %v9201 = vpop.f32.mrb[0].mxu0
      %v9202 = vadd.f32 0.0, %v9201
      %v9203 = vpop.f32.mrb[0].mxu0
      %9204 = vmatprep.mubr.f32.mxu0 0.0
      %9205 = vmatmul.mubr.f32.gmra.mrb[0].mxu0 %v9019
      %v9206 = vpop.f32.mrb[0].mxu0
      %v9207 = vadd.f32 0.0, %v9206
      %v9208 = vpop.f32.mrb[0].mxu0
      %9209 = vmatprep.mubr.f32.mxu0 0.0
      %9210 = vmatmul.mubr.f32.gmra.mrb[0].mxu0 %v9022
      %v9211 = vpop.f32.mrb[0].mxu0
      %v9212 = vadd.f32 0.0, %v9211
      %v9213 = vpop.f32.mrb[0].mxu0
      %9214 = vmatprep.mubr.f32.mxu0 0.0
      %9215 = vmatmul.mubr.f32.gmra.mrb[0].mxu0 %v9025
      %v9216 = vpop.f32.mrb[0].mxu0
      %v9217 = vadd.f32 0.0, %v9216
      %v9218 = vpop.f32.mrb[0].mxu0
      %9219 = vmatprep.mubr.f32.mxu0 0.0
      %9220 = vmatmul.mubr.f32.gmra.mrb[0].mxu0 %v9028
      %v9221 = vpop.f32.mrb[0].mxu0
      %v9222 = vadd.f32 0.0, %v9221
      %v9223 = vpop.f32.mrb[0].mxu0
      %9224 = vmatprep.mubr.f32.mxu0 0.0
      %9225 = vmatmul.mubr.f32.gmra.mrb[0].mxu0 %v9031
      %v9226 = vpop.f32.mrb[0].mxu0
      %v9227 = vadd.f32 0.0, %v9226
      %v9228 = vpop.f32.mrb[0].mxu0
      %9229 = vmatprep.mubr.f32.mxu0 0.0
      %9230 = vmatmul.mubr.f32.gmra.mrb[0].mxu0 %v9034
      %v9231 = vpop.f32.mrb[0].mxu0
      %v9232 = vadd.f32 0.0, %v9231
      %v9233 = vpop.f32.mrb[0].mxu0
      %9234 = vmatprep.mubr.f32.mxu0 0.0
      %9235 = vmatmul.mubr.f32.gmra.mrb[0].mxu0 %v9037
      %v9236 = vpop.f32.mrb[0].mxu0
      %v9237 = vadd.f32 0.0, %v9236
      %v9238 = vpop.f32.mrb[0].mxu0
      %9239 = vmatprep.mubr.f32.mxu0 0.0
      %9240 = vmatmul.mubr.f32.gmra.mrb[0].mxu0 %v9040
      %v9241 = vpop.f32.mrb[0].mxu0
      %v9242 = vadd.f32 0.0, %v9241
      %v9243 = vpop.f32.mrb[0].mxu0
      %9244 = vmatprep.mubr.f32.mxu0 0.0
      %9245 = vmatmul.mubr.f32.gmra.mrb[0].mxu0 %v9043
      %v9246 = vpop.f32.mrb[0].mxu0
      %v9247 = vadd.f32 0.0, %v9246
      %v9248 = vpop.f32.mrb[0].mxu0
      %9249 = vmatprep.mubr.f32.mxu0 0.0
      %9250 = vmatmul.mubr.f32.gmra.mrb[0].mxu0 %v9046
      %v9251 = vpop.f32.mrb[0].mxu0
      %v9252 = vadd.f32 0.0, %v9251
      %v9253 = vpop.f32.mrb[0].mxu0
      %9254 = vmatprep.mubr.f32.mxu0 0.0
      %9255 = vmatmul.mubr.f32.gmra.mrb[0].mxu0 %v9049
      %v9256 = vpop.f32.mrb[0].mxu0
      %v9257 = vadd.f32 0.0, %v9256
      %v9258 = vpop.f32.mrb[0].mxu0
      %9259 = vmatprep.mubr.f32.mxu0 0.0
      %9260 = vmatmul.mubr.f32.gmra.mrb[0].mxu0 %v9052
      %v9261 = vpop.f32.mrb[0].mxu0
      %v9262 = vadd.f32 0.0, %v9261
      %v9263 = vpop.f32.mrb[0].mxu0
      %9264 = vmatprep.mubr.f32.mxu0 0.0
      %9265 = vmatmul.mubr.f32.gmra.mrb[0].mxu0 %v9055
      %v9266 = vpop.f32.mrb[0].mxu0
      %v9267 = vadd.f32 0.0, %v9266
      %v9268 = vpop.f32.mrb[0].mxu0
      %9269 = vmatprep.mubr.f32.mxu0 0.0
      %9270 = vmatmul.mubr.f32.gmra.mrb[0].mxu0 %v9058
      %v9271 = vpop.f32.mrb[0].mxu0
      %v9272 = vadd.f32 0.0, %v9271
      %v9273 = vpop.f32.mrb[0].mxu0
      %9274 = vmatprep.mubr.f32.mxu0 0.0
      %9275 = vmatmul.mubr.f32.gmra.mrb[0].mxu0 %v9061
      %v9276 = vpop.f32.mrb[0].mxu0
      %v9277 = vadd.f32 0.0, %v9276
      %v9278 = vpop.f32.mrb[0].mxu0
      %9279 = vmatprep.mubr.f32.mxu0 0.0
      %9280 = vmatmul.mubr.f32.gmra.mrb[0].mxu0 %v9064
      %v9281 = vpop.f32.mrb[0].mxu0
      %v9282 = vadd.f32 0.0, %v9281
      %v9283 = vpop.f32.mrb[0].mxu0
      %9284 = vmatprep.mubr.f32.mxu0 0.0
      %9285 = vmatmul.mubr.f32.gmra.mrb[0].mxu0 %v9067
      %v9286 = vpop.f32.mrb[0].mxu0
      %v9287 = vadd.f32 0.0, %v9286
      %v9288 = vpop.f32.mrb[0].mxu0
      %9289 = vmatprep.mubr.f32.mxu0 0.0
      %9290 = vmatmul.mubr.f32.gmra.mrb[0].mxu0 %v9070
      %v9291 = vpop.f32.mrb[0].mxu0
      %v9292 = vadd.f32 0.0, %v9291
      %v9293 = vpop.f32.mrb[0].mxu0
      %9294 = vmatprep.mubr.f32.mxu0 0.0
      %9295 = vmatmul.mubr.f32.gmra.mrb[0].mxu0 %v9073
      %v9296 = vpop.f32.mrb[0].mxu0
      %v9297 = vadd.f32 0.0, %v9296
      %v9298 = vpop.f32.mrb[0].mxu0
      %9299 = vdwg.mxu0
      %v9300 = vld [vmem:[#allocation3] sm:$0xff]
      %v9301 = vld [vmem:[#allocation3 + $0x8] sm:$0xff]
      %v9302 = vld [vmem:[#allocation3 + $0x10] sm:$0xff]
      %v9303 = vld [vmem:[#allocation3 + $0x18] sm:$0xff]
      %v9304 = vld [vmem:[#allocation3 + $0x20] sm:$0xff]
      %v9305 = vld [vmem:[#allocation3 + $0x28] sm:$0xff]
      %v9306 = vld [vmem:[#allocation3 + $0x30] sm:$0xff]
      %v9307 = vld [vmem:[#allocation3 + $0x38] sm:$0xff]
      %v9308 = vld [vmem:[#allocation3 + $0x40] sm:$0xff]
      %v9309 = vld [vmem:[#allocation3 + $0x48] sm:$0xff]
      %v9310 = vld [vmem:[#allocation3 + $0x50] sm:$0xff]
      %v9311 = vld [vmem:[#allocation3 + $0x58] sm:$0xff]
      %v9312 = vld [vmem:[#allocation3 + $0x60] sm:$0xff]
      %v9313 = vld [vmem:[#allocation3 + $0x68] sm:$0xff]
      %v9314 = vld [vmem:[#allocation3 + $0x70] sm:$0xff]
      %v9315 = vld [vmem:[#allocation3 + $0x78] sm:$0xff]
      %v9316 = vld [vmem:[#allocation3 + $0x80] sm:$0xff]
      %v9317 = vld [vmem:[#allocation3 + $0x88] sm:$0xff]
      %v9318 = vld [vmem:[#allocation3 + $0x90] sm:$0xff]
      %v9319 = vld [vmem:[#allocation3 + $0x98] sm:$0xff]
      %v9320 = vld [vmem:[#allocation3 + $0xa0] sm:$0xff]
      %v9321 = vld [vmem:[#allocation3 + $0xa8] sm:$0xff]
      %v9322 = vld [vmem:[#allocation3 + $0xb0] sm:$0xff]
      %v9323 = vld [vmem:[#allocation3 + $0xb8] sm:$0xff]
      %v9324 = vld [vmem:[#allocation3 + $0xc0] sm:$0xff]
      %v9325 = vld [vmem:[#allocation3 + $0xc8] sm:$0xff]
      %v9326 = vld [vmem:[#allocation3 + $0xd0] sm:$0xff]
      %v9327 = vld [vmem:[#allocation3 + $0xd8] sm:$0xff]
      %v9328 = vld [vmem:[#allocation3 + $0xe0] sm:$0xff]
      %v9329 = vld [vmem:[#allocation3 + $0xe8] sm:$0xff]
      %v9330 = vld [vmem:[#allocation3 + $0xf0] sm:$0xff]
      %v9331 = vld [vmem:[#allocation3 + $0xf8] sm:$0xff]
      %v9332 = vadd.f32 %v9300, %v9142
      %v9333 = vadd.f32 %v9301, %v9147
      %v9334 = vadd.f32 %v9302, %v9152
      %v9335 = vadd.f32 %v9303, %v9157
      %v9336 = vadd.f32 %v9304, %v9162
      %v9337 = vadd.f32 %v9305, %v9167
      %v9338 = vadd.f32 %v9306, %v9172
      %v9339 = vadd.f32 %v9307, %v9177
      %v9340 = vadd.f32 %v9308, %v9182
      %v9341 = vadd.f32 %v9309, %v9187
      %v9342 = vadd.f32 %v9310, %v9192
      %v9343 = vadd.f32 %v9311, %v9197
      %v9344 = vadd.f32 %v9312, %v9202
      %v9345 = vadd.f32 %v9313, %v9207
      %v9346 = vadd.f32 %v9314, %v9212
      %v9347 = vadd.f32 %v9315, %v9217
      %v9348 = vadd.f32 %v9316, %v9222
      %v9349 = vadd.f32 %v9317, %v9227
      %v9350 = vadd.f32 %v9318, %v9232
      %v9351 = vadd.f32 %v9319, %v9237
      %v9352 = vadd.f32 %v9320, %v9242
      %v9353 = vadd.f32 %v9321, %v9247
      %v9354 = vadd.f32 %v9322, %v9252
      %v9355 = vadd.f32 %v9323, %v9257
      %v9356 = vadd.f32 %v9324, %v9262
      %v9357 = vadd.f32 %v9325, %v9267
      %v9358 = vadd.f32 %v9326, %v9272
      %v9359 = vadd.f32 %v9327, %v9277
      %v9360 = vadd.f32 %v9328, %v9282
      %v9361 = vadd.f32 %v9329, %v9287
      %v9362 = vadd.f32 %v9330, %v9292
      %v9363 = vadd.f32 %v9331, %v9297
      %9364 = vst.msk [vmem:[#allocation3] sm:$0xff] %vm728, %v9332
      %9365 = vst.msk [vmem:[#allocation3 + $0x8] sm:$0xff] %vm728, %v9333
      %9366 = vst.msk [vmem:[#allocation3 + $0x10] sm:$0xff] %vm728, %v9334
      %9367 = vst.msk [vmem:[#allocation3 + $0x18] sm:$0xff] %vm728, %v9335
      %9368 = vst.msk [vmem:[#allocation3 + $0x20] sm:$0xff] %vm728, %v9336
      %9369 = vst.msk [vmem:[#allocation3 + $0x28] sm:$0xff] %vm728, %v9337
      %9370 = vst.msk [vmem:[#allocation3 + $0x30] sm:$0xff] %vm728, %v9338
      %9371 = vst.msk [vmem:[#allocation3 + $0x38] sm:$0xff] %vm728, %v9339
      %9372 = vst.msk [vmem:[#allocation3 + $0x40] sm:$0xff] %vm728, %v9340
      %9373 = vst.msk [vmem:[#allocation3 + $0x48] sm:$0xff] %vm728, %v9341
      %9374 = vst.msk [vmem:[#allocation3 + $0x50] sm:$0xff] %vm728, %v9342
      %9375 = vst.msk [vmem:[#allocation3 + $0x58] sm:$0xff] %vm728, %v9343
      %9376 = vst.msk [vmem:[#allocation3 + $0x60] sm:$0xff] %vm728, %v9344
      %9377 = vst.msk [vmem:[#allocation3 + $0x68] sm:$0xff] %vm728, %v9345
      %9378 = vst.msk [vmem:[#allocation3 + $0x70] sm:$0xff] %vm728, %v9346
      %9379 = vst.msk [vmem:[#allocation3 + $0x78] sm:$0xff] %vm728, %v9347
      %9380 = vst.msk [vmem:[#allocation3 + $0x80] sm:$0xff] %vm728, %v9348
      %9381 = vst.msk [vmem:[#allocation3 + $0x88] sm:$0xff] %vm728, %v9349
      %9382 = vst.msk [vmem:[#allocation3 + $0x90] sm:$0xff] %vm728, %v9350
      %9383 = vst.msk [vmem:[#allocation3 + $0x98] sm:$0xff] %vm728, %v9351
      %9384 = vst.msk [vmem:[#allocation3 + $0xa0] sm:$0xff] %vm728, %v9352
      %9385 = vst.msk [vmem:[#allocation3 + $0xa8] sm:$0xff] %vm728, %v9353
      %9386 = vst.msk [vmem:[#allocation3 + $0xb0] sm:$0xff] %vm728, %v9354
      %9387 = vst.msk [vmem:[#allocation3 + $0xb8] sm:$0xff] %vm728, %v9355
      %9388 = vst.msk [vmem:[#allocation3 + $0xc0] sm:$0xff] %vm728, %v9356
      %9389 = vst.msk [vmem:[#allocation3 + $0xc8] sm:$0xff] %vm728, %v9357
      %9390 = vst.msk [vmem:[#allocation3 + $0xd0] sm:$0xff] %vm728, %v9358
      %9391 = vst.msk [vmem:[#allocation3 + $0xd8] sm:$0xff] %vm728, %v9359
      %9392 = vst.msk [vmem:[#allocation3 + $0xe0] sm:$0xff] %vm728, %v9360
      %9393 = vst.msk [vmem:[#allocation3 + $0xe8] sm:$0xff] %vm728, %v9361
      %9394 = vst.msk [vmem:[#allocation3 + $0xf0] sm:$0xff] %vm728, %v9362
      %9395 = vst.msk [vmem:[#allocation3 + $0xf8] sm:$0xff] %vm728, %v9363
      %s9396 = scalar_lea.vmem [#allocation2], 48
      %v9397 = vld [vmem:[%s9396] sm:$0xff]
      %v9398 = vld [vmem:[%s9396 + $0x8] sm:$0xff]
      %v9399 = vld [vmem:[%s9396 + $0x18] sm:$0xff]
      %v9400 = vld [vmem:[%s9396 + $0x20] sm:$0xff]
      %v9401 = vld [vmem:[%s9396 + $0x30] sm:$0xff]
      %v9402 = vld [vmem:[%s9396 + $0x38] sm:$0xff]
      %v9403 = vld [vmem:[%s9396 + $0x48] sm:$0xff]
      %v9404 = vld [vmem:[%s9396 + $0x50] sm:$0xff]
      %v9405 = vld [vmem:[%s9396 + $0x60] sm:$0xff]
      %v9406 = vld [vmem:[%s9396 + $0x68] sm:$0xff]
      %v9407 = vld [vmem:[%s9396 + $0x78] sm:$0xff]
      %v9408 = vld [vmem:[%s9396 + $0x80] sm:$0xff]
      %v9409 = vld [vmem:[%s9396 + $0x90] sm:$0xff]
      %v9410 = vld [vmem:[%s9396 + $0x98] sm:$0xff]
      %v9411 = vld [vmem:[%s9396 + $0xa8] sm:$0xff]
      %v9412 = vld [vmem:[%s9396 + $0xb0] sm:$0xff]
      %v9413 = vld [vmem:[%s9396 + $0xc0] sm:$0xff]
      %v9414 = vld [vmem:[%s9396 + $0xc8] sm:$0xff]
      %v9415 = vld [vmem:[%s9396 + $0xd8] sm:$0xff]
      %v9416 = vld [vmem:[%s9396 + $0xe0] sm:$0xff]
      %v9417 = vld [vmem:[%s9396 + $0xf0] sm:$0xff]
      %v9418 = vld [vmem:[%s9396 + $0xf8] sm:$0xff]
      %v9419 = vld [vmem:[%s9396 + $0x108] sm:$0xff]
      %v9420 = vld [vmem:[%s9396 + $0x110] sm:$0xff]
      %v9421 = vld [vmem:[%s9396 + $0x120] sm:$0xff]
      %v9422 = vld [vmem:[%s9396 + $0x128] sm:$0xff]
      %v9423 = vld [vmem:[%s9396 + $0x138] sm:$0xff]
      %v9424 = vld [vmem:[%s9396 + $0x140] sm:$0xff]
      %v9425 = vld [vmem:[%s9396 + $0x150] sm:$0xff]
      %v9426 = vld [vmem:[%s9396 + $0x158] sm:$0xff]
      %v9427 = vld [vmem:[%s9396 + $0x168] sm:$0xff]
      %v9428 = vld [vmem:[%s9396 + $0x170] sm:$0xff]
      %v9429 = vld [vmem:[%s2 + $0x30] sm:$0xff]
      %v9431 = vsel %vm728, %v9397, 0
      %v9434 = vsel %vm728, %v9398, 0
      %v9437 = vsel %vm728, %v9399, 0
      %v9440 = vsel %vm728, %v9400, 0
      %v9443 = vsel %vm728, %v9401, 0
      %v9446 = vsel %vm728, %v9402, 0
      %v9449 = vsel %vm728, %v9403, 0
      %v9452 = vsel %vm728, %v9404, 0
      %v9455 = vsel %vm728, %v9405, 0
      %v9458 = vsel %vm728, %v9406, 0
      %v9461 = vsel %vm728, %v9407, 0
      %v9464 = vsel %vm728, %v9408, 0
      %v9467 = vsel %vm728, %v9409, 0
      %v9470 = vsel %vm728, %v9410, 0
      %v9473 = vsel %vm728, %v9411, 0
      %v9476 = vsel %vm728, %v9412, 0
      %v9479 = vsel %vm728, %v9413, 0
      %v9482 = vsel %vm728, %v9414, 0
      %v9485 = vsel %vm728, %v9415, 0
      %v9488 = vsel %vm728, %v9416, 0
      %v9491 = vsel %vm728, %v9417, 0
      %v9494 = vsel %vm728, %v9418, 0
      %v9497 = vsel %vm728, %v9419, 0
      %v9500 = vsel %vm728, %v9420, 0
      %v9503 = vsel %vm728, %v9421, 0
      %v9506 = vsel %vm728, %v9422, 0
      %v9509 = vsel %vm728, %v9423, 0
      %v9512 = vsel %vm728, %v9424, 0
      %v9515 = vsel %vm728, %v9425, 0
      %v9518 = vsel %vm728, %v9426, 0
      %v9521 = vsel %vm728, %v9427, 0
      %v9524 = vsel %vm728, %v9428, 0
      %9526 = vmatprep.subr.mxu0 0.0
      %9527 = vmatpush1.msra.mxu0 %v9429
      %9528 = vmatprep.subr.mxu0 0.0
      %9529 = vmatpush1.msra.mxu0 0.0
      %9530 = vmatprep.subr.mxu0 0.0
      %9531 = vmatpush1.msra.mxu0 0.0
      %9532 = vmatprep.subr.mxu0 0.0
      %9533 = vmatpush1.msra.mxu0 0.0
      %9534 = vmatprep.subr.mxu0 0.0
      %9535 = vmatpush1.msra.mxu0 0.0
      %9536 = vmatprep.subr.mxu0 0.0
      %9537 = vmatpush1.msra.mxu0 0.0
      %9538 = vmatprep.subr.mxu0 0.0
      %9539 = vmatpush1.msra.mxu0 0.0
      %9540 = vmatprep.subr.mxu0 0.0
      %9541 = vmatpush1.msra.mxu0 0.0
      %9542 = vmatprep.subr.mxu0 0.0
      %9543 = vmatpush1.msra.mxu0 0.0
      %9544 = vmatprep.subr.mxu0 0.0
      %9545 = vmatpush1.msra.mxu0 0.0
      %9546 = vmatprep.subr.mxu0 0.0
      %9547 = vmatpush1.msra.mxu0 0.0
      %9548 = vmatprep.subr.mxu0 0.0
      %9549 = vmatpush1.msra.mxu0 0.0
      %9550 = vmatprep.subr.mxu0 0.0
      %9551 = vmatpush1.msra.mxu0 0.0
      %9552 = vmatprep.subr.mxu0 0.0
      %9553 = vmatpush1.msra.mxu0 0.0
      %9554 = vmatprep.subr.mxu0 0.0
      %9555 = vmatpush1.msra.mxu0 0.0
      %9556 = vmatprep.subr.mxu0 0.0
      %9557 = vmatpush1.msra.mxu0 0.0
      %9558 = vmatprep.subr.mxu0 0.0
      %9559 = vmatpush1.msra.mxu0 0.0
      %9560 = vmatprep.subr.mxu0 0.0
      %9561 = vmatpush1.msra.mxu0 0.0
      %9562 = vmatprep.subr.mxu0 0.0
      %9563 = vmatpush1.msra.mxu0 0.0
      %9564 = vmatprep.subr.mxu0 0.0
      %9565 = vmatpush1.msra.mxu0 0.0
      %9566 = vmatprep.subr.mxu0 0.0
      %9567 = vmatpush1.msra.mxu0 0.0
      %9568 = vmatprep.subr.mxu0 0.0
      %9569 = vmatpush1.msra.mxu0 0.0
      %9570 = vmatprep.subr.mxu0 0.0
      %9571 = vmatpush1.msra.mxu0 0.0
      %9572 = vmatprep.subr.mxu0 0.0
      %9573 = vmatpush1.msra.mxu0 0.0
      %9574 = vmatprep.subr.mxu0 0.0
      %9575 = vmatpush1.msra.mxu0 0.0
      %9576 = vmatprep.subr.mxu0 0.0
      %9577 = vmatpush1.msra.mxu0 0.0
      %9578 = vmatprep.subr.mxu0 0.0
      %9579 = vmatpush1.msra.mxu0 0.0
      %9580 = vmatprep.subr.mxu0 0.0
      %9581 = vmatpush1.msra.mxu0 0.0
      %9582 = vmatprep.subr.mxu0 0.0
      %9583 = vmatpush1.msra.mxu0 0.0
      %9584 = vmatprep.subr.mxu0 0.0
      %9585 = vmatpush1.msra.mxu0 0.0
      %9586 = vmatprep.subr.mxu0 0.0
      %9587 = vmatpush1.msra.mxu0 0.0
      %9588 = vmatprep.subr.mxu0 0.0
      %9589 = vmatpush1.msra.mxu0 0.0
      %9590 = vmatprep.mubr.f32.mxu0 0.0
      %9591 = vmatmul.mubr.f32.gmra.mrb[0].mxu0 %v9431
      %v9592 = vpop.f32.mrb[0].mxu0
      %v9593 = vadd.f32 0.0, %v9592
      %v9594 = vpop.f32.mrb[0].mxu0
      %9595 = vmatprep.mubr.f32.mxu0 0.0
      %9596 = vmatmul.mubr.f32.gmra.mrb[0].mxu0 %v9434
      %v9597 = vpop.f32.mrb[0].mxu0
      %v9598 = vadd.f32 0.0, %v9597
      %v9599 = vpop.f32.mrb[0].mxu0
      %9600 = vmatprep.mubr.f32.mxu0 0.0
      %9601 = vmatmul.mubr.f32.gmra.mrb[0].mxu0 %v9437
      %v9602 = vpop.f32.mrb[0].mxu0
      %v9603 = vadd.f32 0.0, %v9602
      %v9604 = vpop.f32.mrb[0].mxu0
      %9605 = vmatprep.mubr.f32.mxu0 0.0
      %9606 = vmatmul.mubr.f32.gmra.mrb[0].mxu0 %v9440
      %v9607 = vpop.f32.mrb[0].mxu0
      %v9608 = vadd.f32 0.0, %v9607
      %v9609 = vpop.f32.mrb[0].mxu0
      %9610 = vmatprep.mubr.f32.mxu0 0.0
      %9611 = vmatmul.mubr.f32.gmra.mrb[0].mxu0 %v9443
      %v9612 = vpop.f32.mrb[0].mxu0
      %v9613 = vadd.f32 0.0, %v9612
      %v9614 = vpop.f32.mrb[0].mxu0
      %9615 = vmatprep.mubr.f32.mxu0 0.0
      %9616 = vmatmul.mubr.f32.gmra.mrb[0].mxu0 %v9446
      %v9617 = vpop.f32.mrb[0].mxu0
      %v9618 = vadd.f32 0.0, %v9617
      %v9619 = vpop.f32.mrb[0].mxu0
      %9620 = vmatprep.mubr.f32.mxu0 0.0
      %9621 = vmatmul.mubr.f32.gmra.mrb[0].mxu0 %v9449
      %v9622 = vpop.f32.mrb[0].mxu0
      %v9623 = vadd.f32 0.0, %v9622
      %v9624 = vpop.f32.mrb[0].mxu0
      %9625 = vmatprep.mubr.f32.mxu0 0.0
      %9626 = vmatmul.mubr.f32.gmra.mrb[0].mxu0 %v9452
      %v9627 = vpop.f32.mrb[0].mxu0
      %v9628 = vadd.f32 0.0, %v9627
      %v9629 = vpop.f32.mrb[0].mxu0
      %9630 = vmatprep.mubr.f32.mxu0 0.0
      %9631 = vmatmul.mubr.f32.gmra.mrb[0].mxu0 %v9455
      %v9632 = vpop.f32.mrb[0].mxu0
      %v9633 = vadd.f32 0.0, %v9632
      %v9634 = vpop.f32.mrb[0].mxu0
      %9635 = vmatprep.mubr.f32.mxu0 0.0
      %9636 = vmatmul.mubr.f32.gmra.mrb[0].mxu0 %v9458
      %v9637 = vpop.f32.mrb[0].mxu0
      %v9638 = vadd.f32 0.0, %v9637
      %v9639 = vpop.f32.mrb[0].mxu0
      %9640 = vmatprep.mubr.f32.mxu0 0.0
      %9641 = vmatmul.mubr.f32.gmra.mrb[0].mxu0 %v9461
      %v9642 = vpop.f32.mrb[0].mxu0
      %v9643 = vadd.f32 0.0, %v9642
      %v9644 = vpop.f32.mrb[0].mxu0
      %9645 = vmatprep.mubr.f32.mxu0 0.0
      %9646 = vmatmul.mubr.f32.gmra.mrb[0].mxu0 %v9464
      %v9647 = vpop.f32.mrb[0].mxu0
      %v9648 = vadd.f32 0.0, %v9647
      %v9649 = vpop.f32.mrb[0].mxu0
      %9650 = vmatprep.mubr.f32.mxu0 0.0
      %9651 = vmatmul.mubr.f32.gmra.mrb[0].mxu0 %v9467
      %v9652 = vpop.f32.mrb[0].mxu0
      %v9653 = vadd.f32 0.0, %v9652
      %v9654 = vpop.f32.mrb[0].mxu0
      %9655 = vmatprep.mubr.f32.mxu0 0.0
      %9656 = vmatmul.mubr.f32.gmra.mrb[0].mxu0 %v9470
      %v9657 = vpop.f32.mrb[0].mxu0
      %v9658 = vadd.f32 0.0, %v9657
      %v9659 = vpop.f32.mrb[0].mxu0
      %9660 = vmatprep.mubr.f32.mxu0 0.0
      %9661 = vmatmul.mubr.f32.gmra.mrb[0].mxu0 %v9473
      %v9662 = vpop.f32.mrb[0].mxu0
      %v9663 = vadd.f32 0.0, %v9662
      %v9664 = vpop.f32.mrb[0].mxu0
      %9665 = vmatprep.mubr.f32.mxu0 0.0
      %9666 = vmatmul.mubr.f32.gmra.mrb[0].mxu0 %v9476
      %v9667 = vpop.f32.mrb[0].mxu0
      %v9668 = vadd.f32 0.0, %v9667
      %v9669 = vpop.f32.mrb[0].mxu0
      %9670 = vmatprep.mubr.f32.mxu0 0.0
      %9671 = vmatmul.mubr.f32.gmra.mrb[0].mxu0 %v9479
      %v9672 = vpop.f32.mrb[0].mxu0
      %v9673 = vadd.f32 0.0, %v9672
      %v9674 = vpop.f32.mrb[0].mxu0
      %9675 = vmatprep.mubr.f32.mxu0 0.0
      %9676 = vmatmul.mubr.f32.gmra.mrb[0].mxu0 %v9482
      %v9677 = vpop.f32.mrb[0].mxu0
      %v9678 = vadd.f32 0.0, %v9677
      %v9679 = vpop.f32.mrb[0].mxu0
      %9680 = vmatprep.mubr.f32.mxu0 0.0
      %9681 = vmatmul.mubr.f32.gmra.mrb[0].mxu0 %v9485
      %v9682 = vpop.f32.mrb[0].mxu0
      %v9683 = vadd.f32 0.0, %v9682
      %v9684 = vpop.f32.mrb[0].mxu0
      %9685 = vmatprep.mubr.f32.mxu0 0.0
      %9686 = vmatmul.mubr.f32.gmra.mrb[0].mxu0 %v9488
      %v9687 = vpop.f32.mrb[0].mxu0
      %v9688 = vadd.f32 0.0, %v9687
      %v9689 = vpop.f32.mrb[0].mxu0
      %9690 = vmatprep.mubr.f32.mxu0 0.0
      %9691 = vmatmul.mubr.f32.gmra.mrb[0].mxu0 %v9491
      %v9692 = vpop.f32.mrb[0].mxu0
      %v9693 = vadd.f32 0.0, %v9692
      %v9694 = vpop.f32.mrb[0].mxu0
      %9695 = vmatprep.mubr.f32.mxu0 0.0
      %9696 = vmatmul.mubr.f32.gmra.mrb[0].mxu0 %v9494
      %v9697 = vpop.f32.mrb[0].mxu0
      %v9698 = vadd.f32 0.0, %v9697
      %v9699 = vpop.f32.mrb[0].mxu0
      %9700 = vmatprep.mubr.f32.mxu0 0.0
      %9701 = vmatmul.mubr.f32.gmra.mrb[0].mxu0 %v9497
      %v9702 = vpop.f32.mrb[0].mxu0
      %v9703 = vadd.f32 0.0, %v9702
      %v9704 = vpop.f32.mrb[0].mxu0
      %9705 = vmatprep.mubr.f32.mxu0 0.0
      %9706 = vmatmul.mubr.f32.gmra.mrb[0].mxu0 %v9500
      %v9707 = vpop.f32.mrb[0].mxu0
      %v9708 = vadd.f32 0.0, %v9707
      %v9709 = vpop.f32.mrb[0].mxu0
      %9710 = vmatprep.mubr.f32.mxu0 0.0
      %9711 = vmatmul.mubr.f32.gmra.mrb[0].mxu0 %v9503
      %v9712 = vpop.f32.mrb[0].mxu0
      %v9713 = vadd.f32 0.0, %v9712
      %v9714 = vpop.f32.mrb[0].mxu0
      %9715 = vmatprep.mubr.f32.mxu0 0.0
      %9716 = vmatmul.mubr.f32.gmra.mrb[0].mxu0 %v9506
      %v9717 = vpop.f32.mrb[0].mxu0
      %v9718 = vadd.f32 0.0, %v9717
      %v9719 = vpop.f32.mrb[0].mxu0
      %9720 = vmatprep.mubr.f32.mxu0 0.0
      %9721 = vmatmul.mubr.f32.gmra.mrb[0].mxu0 %v9509
      %v9722 = vpop.f32.mrb[0].mxu0
      %v9723 = vadd.f32 0.0, %v9722
      %v9724 = vpop.f32.mrb[0].mxu0
      %9725 = vmatprep.mubr.f32.mxu0 0.0
      %9726 = vmatmul.mubr.f32.gmra.mrb[0].mxu0 %v9512
      %v9727 = vpop.f32.mrb[0].mxu0
      %v9728 = vadd.f32 0.0, %v9727
      %v9729 = vpop.f32.mrb[0].mxu0
      %9730 = vmatprep.mubr.f32.mxu0 0.0
      %9731 = vmatmul.mubr.f32.gmra.mrb[0].mxu0 %v9515
      %v9732 = vpop.f32.mrb[0].mxu0
      %v9733 = vadd.f32 0.0, %v9732
      %v9734 = vpop.f32.mrb[0].mxu0
      %9735 = vmatprep.mubr.f32.mxu0 0.0
      %9736 = vmatmul.mubr.f32.gmra.mrb[0].mxu0 %v9518
      %v9737 = vpop.f32.mrb[0].mxu0
      %v9738 = vadd.f32 0.0, %v9737
      %v9739 = vpop.f32.mrb[0].mxu0
      %9740 = vmatprep.mubr.f32.mxu0 0.0
      %9741 = vmatmul.mubr.f32.gmra.mrb[0].mxu0 %v9521
      %v9742 = vpop.f32.mrb[0].mxu0
      %v9743 = vadd.f32 0.0, %v9742
      %v9744 = vpop.f32.mrb[0].mxu0
      %9745 = vmatprep.mubr.f32.mxu0 0.0
      %9746 = vmatmul.mubr.f32.gmra.mrb[0].mxu0 %v9524
      %v9747 = vpop.f32.mrb[0].mxu0
      %v9748 = vadd.f32 0.0, %v9747
      %v9749 = vpop.f32.mrb[0].mxu0
      %9750 = vdwg.mxu0
      %v9751 = vld [vmem:[#allocation3] sm:$0xff]
      %v9752 = vld [vmem:[#allocation3 + $0x8] sm:$0xff]
      %v9753 = vld [vmem:[#allocation3 + $0x10] sm:$0xff]
      %v9754 = vld [vmem:[#allocation3 + $0x18] sm:$0xff]
      %v9755 = vld [vmem:[#allocation3 + $0x20] sm:$0xff]
      %v9756 = vld [vmem:[#allocation3 + $0x28] sm:$0xff]
      %v9757 = vld [vmem:[#allocation3 + $0x30] sm:$0xff]
      %v9758 = vld [vmem:[#allocation3 + $0x38] sm:$0xff]
      %v9759 = vld [vmem:[#allocation3 + $0x40] sm:$0xff]
      %v9760 = vld [vmem:[#allocation3 + $0x48] sm:$0xff]
      %v9761 = vld [vmem:[#allocation3 + $0x50] sm:$0xff]
      %v9762 = vld [vmem:[#allocation3 + $0x58] sm:$0xff]
      %v9763 = vld [vmem:[#allocation3 + $0x60] sm:$0xff]
      %v9764 = vld [vmem:[#allocation3 + $0x68] sm:$0xff]
      %v9765 = vld [vmem:[#allocation3 + $0x70] sm:$0xff]
      %v9766 = vld [vmem:[#allocation3 + $0x78] sm:$0xff]
      %v9767 = vld [vmem:[#allocation3 + $0x80] sm:$0xff]
      %v9768 = vld [vmem:[#allocation3 + $0x88] sm:$0xff]
      %v9769 = vld [vmem:[#allocation3 + $0x90] sm:$0xff]
      %v9770 = vld [vmem:[#allocation3 + $0x98] sm:$0xff]
      %v9771 = vld [vmem:[#allocation3 + $0xa0] sm:$0xff]
      %v9772 = vld [vmem:[#allocation3 + $0xa8] sm:$0xff]
      %v9773 = vld [vmem:[#allocation3 + $0xb0] sm:$0xff]
      %v9774 = vld [vmem:[#allocation3 + $0xb8] sm:$0xff]
      %v9775 = vld [vmem:[#allocation3 + $0xc0] sm:$0xff]
      %v9776 = vld [vmem:[#allocation3 + $0xc8] sm:$0xff]
      %v9777 = vld [vmem:[#allocation3 + $0xd0] sm:$0xff]
      %v9778 = vld [vmem:[#allocation3 + $0xd8] sm:$0xff]
      %v9779 = vld [vmem:[#allocation3 + $0xe0] sm:$0xff]
      %v9780 = vld [vmem:[#allocation3 + $0xe8] sm:$0xff]
      %v9781 = vld [vmem:[#allocation3 + $0xf0] sm:$0xff]
      %v9782 = vld [vmem:[#allocation3 + $0xf8] sm:$0xff]
      %v9783 = vadd.f32 %v9751, %v9593
      %v9784 = vadd.f32 %v9752, %v9598
      %v9785 = vadd.f32 %v9753, %v9603
      %v9786 = vadd.f32 %v9754, %v9608
      %v9787 = vadd.f32 %v9755, %v9613
      %v9788 = vadd.f32 %v9756, %v9618
      %v9789 = vadd.f32 %v9757, %v9623
      %v9790 = vadd.f32 %v9758, %v9628
      %v9791 = vadd.f32 %v9759, %v9633
      %v9792 = vadd.f32 %v9760, %v9638
      %v9793 = vadd.f32 %v9761, %v9643
      %v9794 = vadd.f32 %v9762, %v9648
      %v9795 = vadd.f32 %v9763, %v9653
      %v9796 = vadd.f32 %v9764, %v9658
      %v9797 = vadd.f32 %v9765, %v9663
      %v9798 = vadd.f32 %v9766, %v9668
      %v9799 = vadd.f32 %v9767, %v9673
      %v9800 = vadd.f32 %v9768, %v9678
      %v9801 = vadd.f32 %v9769, %v9683
      %v9802 = vadd.f32 %v9770, %v9688
      %v9803 = vadd.f32 %v9771, %v9693
      %v9804 = vadd.f32 %v9772, %v9698
      %v9805 = vadd.f32 %v9773, %v9703
      %v9806 = vadd.f32 %v9774, %v9708
      %v9807 = vadd.f32 %v9775, %v9713
      %v9808 = vadd.f32 %v9776, %v9718
      %v9809 = vadd.f32 %v9777, %v9723
      %v9810 = vadd.f32 %v9778, %v9728
      %v9811 = vadd.f32 %v9779, %v9733
      %v9812 = vadd.f32 %v9780, %v9738
      %v9813 = vadd.f32 %v9781, %v9743
      %v9814 = vadd.f32 %v9782, %v9748
      %9815 = vst.msk [vmem:[#allocation3] sm:$0xff] %vm728, %v9783
      %9816 = vst.msk [vmem:[#allocation3 + $0x8] sm:$0xff] %vm728, %v9784
      %9817 = vst.msk [vmem:[#allocation3 + $0x10] sm:$0xff] %vm728, %v9785
      %9818 = vst.msk [vmem:[#allocation3 + $0x18] sm:$0xff] %vm728, %v9786
      %9819 = vst.msk [vmem:[#allocation3 + $0x20] sm:$0xff] %vm728, %v9787
      %9820 = vst.msk [vmem:[#allocation3 + $0x28] sm:$0xff] %vm728, %v9788
      %9821 = vst.msk [vmem:[#allocation3 + $0x30] sm:$0xff] %vm728, %v9789
      %9822 = vst.msk [vmem:[#allocation3 + $0x38] sm:$0xff] %vm728, %v9790
      %9823 = vst.msk [vmem:[#allocation3 + $0x40] sm:$0xff] %vm728, %v9791
      %9824 = vst.msk [vmem:[#allocation3 + $0x48] sm:$0xff] %vm728, %v9792
      %9825 = vst.msk [vmem:[#allocation3 + $0x50] sm:$0xff] %vm728, %v9793
      %9826 = vst.msk [vmem:[#allocation3 + $0x58] sm:$0xff] %vm728, %v9794
      %9827 = vst.msk [vmem:[#allocation3 + $0x60] sm:$0xff] %vm728, %v9795
      %9828 = vst.msk [vmem:[#allocation3 + $0x68] sm:$0xff] %vm728, %v9796
      %9829 = vst.msk [vmem:[#allocation3 + $0x70] sm:$0xff] %vm728, %v9797
      %9830 = vst.msk [vmem:[#allocation3 + $0x78] sm:$0xff] %vm728, %v9798
      %9831 = vst.msk [vmem:[#allocation3 + $0x80] sm:$0xff] %vm728, %v9799
      %9832 = vst.msk [vmem:[#allocation3 + $0x88] sm:$0xff] %vm728, %v9800
      %9833 = vst.msk [vmem:[#allocation3 + $0x90] sm:$0xff] %vm728, %v9801
      %9834 = vst.msk [vmem:[#allocation3 + $0x98] sm:$0xff] %vm728, %v9802
      %9835 = vst.msk [vmem:[#allocation3 + $0xa0] sm:$0xff] %vm728, %v9803
      %9836 = vst.msk [vmem:[#allocation3 + $0xa8] sm:$0xff] %vm728, %v9804
      %9837 = vst.msk [vmem:[#allocation3 + $0xb0] sm:$0xff] %vm728, %v9805
      %9838 = vst.msk [vmem:[#allocation3 + $0xb8] sm:$0xff] %vm728, %v9806
      %9839 = vst.msk [vmem:[#allocation3 + $0xc0] sm:$0xff] %vm728, %v9807
      %9840 = vst.msk [vmem:[#allocation3 + $0xc8] sm:$0xff] %vm728, %v9808
      %9841 = vst.msk [vmem:[#allocation3 + $0xd0] sm:$0xff] %vm728, %v9809
      %9842 = vst.msk [vmem:[#allocation3 + $0xd8] sm:$0xff] %vm728, %v9810
      %9843 = vst.msk [vmem:[#allocation3 + $0xe0] sm:$0xff] %vm728, %v9811
      %9844 = vst.msk [vmem:[#allocation3 + $0xe8] sm:$0xff] %vm728, %v9812
      %9845 = vst.msk [vmem:[#allocation3 + $0xf0] sm:$0xff] %vm728, %v9813
      %9846 = vst.msk [vmem:[#allocation3 + $0xf8] sm:$0xff] %vm728, %v9814
      %v9847 = vld [vmem:[%s9396 + $0x1] sm:$0xff]
      %v9848 = vld [vmem:[%s9396 + $0x9] sm:$0xff]
      %v9849 = vld [vmem:[%s9396 + $0x19] sm:$0xff]
      %v9850 = vld [vmem:[%s9396 + $0x21] sm:$0xff]
      %v9851 = vld [vmem:[%s9396 + $0x31] sm:$0xff]
      %v9852 = vld [vmem:[%s9396 + $0x39] sm:$0xff]
      %v9853 = vld [vmem:[%s9396 + $0x49] sm:$0xff]
      %v9854 = vld [vmem:[%s9396 + $0x51] sm:$0xff]
      %v9855 = vld [vmem:[%s9396 + $0x61] sm:$0xff]
      %v9856 = vld [vmem:[%s9396 + $0x69] sm:$0xff]
      %v9857 = vld [vmem:[%s9396 + $0x79] sm:$0xff]
      %v9858 = vld [vmem:[%s9396 + $0x81] sm:$0xff]
      %v9859 = vld [vmem:[%s9396 + $0x91] sm:$0xff]
      %v9860 = vld [vmem:[%s9396 + $0x99] sm:$0xff]
      %v9861 = vld [vmem:[%s9396 + $0xa9] sm:$0xff]
      %v9862 = vld [vmem:[%s9396 + $0xb1] sm:$0xff]
      %v9863 = vld [vmem:[%s9396 + $0xc1] sm:$0xff]
      %v9864 = vld [vmem:[%s9396 + $0xc9] sm:$0xff]
      %v9865 = vld [vmem:[%s9396 + $0xd9] sm:$0xff]
      %v9866 = vld [vmem:[%s9396 + $0xe1] sm:$0xff]
      %v9867 = vld [vmem:[%s9396 + $0xf1] sm:$0xff]
      %v9868 = vld [vmem:[%s9396 + $0xf9] sm:$0xff]
      %v9869 = vld [vmem:[%s9396 + $0x109] sm:$0xff]
      %v9870 = vld [vmem:[%s9396 + $0x111] sm:$0xff]
      %v9871 = vld [vmem:[%s9396 + $0x121] sm:$0xff]
      %v9872 = vld [vmem:[%s9396 + $0x129] sm:$0xff]
      %v9873 = vld [vmem:[%s9396 + $0x139] sm:$0xff]
      %v9874 = vld [vmem:[%s9396 + $0x141] sm:$0xff]
      %v9875 = vld [vmem:[%s9396 + $0x151] sm:$0xff]
      %v9876 = vld [vmem:[%s9396 + $0x159] sm:$0xff]
      %v9877 = vld [vmem:[%s9396 + $0x169] sm:$0xff]
      %v9878 = vld [vmem:[%s9396 + $0x171] sm:$0xff]
      %v9879 = vld [vmem:[%s2 + $0x38] sm:$0xff]
      %v9881 = vsel %vm728, %v9847, 0
      %v9884 = vsel %vm728, %v9848, 0
      %v9887 = vsel %vm728, %v9849, 0
      %v9890 = vsel %vm728, %v9850, 0
      %v9893 = vsel %vm728, %v9851, 0
      %v9896 = vsel %vm728, %v9852, 0
      %v9899 = vsel %vm728, %v9853, 0
      %v9902 = vsel %vm728, %v9854, 0
      %v9905 = vsel %vm728, %v9855, 0
      %v9908 = vsel %vm728, %v9856, 0
      %v9911 = vsel %vm728, %v9857, 0
      %v9914 = vsel %vm728, %v9858, 0
      %v9917 = vsel %vm728, %v9859, 0
      %v9920 = vsel %vm728, %v9860, 0
      %v9923 = vsel %vm728, %v9861, 0
      %v9926 = vsel %vm728, %v9862, 0
      %v9929 = vsel %vm728, %v9863, 0
      %v9932 = vsel %vm728, %v9864, 0
      %v9935 = vsel %vm728, %v9865, 0
      %v9938 = vsel %vm728, %v9866, 0
      %v9941 = vsel %vm728, %v9867, 0
      %v9944 = vsel %vm728, %v9868, 0
      %v9947 = vsel %vm728, %v9869, 0
      %v9950 = vsel %vm728, %v9870, 0
      %v9953 = vsel %vm728, %v9871, 0
      %v9956 = vsel %vm728, %v9872, 0
      %v9959 = vsel %vm728, %v9873, 0
      %v9962 = vsel %vm728, %v9874, 0
      %v9965 = vsel %vm728, %v9875, 0
      %v9968 = vsel %vm728, %v9876, 0
      %v9971 = vsel %vm728, %v9877, 0
      %v9974 = vsel %vm728, %v9878, 0
      %9976 = vmatprep.subr.mxu0 0.0
      %9977 = vmatpush1.msra.mxu0 %v9879
      %9978 = vmatprep.subr.mxu0 0.0
      %9979 = vmatpush1.msra.mxu0 0.0
      %9980 = vmatprep.subr.mxu0 0.0
      %9981 = vmatpush1.msra.mxu0 0.0
      %9982 = vmatprep.subr.mxu0 0.0
      %9983 = vmatpush1.msra.mxu0 0.0
      %9984 = vmatprep.subr.mxu0 0.0
      %9985 = vmatpush1.msra.mxu0 0.0
      %9986 = vmatprep.subr.mxu0 0.0
      %9987 = vmatpush1.msra.mxu0 0.0
      %9988 = vmatprep.subr.mxu0 0.0
      %9989 = vmatpush1.msra.mxu0 0.0
      %9990 = vmatprep.subr.mxu0 0.0
      %9991 = vmatpush1.msra.mxu0 0.0
      %9992 = vmatprep.subr.mxu0 0.0
      %9993 = vmatpush1.msra.mxu0 0.0
      %9994 = vmatprep.subr.mxu0 0.0
      %9995 = vmatpush1.msra.mxu0 0.0
      %9996 = vmatprep.subr.mxu0 0.0
      %9997 = vmatpush1.msra.mxu0 0.0
      %9998 = vmatprep.subr.mxu0 0.0
      %9999 = vmatpush1.msra.mxu0 0.0
      %10000 = vmatprep.subr.mxu0 0.0
      %10001 = vmatpush1.msra.mxu0 0.0
      %10002 = vmatprep.subr.mxu0 0.0
      %10003 = vmatpush1.msra.mxu0 0.0
      %10004 = vmatprep.subr.mxu0 0.0
      %10005 = vmatpush1.msra.mxu0 0.0
      %10006 = vmatprep.subr.mxu0 0.0
      %10007 = vmatpush1.msra.mxu0 0.0
      %10008 = vmatprep.subr.mxu0 0.0
      %10009 = vmatpush1.msra.mxu0 0.0
      %10010 = vmatprep.subr.mxu0 0.0
      %10011 = vmatpush1.msra.mxu0 0.0
      %10012 = vmatprep.subr.mxu0 0.0
      %10013 = vmatpush1.msra.mxu0 0.0
      %10014 = vmatprep.subr.mxu0 0.0
      %10015 = vmatpush1.msra.mxu0 0.0
      %10016 = vmatprep.subr.mxu0 0.0
      %10017 = vmatpush1.msra.mxu0 0.0
      %10018 = vmatprep.subr.mxu0 0.0
      %10019 = vmatpush1.msra.mxu0 0.0
      %10020 = vmatprep.subr.mxu0 0.0
      %10021 = vmatpush1.msra.mxu0 0.0
      %10022 = vmatprep.subr.mxu0 0.0
      %10023 = vmatpush1.msra.mxu0 0.0
      %10024 = vmatprep.subr.mxu0 0.0
      %10025 = vmatpush1.msra.mxu0 0.0
      %10026 = vmatprep.subr.mxu0 0.0
      %10027 = vmatpush1.msra.mxu0 0.0
      %10028 = vmatprep.subr.mxu0 0.0
      %10029 = vmatpush1.msra.mxu0 0.0
      %10030 = vmatprep.subr.mxu0 0.0
      %10031 = vmatpush1.msra.mxu0 0.0
      %10032 = vmatprep.subr.mxu0 0.0
      %10033 = vmatpush1.msra.mxu0 0.0
      %10034 = vmatprep.subr.mxu0 0.0
      %10035 = vmatpush1.msra.mxu0 0.0
      %10036 = vmatprep.subr.mxu0 0.0
      %10037 = vmatpush1.msra.mxu0 0.0
      %10038 = vmatprep.subr.mxu0 0.0
      %10039 = vmatpush1.msra.mxu0 0.0
      %10040 = vmatprep.mubr.f32.mxu0 0.0
      %10041 = vmatmul.mubr.f32.gmra.mrb[0].mxu0 %v9881
      %v10042 = vpop.f32.mrb[0].mxu0
      %v10043 = vadd.f32 0.0, %v10042
      %v10044 = vpop.f32.mrb[0].mxu0
      %10045 = vmatprep.mubr.f32.mxu0 0.0
      %10046 = vmatmul.mubr.f32.gmra.mrb[0].mxu0 %v9884
      %v10047 = vpop.f32.mrb[0].mxu0
      %v10048 = vadd.f32 0.0, %v10047
      %v10049 = vpop.f32.mrb[0].mxu0
      %10050 = vmatprep.mubr.f32.mxu0 0.0
      %10051 = vmatmul.mubr.f32.gmra.mrb[0].mxu0 %v9887
      %v10052 = vpop.f32.mrb[0].mxu0
      %v10053 = vadd.f32 0.0, %v10052
      %v10054 = vpop.f32.mrb[0].mxu0
      %10055 = vmatprep.mubr.f32.mxu0 0.0
      %10056 = vmatmul.mubr.f32.gmra.mrb[0].mxu0 %v9890
      %v10057 = vpop.f32.mrb[0].mxu0
      %v10058 = vadd.f32 0.0, %v10057
      %v10059 = vpop.f32.mrb[0].mxu0
      %10060 = vmatprep.mubr.f32.mxu0 0.0
      %10061 = vmatmul.mubr.f32.gmra.mrb[0].mxu0 %v9893
      %v10062 = vpop.f32.mrb[0].mxu0
      %v10063 = vadd.f32 0.0, %v10062
      %v10064 = vpop.f32.mrb[0].mxu0
      %10065 = vmatprep.mubr.f32.mxu0 0.0
      %10066 = vmatmul.mubr.f32.gmra.mrb[0].mxu0 %v9896
      %v10067 = vpop.f32.mrb[0].mxu0
      %v10068 = vadd.f32 0.0, %v10067
      %v10069 = vpop.f32.mrb[0].mxu0
      %10070 = vmatprep.mubr.f32.mxu0 0.0
      %10071 = vmatmul.mubr.f32.gmra.mrb[0].mxu0 %v9899
      %v10072 = vpop.f32.mrb[0].mxu0
      %v10073 = vadd.f32 0.0, %v10072
      %v10074 = vpop.f32.mrb[0].mxu0
      %10075 = vmatprep.mubr.f32.mxu0 0.0
      %10076 = vmatmul.mubr.f32.gmra.mrb[0].mxu0 %v9902
      %v10077 = vpop.f32.mrb[0].mxu0
      %v10078 = vadd.f32 0.0, %v10077
      %v10079 = vpop.f32.mrb[0].mxu0
      %10080 = vmatprep.mubr.f32.mxu0 0.0
      %10081 = vmatmul.mubr.f32.gmra.mrb[0].mxu0 %v9905
      %v10082 = vpop.f32.mrb[0].mxu0
      %v10083 = vadd.f32 0.0, %v10082
      %v10084 = vpop.f32.mrb[0].mxu0
      %10085 = vmatprep.mubr.f32.mxu0 0.0
      %10086 = vmatmul.mubr.f32.gmra.mrb[0].mxu0 %v9908
      %v10087 = vpop.f32.mrb[0].mxu0
      %v10088 = vadd.f32 0.0, %v10087
      %v10089 = vpop.f32.mrb[0].mxu0
      %10090 = vmatprep.mubr.f32.mxu0 0.0
      %10091 = vmatmul.mubr.f32.gmra.mrb[0].mxu0 %v9911
      %v10092 = vpop.f32.mrb[0].mxu0
      %v10093 = vadd.f32 0.0, %v10092
      %v10094 = vpop.f32.mrb[0].mxu0
      %10095 = vmatprep.mubr.f32.mxu0 0.0
      %10096 = vmatmul.mubr.f32.gmra.mrb[0].mxu0 %v9914
      %v10097 = vpop.f32.mrb[0].mxu0
      %v10098 = vadd.f32 0.0, %v10097
      %v10099 = vpop.f32.mrb[0].mxu0
      %10100 = vmatprep.mubr.f32.mxu0 0.0
      %10101 = vmatmul.mubr.f32.gmra.mrb[0].mxu0 %v9917
      %v10102 = vpop.f32.mrb[0].mxu0
      %v10103 = vadd.f32 0.0, %v10102
      %v10104 = vpop.f32.mrb[0].mxu0
      %10105 = vmatprep.mubr.f32.mxu0 0.0
      %10106 = vmatmul.mubr.f32.gmra.mrb[0].mxu0 %v9920
      %v10107 = vpop.f32.mrb[0].mxu0
      %v10108 = vadd.f32 0.0, %v10107
      %v10109 = vpop.f32.mrb[0].mxu0
      %10110 = vmatprep.mubr.f32.mxu0 0.0
      %10111 = vmatmul.mubr.f32.gmra.mrb[0].mxu0 %v9923
      %v10112 = vpop.f32.mrb[0].mxu0
      %v10113 = vadd.f32 0.0, %v10112
      %v10114 = vpop.f32.mrb[0].mxu0
      %10115 = vmatprep.mubr.f32.mxu0 0.0
      %10116 = vmatmul.mubr.f32.gmra.mrb[0].mxu0 %v9926
      %v10117 = vpop.f32.mrb[0].mxu0
      %v10118 = vadd.f32 0.0, %v10117
      %v10119 = vpop.f32.mrb[0].mxu0
      %10120 = vmatprep.mubr.f32.mxu0 0.0
      %10121 = vmatmul.mubr.f32.gmra.mrb[0].mxu0 %v9929
      %v10122 = vpop.f32.mrb[0].mxu0
      %v10123 = vadd.f32 0.0, %v10122
      %v10124 = vpop.f32.mrb[0].mxu0
      %10125 = vmatprep.mubr.f32.mxu0 0.0
      %10126 = vmatmul.mubr.f32.gmra.mrb[0].mxu0 %v9932
      %v10127 = vpop.f32.mrb[0].mxu0
      %v10128 = vadd.f32 0.0, %v10127
      %v10129 = vpop.f32.mrb[0].mxu0
      %10130 = vmatprep.mubr.f32.mxu0 0.0
      %10131 = vmatmul.mubr.f32.gmra.mrb[0].mxu0 %v9935
      %v10132 = vpop.f32.mrb[0].mxu0
      %v10133 = vadd.f32 0.0, %v10132
      %v10134 = vpop.f32.mrb[0].mxu0
      %10135 = vmatprep.mubr.f32.mxu0 0.0
      %10136 = vmatmul.mubr.f32.gmra.mrb[0].mxu0 %v9938
      %v10137 = vpop.f32.mrb[0].mxu0
      %v10138 = vadd.f32 0.0, %v10137
      %v10139 = vpop.f32.mrb[0].mxu0
      %10140 = vmatprep.mubr.f32.mxu0 0.0
      %10141 = vmatmul.mubr.f32.gmra.mrb[0].mxu0 %v9941
      %v10142 = vpop.f32.mrb[0].mxu0
      %v10143 = vadd.f32 0.0, %v10142
      %v10144 = vpop.f32.mrb[0].mxu0
      %10145 = vmatprep.mubr.f32.mxu0 0.0
      %10146 = vmatmul.mubr.f32.gmra.mrb[0].mxu0 %v9944
      %v10147 = vpop.f32.mrb[0].mxu0
      %v10148 = vadd.f32 0.0, %v10147
      %v10149 = vpop.f32.mrb[0].mxu0
      %10150 = vmatprep.mubr.f32.mxu0 0.0
      %10151 = vmatmul.mubr.f32.gmra.mrb[0].mxu0 %v9947
      %v10152 = vpop.f32.mrb[0].mxu0
      %v10153 = vadd.f32 0.0, %v10152
      %v10154 = vpop.f32.mrb[0].mxu0
      %10155 = vmatprep.mubr.f32.mxu0 0.0
      %10156 = vmatmul.mubr.f32.gmra.mrb[0].mxu0 %v9950
      %v10157 = vpop.f32.mrb[0].mxu0
      %v10158 = vadd.f32 0.0, %v10157
      %v10159 = vpop.f32.mrb[0].mxu0
      %10160 = vmatprep.mubr.f32.mxu0 0.0
      %10161 = vmatmul.mubr.f32.gmra.mrb[0].mxu0 %v9953
      %v10162 = vpop.f32.mrb[0].mxu0
      %v10163 = vadd.f32 0.0, %v10162
      %v10164 = vpop.f32.mrb[0].mxu0
      %10165 = vmatprep.mubr.f32.mxu0 0.0
      %10166 = vmatmul.mubr.f32.gmra.mrb[0].mxu0 %v9956
      %v10167 = vpop.f32.mrb[0].mxu0
      %v10168 = vadd.f32 0.0, %v10167
      %v10169 = vpop.f32.mrb[0].mxu0
      %10170 = vmatprep.mubr.f32.mxu0 0.0
      %10171 = vmatmul.mubr.f32.gmra.mrb[0].mxu0 %v9959
      %v10172 = vpop.f32.mrb[0].mxu0
      %v10173 = vadd.f32 0.0, %v10172
      %v10174 = vpop.f32.mrb[0].mxu0
      %10175 = vmatprep.mubr.f32.mxu0 0.0
      %10176 = vmatmul.mubr.f32.gmra.mrb[0].mxu0 %v9962
      %v10177 = vpop.f32.mrb[0].mxu0
      %v10178 = vadd.f32 0.0, %v10177
      %v10179 = vpop.f32.mrb[0].mxu0
      %10180 = vmatprep.mubr.f32.mxu0 0.0
      %10181 = vmatmul.mubr.f32.gmra.mrb[0].mxu0 %v9965
      %v10182 = vpop.f32.mrb[0].mxu0
      %v10183 = vadd.f32 0.0, %v10182
      %v10184 = vpop.f32.mrb[0].mxu0
      %10185 = vmatprep.mubr.f32.mxu0 0.0
      %10186 = vmatmul.mubr.f32.gmra.mrb[0].mxu0 %v9968
      %v10187 = vpop.f32.mrb[0].mxu0
      %v10188 = vadd.f32 0.0, %v10187
      %v10189 = vpop.f32.mrb[0].mxu0
      %10190 = vmatprep.mubr.f32.mxu0 0.0
      %10191 = vmatmul.mubr.f32.gmra.mrb[0].mxu0 %v9971
      %v10192 = vpop.f32.mrb[0].mxu0
      %v10193 = vadd.f32 0.0, %v10192
      %v10194 = vpop.f32.mrb[0].mxu0
      %10195 = vmatprep.mubr.f32.mxu0 0.0
      %10196 = vmatmul.mubr.f32.gmra.mrb[0].mxu0 %v9974
      %v10197 = vpop.f32.mrb[0].mxu0
      %v10198 = vadd.f32 0.0, %v10197
      %v10199 = vpop.f32.mrb[0].mxu0
      %10200 = vdwg.mxu0
      %v10201 = vld [vmem:[#allocation3] sm:$0xff]
      %v10202 = vld [vmem:[#allocation3 + $0x8] sm:$0xff]
      %v10203 = vld [vmem:[#allocation3 + $0x10] sm:$0xff]
      %v10204 = vld [vmem:[#allocation3 + $0x18] sm:$0xff]
      %v10205 = vld [vmem:[#allocation3 + $0x20] sm:$0xff]
      %v10206 = vld [vmem:[#allocation3 + $0x28] sm:$0xff]
      %v10207 = vld [vmem:[#allocation3 + $0x30] sm:$0xff]
      %v10208 = vld [vmem:[#allocation3 + $0x38] sm:$0xff]
      %v10209 = vld [vmem:[#allocation3 + $0x40] sm:$0xff]
      %v10210 = vld [vmem:[#allocation3 + $0x48] sm:$0xff]
      %v10211 = vld [vmem:[#allocation3 + $0x50] sm:$0xff]
      %v10212 = vld [vmem:[#allocation3 + $0x58] sm:$0xff]
      %v10213 = vld [vmem:[#allocation3 + $0x60] sm:$0xff]
      %v10214 = vld [vmem:[#allocation3 + $0x68] sm:$0xff]
      %v10215 = vld [vmem:[#allocation3 + $0x70] sm:$0xff]
      %v10216 = vld [vmem:[#allocation3 + $0x78] sm:$0xff]
      %v10217 = vld [vmem:[#allocation3 + $0x80] sm:$0xff]
      %v10218 = vld [vmem:[#allocation3 + $0x88] sm:$0xff]
      %v10219 = vld [vmem:[#allocation3 + $0x90] sm:$0xff]
      %v10220 = vld [vmem:[#allocation3 + $0x98] sm:$0xff]
      %v10221 = vld [vmem:[#allocation3 + $0xa0] sm:$0xff]
      %v10222 = vld [vmem:[#allocation3 + $0xa8] sm:$0xff]
      %v10223 = vld [vmem:[#allocation3 + $0xb0] sm:$0xff]
      %v10224 = vld [vmem:[#allocation3 + $0xb8] sm:$0xff]
      %v10225 = vld [vmem:[#allocation3 + $0xc0] sm:$0xff]
      %v10226 = vld [vmem:[#allocation3 + $0xc8] sm:$0xff]
      %v10227 = vld [vmem:[#allocation3 + $0xd0] sm:$0xff]
      %v10228 = vld [vmem:[#allocation3 + $0xd8] sm:$0xff]
      %v10229 = vld [vmem:[#allocation3 + $0xe0] sm:$0xff]
      %v10230 = vld [vmem:[#allocation3 + $0xe8] sm:$0xff]
      %v10231 = vld [vmem:[#allocation3 + $0xf0] sm:$0xff]
      %v10232 = vld [vmem:[#allocation3 + $0xf8] sm:$0xff]
      %v10233 = vadd.f32 %v10201, %v10043
      %v10234 = vadd.f32 %v10202, %v10048
      %v10235 = vadd.f32 %v10203, %v10053
      %v10236 = vadd.f32 %v10204, %v10058
      %v10237 = vadd.f32 %v10205, %v10063
      %v10238 = vadd.f32 %v10206, %v10068
      %v10239 = vadd.f32 %v10207, %v10073
      %v10240 = vadd.f32 %v10208, %v10078
      %v10241 = vadd.f32 %v10209, %v10083
      %v10242 = vadd.f32 %v10210, %v10088
      %v10243 = vadd.f32 %v10211, %v10093
      %v10244 = vadd.f32 %v10212, %v10098
      %v10245 = vadd.f32 %v10213, %v10103
      %v10246 = vadd.f32 %v10214, %v10108
      %v10247 = vadd.f32 %v10215, %v10113
      %v10248 = vadd.f32 %v10216, %v10118
      %v10249 = vadd.f32 %v10217, %v10123
      %v10250 = vadd.f32 %v10218, %v10128
      %v10251 = vadd.f32 %v10219, %v10133
      %v10252 = vadd.f32 %v10220, %v10138
      %v10253 = vadd.f32 %v10221, %v10143
      %v10254 = vadd.f32 %v10222, %v10148
      %v10255 = vadd.f32 %v10223, %v10153
      %v10256 = vadd.f32 %v10224, %v10158
      %v10257 = vadd.f32 %v10225, %v10163
      %v10258 = vadd.f32 %v10226, %v10168
      %v10259 = vadd.f32 %v10227, %v10173
      %v10260 = vadd.f32 %v10228, %v10178
      %v10261 = vadd.f32 %v10229, %v10183
      %v10262 = vadd.f32 %v10230, %v10188
      %v10263 = vadd.f32 %v10231, %v10193
      %v10264 = vadd.f32 %v10232, %v10198
      %10265 = vst.msk [vmem:[#allocation3] sm:$0xff] %vm728, %v10233
      %10266 = vst.msk [vmem:[#allocation3 + $0x8] sm:$0xff] %vm728, %v10234
      %10267 = vst.msk [vmem:[#allocation3 + $0x10] sm:$0xff] %vm728, %v10235
      %10268 = vst.msk [vmem:[#allocation3 + $0x18] sm:$0xff] %vm728, %v10236
      %10269 = vst.msk [vmem:[#allocation3 + $0x20] sm:$0xff] %vm728, %v10237
      %10270 = vst.msk [vmem:[#allocation3 + $0x28] sm:$0xff] %vm728, %v10238
      %10271 = vst.msk [vmem:[#allocation3 + $0x30] sm:$0xff] %vm728, %v10239
      %10272 = vst.msk [vmem:[#allocation3 + $0x38] sm:$0xff] %vm728, %v10240
      %10273 = vst.msk [vmem:[#allocation3 + $0x40] sm:$0xff] %vm728, %v10241
      %10274 = vst.msk [vmem:[#allocation3 + $0x48] sm:$0xff] %vm728, %v10242
      %10275 = vst.msk [vmem:[#allocation3 + $0x50] sm:$0xff] %vm728, %v10243
      %10276 = vst.msk [vmem:[#allocation3 + $0x58] sm:$0xff] %vm728, %v10244
      %10277 = vst.msk [vmem:[#allocation3 + $0x60] sm:$0xff] %vm728, %v10245
      %10278 = vst.msk [vmem:[#allocation3 + $0x68] sm:$0xff] %vm728, %v10246
      %10279 = vst.msk [vmem:[#allocation3 + $0x70] sm:$0xff] %vm728, %v10247
      %10280 = vst.msk [vmem:[#allocation3 + $0x78] sm:$0xff] %vm728, %v10248
      %10281 = vst.msk [vmem:[#allocation3 + $0x80] sm:$0xff] %vm728, %v10249
      %10282 = vst.msk [vmem:[#allocation3 + $0x88] sm:$0xff] %vm728, %v10250
      %10283 = vst.msk [vmem:[#allocation3 + $0x90] sm:$0xff] %vm728, %v10251
      %10284 = vst.msk [vmem:[#allocation3 + $0x98] sm:$0xff] %vm728, %v10252
      %10285 = vst.msk [vmem:[#allocation3 + $0xa0] sm:$0xff] %vm728, %v10253
      %10286 = vst.msk [vmem:[#allocation3 + $0xa8] sm:$0xff] %vm728, %v10254
      %10287 = vst.msk [vmem:[#allocation3 + $0xb0] sm:$0xff] %vm728, %v10255
      %10288 = vst.msk [vmem:[#allocation3 + $0xb8] sm:$0xff] %vm728, %v10256
      %10289 = vst.msk [vmem:[#allocation3 + $0xc0] sm:$0xff] %vm728, %v10257
      %10290 = vst.msk [vmem:[#allocation3 + $0xc8] sm:$0xff] %vm728, %v10258
      %10291 = vst.msk [vmem:[#allocation3 + $0xd0] sm:$0xff] %vm728, %v10259
      %10292 = vst.msk [vmem:[#allocation3 + $0xd8] sm:$0xff] %vm728, %v10260
      %10293 = vst.msk [vmem:[#allocation3 + $0xe0] sm:$0xff] %vm728, %v10261
      %10294 = vst.msk [vmem:[#allocation3 + $0xe8] sm:$0xff] %vm728, %v10262
      %10295 = vst.msk [vmem:[#allocation3 + $0xf0] sm:$0xff] %vm728, %v10263
      %10296 = vst.msk [vmem:[#allocation3 + $0xf8] sm:$0xff] %vm728, %v10264
      %v10297 = vld [vmem:[%s9396 + $0x2] sm:$0xff]
      %v10298 = vld [vmem:[%s9396 + $0xa] sm:$0xff]
      %v10299 = vld [vmem:[%s9396 + $0x1a] sm:$0xff]
      %v10300 = vld [vmem:[%s9396 + $0x22] sm:$0xff]
      %v10301 = vld [vmem:[%s9396 + $0x32] sm:$0xff]
      %v10302 = vld [vmem:[%s9396 + $0x3a] sm:$0xff]
      %v10303 = vld [vmem:[%s9396 + $0x4a] sm:$0xff]
      %v10304 = vld [vmem:[%s9396 + $0x52] sm:$0xff]
      %v10305 = vld [vmem:[%s9396 + $0x62] sm:$0xff]
      %v10306 = vld [vmem:[%s9396 + $0x6a] sm:$0xff]
      %v10307 = vld [vmem:[%s9396 + $0x7a] sm:$0xff]
      %v10308 = vld [vmem:[%s9396 + $0x82] sm:$0xff]
      %v10309 = vld [vmem:[%s9396 + $0x92] sm:$0xff]
      %v10310 = vld [vmem:[%s9396 + $0x9a] sm:$0xff]
      %v10311 = vld [vmem:[%s9396 + $0xaa] sm:$0xff]
      %v10312 = vld [vmem:[%s9396 + $0xb2] sm:$0xff]
      %v10313 = vld [vmem:[%s9396 + $0xc2] sm:$0xff]
      %v10314 = vld [vmem:[%s9396 + $0xca] sm:$0xff]
      %v10315 = vld [vmem:[%s9396 + $0xda] sm:$0xff]
      %v10316 = vld [vmem:[%s9396 + $0xe2] sm:$0xff]
      %v10317 = vld [vmem:[%s9396 + $0xf2] sm:$0xff]
      %v10318 = vld [vmem:[%s9396 + $0xfa] sm:$0xff]
      %v10319 = vld [vmem:[%s9396 + $0x10a] sm:$0xff]
      %v10320 = vld [vmem:[%s9396 + $0x112] sm:$0xff]
      %v10321 = vld [vmem:[%s9396 + $0x122] sm:$0xff]
      %v10322 = vld [vmem:[%s9396 + $0x12a] sm:$0xff]
      %v10323 = vld [vmem:[%s9396 + $0x13a] sm:$0xff]
      %v10324 = vld [vmem:[%s9396 + $0x142] sm:$0xff]
      %v10325 = vld [vmem:[%s9396 + $0x152] sm:$0xff]
      %v10326 = vld [vmem:[%s9396 + $0x15a] sm:$0xff]
      %v10327 = vld [vmem:[%s9396 + $0x16a] sm:$0xff]
      %v10328 = vld [vmem:[%s9396 + $0x172] sm:$0xff]
      %v10329 = vld [vmem:[%s2 + $0x40] sm:$0xff]
      %v10331 = vsel %vm728, %v10297, 0
      %v10334 = vsel %vm728, %v10298, 0
      %v10337 = vsel %vm728, %v10299, 0
      %v10340 = vsel %vm728, %v10300, 0
      %v10343 = vsel %vm728, %v10301, 0
      %v10346 = vsel %vm728, %v10302, 0
      %v10349 = vsel %vm728, %v10303, 0
      %v10352 = vsel %vm728, %v10304, 0
      %v10355 = vsel %vm728, %v10305, 0
      %v10358 = vsel %vm728, %v10306, 0
      %v10361 = vsel %vm728, %v10307, 0
      %v10364 = vsel %vm728, %v10308, 0
      %v10367 = vsel %vm728, %v10309, 0
      %v10370 = vsel %vm728, %v10310, 0
      %v10373 = vsel %vm728, %v10311, 0
      %v10376 = vsel %vm728, %v10312, 0
      %v10379 = vsel %vm728, %v10313, 0
      %v10382 = vsel %vm728, %v10314, 0
      %v10385 = vsel %vm728, %v10315, 0
      %v10388 = vsel %vm728, %v10316, 0
      %v10391 = vsel %vm728, %v10317, 0
      %v10394 = vsel %vm728, %v10318, 0
      %v10397 = vsel %vm728, %v10319, 0
      %v10400 = vsel %vm728, %v10320, 0
      %v10403 = vsel %vm728, %v10321, 0
      %v10406 = vsel %vm728, %v10322, 0
      %v10409 = vsel %vm728, %v10323, 0
      %v10412 = vsel %vm728, %v10324, 0
      %v10415 = vsel %vm728, %v10325, 0
      %v10418 = vsel %vm728, %v10326, 0
      %v10421 = vsel %vm728, %v10327, 0
      %v10424 = vsel %vm728, %v10328, 0
      %10426 = vmatprep.subr.mxu0 0.0
      %10427 = vmatpush1.msra.mxu0 %v10329
      %10428 = vmatprep.subr.mxu0 0.0
      %10429 = vmatpush1.msra.mxu0 0.0
      %10430 = vmatprep.subr.mxu0 0.0
      %10431 = vmatpush1.msra.mxu0 0.0
      %10432 = vmatprep.subr.mxu0 0.0
      %10433 = vmatpush1.msra.mxu0 0.0
      %10434 = vmatprep.subr.mxu0 0.0
      %10435 = vmatpush1.msra.mxu0 0.0
      %10436 = vmatprep.subr.mxu0 0.0
      %10437 = vmatpush1.msra.mxu0 0.0
      %10438 = vmatprep.subr.mxu0 0.0
      %10439 = vmatpush1.msra.mxu0 0.0
      %10440 = vmatprep.subr.mxu0 0.0
      %10441 = vmatpush1.msra.mxu0 0.0
      %10442 = vmatprep.subr.mxu0 0.0
      %10443 = vmatpush1.msra.mxu0 0.0
      %10444 = vmatprep.subr.mxu0 0.0
      %10445 = vmatpush1.msra.mxu0 0.0
      %10446 = vmatprep.subr.mxu0 0.0
      %10447 = vmatpush1.msra.mxu0 0.0
      %10448 = vmatprep.subr.mxu0 0.0
      %10449 = vmatpush1.msra.mxu0 0.0
      %10450 = vmatprep.subr.mxu0 0.0
      %10451 = vmatpush1.msra.mxu0 0.0
      %10452 = vmatprep.subr.mxu0 0.0
      %10453 = vmatpush1.msra.mxu0 0.0
      %10454 = vmatprep.subr.mxu0 0.0
      %10455 = vmatpush1.msra.mxu0 0.0
      %10456 = vmatprep.subr.mxu0 0.0
      %10457 = vmatpush1.msra.mxu0 0.0
      %10458 = vmatprep.subr.mxu0 0.0
      %10459 = vmatpush1.msra.mxu0 0.0
      %10460 = vmatprep.subr.mxu0 0.0
      %10461 = vmatpush1.msra.mxu0 0.0
      %10462 = vmatprep.subr.mxu0 0.0
      %10463 = vmatpush1.msra.mxu0 0.0
      %10464 = vmatprep.subr.mxu0 0.0
      %10465 = vmatpush1.msra.mxu0 0.0
      %10466 = vmatprep.subr.mxu0 0.0
      %10467 = vmatpush1.msra.mxu0 0.0
      %10468 = vmatprep.subr.mxu0 0.0
      %10469 = vmatpush1.msra.mxu0 0.0
      %10470 = vmatprep.subr.mxu0 0.0
      %10471 = vmatpush1.msra.mxu0 0.0
      %10472 = vmatprep.subr.mxu0 0.0
      %10473 = vmatpush1.msra.mxu0 0.0
      %10474 = vmatprep.subr.mxu0 0.0
      %10475 = vmatpush1.msra.mxu0 0.0
      %10476 = vmatprep.subr.mxu0 0.0
      %10477 = vmatpush1.msra.mxu0 0.0
      %10478 = vmatprep.subr.mxu0 0.0
      %10479 = vmatpush1.msra.mxu0 0.0
      %10480 = vmatprep.subr.mxu0 0.0
      %10481 = vmatpush1.msra.mxu0 0.0
      %10482 = vmatprep.subr.mxu0 0.0
      %10483 = vmatpush1.msra.mxu0 0.0
      %10484 = vmatprep.subr.mxu0 0.0
      %10485 = vmatpush1.msra.mxu0 0.0
      %10486 = vmatprep.subr.mxu0 0.0
      %10487 = vmatpush1.msra.mxu0 0.0
      %10488 = vmatprep.subr.mxu0 0.0
      %10489 = vmatpush1.msra.mxu0 0.0
      %10490 = vmatprep.mubr.f32.mxu0 0.0
      %10491 = vmatmul.mubr.f32.gmra.mrb[0].mxu0 %v10331
      %v10492 = vpop.f32.mrb[0].mxu0
      %v10493 = vadd.f32 0.0, %v10492
      %v10494 = vpop.f32.mrb[0].mxu0
      %10495 = vmatprep.mubr.f32.mxu0 0.0
      %10496 = vmatmul.mubr.f32.gmra.mrb[0].mxu0 %v10334
      %v10497 = vpop.f32.mrb[0].mxu0
      %v10498 = vadd.f32 0.0, %v10497
      %v10499 = vpop.f32.mrb[0].mxu0
      %10500 = vmatprep.mubr.f32.mxu0 0.0
      %10501 = vmatmul.mubr.f32.gmra.mrb[0].mxu0 %v10337
      %v10502 = vpop.f32.mrb[0].mxu0
      %v10503 = vadd.f32 0.0, %v10502
      %v10504 = vpop.f32.mrb[0].mxu0
      %10505 = vmatprep.mubr.f32.mxu0 0.0
      %10506 = vmatmul.mubr.f32.gmra.mrb[0].mxu0 %v10340
      %v10507 = vpop.f32.mrb[0].mxu0
      %v10508 = vadd.f32 0.0, %v10507
      %v10509 = vpop.f32.mrb[0].mxu0
      %10510 = vmatprep.mubr.f32.mxu0 0.0
      %10511 = vmatmul.mubr.f32.gmra.mrb[0].mxu0 %v10343
      %v10512 = vpop.f32.mrb[0].mxu0
      %v10513 = vadd.f32 0.0, %v10512
      %v10514 = vpop.f32.mrb[0].mxu0
      %10515 = vmatprep.mubr.f32.mxu0 0.0
      %10516 = vmatmul.mubr.f32.gmra.mrb[0].mxu0 %v10346
      %v10517 = vpop.f32.mrb[0].mxu0
      %v10518 = vadd.f32 0.0, %v10517
      %v10519 = vpop.f32.mrb[0].mxu0
      %10520 = vmatprep.mubr.f32.mxu0 0.0
      %10521 = vmatmul.mubr.f32.gmra.mrb[0].mxu0 %v10349
      %v10522 = vpop.f32.mrb[0].mxu0
      %v10523 = vadd.f32 0.0, %v10522
      %v10524 = vpop.f32.mrb[0].mxu0
      %10525 = vmatprep.mubr.f32.mxu0 0.0
      %10526 = vmatmul.mubr.f32.gmra.mrb[0].mxu0 %v10352
      %v10527 = vpop.f32.mrb[0].mxu0
      %v10528 = vadd.f32 0.0, %v10527
      %v10529 = vpop.f32.mrb[0].mxu0
      %10530 = vmatprep.mubr.f32.mxu0 0.0
      %10531 = vmatmul.mubr.f32.gmra.mrb[0].mxu0 %v10355
      %v10532 = vpop.f32.mrb[0].mxu0
      %v10533 = vadd.f32 0.0, %v10532
      %v10534 = vpop.f32.mrb[0].mxu0
      %10535 = vmatprep.mubr.f32.mxu0 0.0
      %10536 = vmatmul.mubr.f32.gmra.mrb[0].mxu0 %v10358
      %v10537 = vpop.f32.mrb[0].mxu0
      %v10538 = vadd.f32 0.0, %v10537
      %v10539 = vpop.f32.mrb[0].mxu0
      %10540 = vmatprep.mubr.f32.mxu0 0.0
      %10541 = vmatmul.mubr.f32.gmra.mrb[0].mxu0 %v10361
      %v10542 = vpop.f32.mrb[0].mxu0
      %v10543 = vadd.f32 0.0, %v10542
      %v10544 = vpop.f32.mrb[0].mxu0
      %10545 = vmatprep.mubr.f32.mxu0 0.0
      %10546 = vmatmul.mubr.f32.gmra.mrb[0].mxu0 %v10364
      %v10547 = vpop.f32.mrb[0].mxu0
      %v10548 = vadd.f32 0.0, %v10547
      %v10549 = vpop.f32.mrb[0].mxu0
      %10550 = vmatprep.mubr.f32.mxu0 0.0
      %10551 = vmatmul.mubr.f32.gmra.mrb[0].mxu0 %v10367
      %v10552 = vpop.f32.mrb[0].mxu0
      %v10553 = vadd.f32 0.0, %v10552
      %v10554 = vpop.f32.mrb[0].mxu0
      %10555 = vmatprep.mubr.f32.mxu0 0.0
      %10556 = vmatmul.mubr.f32.gmra.mrb[0].mxu0 %v10370
      %v10557 = vpop.f32.mrb[0].mxu0
      %v10558 = vadd.f32 0.0, %v10557
      %v10559 = vpop.f32.mrb[0].mxu0
      %10560 = vmatprep.mubr.f32.mxu0 0.0
      %10561 = vmatmul.mubr.f32.gmra.mrb[0].mxu0 %v10373
      %v10562 = vpop.f32.mrb[0].mxu0
      %v10563 = vadd.f32 0.0, %v10562
      %v10564 = vpop.f32.mrb[0].mxu0
      %10565 = vmatprep.mubr.f32.mxu0 0.0
      %10566 = vmatmul.mubr.f32.gmra.mrb[0].mxu0 %v10376
      %v10567 = vpop.f32.mrb[0].mxu0
      %v10568 = vadd.f32 0.0, %v10567
      %v10569 = vpop.f32.mrb[0].mxu0
      %10570 = vmatprep.mubr.f32.mxu0 0.0
      %10571 = vmatmul.mubr.f32.gmra.mrb[0].mxu0 %v10379
      %v10572 = vpop.f32.mrb[0].mxu0
      %v10573 = vadd.f32 0.0, %v10572
      %v10574 = vpop.f32.mrb[0].mxu0
      %10575 = vmatprep.mubr.f32.mxu0 0.0
      %10576 = vmatmul.mubr.f32.gmra.mrb[0].mxu0 %v10382
      %v10577 = vpop.f32.mrb[0].mxu0
      %v10578 = vadd.f32 0.0, %v10577
      %v10579 = vpop.f32.mrb[0].mxu0
      %10580 = vmatprep.mubr.f32.mxu0 0.0
      %10581 = vmatmul.mubr.f32.gmra.mrb[0].mxu0 %v10385
      %v10582 = vpop.f32.mrb[0].mxu0
      %v10583 = vadd.f32 0.0, %v10582
      %v10584 = vpop.f32.mrb[0].mxu0
      %10585 = vmatprep.mubr.f32.mxu0 0.0
      %10586 = vmatmul.mubr.f32.gmra.mrb[0].mxu0 %v10388
      %v10587 = vpop.f32.mrb[0].mxu0
      %v10588 = vadd.f32 0.0, %v10587
      %v10589 = vpop.f32.mrb[0].mxu0
      %10590 = vmatprep.mubr.f32.mxu0 0.0
      %10591 = vmatmul.mubr.f32.gmra.mrb[0].mxu0 %v10391
      %v10592 = vpop.f32.mrb[0].mxu0
      %v10593 = vadd.f32 0.0, %v10592
      %v10594 = vpop.f32.mrb[0].mxu0
      %10595 = vmatprep.mubr.f32.mxu0 0.0
      %10596 = vmatmul.mubr.f32.gmra.mrb[0].mxu0 %v10394
      %v10597 = vpop.f32.mrb[0].mxu0
      %v10598 = vadd.f32 0.0, %v10597
      %v10599 = vpop.f32.mrb[0].mxu0
      %10600 = vmatprep.mubr.f32.mxu0 0.0
      %10601 = vmatmul.mubr.f32.gmra.mrb[0].mxu0 %v10397
      %v10602 = vpop.f32.mrb[0].mxu0
      %v10603 = vadd.f32 0.0, %v10602
      %v10604 = vpop.f32.mrb[0].mxu0
      %10605 = vmatprep.mubr.f32.mxu0 0.0
      %10606 = vmatmul.mubr.f32.gmra.mrb[0].mxu0 %v10400
      %v10607 = vpop.f32.mrb[0].mxu0
      %v10608 = vadd.f32 0.0, %v10607
      %v10609 = vpop.f32.mrb[0].mxu0
      %10610 = vmatprep.mubr.f32.mxu0 0.0
      %10611 = vmatmul.mubr.f32.gmra.mrb[0].mxu0 %v10403
      %v10612 = vpop.f32.mrb[0].mxu0
      %v10613 = vadd.f32 0.0, %v10612
      %v10614 = vpop.f32.mrb[0].mxu0
      %10615 = vmatprep.mubr.f32.mxu0 0.0
      %10616 = vmatmul.mubr.f32.gmra.mrb[0].mxu0 %v10406
      %v10617 = vpop.f32.mrb[0].mxu0
      %v10618 = vadd.f32 0.0, %v10617
      %v10619 = vpop.f32.mrb[0].mxu0
      %10620 = vmatprep.mubr.f32.mxu0 0.0
      %10621 = vmatmul.mubr.f32.gmra.mrb[0].mxu0 %v10409
      %v10622 = vpop.f32.mrb[0].mxu0
      %v10623 = vadd.f32 0.0, %v10622
      %v10624 = vpop.f32.mrb[0].mxu0
      %10625 = vmatprep.mubr.f32.mxu0 0.0
      %10626 = vmatmul.mubr.f32.gmra.mrb[0].mxu0 %v10412
      %v10627 = vpop.f32.mrb[0].mxu0
      %v10628 = vadd.f32 0.0, %v10627
      %v10629 = vpop.f32.mrb[0].mxu0
      %10630 = vmatprep.mubr.f32.mxu0 0.0
      %10631 = vmatmul.mubr.f32.gmra.mrb[0].mxu0 %v10415
      %v10632 = vpop.f32.mrb[0].mxu0
      %v10633 = vadd.f32 0.0, %v10632
      %v10634 = vpop.f32.mrb[0].mxu0
      %10635 = vmatprep.mubr.f32.mxu0 0.0
      %10636 = vmatmul.mubr.f32.gmra.mrb[0].mxu0 %v10418
      %v10637 = vpop.f32.mrb[0].mxu0
      %v10638 = vadd.f32 0.0, %v10637
      %v10639 = vpop.f32.mrb[0].mxu0
      %10640 = vmatprep.mubr.f32.mxu0 0.0
      %10641 = vmatmul.mubr.f32.gmra.mrb[0].mxu0 %v10421
      %v10642 = vpop.f32.mrb[0].mxu0
      %v10643 = vadd.f32 0.0, %v10642
      %v10644 = vpop.f32.mrb[0].mxu0
      %10645 = vmatprep.mubr.f32.mxu0 0.0
      %10646 = vmatmul.mubr.f32.gmra.mrb[0].mxu0 %v10424
      %v10647 = vpop.f32.mrb[0].mxu0
      %v10648 = vadd.f32 0.0, %v10647
      %v10649 = vpop.f32.mrb[0].mxu0
      %10650 = vdwg.mxu0
      %v10651 = vld [vmem:[#allocation3] sm:$0xff]
      %v10652 = vld [vmem:[#allocation3 + $0x8] sm:$0xff]
      %v10653 = vld [vmem:[#allocation3 + $0x10] sm:$0xff]
      %v10654 = vld [vmem:[#allocation3 + $0x18] sm:$0xff]
      %v10655 = vld [vmem:[#allocation3 + $0x20] sm:$0xff]
      %v10656 = vld [vmem:[#allocation3 + $0x28] sm:$0xff]
      %v10657 = vld [vmem:[#allocation3 + $0x30] sm:$0xff]
      %v10658 = vld [vmem:[#allocation3 + $0x38] sm:$0xff]
      %v10659 = vld [vmem:[#allocation3 + $0x40] sm:$0xff]
      %v10660 = vld [vmem:[#allocation3 + $0x48] sm:$0xff]
      %v10661 = vld [vmem:[#allocation3 + $0x50] sm:$0xff]
      %v10662 = vld [vmem:[#allocation3 + $0x58] sm:$0xff]
      %v10663 = vld [vmem:[#allocation3 + $0x60] sm:$0xff]
      %v10664 = vld [vmem:[#allocation3 + $0x68] sm:$0xff]
      %v10665 = vld [vmem:[#allocation3 + $0x70] sm:$0xff]
      %v10666 = vld [vmem:[#allocation3 + $0x78] sm:$0xff]
      %v10667 = vld [vmem:[#allocation3 + $0x80] sm:$0xff]
      %v10668 = vld [vmem:[#allocation3 + $0x88] sm:$0xff]
      %v10669 = vld [vmem:[#allocation3 + $0x90] sm:$0xff]
      %v10670 = vld [vmem:[#allocation3 + $0x98] sm:$0xff]
      %v10671 = vld [vmem:[#allocation3 + $0xa0] sm:$0xff]
      %v10672 = vld [vmem:[#allocation3 + $0xa8] sm:$0xff]
      %v10673 = vld [vmem:[#allocation3 + $0xb0] sm:$0xff]
      %v10674 = vld [vmem:[#allocation3 + $0xb8] sm:$0xff]
      %v10675 = vld [vmem:[#allocation3 + $0xc0] sm:$0xff]
      %v10676 = vld [vmem:[#allocation3 + $0xc8] sm:$0xff]
      %v10677 = vld [vmem:[#allocation3 + $0xd0] sm:$0xff]
      %v10678 = vld [vmem:[#allocation3 + $0xd8] sm:$0xff]
      %v10679 = vld [vmem:[#allocation3 + $0xe0] sm:$0xff]
      %v10680 = vld [vmem:[#allocation3 + $0xe8] sm:$0xff]
      %v10681 = vld [vmem:[#allocation3 + $0xf0] sm:$0xff]
      %v10682 = vld [vmem:[#allocation3 + $0xf8] sm:$0xff]
      %v10683 = vadd.f32 %v10651, %v10493
      %v10684 = vadd.f32 %v10652, %v10498
      %v10685 = vadd.f32 %v10653, %v10503
      %v10686 = vadd.f32 %v10654, %v10508
      %v10687 = vadd.f32 %v10655, %v10513
      %v10688 = vadd.f32 %v10656, %v10518
      %v10689 = vadd.f32 %v10657, %v10523
      %v10690 = vadd.f32 %v10658, %v10528
      %v10691 = vadd.f32 %v10659, %v10533
      %v10692 = vadd.f32 %v10660, %v10538
      %v10693 = vadd.f32 %v10661, %v10543
      %v10694 = vadd.f32 %v10662, %v10548
      %v10695 = vadd.f32 %v10663, %v10553
      %v10696 = vadd.f32 %v10664, %v10558
      %v10697 = vadd.f32 %v10665, %v10563
      %v10698 = vadd.f32 %v10666, %v10568
      %v10699 = vadd.f32 %v10667, %v10573
      %v10700 = vadd.f32 %v10668, %v10578
      %v10701 = vadd.f32 %v10669, %v10583
      %v10702 = vadd.f32 %v10670, %v10588
      %v10703 = vadd.f32 %v10671, %v10593
      %v10704 = vadd.f32 %v10672, %v10598
      %v10705 = vadd.f32 %v10673, %v10603
      %v10706 = vadd.f32 %v10674, %v10608
      %v10707 = vadd.f32 %v10675, %v10613
      %v10708 = vadd.f32 %v10676, %v10618
      %v10709 = vadd.f32 %v10677, %v10623
      %v10710 = vadd.f32 %v10678, %v10628
      %v10711 = vadd.f32 %v10679, %v10633
      %v10712 = vadd.f32 %v10680, %v10638
      %v10713 = vadd.f32 %v10681, %v10643
      %v10714 = vadd.f32 %v10682, %v10648
      %10715 = vst.msk [vmem:[#allocation3] sm:$0xff] %vm728, %v10683
      %10716 = vst.msk [vmem:[#allocation3 + $0x8] sm:$0xff] %vm728, %v10684
      %10717 = vst.msk [vmem:[#allocation3 + $0x10] sm:$0xff] %vm728, %v10685
      %10718 = vst.msk [vmem:[#allocation3 + $0x18] sm:$0xff] %vm728, %v10686
      %10719 = vst.msk [vmem:[#allocation3 + $0x20] sm:$0xff] %vm728, %v10687
      %10720 = vst.msk [vmem:[#allocation3 + $0x28] sm:$0xff] %vm728, %v10688
      %10721 = vst.msk [vmem:[#allocation3 + $0x30] sm:$0xff] %vm728, %v10689
      %10722 = vst.msk [vmem:[#allocation3 + $0x38] sm:$0xff] %vm728, %v10690
      %10723 = vst.msk [vmem:[#allocation3 + $0x40] sm:$0xff] %vm728, %v10691
      %10724 = vst.msk [vmem:[#allocation3 + $0x48] sm:$0xff] %vm728, %v10692
      %10725 = vst.msk [vmem:[#allocation3 + $0x50] sm:$0xff] %vm728, %v10693
      %10726 = vst.msk [vmem:[#allocation3 + $0x58] sm:$0xff] %vm728, %v10694
      %10727 = vst.msk [vmem:[#allocation3 + $0x60] sm:$0xff] %vm728, %v10695
      %10728 = vst.msk [vmem:[#allocation3 + $0x68] sm:$0xff] %vm728, %v10696
      %10729 = vst.msk [vmem:[#allocation3 + $0x70] sm:$0xff] %vm728, %v10697
      %10730 = vst.msk [vmem:[#allocation3 + $0x78] sm:$0xff] %vm728, %v10698
      %10731 = vst.msk [vmem:[#allocation3 + $0x80] sm:$0xff] %vm728, %v10699
      %10732 = vst.msk [vmem:[#allocation3 + $0x88] sm:$0xff] %vm728, %v10700
      %10733 = vst.msk [vmem:[#allocation3 + $0x90] sm:$0xff] %vm728, %v10701
      %10734 = vst.msk [vmem:[#allocation3 + $0x98] sm:$0xff] %vm728, %v10702
      %10735 = vst.msk [vmem:[#allocation3 + $0xa0] sm:$0xff] %vm728, %v10703
      %10736 = vst.msk [vmem:[#allocation3 + $0xa8] sm:$0xff] %vm728, %v10704
      %10737 = vst.msk [vmem:[#allocation3 + $0xb0] sm:$0xff] %vm728, %v10705
      %10738 = vst.msk [vmem:[#allocation3 + $0xb8] sm:$0xff] %vm728, %v10706
      %10739 = vst.msk [vmem:[#allocation3 + $0xc0] sm:$0xff] %vm728, %v10707
      %10740 = vst.msk [vmem:[#allocation3 + $0xc8] sm:$0xff] %vm728, %v10708
      %10741 = vst.msk [vmem:[#allocation3 + $0xd0] sm:$0xff] %vm728, %v10709
      %10742 = vst.msk [vmem:[#allocation3 + $0xd8] sm:$0xff] %vm728, %v10710
      %10743 = vst.msk [vmem:[#allocation3 + $0xe0] sm:$0xff] %vm728, %v10711
      %10744 = vst.msk [vmem:[#allocation3 + $0xe8] sm:$0xff] %vm728, %v10712
      %10745 = vst.msk [vmem:[#allocation3 + $0xf0] sm:$0xff] %vm728, %v10713
      %10746 = vst.msk [vmem:[#allocation3 + $0xf8] sm:$0xff] %vm728, %v10714
      %v10747 = vld [vmem:[#allocation3] sm:$0xff]
      %v10748 = vld [vmem:[#allocation3 + $0x8] sm:$0xff]
      %v10749 = vld [vmem:[#allocation3 + $0x10] sm:$0xff]
      %v10750 = vld [vmem:[#allocation3 + $0x18] sm:$0xff]
      %v10751 = vld [vmem:[#allocation3 + $0x20] sm:$0xff]
      %v10752 = vld [vmem:[#allocation3 + $0x28] sm:$0xff]
      %v10753 = vld [vmem:[#allocation3 + $0x30] sm:$0xff]
      %v10754 = vld [vmem:[#allocation3 + $0x38] sm:$0xff]
      %v10755 = vld [vmem:[#allocation3 + $0x40] sm:$0xff]
      %v10756 = vld [vmem:[#allocation3 + $0x48] sm:$0xff]
      %v10757 = vld [vmem:[#allocation3 + $0x50] sm:$0xff]
      %v10758 = vld [vmem:[#allocation3 + $0x58] sm:$0xff]
      %v10759 = vld [vmem:[#allocation3 + $0x60] sm:$0xff]
      %v10760 = vld [vmem:[#allocation3 + $0x68] sm:$0xff]
      %v10761 = vld [vmem:[#allocation3 + $0x70] sm:$0xff]
      %v10762 = vld [vmem:[#allocation3 + $0x78] sm:$0xff]
      %v10763 = vld [vmem:[#allocation3 + $0x80] sm:$0xff]
      %v10764 = vld [vmem:[#allocation3 + $0x88] sm:$0xff]
      %v10765 = vld [vmem:[#allocation3 + $0x90] sm:$0xff]
      %v10766 = vld [vmem:[#allocation3 + $0x98] sm:$0xff]
      %v10767 = vld [vmem:[#allocation3 + $0xa0] sm:$0xff]
      %v10768 = vld [vmem:[#allocation3 + $0xa8] sm:$0xff]
      %v10769 = vld [vmem:[#allocation3 + $0xb0] sm:$0xff]
      %v10770 = vld [vmem:[#allocation3 + $0xb8] sm:$0xff]
      %v10771 = vld [vmem:[#allocation3 + $0xc0] sm:$0xff]
      %v10772 = vld [vmem:[#allocation3 + $0xc8] sm:$0xff]
      %v10773 = vld [vmem:[#allocation3 + $0xd0] sm:$0xff]
      %v10774 = vld [vmem:[#allocation3 + $0xd8] sm:$0xff]
      %v10775 = vld [vmem:[#allocation3 + $0xe0] sm:$0xff]
      %v10776 = vld [vmem:[#allocation3 + $0xe8] sm:$0xff]
      %v10777 = vld [vmem:[#allocation3 + $0xf0] sm:$0xff]
      %v10778 = vld [vmem:[#allocation3 + $0xf8] sm:$0xff]
      %v10779 = vmax.f32 %v10747, 0.0
      %v10780 = vmax.f32 %v10748, 0.0
      %v10781 = vmax.f32 %v10749, 0.0
      %v10782 = vmax.f32 %v10750, 0.0
      %v10783 = vmax.f32 %v10751, 0.0
      %v10784 = vmax.f32 %v10752, 0.0
      %v10785 = vmax.f32 %v10753, 0.0
      %v10786 = vmax.f32 %v10754, 0.0
      %v10787 = vmax.f32 %v10755, 0.0
      %v10788 = vmax.f32 %v10756, 0.0
      %v10789 = vmax.f32 %v10757, 0.0
      %v10790 = vmax.f32 %v10758, 0.0
      %v10791 = vmax.f32 %v10759, 0.0
      %v10792 = vmax.f32 %v10760, 0.0
      %v10793 = vmax.f32 %v10761, 0.0
      %v10794 = vmax.f32 %v10762, 0.0
      %v10795 = vmax.f32 %v10763, 0.0
      %v10796 = vmax.f32 %v10764, 0.0
      %v10797 = vmax.f32 %v10765, 0.0
      %v10798 = vmax.f32 %v10766, 0.0
      %v10799 = vmax.f32 %v10767, 0.0
      %v10800 = vmax.f32 %v10768, 0.0
      %v10801 = vmax.f32 %v10769, 0.0
      %v10802 = vmax.f32 %v10770, 0.0
      %v10803 = vmax.f32 %v10771, 0.0
      %v10804 = vmax.f32 %v10772, 0.0
      %v10805 = vmax.f32 %v10773, 0.0
      %v10806 = vmax.f32 %v10774, 0.0
      %v10807 = vmax.f32 %v10775, 0.0
      %v10808 = vmax.f32 %v10776, 0.0
      %v10809 = vmax.f32 %v10777, 0.0
      %v10810 = vmax.f32 %v10778, 0.0
      %10811 = vst.msk [vmem:[%s170] sm:$0xff] %vm728, %v10779
      %10812 = vst.msk [vmem:[%s170 + $0x8] sm:$0xff] %vm728, %v10780
      %10813 = vst.msk [vmem:[%s170 + $0x10] sm:$0xff] %vm728, %v10781
      %10814 = vst.msk [vmem:[%s170 + $0x18] sm:$0xff] %vm728, %v10782
      %10815 = vst.msk [vmem:[%s170 + $0x20] sm:$0xff] %vm728, %v10783
      %10816 = vst.msk [vmem:[%s170 + $0x28] sm:$0xff] %vm728, %v10784
      %10817 = vst.msk [vmem:[%s170 + $0x30] sm:$0xff] %vm728, %v10785
      %10818 = vst.msk [vmem:[%s170 + $0x38] sm:$0xff] %vm728, %v10786
      %10819 = vst.msk [vmem:[%s170 + $0x40] sm:$0xff] %vm728, %v10787
      %10820 = vst.msk [vmem:[%s170 + $0x48] sm:$0xff] %vm728, %v10788
      %10821 = vst.msk [vmem:[%s170 + $0x50] sm:$0xff] %vm728, %v10789
      %10822 = vst.msk [vmem:[%s170 + $0x58] sm:$0xff] %vm728, %v10790
      %10823 = vst.msk [vmem:[%s170 + $0x60] sm:$0xff] %vm728, %v10791
      %10824 = vst.msk [vmem:[%s170 + $0x68] sm:$0xff] %vm728, %v10792
      %10825 = vst.msk [vmem:[%s170 + $0x70] sm:$0xff] %vm728, %v10793
      %10826 = vst.msk [vmem:[%s170 + $0x78] sm:$0xff] %vm728, %v10794
      %10827 = vst.msk [vmem:[%s170 + $0x80] sm:$0xff] %vm728, %v10795
      %10828 = vst.msk [vmem:[%s170 + $0x88] sm:$0xff] %vm728, %v10796
      %10829 = vst.msk [vmem:[%s170 + $0x90] sm:$0xff] %vm728, %v10797
      %10830 = vst.msk [vmem:[%s170 + $0x98] sm:$0xff] %vm728, %v10798
      %10831 = vst.msk [vmem:[%s170 + $0xa0] sm:$0xff] %vm728, %v10799
      %10832 = vst.msk [vmem:[%s170 + $0xa8] sm:$0xff] %vm728, %v10800
      %10833 = vst.msk [vmem:[%s170 + $0xb0] sm:$0xff] %vm728, %v10801
      %10834 = vst.msk [vmem:[%s170 + $0xb8] sm:$0xff] %vm728, %v10802
      %10835 = vst.msk [vmem:[%s170 + $0xc0] sm:$0xff] %vm728, %v10803
      %10836 = vst.msk [vmem:[%s170 + $0xc8] sm:$0xff] %vm728, %v10804
      %10837 = vst.msk [vmem:[%s170 + $0xd0] sm:$0xff] %vm728, %v10805
      %10838 = vst.msk [vmem:[%s170 + $0xd8] sm:$0xff] %vm728, %v10806
      %10839 = vst.msk [vmem:[%s170 + $0xe0] sm:$0xff] %vm728, %v10807
      %10840 = vst.msk [vmem:[%s170 + $0xe8] sm:$0xff] %vm728, %v10808
      %10841 = vst.msk [vmem:[%s170 + $0xf0] sm:$0xff] %vm728, %v10809
      %10842 = vst.msk [vmem:[%s170 + $0xf8] sm:$0xff] %vm728, %v10810
      %p10843 = scmp.lt.s32.totalorder %s14, 1
      %s10844 = scalar_select %p10843, %s14, 1
      %s10845 = smul.addr %s10844, 32
      %s10846 = smul.addr %s10845, 8
      %s10847 = scalar_lea.vmem %s3, %s10846
      // Predicated region
      $region33: #{tpu_custom_call.1} parent=31 // pred_check
        %p10848 = pneg %p100
      $region34: #{tpu_custom_call.1} parent=31 // pred_check_branch
        %10850 = sbr.rel (%p10848) target = $region36
      $region35: #{tpu_custom_call.1} parent=31 // pred_region
        _
      $region36: #{tpu_custom_call.1} parent=31 // pred_fallthru
        _
    $region32: #{tpu_custom_call.1} parent=5 // pred_fallthru
      _
    %p10851 = scmp.le.s32.totalorder 2, %s9
    // Predicated region
    $region37: #{tpu_custom_call.1} parent=5 // pred_check
      %p10852 = pneg %p10851
    $region38: #{tpu_custom_call.1} parent=5 // pred_check_branch
      %10854 = sbr.rel (%p10852) target = $region40
    $region39: #{tpu_custom_call.1} parent=5 // pred_region
      %s10855 = ssub.s32 %s9, 2
      // Predicated region
      $region41: #{tpu_custom_call.1} parent=39 // pred_check
        %p10856 = pneg %p106
      $region42: #{tpu_custom_call.1} parent=39 // pred_check_branch
        %10858 = sbr.rel (%p10856) target = $region44
      $region43: #{tpu_custom_call.1} parent=39 // pred_region
        %p10859 = scmp.lt.s32.totalorder %s15, 1
        %s10860 = scalar_select %p10859, %s15, 1
        %s10861 = smul.addr %s10860, 32
        %s10862 = smul.addr %s10861, 8
        %s10863 = scalar_lea.vmem %s3, %s10862
      $region44: #{tpu_custom_call.1} parent=39 // pred_fallthru
        _
    $region40: #{tpu_custom_call.1} parent=5 // pred_fallthru
      _
  $region6: #{tpu_custom_call.1} parent=0 // loop_footer
    %s13 = sadd.s32 1, %s9
  $region7: #{tpu_custom_call.1} parent=0 // loop_footer_branch
    %8 = sbr.rel target = $region3
  $region8: #{tpu_custom_call.1} parent=0 // loop_exit
    _

</llo_original>
